<compile_context>
chip_gen: v6e
topology: v6e:2x2x1
jax: 0.10.0
libtpu: 0.0.40
codegen_flags: <defaults>
</compile_context>

<pallas_src>
import numpy as np
import jax
import jax.numpy as jnp
from jax.experimental import pallas as pl
from jax.experimental.pallas import tpu as pltpu


ENC_NF = (16, 32, 32, 32)
DEC_NF = (32, 32, 32, 32, 16, 16)
IN_CH = 2
LEAKY_SLOPE = 0.1


def _round_up(x, m):
    return ((x + m - 1) // m) * m


def _leaky(x):
    # LeakyReLU(0) == 0, so the zero halo / zero garbage columns stay exactly zero.
    return jnp.where(x >= 0, x, LEAKY_SLOPE * x)


# ------------------------------ static layer plan ------------------------------ #

def vxm_layer_plan():
    """Per-conv channel plan.  `parts` lists the torch.cat blocks (in cat order)
    feeding the conv; the concat itself is deferred into the kernel."""
    enc_hist = list(reversed(ENC_NF))
    plan = []
    prev = IN_CH
    for nf in ENC_NF:                                    # downarm, stride 2
        plan.append(dict(kind="down", parts=(prev,), cout=nf))
        prev = nf
    for i, nf in enumerate(DEC_NF[:len(ENC_NF)]):        # uparm, stride 1 (+ upsample)
        parts = (prev,) if i == 0 else (prev, enc_hist[i])
        plan.append(dict(kind="up", parts=parts, cout=nf))
        prev = nf
    parts = (prev, IN_CH)                                # last skip is the raw input
    for nf in DEC_NF[len(ENC_NF):]:                      # extras, stride 1
        plan.append(dict(kind="extra", parts=parts, cout=nf))
        parts = (nf,)
    plan.append(dict(kind="flow", parts=parts, cout=2))  # bare flow conv, no activation
    return plan


def make_vxm_params(key):
    """Random VXM params (PyTorch default init).

    Weight layout: (9, Cin, Cout), tap-major with k = 3*kh + kw; for layers fed by
    torch.cat([...], dim=1) the Cin blocks follow the cat order.  To port trained
    PyTorch weights W (Cout, Cin, 3, 3): w = W.permute(2, 3, 1, 0).reshape(9, Cin, Cout).
    """
    plan = vxm_layer_plan()
    keys = jax.random.split(key, len(plan))
    params = []
    for k, layer in zip(keys, plan):
        cin, cout = sum(layer["parts"]), layer["cout"]
        k1, k2 = jax.random.split(k)
        if layer["kind"] == "flow":
            # flow conv: weight ~ Normal(0, 1e-5), bias = 0 (as in VXM.__init__)
            w = 1e-5 * jax.random.normal(k1, (9, cin, cout), jnp.float32)
            b = jnp.zeros((cout,), jnp.float32)
        else:
            bound = 1.0 / np.sqrt(9 * cin)               # U(+-1/sqrt(fan_in))
            w = jax.random.uniform(k1, (9, cin, cout), jnp.float32, -bound, bound)
            b = jax.random.uniform(k2, (cout,), jnp.float32, -bound, bound)
        params.append((w, b))
    return params


# ----------------------- constant 0/1 selection matrices ----------------------- #
# Column-stride-2 and 2x nearest upsample are expressed as tiny constant matmuls on
# the (rows*wt, C)-flattened feature maps: selection / replication rides the
# otherwise-idle MXU instead of strided or sublane-splitting relayouts, and their
# all-zero rows maintain the "garbage column == 0" invariant for free.

def _col_stride2_select(Ho, Wo, Wt_o, wt_in):
    s = np.zeros((Ho * Wt_o, Ho * wt_in), np.float32)
    for ho in range(Ho):
        for wo in range(Wo):
            s[ho * Wt_o + wo, ho * wt_in + 2 * wo] = 1.0
    return s


def _upsample2_select(hc, wc, wtc, hf, wf, wtf):
    r = np.zeros((hf * wtf, hc * wtc), np.float32)
    for rf in range(hf):
        for cf in range(wf):
            r[rf * wtf + cf, (rf // 2) * wtc + (cf // 2)] = 1.0
    return r


# --------------------------------- fused forward -------------------------------- #

def vxm_forward(params, source, target, flow_multiplier=1.0):
    """source, target: (B, 1, H, W) float32 (NCHW, as in the PyTorch module).
    Returns pos_flow: (B, 2, H, W) float32."""
    B, _, H, W = source.shape
    nlev = len(ENC_NF)
    assert H % (1 << nlev) == 0 and W % (1 << nlev) == 0, \
        "spatial dims must be divisible by 2**len(enc_nf)"

    plan = vxm_layer_plan()

    # Geometry per resolution level r0..r4: (h, w, wt).  Activations are stored
    # (h, wt, C) with wt = round_up(w, 8); columns >= w are kept exactly zero.
    geo = []
    h, w = H, W
    for _ in range(nlev + 1):
        geo.append((h, w, max(8, _round_up(w, 8))))
        h, w = h // 2, w // 2

    # -------------- flat operand list (everything stays VMEM-resident) -------------- #
    x = jnp.concatenate([source, target], axis=1)             # torch.cat(dim=1)
    x = jnp.transpose(x, (0, 2, 3, 1)).astype(jnp.float32)    # NCHW -> NHWC (tiny)

    operands = [x]
    in_specs = [pl.BlockSpec((1, H, W, IN_CH), lambda b: (b, 0, 0, 0))]

    def _add(arr):
        operands.append(arr)
        in_specs.append(pl.BlockSpec(arr.shape, lambda b, _r=len(arr.shape): (0,) * _r))
        return len(operands) - 1

    # Per-layer weights: one bf16 (9*Cin_part, Cout) matmul operand per cat part
    # (deferred concat); cast once here (review: hoist bf16 casts / bf16 weights).
    layer_slots = []
    for (wfull, bias), layer in zip(params, plan):
        cout = layer["cout"]
        w_idx, c0 = [], 0
        for ci in layer["parts"]:
            wp = wfull[:, c0:c0 + ci, :].reshape(9 * ci, cout).astype(jnp.bfloat16)
            w_idx.append(_add(wp))
            c0 += ci
        b_idx = _add(bias.reshape(1, cout).astype(jnp.float32))
        layer_slots.append((tuple(w_idx), b_idx))

    # Constant selection matrices (f32 so selected values pass through exactly).
    dn_idx = []
    for i in range(nlev):                                     # down i: r_i -> r_{i+1}
        _, _, wt_i = geo[i]
        ho, wo, wto = geo[i + 1]
        dn_idx.append(_add(jnp.asarray(_col_stride2_select(ho, wo, wto, wt_i))))
    up_idx = []
    for i in range(nlev):                                     # up i: r_{nlev-i} -> r_{nlev-1-i}
        hc, wc, wtc = geo[nlev - i]
        hf, wf, wtf = geo[nlev - 1 - i]
        up_idx.append(_add(jnp.asarray(_upsample2_select(hc, wc, wtc, hf, wf, wtf))))

    # ----------------------------------- kernel ----------------------------------- #
    def kernel(*refs):
        o_ref = refs[-1]

        def conv_flat(parts, slot, leaky):
            """Fused [LeakyReLU -> one big-K im2col matmul per cat part -> bias].
            parts: list of (h, wt, ci) f32 values (same h, wt).  Returns the flat
            f32 output (h*wt, cout) of a 3x3 / stride 1 / pad 1 conv."""
            w_idx, b_idx = slot
            h, wt = parts[0].shape[0], parts[0].shape[1]
            acc = None
            for xv, wi in zip(parts, w_idx):
                ci = xv.shape[-1]
                xa = _leaky(xv) if leaky else xv
                xa = xa.astype(jnp.bfloat16)                  # cast once, not per tap
                zc = jnp.zeros((h, 1, ci), jnp.bfloat16)      # zero halo (VMEM only)
                xa = jnp.concatenate([zc, xa, zc], axis=1)    # (h, wt+2, ci)
                zr = jnp.zeros((1, wt + 2, ci), jnp.bfloat16)
                xa = jnp.concatenate([zr, xa, zr], axis=0)    # (h+2, wt+2, ci)
                taps = [xa[kh:kh + h, kw:kw + wt, :]          # 9 static VMEM slices
                        for kh in range(3) for kw in range(3)]
                col = jnp.concatenate(taps, axis=-1)          # K-concat: (h, wt, 9*ci)
                col = col.reshape(h * wt, 9 * ci)             # wt % 8 == 0
                d = jnp.dot(col, refs[wi][...],               # MXU, K = 9*ci
                            preferred_element_type=jnp.float32)
                acc = d if acc is None else acc + d
            return acc + refs[b_idx][...]                     # + bias, f32

        def conv_down(xv, slot, sel_i):
            """Fused [LeakyReLU -> 3x3 stride-2 conv -> bias].  Row stride via an
            in-VMEM parity split (leading-dim reshape); column stride + output-width
            zero padding folded into the constant `sel` matmul."""
            w_idx, b_idx = slot
            h, wt, ci = xv.shape
            ho = h // 2
            sel = refs[sel_i][...]
            wto = sel.shape[0] // ho
            xa = _leaky(xv).astype(jnp.bfloat16)
            xr = xa.reshape(ho, 2, wt, ci)                    # leading-dim split only
            xe, xo = xr[:, 0], xr[:, 1]                       # even / odd input rows
            zr = jnp.zeros((1, wt, ci), jnp.bfloat16)
            r_top = zr if ho == 1 else jnp.concatenate([zr, xo[:ho - 1]], axis=0)
            rows = (r_top, xe, xo)                            # tap rows for kh = 0, 1, 2
            zc = jnp.zeros((ho, 1, ci), jnp.bfloat16)
            taps = []
            for kh in range(3):
                rp = jnp.concatenate([zc, rows[kh], zc], axis=1)   # (ho, wt+2, ci)
                taps += [rp[:, kw:kw + wt, :] for kw in range(3)]
            col = jnp.concatenate(taps, axis=-1).reshape(ho * wt, 9 * ci)
            y = jnp.dot(col, refs[w_idx[0]][...],
                        preferred_element_type=jnp.float32) + refs[b_idx][...]
            z = jnp.dot(sel, y, preferred_element_type=jnp.float32)   # keep cols 2*wo
            return z.reshape(ho, wto, y.shape[-1])

        # --------------------------------- encoder --------------------------------- #
        x_v = refs[0][0]                                      # (H, W, IN_CH)
        acts = [x_v]                                          # x_enc in the torch code
        li = 0
        for i in range(nlev):
            acts.append(conv_down(acts[-1], layer_slots[li], dn_idx[i]))
            li += 1

        # --------------------------------- decoder --------------------------------- #
        cur = [acts.pop()]                                    # deepest encoder output
        for i in range(nlev):
            hf, _, wtf = geo[nlev - 1 - i]
            cout = plan[li]["cout"]
            yf = conv_flat(cur, layer_slots[li], leaky=True)
            u = jnp.dot(refs[up_idx[i]][...], yf,             # fused 2x NN upsample
                        preferred_element_type=jnp.float32)
            cur = [u.reshape(hf, wtf, cout), acts.pop()]      # deferred torch.cat
            li += 1

        # ----------------------------- extras + flow ------------------------------- #
        h0, w0, wt0 = geo[0]
        for _ in range(len(DEC_NF) - nlev):
            y = conv_flat(cur, layer_slots[li], leaky=True)
            cur = [y.reshape(h0, wt0, plan[li]["cout"])]
            li += 1
        flow = conv_flat(cur, layer_slots[li], leaky=False)   # bare flow conv
        flow = flow.reshape(h0, wt0, 2)                       # wt0 == W (W % 16 == 0)
        if flow_multiplier != 1.0:
            flow = flow * flow_multiplier
        # Single (H, W, 2) store per batch element; after full fusion this is the only
        # activation that ever touches HBM, so its lane-sparseness is off the critical path.
        o_ref[0] = flow.astype(o_ref.dtype)

    out = pl.pallas_call(
        kernel,
        out_shape=jax.ShapeDtypeStruct((B, H, W, 2), jnp.float32),
        grid=(B,),
        in_specs=in_specs,
        out_specs=pl.BlockSpec((1, H, W, 2), lambda b: (b, 0, 0, 0)),
        compiler_params=pltpu.CompilerParams(
            dimension_semantics=("parallel",)),               # batch across TCs on v7x
    )(*operands)

    return jnp.transpose(out, (0, 3, 1, 2))                   # NHWC -> NCHW: (B, 2, H, W)


# ------------------------------------- main ------------------------------------- #

if __name__ == "__main__":
    key = jax.random.PRNGKey(0)
    kp, ks, kt = jax.random.split(key, 3)

    B, H, W = 2, 16, 16
    params = make_vxm_params(kp)
    source = jax.random.normal(ks, (B, 1, H, W), jnp.float32)
    target = jax.random.normal(kt, (B, 1, H, W), jnp.float32)

    fwd = jax.jit(vxm_forward)
    pos_flow = jax.block_until_ready(fwd(params, source, target))

    assert pos_flow.shape == (B, 2, H, W), pos_flow.shape
    assert pos_flow.dtype == jnp.float32
    assert bool(jnp.all(jnp.isfinite(pos_flow)))
    print("KERNEL_OK")
</pallas_src>

<mosaic_0001>
module attributes {stable_mosaic.version = 11 : i64} {
  func.func @kernel(%arg0: i32, %arg1: memref<1x16x16x2xf32, #tpu.memory_space<vmem>>, %arg2: memref<18x16xbf16, #tpu.memory_space<vmem>>, %arg3: memref<1x16xf32, #tpu.memory_space<vmem>>, %arg4: memref<144x32xbf16, #tpu.memory_space<vmem>>, %arg5: memref<1x32xf32, #tpu.memory_space<vmem>>, %arg6: memref<288x32xbf16, #tpu.memory_space<vmem>>, %arg7: memref<1x32xf32, #tpu.memory_space<vmem>>, %arg8: memref<288x32xbf16, #tpu.memory_space<vmem>>, %arg9: memref<1x32xf32, #tpu.memory_space<vmem>>, %arg10: memref<288x32xbf16, #tpu.memory_space<vmem>>, %arg11: memref<1x32xf32, #tpu.memory_space<vmem>>, %arg12: memref<288x32xbf16, #tpu.memory_space<vmem>>, %arg13: memref<288x32xbf16, #tpu.memory_space<vmem>>, %arg14: memref<1x32xf32, #tpu.memory_space<vmem>>, %arg15: memref<288x32xbf16, #tpu.memory_space<vmem>>, %arg16: memref<288x32xbf16, #tpu.memory_space<vmem>>, %arg17: memref<1x32xf32, #tpu.memory_space<vmem>>, %arg18: memref<288x32xbf16, #tpu.memory_space<vmem>>, %arg19: memref<144x32xbf16, #tpu.memory_space<vmem>>, %arg20: memref<1x32xf32, #tpu.memory_space<vmem>>, %arg21: memref<288x16xbf16, #tpu.memory_space<vmem>>, %arg22: memref<18x16xbf16, #tpu.memory_space<vmem>>, %arg23: memref<1x16xf32, #tpu.memory_space<vmem>>, %arg24: memref<144x16xbf16, #tpu.memory_space<vmem>>, %arg25: memref<1x16xf32, #tpu.memory_space<vmem>>, %arg26: memref<144x2xbf16, #tpu.memory_space<vmem>>, %arg27: memref<1x2xf32, #tpu.memory_space<vmem>>, %arg28: memref<64x128xf32, #tpu.memory_space<vmem>>, %arg29: memref<32x32xf32, #tpu.memory_space<vmem>>, %arg30: memref<16x16xf32, #tpu.memory_space<vmem>>, %arg31: memref<8x8xf32, #tpu.memory_space<vmem>>, %arg32: memref<16x8xf32, #tpu.memory_space<vmem>>, %arg33: memref<32x16xf32, #tpu.memory_space<vmem>>, %arg34: memref<64x32xf32, #tpu.memory_space<vmem>>, %arg35: memref<256x64xf32, #tpu.memory_space<vmem>>, %arg36: memref<1x16x16x2xf32, #tpu.memory_space<vmem>>) attributes {dimension_semantics = [#tpu.dimension_semantics<parallel>], iteration_bounds = array<i64: 2>, scalar_prefetch = 0 : i64, scratch_operands = 0 : i64, tpu.core_type = #tpu.core_type<tc>, window_params = [{transform_indices = @transform_0, window_bounds = array<i64: 1, 16, 16, 2>}, {pipeline_mode = #tpu.pipeline_mode<synchronous>, transform_indices = @transform_1, window_bounds = array<i64: 18, 16>}, {pipeline_mode = #tpu.pipeline_mode<synchronous>, transform_indices = @transform_2, window_bounds = array<i64: 1, 16>}, {pipeline_mode = #tpu.pipeline_mode<synchronous>, transform_indices = @transform_3, window_bounds = array<i64: 144, 32>}, {pipeline_mode = #tpu.pipeline_mode<synchronous>, transform_indices = @transform_4, window_bounds = array<i64: 1, 32>}, {pipeline_mode = #tpu.pipeline_mode<synchronous>, transform_indices = @transform_5, window_bounds = array<i64: 288, 32>}, {pipeline_mode = #tpu.pipeline_mode<synchronous>, transform_indices = @transform_6, window_bounds = array<i64: 1, 32>}, {pipeline_mode = #tpu.pipeline_mode<synchronous>, transform_indices = @transform_7, window_bounds = array<i64: 288, 32>}, {pipeline_mode = #tpu.pipeline_mode<synchronous>, transform_indices = @transform_8, window_bounds = array<i64: 1, 32>}, {pipeline_mode = #tpu.pipeline_mode<synchronous>, transform_indices = @transform_9, window_bounds = array<i64: 288, 32>}, {pipeline_mode = #tpu.pipeline_mode<synchronous>, transform_indices = @transform_10, window_bounds = array<i64: 1, 32>}, {pipeline_mode = #tpu.pipeline_mode<synchronous>, transform_indices = @transform_11, window_bounds = array<i64: 288, 32>}, {pipeline_mode = #tpu.pipeline_mode<synchronous>, transform_indices = @transform_12, window_bounds = array<i64: 288, 32>}, {pipeline_mode = #tpu.pipeline_mode<synchronous>, transform_indices = @transform_13, window_bounds = array<i64: 1, 32>}, {pipeline_mode = #tpu.pipeline_mode<synchronous>, transform_indices = @transform_14, window_bounds = array<i64: 288, 32>}, {pipeline_mode = #tpu.pipeline_mode<synchronous>, transform_indices = @transform_15, window_bounds = array<i64: 288, 32>}, {pipeline_mode = #tpu.pipeline_mode<synchronous>, transform_indices = @transform_16, window_bounds = array<i64: 1, 32>}, {pipeline_mode = #tpu.pipeline_mode<synchronous>, transform_indices = @transform_17, window_bounds = array<i64: 288, 32>}, {pipeline_mode = #tpu.pipeline_mode<synchronous>, transform_indices = @transform_18, window_bounds = array<i64: 144, 32>}, {pipeline_mode = #tpu.pipeline_mode<synchronous>, transform_indices = @transform_19, window_bounds = array<i64: 1, 32>}, {pipeline_mode = #tpu.pipeline_mode<synchronous>, transform_indices = @transform_20, window_bounds = array<i64: 288, 16>}, {pipeline_mode = #tpu.pipeline_mode<synchronous>, transform_indices = @transform_21, window_bounds = array<i64: 18, 16>}, {pipeline_mode = #tpu.pipeline_mode<synchronous>, transform_indices = @transform_22, window_bounds = array<i64: 1, 16>}, {pipeline_mode = #tpu.pipeline_mode<synchronous>, transform_indices = @transform_23, window_bounds = array<i64: 144, 16>}, {pipeline_mode = #tpu.pipeline_mode<synchronous>, transform_indices = @transform_24, window_bounds = array<i64: 1, 16>}, {pipeline_mode = #tpu.pipeline_mode<synchronous>, transform_indices = @transform_25, window_bounds = array<i64: 144, 2>}, {pipeline_mode = #tpu.pipeline_mode<synchronous>, transform_indices = @transform_26, window_bounds = array<i64: 1, 2>}, {pipeline_mode = #tpu.pipeline_mode<synchronous>, transform_indices = @transform_27, window_bounds = array<i64: 64, 128>}, {pipeline_mode = #tpu.pipeline_mode<synchronous>, transform_indices = @transform_28, window_bounds = array<i64: 32, 32>}, {pipeline_mode = #tpu.pipeline_mode<synchronous>, transform_indices = @transform_29, window_bounds = array<i64: 16, 16>}, {pipeline_mode = #tpu.pipeline_mode<synchronous>, transform_indices = @transform_30, window_bounds = array<i64: 8, 8>}, {pipeline_mode = #tpu.pipeline_mode<synchronous>, transform_indices = @transform_31, window_bounds = array<i64: 16, 8>}, {pipeline_mode = #tpu.pipeline_mode<synchronous>, transform_indices = @transform_32, window_bounds = array<i64: 32, 16>}, {pipeline_mode = #tpu.pipeline_mode<synchronous>, transform_indices = @transform_33, window_bounds = array<i64: 64, 32>}, {pipeline_mode = #tpu.pipeline_mode<synchronous>, transform_indices = @transform_34, window_bounds = array<i64: 256, 64>}, {transform_indices = @transform_35, window_bounds = array<i64: 1, 16, 16, 2>}]} {
    %c0 = arith.constant 0 : index
    %c0_0 = arith.constant 0 : index
    %c0_1 = arith.constant 0 : index
    %c0_2 = arith.constant 0 : index
    %0 = vector.load %arg1[%c0, %c0_0, %c0_1, %c0_2] : memref<1x16x16x2xf32, #tpu.memory_space<vmem>>, vector<1x16x16x2xf32>
    %1 = vector.shape_cast %0 : vector<1x16x16x2xf32> to vector<16x16x2xf32>
    %c0_3 = arith.constant 0 : index
    %c0_4 = arith.constant 0 : index
    %2 = vector.load %arg28[%c0_3, %c0_4] : memref<64x128xf32, #tpu.memory_space<vmem>>, vector<64x128xf32>
    %cst = arith.constant 0.000000e+00 : f32
    %3 = vector.broadcast %cst : f32 to vector<16x16x2xf32>
    %4 = arith.cmpf oge, %1, %3 : vector<16x16x2xf32>
    %cst_5 = arith.constant 1.000000e-01 : f32
    %5 = vector.broadcast %cst_5 : f32 to vector<16x16x2xf32>
    %6 = arith.mulf %5, %1 : vector<16x16x2xf32>
    %7 = arith.select %4, %1, %6 : vector<16x16x2xi1>, vector<16x16x2xf32>
    %8 = arith.truncf %7 : vector<16x16x2xf32> to vector<16x16x2xbf16>
    %9 = vector.shape_cast %8 : vector<16x16x2xbf16> to vector<8x2x16x2xbf16>
    %10 = vector.extract_strided_slice %9 {offsets = [0, 0, 0, 0], sizes = [8, 1, 16, 2], strides = [1, 1, 1, 1]} : vector<8x2x16x2xbf16> to vector<8x1x16x2xbf16>
    %11 = vector.shape_cast %10 : vector<8x1x16x2xbf16> to vector<8x16x2xbf16>
    %12 = vector.extract_strided_slice %9 {offsets = [0, 1, 0, 0], sizes = [8, 1, 16, 2], strides = [1, 1, 1, 1]} : vector<8x2x16x2xbf16> to vector<8x1x16x2xbf16>
    %13 = vector.shape_cast %12 : vector<8x1x16x2xbf16> to vector<8x16x2xbf16>
    %cst_6 = arith.constant 0.000000e+00 : bf16
    %14 = vector.broadcast %cst_6 : bf16 to vector<1x16x2xbf16>
    %15 = vector.extract_strided_slice %13 {offsets = [0, 0, 0], sizes = [7, 16, 2], strides = [1, 1, 1]} : vector<8x16x2xbf16> to vector<7x16x2xbf16>
    %16 = tpu.concatenate %14, %15 in 0 : vector<1x16x2xbf16>, vector<7x16x2xbf16> -> vector<8x16x2xbf16>
    %cst_7 = arith.constant 0.000000e+00 : bf16
    %17 = vector.broadcast %cst_7 : bf16 to vector<8x1x2xbf16>
    %18 = tpu.concatenate %17, %16, %17 in 1 : vector<8x1x2xbf16>, vector<8x16x2xbf16>, vector<8x1x2xbf16> -> vector<8x18x2xbf16>
    %19 = vector.extract_strided_slice %18 {offsets = [0, 0, 0], sizes = [8, 16, 2], strides = [1, 1, 1]} : vector<8x18x2xbf16> to vector<8x16x2xbf16>
    %20 = vector.extract_strided_slice %18 {offsets = [0, 1, 0], sizes = [8, 16, 2], strides = [1, 1, 1]} : vector<8x18x2xbf16> to vector<8x16x2xbf16>
    %21 = vector.extract_strided_slice %18 {offsets = [0, 2, 0], sizes = [8, 16, 2], strides = [1, 1, 1]} : vector<8x18x2xbf16> to vector<8x16x2xbf16>
    %22 = tpu.concatenate %17, %11, %17 in 1 : vector<8x1x2xbf16>, vector<8x16x2xbf16>, vector<8x1x2xbf16> -> vector<8x18x2xbf16>
    %23 = vector.extract_strided_slice %22 {offsets = [0, 0, 0], sizes = [8, 16, 2], strides = [1, 1, 1]} : vector<8x18x2xbf16> to vector<8x16x2xbf16>
    %24 = vector.extract_strided_slice %22 {offsets = [0, 1, 0], sizes = [8, 16, 2], strides = [1, 1, 1]} : vector<8x18x2xbf16> to vector<8x16x2xbf16>
    %25 = vector.extract_strided_slice %22 {offsets = [0, 2, 0], sizes = [8, 16, 2], strides = [1, 1, 1]} : vector<8x18x2xbf16> to vector<8x16x2xbf16>
    %26 = tpu.concatenate %17, %13, %17 in 1 : vector<8x1x2xbf16>, vector<8x16x2xbf16>, vector<8x1x2xbf16> -> vector<8x18x2xbf16>
    %27 = vector.extract_strided_slice %26 {offsets = [0, 0, 0], sizes = [8, 16, 2], strides = [1, 1, 1]} : vector<8x18x2xbf16> to vector<8x16x2xbf16>
    %28 = vector.extract_strided_slice %26 {offsets = [0, 1, 0], sizes = [8, 16, 2], strides = [1, 1, 1]} : vector<8x18x2xbf16> to vector<8x16x2xbf16>
    %29 = vector.extract_strided_slice %26 {offsets = [0, 2, 0], sizes = [8, 16, 2], strides = [1, 1, 1]} : vector<8x18x2xbf16> to vector<8x16x2xbf16>
    %30 = tpu.concatenate %19, %20, %21, %23, %24, %25, %27, %28, %29 in 2 : vector<8x16x2xbf16>, vector<8x16x2xbf16>, vector<8x16x2xbf16>, vector<8x16x2xbf16>, vector<8x16x2xbf16>, vector<8x16x2xbf16>, vector<8x16x2xbf16>, vector<8x16x2xbf16>, vector<8x16x2xbf16> -> vector<8x16x18xbf16>
    %31 = vector.shape_cast %30 : vector<8x16x18xbf16> to vector<128x18xbf16>
    %c0_8 = arith.constant 0 : index
    %c0_9 = arith.constant 0 : index
    %32 = vector.load %arg2[%c0_8, %c0_9] : memref<18x16xbf16, #tpu.memory_space<vmem>>, vector<18x16xbf16>
    %cst_10 = arith.constant dense<0.000000e+00> : vector<128x16xf32>
    %33 = tpu.matmul %31, %32, %cst_10 {dimension_numbers = #tpu.dot_dimension_numbers<[1], [0], [0], [1], [0, 0, 1, 1], [], []>} : vector<128x18xbf16>, vector<18x16xbf16>, vector<128x16xf32> -> vector<128x16xf32>
    %c0_11 = arith.constant 0 : index
    %c0_12 = arith.constant 0 : index
    %34 = vector.load %arg3[%c0_11, %c0_12] : memref<1x16xf32, #tpu.memory_space<vmem>>, vector<1x16xf32>
    %35 = vector.broadcast %34 : vector<1x16xf32> to vector<128x16xf32>
    %36 = arith.addf %33, %35 : vector<128x16xf32>
    %cst_13 = arith.constant dense<0.000000e+00> : vector<64x16xf32>
    %37 = tpu.matmul %2, %36, %cst_13 {dimension_numbers = #tpu.dot_dimension_numbers<[1], [0], [0], [1], [0, 0, 1, 1], [], []>} : vector<64x128xf32>, vector<128x16xf32>, vector<64x16xf32> -> vector<64x16xf32>
    %38 = vector.shape_cast %37 : vector<64x16xf32> to vector<8x8x16xf32>
    %c0_14 = arith.constant 0 : index
    %c0_15 = arith.constant 0 : index
    %39 = vector.load %arg29[%c0_14, %c0_15] : memref<32x32xf32, #tpu.memory_space<vmem>>, vector<32x32xf32>
    %cst_16 = arith.constant 0.000000e+00 : f32
    %40 = vector.broadcast %cst_16 : f32 to vector<8x8x16xf32>
    %41 = arith.cmpf oge, %38, %40 : vector<8x8x16xf32>
    %cst_17 = arith.constant 1.000000e-01 : f32
    %42 = vector.broadcast %cst_17 : f32 to vector<8x8x16xf32>
    %43 = arith.mulf %42, %38 : vector<8x8x16xf32>
    %44 = arith.select %41, %38, %43 : vector<8x8x16xi1>, vector<8x8x16xf32>
    %45 = arith.truncf %44 : vector<8x8x16xf32> to vector<8x8x16xbf16>
    %46 = vector.shape_cast %45 : vector<8x8x16xbf16> to vector<4x2x8x16xbf16>
    %47 = vector.extract_strided_slice %46 {offsets = [0, 0, 0, 0], sizes = [4, 1, 8, 16], strides = [1, 1, 1, 1]} : vector<4x2x8x16xbf16> to vector<4x1x8x16xbf16>
    %48 = vector.shape_cast %47 : vector<4x1x8x16xbf16> to vector<4x8x16xbf16>
    %49 = vector.extract_strided_slice %46 {offsets = [0, 1, 0, 0], sizes = [4, 1, 8, 16], strides = [1, 1, 1, 1]} : vector<4x2x8x16xbf16> to vector<4x1x8x16xbf16>
    %50 = vector.shape_cast %49 : vector<4x1x8x16xbf16> to vector<4x8x16xbf16>
    %cst_18 = arith.constant 0.000000e+00 : bf16
    %51 = vector.broadcast %cst_18 : bf16 to vector<1x8x16xbf16>
    %52 = vector.extract_strided_slice %50 {offsets = [0, 0, 0], sizes = [3, 8, 16], strides = [1, 1, 1]} : vector<4x8x16xbf16> to vector<3x8x16xbf16>
    %53 = tpu.concatenate %51, %52 in 0 : vector<1x8x16xbf16>, vector<3x8x16xbf16> -> vector<4x8x16xbf16>
    %cst_19 = arith.constant 0.000000e+00 : bf16
    %54 = vector.broadcast %cst_19 : bf16 to vector<4x1x16xbf16>
    %55 = tpu.concatenate %54, %53, %54 in 1 : vector<4x1x16xbf16>, vector<4x8x16xbf16>, vector<4x1x16xbf16> -> vector<4x10x16xbf16>
    %56 = vector.extract_strided_slice %55 {offsets = [0, 0, 0], sizes = [4, 8, 16], strides = [1, 1, 1]} : vector<4x10x16xbf16> to vector<4x8x16xbf16>
    %57 = vector.extract_strided_slice %55 {offsets = [0, 1, 0], sizes = [4, 8, 16], strides = [1, 1, 1]} : vector<4x10x16xbf16> to vector<4x8x16xbf16>
    %58 = vector.extract_strided_slice %55 {offsets = [0, 2, 0], sizes = [4, 8, 16], strides = [1, 1, 1]} : vector<4x10x16xbf16> to vector<4x8x16xbf16>
    %59 = tpu.concatenate %54, %48, %54 in 1 : vector<4x1x16xbf16>, vector<4x8x16xbf16>, vector<4x1x16xbf16> -> vector<4x10x16xbf16>
    %60 = vector.extract_strided_slice %59 {offsets = [0, 0, 0], sizes = [4, 8, 16], strides = [1, 1, 1]} : vector<4x10x16xbf16> to vector<4x8x16xbf16>
    %61 = vector.extract_strided_slice %59 {offsets = [0, 1, 0], sizes = [4, 8, 16], strides = [1, 1, 1]} : vector<4x10x16xbf16> to vector<4x8x16xbf16>
    %62 = vector.extract_strided_slice %59 {offsets = [0, 2, 0], sizes = [4, 8, 16], strides = [1, 1, 1]} : vector<4x10x16xbf16> to vector<4x8x16xbf16>
    %63 = tpu.concatenate %54, %50, %54 in 1 : vector<4x1x16xbf16>, vector<4x8x16xbf16>, vector<4x1x16xbf16> -> vector<4x10x16xbf16>
    %64 = vector.extract_strided_slice %63 {offsets = [0, 0, 0], sizes = [4, 8, 16], strides = [1, 1, 1]} : vector<4x10x16xbf16> to vector<4x8x16xbf16>
    %65 = vector.extract_strided_slice %63 {offsets = [0, 1, 0], sizes = [4, 8, 16], strides = [1, 1, 1]} : vector<4x10x16xbf16> to vector<4x8x16xbf16>
    %66 = vector.extract_strided_slice %63 {offsets = [0, 2, 0], sizes = [4, 8, 16], strides = [1, 1, 1]} : vector<4x10x16xbf16> to vector<4x8x16xbf16>
    %67 = tpu.concatenate %56, %57, %58, %60, %61, %62, %64, %65, %66 in 2 : vector<4x8x16xbf16>, vector<4x8x16xbf16>, vector<4x8x16xbf16>, vector<4x8x16xbf16>, vector<4x8x16xbf16>, vector<4x8x16xbf16>, vector<4x8x16xbf16>, vector<4x8x16xbf16>, vector<4x8x16xbf16> -> vector<4x8x144xbf16>
    %68 = vector.shape_cast %67 : vector<4x8x144xbf16> to vector<32x144xbf16>
    %c0_20 = arith.constant 0 : index
    %c0_21 = arith.constant 0 : index
    %69 = vector.load %arg4[%c0_20, %c0_21] : memref<144x32xbf16, #tpu.memory_space<vmem>>, vector<144x32xbf16>
    %cst_22 = arith.constant dense<0.000000e+00> : vector<32x32xf32>
    %70 = tpu.matmul %68, %69, %cst_22 {dimension_numbers = #tpu.dot_dimension_numbers<[1], [0], [0], [1], [0, 0, 1, 1], [], []>} : vector<32x144xbf16>, vector<144x32xbf16>, vector<32x32xf32> -> vector<32x32xf32>
    %c0_23 = arith.constant 0 : index
    %c0_24 = arith.constant 0 : index
    %71 = vector.load %arg5[%c0_23, %c0_24] : memref<1x32xf32, #tpu.memory_space<vmem>>, vector<1x32xf32>
    %72 = vector.broadcast %71 : vector<1x32xf32> to vector<32x32xf32>
    %73 = arith.addf %70, %72 : vector<32x32xf32>
    %cst_25 = arith.constant dense<0.000000e+00> : vector<32x32xf32>
    %74 = tpu.matmul %39, %73, %cst_25 {dimension_numbers = #tpu.dot_dimension_numbers<[1], [0], [0], [1], [0, 0, 1, 1], [], []>} : vector<32x32xf32>, vector<32x32xf32>, vector<32x32xf32> -> vector<32x32xf32>
    %75 = vector.shape_cast %74 : vector<32x32xf32> to vector<4x8x32xf32>
    %c0_26 = arith.constant 0 : index
    %c0_27 = arith.constant 0 : index
    %76 = vector.load %arg30[%c0_26, %c0_27] : memref<16x16xf32, #tpu.memory_space<vmem>>, vector<16x16xf32>
    %cst_28 = arith.constant 0.000000e+00 : f32
    %77 = vector.broadcast %cst_28 : f32 to vector<4x8x32xf32>
    %78 = arith.cmpf oge, %75, %77 : vector<4x8x32xf32>
    %cst_29 = arith.constant 1.000000e-01 : f32
    %79 = vector.broadcast %cst_29 : f32 to vector<4x8x32xf32>
    %80 = arith.mulf %79, %75 : vector<4x8x32xf32>
    %81 = arith.select %78, %75, %80 : vector<4x8x32xi1>, vector<4x8x32xf32>
    %82 = arith.truncf %81 : vector<4x8x32xf32> to vector<4x8x32xbf16>
    %83 = vector.shape_cast %82 : vector<4x8x32xbf16> to vector<2x2x8x32xbf16>
    %84 = vector.extract_strided_slice %83 {offsets = [0, 0, 0, 0], sizes = [2, 1, 8, 32], strides = [1, 1, 1, 1]} : vector<2x2x8x32xbf16> to vector<2x1x8x32xbf16>
    %85 = vector.shape_cast %84 : vector<2x1x8x32xbf16> to vector<2x8x32xbf16>
    %86 = vector.extract_strided_slice %83 {offsets = [0, 1, 0, 0], sizes = [2, 1, 8, 32], strides = [1, 1, 1, 1]} : vector<2x2x8x32xbf16> to vector<2x1x8x32xbf16>
    %87 = vector.shape_cast %86 : vector<2x1x8x32xbf16> to vector<2x8x32xbf16>
    %cst_30 = arith.constant 0.000000e+00 : bf16
    %88 = vector.broadcast %cst_30 : bf16 to vector<1x8x32xbf16>
    %89 = vector.extract_strided_slice %87 {offsets = [0, 0, 0], sizes = [1, 8, 32], strides = [1, 1, 1]} : vector<2x8x32xbf16> to vector<1x8x32xbf16>
    %90 = tpu.concatenate %88, %89 in 0 : vector<1x8x32xbf16>, vector<1x8x32xbf16> -> vector<2x8x32xbf16>
    %cst_31 = arith.constant 0.000000e+00 : bf16
    %91 = vector.broadcast %cst_31 : bf16 to vector<2x1x32xbf16>
    %92 = tpu.concatenate %91, %90, %91 in 1 : vector<2x1x32xbf16>, vector<2x8x32xbf16>, vector<2x1x32xbf16> -> vector<2x10x32xbf16>
    %93 = vector.extract_strided_slice %92 {offsets = [0, 0, 0], sizes = [2, 8, 32], strides = [1, 1, 1]} : vector<2x10x32xbf16> to vector<2x8x32xbf16>
    %94 = vector.extract_strided_slice %92 {offsets = [0, 1, 0], sizes = [2, 8, 32], strides = [1, 1, 1]} : vector<2x10x32xbf16> to vector<2x8x32xbf16>
    %95 = vector.extract_strided_slice %92 {offsets = [0, 2, 0], sizes = [2, 8, 32], strides = [1, 1, 1]} : vector<2x10x32xbf16> to vector<2x8x32xbf16>
    %96 = tpu.concatenate %91, %85, %91 in 1 : vector<2x1x32xbf16>, vector<2x8x32xbf16>, vector<2x1x32xbf16> -> vector<2x10x32xbf16>
    %97 = vector.extract_strided_slice %96 {offsets = [0, 0, 0], sizes = [2, 8, 32], strides = [1, 1, 1]} : vector<2x10x32xbf16> to vector<2x8x32xbf16>
    %98 = vector.extract_strided_slice %96 {offsets = [0, 1, 0], sizes = [2, 8, 32], strides = [1, 1, 1]} : vector<2x10x32xbf16> to vector<2x8x32xbf16>
    %99 = vector.extract_strided_slice %96 {offsets = [0, 2, 0], sizes = [2, 8, 32], strides = [1, 1, 1]} : vector<2x10x32xbf16> to vector<2x8x32xbf16>
    %100 = tpu.concatenate %91, %87, %91 in 1 : vector<2x1x32xbf16>, vector<2x8x32xbf16>, vector<2x1x32xbf16> -> vector<2x10x32xbf16>
    %101 = vector.extract_strided_slice %100 {offsets = [0, 0, 0], sizes = [2, 8, 32], strides = [1, 1, 1]} : vector<2x10x32xbf16> to vector<2x8x32xbf16>
    %102 = vector.extract_strided_slice %100 {offsets = [0, 1, 0], sizes = [2, 8, 32], strides = [1, 1, 1]} : vector<2x10x32xbf16> to vector<2x8x32xbf16>
    %103 = vector.extract_strided_slice %100 {offsets = [0, 2, 0], sizes = [2, 8, 32], strides = [1, 1, 1]} : vector<2x10x32xbf16> to vector<2x8x32xbf16>
    %104 = tpu.concatenate %93, %94, %95, %97, %98, %99, %101, %102, %103 in 2 : vector<2x8x32xbf16>, vector<2x8x32xbf16>, vector<2x8x32xbf16>, vector<2x8x32xbf16>, vector<2x8x32xbf16>, vector<2x8x32xbf16>, vector<2x8x32xbf16>, vector<2x8x32xbf16>, vector<2x8x32xbf16> -> vector<2x8x288xbf16>
    %105 = vector.shape_cast %104 : vector<2x8x288xbf16> to vector<16x288xbf16>
    %c0_32 = arith.constant 0 : index
    %c0_33 = arith.constant 0 : index
    %106 = vector.load %arg6[%c0_32, %c0_33] : memref<288x32xbf16, #tpu.memory_space<vmem>>, vector<288x32xbf16>
    %cst_34 = arith.constant dense<0.000000e+00> : vector<16x32xf32>
    %107 = tpu.matmul %105, %106, %cst_34 {dimension_numbers = #tpu.dot_dimension_numbers<[1], [0], [0], [1], [0, 0, 1, 1], [], []>} : vector<16x288xbf16>, vector<288x32xbf16>, vector<16x32xf32> -> vector<16x32xf32>
    %c0_35 = arith.constant 0 : index
    %c0_36 = arith.constant 0 : index
    %108 = vector.load %arg7[%c0_35, %c0_36] : memref<1x32xf32, #tpu.memory_space<vmem>>, vector<1x32xf32>
    %109 = vector.broadcast %108 : vector<1x32xf32> to vector<16x32xf32>
    %110 = arith.addf %107, %109 : vector<16x32xf32>
    %cst_37 = arith.constant dense<0.000000e+00> : vector<16x32xf32>
    %111 = tpu.matmul %76, %110, %cst_37 {dimension_numbers = #tpu.dot_dimension_numbers<[1], [0], [0], [1], [0, 0, 1, 1], [], []>} : vector<16x16xf32>, vector<16x32xf32>, vector<16x32xf32> -> vector<16x32xf32>
    %112 = vector.shape_cast %111 : vector<16x32xf32> to vector<2x8x32xf32>
    %c0_38 = arith.constant 0 : index
    %c0_39 = arith.constant 0 : index
    %113 = vector.load %arg31[%c0_38, %c0_39] : memref<8x8xf32, #tpu.memory_space<vmem>>, vector<8x8xf32>
    %cst_40 = arith.constant 0.000000e+00 : f32
    %114 = vector.broadcast %cst_40 : f32 to vector<2x8x32xf32>
    %115 = arith.cmpf oge, %112, %114 : vector<2x8x32xf32>
    %cst_41 = arith.constant 1.000000e-01 : f32
    %116 = vector.broadcast %cst_41 : f32 to vector<2x8x32xf32>
    %117 = arith.mulf %116, %112 : vector<2x8x32xf32>
    %118 = arith.select %115, %112, %117 : vector<2x8x32xi1>, vector<2x8x32xf32>
    %119 = arith.truncf %118 : vector<2x8x32xf32> to vector<2x8x32xbf16>
    %120 = vector.shape_cast %119 : vector<2x8x32xbf16> to vector<1x2x8x32xbf16>
    %121 = vector.extract_strided_slice %120 {offsets = [0, 0, 0, 0], sizes = [1, 1, 8, 32], strides = [1, 1, 1, 1]} : vector<1x2x8x32xbf16> to vector<1x1x8x32xbf16>
    %122 = vector.shape_cast %121 : vector<1x1x8x32xbf16> to vector<1x8x32xbf16>
    %123 = vector.extract_strided_slice %120 {offsets = [0, 1, 0, 0], sizes = [1, 1, 8, 32], strides = [1, 1, 1, 1]} : vector<1x2x8x32xbf16> to vector<1x1x8x32xbf16>
    %124 = vector.shape_cast %123 : vector<1x1x8x32xbf16> to vector<1x8x32xbf16>
    %cst_42 = arith.constant 0.000000e+00 : bf16
    %125 = vector.broadcast %cst_42 : bf16 to vector<1x8x32xbf16>
    %cst_43 = arith.constant 0.000000e+00 : bf16
    %126 = vector.broadcast %cst_43 : bf16 to vector<1x1x32xbf16>
    %127 = tpu.concatenate %126, %125, %126 in 1 : vector<1x1x32xbf16>, vector<1x8x32xbf16>, vector<1x1x32xbf16> -> vector<1x10x32xbf16>
    %128 = vector.extract_strided_slice %127 {offsets = [0, 0, 0], sizes = [1, 8, 32], strides = [1, 1, 1]} : vector<1x10x32xbf16> to vector<1x8x32xbf16>
    %129 = vector.extract_strided_slice %127 {offsets = [0, 1, 0], sizes = [1, 8, 32], strides = [1, 1, 1]} : vector<1x10x32xbf16> to vector<1x8x32xbf16>
    %130 = vector.extract_strided_slice %127 {offsets = [0, 2, 0], sizes = [1, 8, 32], strides = [1, 1, 1]} : vector<1x10x32xbf16> to vector<1x8x32xbf16>
    %131 = tpu.concatenate %126, %122, %126 in 1 : vector<1x1x32xbf16>, vector<1x8x32xbf16>, vector<1x1x32xbf16> -> vector<1x10x32xbf16>
    %132 = vector.extract_strided_slice %131 {offsets = [0, 0, 0], sizes = [1, 8, 32], strides = [1, 1, 1]} : vector<1x10x32xbf16> to vector<1x8x32xbf16>
    %133 = vector.extract_strided_slice %131 {offsets = [0, 1, 0], sizes = [1, 8, 32], strides = [1, 1, 1]} : vector<1x10x32xbf16> to vector<1x8x32xbf16>
    %134 = vector.extract_strided_slice %131 {offsets = [0, 2, 0], sizes = [1, 8, 32], strides = [1, 1, 1]} : vector<1x10x32xbf16> to vector<1x8x32xbf16>
    %135 = tpu.concatenate %126, %124, %126 in 1 : vector<1x1x32xbf16>, vector<1x8x32xbf16>, vector<1x1x32xbf16> -> vector<1x10x32xbf16>
    %136 = vector.extract_strided_slice %135 {offsets = [0, 0, 0], sizes = [1, 8, 32], strides = [1, 1, 1]} : vector<1x10x32xbf16> to vector<1x8x32xbf16>
    %137 = vector.extract_strided_slice %135 {offsets = [0, 1, 0], sizes = [1, 8, 32], strides = [1, 1, 1]} : vector<1x10x32xbf16> to vector<1x8x32xbf16>
    %138 = vector.extract_strided_slice %135 {offsets = [0, 2, 0], sizes = [1, 8, 32], strides = [1, 1, 1]} : vector<1x10x32xbf16> to vector<1x8x32xbf16>
    %139 = tpu.concatenate %128, %129, %130, %132, %133, %134, %136, %137, %138 in 2 : vector<1x8x32xbf16>, vector<1x8x32xbf16>, vector<1x8x32xbf16>, vector<1x8x32xbf16>, vector<1x8x32xbf16>, vector<1x8x32xbf16>, vector<1x8x32xbf16>, vector<1x8x32xbf16>, vector<1x8x32xbf16> -> vector<1x8x288xbf16>
    %140 = vector.shape_cast %139 : vector<1x8x288xbf16> to vector<8x288xbf16>
    %c0_44 = arith.constant 0 : index
    %c0_45 = arith.constant 0 : index
    %141 = vector.load %arg8[%c0_44, %c0_45] : memref<288x32xbf16, #tpu.memory_space<vmem>>, vector<288x32xbf16>
    %cst_46 = arith.constant dense<0.000000e+00> : vector<8x32xf32>
    %142 = tpu.matmul %140, %141, %cst_46 {dimension_numbers = #tpu.dot_dimension_numbers<[1], [0], [0], [1], [0, 0, 1, 1], [], []>} : vector<8x288xbf16>, vector<288x32xbf16>, vector<8x32xf32> -> vector<8x32xf32>
    %c0_47 = arith.constant 0 : index
    %c0_48 = arith.constant 0 : index
    %143 = vector.load %arg9[%c0_47, %c0_48] : memref<1x32xf32, #tpu.memory_space<vmem>>, vector<1x32xf32>
    %144 = vector.broadcast %143 : vector<1x32xf32> to vector<8x32xf32>
    %145 = arith.addf %142, %144 : vector<8x32xf32>
    %cst_49 = arith.constant dense<0.000000e+00> : vector<8x32xf32>
    %146 = tpu.matmul %113, %145, %cst_49 {dimension_numbers = #tpu.dot_dimension_numbers<[1], [0], [0], [1], [0, 0, 1, 1], [], []>} : vector<8x8xf32>, vector<8x32xf32>, vector<8x32xf32> -> vector<8x32xf32>
    %147 = vector.shape_cast %146 : vector<8x32xf32> to vector<1x8x32xf32>
    %cst_50 = arith.constant 0.000000e+00 : f32
    %148 = vector.broadcast %cst_50 : f32 to vector<1x8x32xf32>
    %149 = arith.cmpf oge, %147, %148 : vector<1x8x32xf32>
    %cst_51 = arith.constant 1.000000e-01 : f32
    %150 = vector.broadcast %cst_51 : f32 to vector<1x8x32xf32>
    %151 = arith.mulf %150, %147 : vector<1x8x32xf32>
    %152 = arith.select %149, %147, %151 : vector<1x8x32xi1>, vector<1x8x32xf32>
    %153 = arith.truncf %152 : vector<1x8x32xf32> to vector<1x8x32xbf16>
    %cst_52 = arith.constant 0.000000e+00 : bf16
    %154 = vector.broadcast %cst_52 : bf16 to vector<1x1x32xbf16>
    %155 = tpu.concatenate %154, %153, %154 in 1 : vector<1x1x32xbf16>, vector<1x8x32xbf16>, vector<1x1x32xbf16> -> vector<1x10x32xbf16>
    %cst_53 = arith.constant 0.000000e+00 : bf16
    %156 = vector.broadcast %cst_53 : bf16 to vector<1x10x32xbf16>
    %157 = tpu.concatenate %156, %155, %156 in 0 : vector<1x10x32xbf16>, vector<1x10x32xbf16>, vector<1x10x32xbf16> -> vector<3x10x32xbf16>
    %158 = vector.extract_strided_slice %157 {offsets = [0, 0, 0], sizes = [1, 8, 32], strides = [1, 1, 1]} : vector<3x10x32xbf16> to vector<1x8x32xbf16>
    %159 = vector.extract_strided_slice %157 {offsets = [0, 1, 0], sizes = [1, 8, 32], strides = [1, 1, 1]} : vector<3x10x32xbf16> to vector<1x8x32xbf16>
    %160 = vector.extract_strided_slice %157 {offsets = [0, 2, 0], sizes = [1, 8, 32], strides = [1, 1, 1]} : vector<3x10x32xbf16> to vector<1x8x32xbf16>
    %161 = vector.extract_strided_slice %157 {offsets = [1, 0, 0], sizes = [1, 8, 32], strides = [1, 1, 1]} : vector<3x10x32xbf16> to vector<1x8x32xbf16>
    %162 = vector.extract_strided_slice %157 {offsets = [1, 1, 0], sizes = [1, 8, 32], strides = [1, 1, 1]} : vector<3x10x32xbf16> to vector<1x8x32xbf16>
    %163 = vector.extract_strided_slice %157 {offsets = [1, 2, 0], sizes = [1, 8, 32], strides = [1, 1, 1]} : vector<3x10x32xbf16> to vector<1x8x32xbf16>
    %164 = vector.extract_strided_slice %157 {offsets = [2, 0, 0], sizes = [1, 8, 32], strides = [1, 1, 1]} : vector<3x10x32xbf16> to vector<1x8x32xbf16>
    %165 = vector.extract_strided_slice %157 {offsets = [2, 1, 0], sizes = [1, 8, 32], strides = [1, 1, 1]} : vector<3x10x32xbf16> to vector<1x8x32xbf16>
    %166 = vector.extract_strided_slice %157 {offsets = [2, 2, 0], sizes = [1, 8, 32], strides = [1, 1, 1]} : vector<3x10x32xbf16> to vector<1x8x32xbf16>
    %167 = tpu.concatenate %158, %159, %160, %161, %162, %163, %164, %165, %166 in 2 : vector<1x8x32xbf16>, vector<1x8x32xbf16>, vector<1x8x32xbf16>, vector<1x8x32xbf16>, vector<1x8x32xbf16>, vector<1x8x32xbf16>, vector<1x8x32xbf16>, vector<1x8x32xbf16>, vector<1x8x32xbf16> -> vector<1x8x288xbf16>
    %168 = vector.shape_cast %167 : vector<1x8x288xbf16> to vector<8x288xbf16>
    %c0_54 = arith.constant 0 : index
    %c0_55 = arith.constant 0 : index
    %169 = vector.load %arg10[%c0_54, %c0_55] : memref<288x32xbf16, #tpu.memory_space<vmem>>, vector<288x32xbf16>
    %cst_56 = arith.constant dense<0.000000e+00> : vector<8x32xf32>
    %170 = tpu.matmul %168, %169, %cst_56 {dimension_numbers = #tpu.dot_dimension_numbers<[1], [0], [0], [1], [0, 0, 1, 1], [], []>} : vector<8x288xbf16>, vector<288x32xbf16>, vector<8x32xf32> -> vector<8x32xf32>
    %c0_57 = arith.constant 0 : index
    %c0_58 = arith.constant 0 : index
    %171 = vector.load %arg11[%c0_57, %c0_58] : memref<1x32xf32, #tpu.memory_space<vmem>>, vector<1x32xf32>
    %172 = vector.broadcast %171 : vector<1x32xf32> to vector<8x32xf32>
    %173 = arith.addf %170, %172 : vector<8x32xf32>
    %c0_59 = arith.constant 0 : index
    %c0_60 = arith.constant 0 : index
    %174 = vector.load %arg32[%c0_59, %c0_60] : memref<16x8xf32, #tpu.memory_space<vmem>>, vector<16x8xf32>
    %cst_61 = arith.constant dense<0.000000e+00> : vector<16x32xf32>
    %175 = tpu.matmul %174, %173, %cst_61 {dimension_numbers = #tpu.dot_dimension_numbers<[1], [0], [0], [1], [0, 0, 1, 1], [], []>} : vector<16x8xf32>, vector<8x32xf32>, vector<16x32xf32> -> vector<16x32xf32>
    %176 = vector.shape_cast %175 : vector<16x32xf32> to vector<2x8x32xf32>
    %cst_62 = arith.constant 0.000000e+00 : f32
    %177 = vector.broadcast %cst_62 : f32 to vector<2x8x32xf32>
    %178 = arith.cmpf oge, %176, %177 : vector<2x8x32xf32>
    %cst_63 = arith.constant 1.000000e-01 : f32
    %179 = vector.broadcast %cst_63 : f32 to vector<2x8x32xf32>
    %180 = arith.mulf %179, %176 : vector<2x8x32xf32>
    %181 = arith.select %178, %176, %180 : vector<2x8x32xi1>, vector<2x8x32xf32>
    %182 = arith.truncf %181 : vector<2x8x32xf32> to vector<2x8x32xbf16>
    %cst_64 = arith.constant 0.000000e+00 : bf16
    %183 = vector.broadcast %cst_64 : bf16 to vector<2x1x32xbf16>
    %184 = tpu.concatenate %183, %182, %183 in 1 : vector<2x1x32xbf16>, vector<2x8x32xbf16>, vector<2x1x32xbf16> -> vector<2x10x32xbf16>
    %cst_65 = arith.constant 0.000000e+00 : bf16
    %185 = vector.broadcast %cst_65 : bf16 to vector<1x10x32xbf16>
    %186 = tpu.concatenate %185, %184, %185 in 0 : vector<1x10x32xbf16>, vector<2x10x32xbf16>, vector<1x10x32xbf16> -> vector<4x10x32xbf16>
    %187 = vector.extract_strided_slice %186 {offsets = [0, 0, 0], sizes = [2, 8, 32], strides = [1, 1, 1]} : vector<4x10x32xbf16> to vector<2x8x32xbf16>
    %188 = vector.extract_strided_slice %186 {offsets = [0, 1, 0], sizes = [2, 8, 32], strides = [1, 1, 1]} : vector<4x10x32xbf16> to vector<2x8x32xbf16>
    %189 = vector.extract_strided_slice %186 {offsets = [0, 2, 0], sizes = [2, 8, 32], strides = [1, 1, 1]} : vector<4x10x32xbf16> to vector<2x8x32xbf16>
    %190 = vector.extract_strided_slice %186 {offsets = [1, 0, 0], sizes = [2, 8, 32], strides = [1, 1, 1]} : vector<4x10x32xbf16> to vector<2x8x32xbf16>
    %191 = vector.extract_strided_slice %186 {offsets = [1, 1, 0], sizes = [2, 8, 32], strides = [1, 1, 1]} : vector<4x10x32xbf16> to vector<2x8x32xbf16>
    %192 = vector.extract_strided_slice %186 {offsets = [1, 2, 0], sizes = [2, 8, 32], strides = [1, 1, 1]} : vector<4x10x32xbf16> to vector<2x8x32xbf16>
    %193 = vector.extract_strided_slice %186 {offsets = [2, 0, 0], sizes = [2, 8, 32], strides = [1, 1, 1]} : vector<4x10x32xbf16> to vector<2x8x32xbf16>
    %194 = vector.extract_strided_slice %186 {offsets = [2, 1, 0], sizes = [2, 8, 32], strides = [1, 1, 1]} : vector<4x10x32xbf16> to vector<2x8x32xbf16>
    %195 = vector.extract_strided_slice %186 {offsets = [2, 2, 0], sizes = [2, 8, 32], strides = [1, 1, 1]} : vector<4x10x32xbf16> to vector<2x8x32xbf16>
    %196 = tpu.concatenate %187, %188, %189, %190, %191, %192, %193, %194, %195 in 2 : vector<2x8x32xbf16>, vector<2x8x32xbf16>, vector<2x8x32xbf16>, vector<2x8x32xbf16>, vector<2x8x32xbf16>, vector<2x8x32xbf16>, vector<2x8x32xbf16>, vector<2x8x32xbf16>, vector<2x8x32xbf16> -> vector<2x8x288xbf16>
    %197 = vector.shape_cast %196 : vector<2x8x288xbf16> to vector<16x288xbf16>
    %c0_66 = arith.constant 0 : index
    %c0_67 = arith.constant 0 : index
    %198 = vector.load %arg12[%c0_66, %c0_67] : memref<288x32xbf16, #tpu.memory_space<vmem>>, vector<288x32xbf16>
    %cst_68 = arith.constant dense<0.000000e+00> : vector<16x32xf32>
    %199 = tpu.matmul %197, %198, %cst_68 {dimension_numbers = #tpu.dot_dimension_numbers<[1], [0], [0], [1], [0, 0, 1, 1], [], []>} : vector<16x288xbf16>, vector<288x32xbf16>, vector<16x32xf32> -> vector<16x32xf32>
    %cst_69 = arith.constant 0.000000e+00 : f32
    %200 = vector.broadcast %cst_69 : f32 to vector<2x8x32xf32>
    %201 = arith.cmpf oge, %112, %200 : vector<2x8x32xf32>
    %cst_70 = arith.constant 1.000000e-01 : f32
    %202 = vector.broadcast %cst_70 : f32 to vector<2x8x32xf32>
    %203 = arith.mulf %202, %112 : vector<2x8x32xf32>
    %204 = arith.select %201, %112, %203 : vector<2x8x32xi1>, vector<2x8x32xf32>
    %205 = arith.truncf %204 : vector<2x8x32xf32> to vector<2x8x32xbf16>
    %cst_71 = arith.constant 0.000000e+00 : bf16
    %206 = vector.broadcast %cst_71 : bf16 to vector<2x1x32xbf16>
    %207 = tpu.concatenate %206, %205, %206 in 1 : vector<2x1x32xbf16>, vector<2x8x32xbf16>, vector<2x1x32xbf16> -> vector<2x10x32xbf16>
    %cst_72 = arith.constant 0.000000e+00 : bf16
    %208 = vector.broadcast %cst_72 : bf16 to vector<1x10x32xbf16>
    %209 = tpu.concatenate %208, %207, %208 in 0 : vector<1x10x32xbf16>, vector<2x10x32xbf16>, vector<1x10x32xbf16> -> vector<4x10x32xbf16>
    %210 = vector.extract_strided_slice %209 {offsets = [0, 0, 0], sizes = [2, 8, 32], strides = [1, 1, 1]} : vector<4x10x32xbf16> to vector<2x8x32xbf16>
    %211 = vector.extract_strided_slice %209 {offsets = [0, 1, 0], sizes = [2, 8, 32], strides = [1, 1, 1]} : vector<4x10x32xbf16> to vector<2x8x32xbf16>
    %212 = vector.extract_strided_slice %209 {offsets = [0, 2, 0], sizes = [2, 8, 32], strides = [1, 1, 1]} : vector<4x10x32xbf16> to vector<2x8x32xbf16>
    %213 = vector.extract_strided_slice %209 {offsets = [1, 0, 0], sizes = [2, 8, 32], strides = [1, 1, 1]} : vector<4x10x32xbf16> to vector<2x8x32xbf16>
    %214 = vector.extract_strided_slice %209 {offsets = [1, 1, 0], sizes = [2, 8, 32], strides = [1, 1, 1]} : vector<4x10x32xbf16> to vector<2x8x32xbf16>
    %215 = vector.extract_strided_slice %209 {offsets = [1, 2, 0], sizes = [2, 8, 32], strides = [1, 1, 1]} : vector<4x10x32xbf16> to vector<2x8x32xbf16>
    %216 = vector.extract_strided_slice %209 {offsets = [2, 0, 0], sizes = [2, 8, 32], strides = [1, 1, 1]} : vector<4x10x32xbf16> to vector<2x8x32xbf16>
    %217 = vector.extract_strided_slice %209 {offsets = [2, 1, 0], sizes = [2, 8, 32], strides = [1, 1, 1]} : vector<4x10x32xbf16> to vector<2x8x32xbf16>
    %218 = vector.extract_strided_slice %209 {offsets = [2, 2, 0], sizes = [2, 8, 32], strides = [1, 1, 1]} : vector<4x10x32xbf16> to vector<2x8x32xbf16>
    %219 = tpu.concatenate %210, %211, %212, %213, %214, %215, %216, %217, %218 in 2 : vector<2x8x32xbf16>, vector<2x8x32xbf16>, vector<2x8x32xbf16>, vector<2x8x32xbf16>, vector<2x8x32xbf16>, vector<2x8x32xbf16>, vector<2x8x32xbf16>, vector<2x8x32xbf16>, vector<2x8x32xbf16> -> vector<2x8x288xbf16>
    %220 = vector.shape_cast %219 : vector<2x8x288xbf16> to vector<16x288xbf16>
    %c0_73 = arith.constant 0 : index
    %c0_74 = arith.constant 0 : index
    %221 = vector.load %arg13[%c0_73, %c0_74] : memref<288x32xbf16, #tpu.memory_space<vmem>>, vector<288x32xbf16>
    %cst_75 = arith.constant dense<0.000000e+00> : vector<16x32xf32>
    %222 = tpu.matmul %220, %221, %cst_75 {dimension_numbers = #tpu.dot_dimension_numbers<[1], [0], [0], [1], [0, 0, 1, 1], [], []>} : vector<16x288xbf16>, vector<288x32xbf16>, vector<16x32xf32> -> vector<16x32xf32>
    %223 = arith.addf %199, %222 : vector<16x32xf32>
    %c0_76 = arith.constant 0 : index
    %c0_77 = arith.constant 0 : index
    %224 = vector.load %arg14[%c0_76, %c0_77] : memref<1x32xf32, #tpu.memory_space<vmem>>, vector<1x32xf32>
    %225 = vector.broadcast %224 : vector<1x32xf32> to vector<16x32xf32>
    %226 = arith.addf %223, %225 : vector<16x32xf32>
    %c0_78 = arith.constant 0 : index
    %c0_79 = arith.constant 0 : index
    %227 = vector.load %arg33[%c0_78, %c0_79] : memref<32x16xf32, #tpu.memory_space<vmem>>, vector<32x16xf32>
    %cst_80 = arith.constant dense<0.000000e+00> : vector<32x32xf32>
    %228 = tpu.matmul %227, %226, %cst_80 {dimension_numbers = #tpu.dot_dimension_numbers<[1], [0], [0], [1], [0, 0, 1, 1], [], []>} : vector<32x16xf32>, vector<16x32xf32>, vector<32x32xf32> -> vector<32x32xf32>
    %229 = vector.shape_cast %228 : vector<32x32xf32> to vector<4x8x32xf32>
    %cst_81 = arith.constant 0.000000e+00 : f32
    %230 = vector.broadcast %cst_81 : f32 to vector<4x8x32xf32>
    %231 = arith.cmpf oge, %229, %230 : vector<4x8x32xf32>
    %cst_82 = arith.constant 1.000000e-01 : f32
    %232 = vector.broadcast %cst_82 : f32 to vector<4x8x32xf32>
    %233 = arith.mulf %232, %229 : vector<4x8x32xf32>
    %234 = arith.select %231, %229, %233 : vector<4x8x32xi1>, vector<4x8x32xf32>
    %235 = arith.truncf %234 : vector<4x8x32xf32> to vector<4x8x32xbf16>
    %cst_83 = arith.constant 0.000000e+00 : bf16
    %236 = vector.broadcast %cst_83 : bf16 to vector<4x1x32xbf16>
    %237 = tpu.concatenate %236, %235, %236 in 1 : vector<4x1x32xbf16>, vector<4x8x32xbf16>, vector<4x1x32xbf16> -> vector<4x10x32xbf16>
    %cst_84 = arith.constant 0.000000e+00 : bf16
    %238 = vector.broadcast %cst_84 : bf16 to vector<1x10x32xbf16>
    %239 = tpu.concatenate %238, %237, %238 in 0 : vector<1x10x32xbf16>, vector<4x10x32xbf16>, vector<1x10x32xbf16> -> vector<6x10x32xbf16>
    %240 = vector.extract_strided_slice %239 {offsets = [0, 0, 0], sizes = [4, 8, 32], strides = [1, 1, 1]} : vector<6x10x32xbf16> to vector<4x8x32xbf16>
    %241 = vector.extract_strided_slice %239 {offsets = [0, 1, 0], sizes = [4, 8, 32], strides = [1, 1, 1]} : vector<6x10x32xbf16> to vector<4x8x32xbf16>
    %242 = vector.extract_strided_slice %239 {offsets = [0, 2, 0], sizes = [4, 8, 32], strides = [1, 1, 1]} : vector<6x10x32xbf16> to vector<4x8x32xbf16>
    %243 = vector.extract_strided_slice %239 {offsets = [1, 0, 0], sizes = [4, 8, 32], strides = [1, 1, 1]} : vector<6x10x32xbf16> to vector<4x8x32xbf16>
    %244 = vector.extract_strided_slice %239 {offsets = [1, 1, 0], sizes = [4, 8, 32], strides = [1, 1, 1]} : vector<6x10x32xbf16> to vector<4x8x32xbf16>
    %245 = vector.extract_strided_slice %239 {offsets = [1, 2, 0], sizes = [4, 8, 32], strides = [1, 1, 1]} : vector<6x10x32xbf16> to vector<4x8x32xbf16>
    %246 = vector.extract_strided_slice %239 {offsets = [2, 0, 0], sizes = [4, 8, 32], strides = [1, 1, 1]} : vector<6x10x32xbf16> to vector<4x8x32xbf16>
    %247 = vector.extract_strided_slice %239 {offsets = [2, 1, 0], sizes = [4, 8, 32], strides = [1, 1, 1]} : vector<6x10x32xbf16> to vector<4x8x32xbf16>
    %248 = vector.extract_strided_slice %239 {offsets = [2, 2, 0], sizes = [4, 8, 32], strides = [1, 1, 1]} : vector<6x10x32xbf16> to vector<4x8x32xbf16>
    %249 = tpu.concatenate %240, %241, %242, %243, %244, %245, %246, %247, %248 in 2 : vector<4x8x32xbf16>, vector<4x8x32xbf16>, vector<4x8x32xbf16>, vector<4x8x32xbf16>, vector<4x8x32xbf16>, vector<4x8x32xbf16>, vector<4x8x32xbf16>, vector<4x8x32xbf16>, vector<4x8x32xbf16> -> vector<4x8x288xbf16>
    %250 = vector.shape_cast %249 : vector<4x8x288xbf16> to vector<32x288xbf16>
    %c0_85 = arith.constant 0 : index
    %c0_86 = arith.constant 0 : index
    %251 = vector.load %arg15[%c0_85, %c0_86] : memref<288x32xbf16, #tpu.memory_space<vmem>>, vector<288x32xbf16>
    %cst_87 = arith.constant dense<0.000000e+00> : vector<32x32xf32>
    %252 = tpu.matmul %250, %251, %cst_87 {dimension_numbers = #tpu.dot_dimension_numbers<[1], [0], [0], [1], [0, 0, 1, 1], [], []>} : vector<32x288xbf16>, vector<288x32xbf16>, vector<32x32xf32> -> vector<32x32xf32>
    %cst_88 = arith.constant 0.000000e+00 : f32
    %253 = vector.broadcast %cst_88 : f32 to vector<4x8x32xf32>
    %254 = arith.cmpf oge, %75, %253 : vector<4x8x32xf32>
    %cst_89 = arith.constant 1.000000e-01 : f32
    %255 = vector.broadcast %cst_89 : f32 to vector<4x8x32xf32>
    %256 = arith.mulf %255, %75 : vector<4x8x32xf32>
    %257 = arith.select %254, %75, %256 : vector<4x8x32xi1>, vector<4x8x32xf32>
    %258 = arith.truncf %257 : vector<4x8x32xf32> to vector<4x8x32xbf16>
    %cst_90 = arith.constant 0.000000e+00 : bf16
    %259 = vector.broadcast %cst_90 : bf16 to vector<4x1x32xbf16>
    %260 = tpu.concatenate %259, %258, %259 in 1 : vector<4x1x32xbf16>, vector<4x8x32xbf16>, vector<4x1x32xbf16> -> vector<4x10x32xbf16>
    %cst_91 = arith.constant 0.000000e+00 : bf16
    %261 = vector.broadcast %cst_91 : bf16 to vector<1x10x32xbf16>
    %262 = tpu.concatenate %261, %260, %261 in 0 : vector<1x10x32xbf16>, vector<4x10x32xbf16>, vector<1x10x32xbf16> -> vector<6x10x32xbf16>
    %263 = vector.extract_strided_slice %262 {offsets = [0, 0, 0], sizes = [4, 8, 32], strides = [1, 1, 1]} : vector<6x10x32xbf16> to vector<4x8x32xbf16>
    %264 = vector.extract_strided_slice %262 {offsets = [0, 1, 0], sizes = [4, 8, 32], strides = [1, 1, 1]} : vector<6x10x32xbf16> to vector<4x8x32xbf16>
    %265 = vector.extract_strided_slice %262 {offsets = [0, 2, 0], sizes = [4, 8, 32], strides = [1, 1, 1]} : vector<6x10x32xbf16> to vector<4x8x32xbf16>
    %266 = vector.extract_strided_slice %262 {offsets = [1, 0, 0], sizes = [4, 8, 32], strides = [1, 1, 1]} : vector<6x10x32xbf16> to vector<4x8x32xbf16>
    %267 = vector.extract_strided_slice %262 {offsets = [1, 1, 0], sizes = [4, 8, 32], strides = [1, 1, 1]} : vector<6x10x32xbf16> to vector<4x8x32xbf16>
    %268 = vector.extract_strided_slice %262 {offsets = [1, 2, 0], sizes = [4, 8, 32], strides = [1, 1, 1]} : vector<6x10x32xbf16> to vector<4x8x32xbf16>
    %269 = vector.extract_strided_slice %262 {offsets = [2, 0, 0], sizes = [4, 8, 32], strides = [1, 1, 1]} : vector<6x10x32xbf16> to vector<4x8x32xbf16>
    %270 = vector.extract_strided_slice %262 {offsets = [2, 1, 0], sizes = [4, 8, 32], strides = [1, 1, 1]} : vector<6x10x32xbf16> to vector<4x8x32xbf16>
    %271 = vector.extract_strided_slice %262 {offsets = [2, 2, 0], sizes = [4, 8, 32], strides = [1, 1, 1]} : vector<6x10x32xbf16> to vector<4x8x32xbf16>
    %272 = tpu.concatenate %263, %264, %265, %266, %267, %268, %269, %270, %271 in 2 : vector<4x8x32xbf16>, vector<4x8x32xbf16>, vector<4x8x32xbf16>, vector<4x8x32xbf16>, vector<4x8x32xbf16>, vector<4x8x32xbf16>, vector<4x8x32xbf16>, vector<4x8x32xbf16>, vector<4x8x32xbf16> -> vector<4x8x288xbf16>
    %273 = vector.shape_cast %272 : vector<4x8x288xbf16> to vector<32x288xbf16>
    %c0_92 = arith.constant 0 : index
    %c0_93 = arith.constant 0 : index
    %274 = vector.load %arg16[%c0_92, %c0_93] : memref<288x32xbf16, #tpu.memory_space<vmem>>, vector<288x32xbf16>
    %cst_94 = arith.constant dense<0.000000e+00> : vector<32x32xf32>
    %275 = tpu.matmul %273, %274, %cst_94 {dimension_numbers = #tpu.dot_dimension_numbers<[1], [0], [0], [1], [0, 0, 1, 1], [], []>} : vector<32x288xbf16>, vector<288x32xbf16>, vector<32x32xf32> -> vector<32x32xf32>
    %276 = arith.addf %252, %275 : vector<32x32xf32>
    %c0_95 = arith.constant 0 : index
    %c0_96 = arith.constant 0 : index
    %277 = vector.load %arg17[%c0_95, %c0_96] : memref<1x32xf32, #tpu.memory_space<vmem>>, vector<1x32xf32>
    %278 = vector.broadcast %277 : vector<1x32xf32> to vector<32x32xf32>
    %279 = arith.addf %276, %278 : vector<32x32xf32>
    %c0_97 = arith.constant 0 : index
    %c0_98 = arith.constant 0 : index
    %280 = vector.load %arg34[%c0_97, %c0_98] : memref<64x32xf32, #tpu.memory_space<vmem>>, vector<64x32xf32>
    %cst_99 = arith.constant dense<0.000000e+00> : vector<64x32xf32>
    %281 = tpu.matmul %280, %279, %cst_99 {dimension_numbers = #tpu.dot_dimension_numbers<[1], [0], [0], [1], [0, 0, 1, 1], [], []>} : vector<64x32xf32>, vector<32x32xf32>, vector<64x32xf32> -> vector<64x32xf32>
    %282 = vector.shape_cast %281 : vector<64x32xf32> to vector<8x8x32xf32>
    %cst_100 = arith.constant 0.000000e+00 : f32
    %283 = vector.broadcast %cst_100 : f32 to vector<8x8x32xf32>
    %284 = arith.cmpf oge, %282, %283 : vector<8x8x32xf32>
    %cst_101 = arith.constant 1.000000e-01 : f32
    %285 = vector.broadcast %cst_101 : f32 to vector<8x8x32xf32>
    %286 = arith.mulf %285, %282 : vector<8x8x32xf32>
    %287 = arith.select %284, %282, %286 : vector<8x8x32xi1>, vector<8x8x32xf32>
    %288 = arith.truncf %287 : vector<8x8x32xf32> to vector<8x8x32xbf16>
    %cst_102 = arith.constant 0.000000e+00 : bf16
    %289 = vector.broadcast %cst_102 : bf16 to vector<8x1x32xbf16>
    %290 = tpu.concatenate %289, %288, %289 in 1 : vector<8x1x32xbf16>, vector<8x8x32xbf16>, vector<8x1x32xbf16> -> vector<8x10x32xbf16>
    %cst_103 = arith.constant 0.000000e+00 : bf16
    %291 = vector.broadcast %cst_103 : bf16 to vector<1x10x32xbf16>
    %292 = tpu.concatenate %291, %290, %291 in 0 : vector<1x10x32xbf16>, vector<8x10x32xbf16>, vector<1x10x32xbf16> -> vector<10x10x32xbf16>
    %293 = vector.extract_strided_slice %292 {offsets = [0, 0, 0], sizes = [8, 8, 32], strides = [1, 1, 1]} : vector<10x10x32xbf16> to vector<8x8x32xbf16>
    %294 = vector.extract_strided_slice %292 {offsets = [0, 1, 0], sizes = [8, 8, 32], strides = [1, 1, 1]} : vector<10x10x32xbf16> to vector<8x8x32xbf16>
    %295 = vector.extract_strided_slice %292 {offsets = [0, 2, 0], sizes = [8, 8, 32], strides = [1, 1, 1]} : vector<10x10x32xbf16> to vector<8x8x32xbf16>
    %296 = vector.extract_strided_slice %292 {offsets = [1, 0, 0], sizes = [8, 8, 32], strides = [1, 1, 1]} : vector<10x10x32xbf16> to vector<8x8x32xbf16>
    %297 = vector.extract_strided_slice %292 {offsets = [1, 1, 0], sizes = [8, 8, 32], strides = [1, 1, 1]} : vector<10x10x32xbf16> to vector<8x8x32xbf16>
    %298 = vector.extract_strided_slice %292 {offsets = [1, 2, 0], sizes = [8, 8, 32], strides = [1, 1, 1]} : vector<10x10x32xbf16> to vector<8x8x32xbf16>
    %299 = vector.extract_strided_slice %292 {offsets = [2, 0, 0], sizes = [8, 8, 32], strides = [1, 1, 1]} : vector<10x10x32xbf16> to vector<8x8x32xbf16>
    %300 = vector.extract_strided_slice %292 {offsets = [2, 1, 0], sizes = [8, 8, 32], strides = [1, 1, 1]} : vector<10x10x32xbf16> to vector<8x8x32xbf16>
    %301 = vector.extract_strided_slice %292 {offsets = [2, 2, 0], sizes = [8, 8, 32], strides = [1, 1, 1]} : vector<10x10x32xbf16> to vector<8x8x32xbf16>
    %302 = tpu.concatenate %293, %294, %295, %296, %297, %298, %299, %300, %301 in 2 : vector<8x8x32xbf16>, vector<8x8x32xbf16>, vector<8x8x32xbf16>, vector<8x8x32xbf16>, vector<8x8x32xbf16>, vector<8x8x32xbf16>, vector<8x8x32xbf16>, vector<8x8x32xbf16>, vector<8x8x32xbf16> -> vector<8x8x288xbf16>
    %303 = vector.shape_cast %302 : vector<8x8x288xbf16> to vector<64x288xbf16>
    %c0_104 = arith.constant 0 : index
    %c0_105 = arith.constant 0 : index
    %304 = vector.load %arg18[%c0_104, %c0_105] : memref<288x32xbf16, #tpu.memory_space<vmem>>, vector<288x32xbf16>
    %cst_106 = arith.constant dense<0.000000e+00> : vector<64x32xf32>
    %305 = tpu.matmul %303, %304, %cst_106 {dimension_numbers = #tpu.dot_dimension_numbers<[1], [0], [0], [1], [0, 0, 1, 1], [], []>} : vector<64x288xbf16>, vector<288x32xbf16>, vector<64x32xf32> -> vector<64x32xf32>
    %cst_107 = arith.constant 0.000000e+00 : f32
    %306 = vector.broadcast %cst_107 : f32 to vector<8x8x16xf32>
    %307 = arith.cmpf oge, %38, %306 : vector<8x8x16xf32>
    %cst_108 = arith.constant 1.000000e-01 : f32
    %308 = vector.broadcast %cst_108 : f32 to vector<8x8x16xf32>
    %309 = arith.mulf %308, %38 : vector<8x8x16xf32>
    %310 = arith.select %307, %38, %309 : vector<8x8x16xi1>, vector<8x8x16xf32>
    %311 = arith.truncf %310 : vector<8x8x16xf32> to vector<8x8x16xbf16>
    %cst_109 = arith.constant 0.000000e+00 : bf16
    %312 = vector.broadcast %cst_109 : bf16 to vector<8x1x16xbf16>
    %313 = tpu.concatenate %312, %311, %312 in 1 : vector<8x1x16xbf16>, vector<8x8x16xbf16>, vector<8x1x16xbf16> -> vector<8x10x16xbf16>
    %cst_110 = arith.constant 0.000000e+00 : bf16
    %314 = vector.broadcast %cst_110 : bf16 to vector<1x10x16xbf16>
    %315 = tpu.concatenate %314, %313, %314 in 0 : vector<1x10x16xbf16>, vector<8x10x16xbf16>, vector<1x10x16xbf16> -> vector<10x10x16xbf16>
    %316 = vector.extract_strided_slice %315 {offsets = [0, 0, 0], sizes = [8, 8, 16], strides = [1, 1, 1]} : vector<10x10x16xbf16> to vector<8x8x16xbf16>
    %317 = vector.extract_strided_slice %315 {offsets = [0, 1, 0], sizes = [8, 8, 16], strides = [1, 1, 1]} : vector<10x10x16xbf16> to vector<8x8x16xbf16>
    %318 = vector.extract_strided_slice %315 {offsets = [0, 2, 0], sizes = [8, 8, 16], strides = [1, 1, 1]} : vector<10x10x16xbf16> to vector<8x8x16xbf16>
    %319 = vector.extract_strided_slice %315 {offsets = [1, 0, 0], sizes = [8, 8, 16], strides = [1, 1, 1]} : vector<10x10x16xbf16> to vector<8x8x16xbf16>
    %320 = vector.extract_strided_slice %315 {offsets = [1, 1, 0], sizes = [8, 8, 16], strides = [1, 1, 1]} : vector<10x10x16xbf16> to vector<8x8x16xbf16>
    %321 = vector.extract_strided_slice %315 {offsets = [1, 2, 0], sizes = [8, 8, 16], strides = [1, 1, 1]} : vector<10x10x16xbf16> to vector<8x8x16xbf16>
    %322 = vector.extract_strided_slice %315 {offsets = [2, 0, 0], sizes = [8, 8, 16], strides = [1, 1, 1]} : vector<10x10x16xbf16> to vector<8x8x16xbf16>
    %323 = vector.extract_strided_slice %315 {offsets = [2, 1, 0], sizes = [8, 8, 16], strides = [1, 1, 1]} : vector<10x10x16xbf16> to vector<8x8x16xbf16>
    %324 = vector.extract_strided_slice %315 {offsets = [2, 2, 0], sizes = [8, 8, 16], strides = [1, 1, 1]} : vector<10x10x16xbf16> to vector<8x8x16xbf16>
    %325 = tpu.concatenate %316, %317, %318, %319, %320, %321, %322, %323, %324 in 2 : vector<8x8x16xbf16>, vector<8x8x16xbf16>, vector<8x8x16xbf16>, vector<8x8x16xbf16>, vector<8x8x16xbf16>, vector<8x8x16xbf16>, vector<8x8x16xbf16>, vector<8x8x16xbf16>, vector<8x8x16xbf16> -> vector<8x8x144xbf16>
    %326 = vector.shape_cast %325 : vector<8x8x144xbf16> to vector<64x144xbf16>
    %c0_111 = arith.constant 0 : index
    %c0_112 = arith.constant 0 : index
    %327 = vector.load %arg19[%c0_111, %c0_112] : memref<144x32xbf16, #tpu.memory_space<vmem>>, vector<144x32xbf16>
    %cst_113 = arith.constant dense<0.000000e+00> : vector<64x32xf32>
    %328 = tpu.matmul %326, %327, %cst_113 {dimension_numbers = #tpu.dot_dimension_numbers<[1], [0], [0], [1], [0, 0, 1, 1], [], []>} : vector<64x144xbf16>, vector<144x32xbf16>, vector<64x32xf32> -> vector<64x32xf32>
    %329 = arith.addf %305, %328 : vector<64x32xf32>
    %c0_114 = arith.constant 0 : index
    %c0_115 = arith.constant 0 : index
    %330 = vector.load %arg20[%c0_114, %c0_115] : memref<1x32xf32, #tpu.memory_space<vmem>>, vector<1x32xf32>
    %331 = vector.broadcast %330 : vector<1x32xf32> to vector<64x32xf32>
    %332 = arith.addf %329, %331 : vector<64x32xf32>
    %c0_116 = arith.constant 0 : index
    %c0_117 = arith.constant 0 : index
    %333 = vector.load %arg35[%c0_116, %c0_117] : memref<256x64xf32, #tpu.memory_space<vmem>>, vector<256x64xf32>
    %cst_118 = arith.constant dense<0.000000e+00> : vector<256x32xf32>
    %334 = tpu.matmul %333, %332, %cst_118 {dimension_numbers = #tpu.dot_dimension_numbers<[1], [0], [0], [1], [0, 0, 1, 1], [], []>} : vector<256x64xf32>, vector<64x32xf32>, vector<256x32xf32> -> vector<256x32xf32>
    %335 = vector.shape_cast %334 : vector<256x32xf32> to vector<16x16x32xf32>
    %cst_119 = arith.constant 0.000000e+00 : f32
    %336 = vector.broadcast %cst_119 : f32 to vector<16x16x32xf32>
    %337 = arith.cmpf oge, %335, %336 : vector<16x16x32xf32>
    %cst_120 = arith.constant 1.000000e-01 : f32
    %338 = vector.broadcast %cst_120 : f32 to vector<16x16x32xf32>
    %339 = arith.mulf %338, %335 : vector<16x16x32xf32>
    %340 = arith.select %337, %335, %339 : vector<16x16x32xi1>, vector<16x16x32xf32>
    %341 = arith.truncf %340 : vector<16x16x32xf32> to vector<16x16x32xbf16>
    %cst_121 = arith.constant 0.000000e+00 : bf16
    %342 = vector.broadcast %cst_121 : bf16 to vector<16x1x32xbf16>
    %343 = tpu.concatenate %342, %341, %342 in 1 : vector<16x1x32xbf16>, vector<16x16x32xbf16>, vector<16x1x32xbf16> -> vector<16x18x32xbf16>
    %cst_122 = arith.constant 0.000000e+00 : bf16
    %344 = vector.broadcast %cst_122 : bf16 to vector<1x18x32xbf16>
    %345 = tpu.concatenate %344, %343, %344 in 0 : vector<1x18x32xbf16>, vector<16x18x32xbf16>, vector<1x18x32xbf16> -> vector<18x18x32xbf16>
    %346 = vector.extract_strided_slice %345 {offsets = [0, 0, 0], sizes = [16, 16, 32], strides = [1, 1, 1]} : vector<18x18x32xbf16> to vector<16x16x32xbf16>
    %347 = vector.extract_strided_slice %345 {offsets = [0, 1, 0], sizes = [16, 16, 32], strides = [1, 1, 1]} : vector<18x18x32xbf16> to vector<16x16x32xbf16>
    %348 = vector.extract_strided_slice %345 {offsets = [0, 2, 0], sizes = [16, 16, 32], strides = [1, 1, 1]} : vector<18x18x32xbf16> to vector<16x16x32xbf16>
    %349 = vector.extract_strided_slice %345 {offsets = [1, 0, 0], sizes = [16, 16, 32], strides = [1, 1, 1]} : vector<18x18x32xbf16> to vector<16x16x32xbf16>
    %350 = vector.extract_strided_slice %345 {offsets = [1, 1, 0], sizes = [16, 16, 32], strides = [1, 1, 1]} : vector<18x18x32xbf16> to vector<16x16x32xbf16>
    %351 = vector.extract_strided_slice %345 {offsets = [1, 2, 0], sizes = [16, 16, 32], strides = [1, 1, 1]} : vector<18x18x32xbf16> to vector<16x16x32xbf16>
    %352 = vector.extract_strided_slice %345 {offsets = [2, 0, 0], sizes = [16, 16, 32], strides = [1, 1, 1]} : vector<18x18x32xbf16> to vector<16x16x32xbf16>
    %353 = vector.extract_strided_slice %345 {offsets = [2, 1, 0], sizes = [16, 16, 32], strides = [1, 1, 1]} : vector<18x18x32xbf16> to vector<16x16x32xbf16>
    %354 = vector.extract_strided_slice %345 {offsets = [2, 2, 0], sizes = [16, 16, 32], strides = [1, 1, 1]} : vector<18x18x32xbf16> to vector<16x16x32xbf16>
    %355 = tpu.concatenate %346, %347, %348, %349, %350, %351, %352, %353, %354 in 2 : vector<16x16x32xbf16>, vector<16x16x32xbf16>, vector<16x16x32xbf16>, vector<16x16x32xbf16>, vector<16x16x32xbf16>, vector<16x16x32xbf16>, vector<16x16x32xbf16>, vector<16x16x32xbf16>, vector<16x16x32xbf16> -> vector<16x16x288xbf16>
    %356 = vector.shape_cast %355 : vector<16x16x288xbf16> to vector<256x288xbf16>
    %c0_123 = arith.constant 0 : index
    %c0_124 = arith.constant 0 : index
    %357 = vector.load %arg21[%c0_123, %c0_124] : memref<288x16xbf16, #tpu.memory_space<vmem>>, vector<288x16xbf16>
    %cst_125 = arith.constant dense<0.000000e+00> : vector<256x16xf32>
    %358 = tpu.matmul %356, %357, %cst_125 {dimension_numbers = #tpu.dot_dimension_numbers<[1], [0], [0], [1], [0, 0, 1, 1], [], []>} : vector<256x288xbf16>, vector<288x16xbf16>, vector<256x16xf32> -> vector<256x16xf32>
    %cst_126 = arith.constant 0.000000e+00 : f32
    %359 = vector.broadcast %cst_126 : f32 to vector<16x16x2xf32>
    %360 = arith.cmpf oge, %1, %359 : vector<16x16x2xf32>
    %cst_127 = arith.constant 1.000000e-01 : f32
    %361 = vector.broadcast %cst_127 : f32 to vector<16x16x2xf32>
    %362 = arith.mulf %361, %1 : vector<16x16x2xf32>
    %363 = arith.select %360, %1, %362 : vector<16x16x2xi1>, vector<16x16x2xf32>
    %364 = arith.truncf %363 : vector<16x16x2xf32> to vector<16x16x2xbf16>
    %cst_128 = arith.constant 0.000000e+00 : bf16
    %365 = vector.broadcast %cst_128 : bf16 to vector<16x1x2xbf16>
    %366 = tpu.concatenate %365, %364, %365 in 1 : vector<16x1x2xbf16>, vector<16x16x2xbf16>, vector<16x1x2xbf16> -> vector<16x18x2xbf16>
    %cst_129 = arith.constant 0.000000e+00 : bf16
    %367 = vector.broadcast %cst_129 : bf16 to vector<1x18x2xbf16>
    %368 = tpu.concatenate %367, %366, %367 in 0 : vector<1x18x2xbf16>, vector<16x18x2xbf16>, vector<1x18x2xbf16> -> vector<18x18x2xbf16>
    %369 = vector.extract_strided_slice %368 {offsets = [0, 0, 0], sizes = [16, 16, 2], strides = [1, 1, 1]} : vector<18x18x2xbf16> to vector<16x16x2xbf16>
    %370 = vector.extract_strided_slice %368 {offsets = [0, 1, 0], sizes = [16, 16, 2], strides = [1, 1, 1]} : vector<18x18x2xbf16> to vector<16x16x2xbf16>
    %371 = vector.extract_strided_slice %368 {offsets = [0, 2, 0], sizes = [16, 16, 2], strides = [1, 1, 1]} : vector<18x18x2xbf16> to vector<16x16x2xbf16>
    %372 = vector.extract_strided_slice %368 {offsets = [1, 0, 0], sizes = [16, 16, 2], strides = [1, 1, 1]} : vector<18x18x2xbf16> to vector<16x16x2xbf16>
    %373 = vector.extract_strided_slice %368 {offsets = [1, 1, 0], sizes = [16, 16, 2], strides = [1, 1, 1]} : vector<18x18x2xbf16> to vector<16x16x2xbf16>
    %374 = vector.extract_strided_slice %368 {offsets = [1, 2, 0], sizes = [16, 16, 2], strides = [1, 1, 1]} : vector<18x18x2xbf16> to vector<16x16x2xbf16>
    %375 = vector.extract_strided_slice %368 {offsets = [2, 0, 0], sizes = [16, 16, 2], strides = [1, 1, 1]} : vector<18x18x2xbf16> to vector<16x16x2xbf16>
    %376 = vector.extract_strided_slice %368 {offsets = [2, 1, 0], sizes = [16, 16, 2], strides = [1, 1, 1]} : vector<18x18x2xbf16> to vector<16x16x2xbf16>
    %377 = vector.extract_strided_slice %368 {offsets = [2, 2, 0], sizes = [16, 16, 2], strides = [1, 1, 1]} : vector<18x18x2xbf16> to vector<16x16x2xbf16>
    %378 = tpu.concatenate %369, %370, %371, %372, %373, %374, %375, %376, %377 in 2 : vector<16x16x2xbf16>, vector<16x16x2xbf16>, vector<16x16x2xbf16>, vector<16x16x2xbf16>, vector<16x16x2xbf16>, vector<16x16x2xbf16>, vector<16x16x2xbf16>, vector<16x16x2xbf16>, vector<16x16x2xbf16> -> vector<16x16x18xbf16>
    %379 = vector.shape_cast %378 : vector<16x16x18xbf16> to vector<256x18xbf16>
    %c0_130 = arith.constant 0 : index
    %c0_131 = arith.constant 0 : index
    %380 = vector.load %arg22[%c0_130, %c0_131] : memref<18x16xbf16, #tpu.memory_space<vmem>>, vector<18x16xbf16>
    %cst_132 = arith.constant dense<0.000000e+00> : vector<256x16xf32>
    %381 = tpu.matmul %379, %380, %cst_132 {dimension_numbers = #tpu.dot_dimension_numbers<[1], [0], [0], [1], [0, 0, 1, 1], [], []>} : vector<256x18xbf16>, vector<18x16xbf16>, vector<256x16xf32> -> vector<256x16xf32>
    %382 = arith.addf %358, %381 : vector<256x16xf32>
    %c0_133 = arith.constant 0 : index
    %c0_134 = arith.constant 0 : index
    %383 = vector.load %arg23[%c0_133, %c0_134] : memref<1x16xf32, #tpu.memory_space<vmem>>, vector<1x16xf32>
    %384 = vector.broadcast %383 : vector<1x16xf32> to vector<256x16xf32>
    %385 = arith.addf %382, %384 : vector<256x16xf32>
    %386 = vector.shape_cast %385 : vector<256x16xf32> to vector<16x16x16xf32>
    %cst_135 = arith.constant 0.000000e+00 : f32
    %387 = vector.broadcast %cst_135 : f32 to vector<16x16x16xf32>
    %388 = arith.cmpf oge, %386, %387 : vector<16x16x16xf32>
    %cst_136 = arith.constant 1.000000e-01 : f32
    %389 = vector.broadcast %cst_136 : f32 to vector<16x16x16xf32>
    %390 = arith.mulf %389, %386 : vector<16x16x16xf32>
    %391 = arith.select %388, %386, %390 : vector<16x16x16xi1>, vector<16x16x16xf32>
    %392 = arith.truncf %391 : vector<16x16x16xf32> to vector<16x16x16xbf16>
    %cst_137 = arith.constant 0.000000e+00 : bf16
    %393 = vector.broadcast %cst_137 : bf16 to vector<16x1x16xbf16>
    %394 = tpu.concatenate %393, %392, %393 in 1 : vector<16x1x16xbf16>, vector<16x16x16xbf16>, vector<16x1x16xbf16> -> vector<16x18x16xbf16>
    %cst_138 = arith.constant 0.000000e+00 : bf16
    %395 = vector.broadcast %cst_138 : bf16 to vector<1x18x16xbf16>
    %396 = tpu.concatenate %395, %394, %395 in 0 : vector<1x18x16xbf16>, vector<16x18x16xbf16>, vector<1x18x16xbf16> -> vector<18x18x16xbf16>
    %397 = vector.extract_strided_slice %396 {offsets = [0, 0, 0], sizes = [16, 16, 16], strides = [1, 1, 1]} : vector<18x18x16xbf16> to vector<16x16x16xbf16>
    %398 = vector.extract_strided_slice %396 {offsets = [0, 1, 0], sizes = [16, 16, 16], strides = [1, 1, 1]} : vector<18x18x16xbf16> to vector<16x16x16xbf16>
    %399 = vector.extract_strided_slice %396 {offsets = [0, 2, 0], sizes = [16, 16, 16], strides = [1, 1, 1]} : vector<18x18x16xbf16> to vector<16x16x16xbf16>
    %400 = vector.extract_strided_slice %396 {offsets = [1, 0, 0], sizes = [16, 16, 16], strides = [1, 1, 1]} : vector<18x18x16xbf16> to vector<16x16x16xbf16>
    %401 = vector.extract_strided_slice %396 {offsets = [1, 1, 0], sizes = [16, 16, 16], strides = [1, 1, 1]} : vector<18x18x16xbf16> to vector<16x16x16xbf16>
    %402 = vector.extract_strided_slice %396 {offsets = [1, 2, 0], sizes = [16, 16, 16], strides = [1, 1, 1]} : vector<18x18x16xbf16> to vector<16x16x16xbf16>
    %403 = vector.extract_strided_slice %396 {offsets = [2, 0, 0], sizes = [16, 16, 16], strides = [1, 1, 1]} : vector<18x18x16xbf16> to vector<16x16x16xbf16>
    %404 = vector.extract_strided_slice %396 {offsets = [2, 1, 0], sizes = [16, 16, 16], strides = [1, 1, 1]} : vector<18x18x16xbf16> to vector<16x16x16xbf16>
    %405 = vector.extract_strided_slice %396 {offsets = [2, 2, 0], sizes = [16, 16, 16], strides = [1, 1, 1]} : vector<18x18x16xbf16> to vector<16x16x16xbf16>
    %406 = tpu.concatenate %397, %398, %399, %400, %401, %402, %403, %404, %405 in 2 : vector<16x16x16xbf16>, vector<16x16x16xbf16>, vector<16x16x16xbf16>, vector<16x16x16xbf16>, vector<16x16x16xbf16>, vector<16x16x16xbf16>, vector<16x16x16xbf16>, vector<16x16x16xbf16>, vector<16x16x16xbf16> -> vector<16x16x144xbf16>
    %407 = vector.shape_cast %406 : vector<16x16x144xbf16> to vector<256x144xbf16>
    %c0_139 = arith.constant 0 : index
    %c0_140 = arith.constant 0 : index
    %408 = vector.load %arg24[%c0_139, %c0_140] : memref<144x16xbf16, #tpu.memory_space<vmem>>, vector<144x16xbf16>
    %cst_141 = arith.constant dense<0.000000e+00> : vector<256x16xf32>
    %409 = tpu.matmul %407, %408, %cst_141 {dimension_numbers = #tpu.dot_dimension_numbers<[1], [0], [0], [1], [0, 0, 1, 1], [], []>} : vector<256x144xbf16>, vector<144x16xbf16>, vector<256x16xf32> -> vector<256x16xf32>
    %c0_142 = arith.constant 0 : index
    %c0_143 = arith.constant 0 : index
    %410 = vector.load %arg25[%c0_142, %c0_143] : memref<1x16xf32, #tpu.memory_space<vmem>>, vector<1x16xf32>
    %411 = vector.broadcast %410 : vector<1x16xf32> to vector<256x16xf32>
    %412 = arith.addf %409, %411 : vector<256x16xf32>
    %413 = vector.shape_cast %412 : vector<256x16xf32> to vector<16x16x16xf32>
    %414 = arith.truncf %413 : vector<16x16x16xf32> to vector<16x16x16xbf16>
    %cst_144 = arith.constant 0.000000e+00 : bf16
    %415 = vector.broadcast %cst_144 : bf16 to vector<16x1x16xbf16>
    %416 = tpu.concatenate %415, %414, %415 in 1 : vector<16x1x16xbf16>, vector<16x16x16xbf16>, vector<16x1x16xbf16> -> vector<16x18x16xbf16>
    %cst_145 = arith.constant 0.000000e+00 : bf16
    %417 = vector.broadcast %cst_145 : bf16 to vector<1x18x16xbf16>
    %418 = tpu.concatenate %417, %416, %417 in 0 : vector<1x18x16xbf16>, vector<16x18x16xbf16>, vector<1x18x16xbf16> -> vector<18x18x16xbf16>
    %419 = vector.extract_strided_slice %418 {offsets = [0, 0, 0], sizes = [16, 16, 16], strides = [1, 1, 1]} : vector<18x18x16xbf16> to vector<16x16x16xbf16>
    %420 = vector.extract_strided_slice %418 {offsets = [0, 1, 0], sizes = [16, 16, 16], strides = [1, 1, 1]} : vector<18x18x16xbf16> to vector<16x16x16xbf16>
    %421 = vector.extract_strided_slice %418 {offsets = [0, 2, 0], sizes = [16, 16, 16], strides = [1, 1, 1]} : vector<18x18x16xbf16> to vector<16x16x16xbf16>
    %422 = vector.extract_strided_slice %418 {offsets = [1, 0, 0], sizes = [16, 16, 16], strides = [1, 1, 1]} : vector<18x18x16xbf16> to vector<16x16x16xbf16>
    %423 = vector.extract_strided_slice %418 {offsets = [1, 1, 0], sizes = [16, 16, 16], strides = [1, 1, 1]} : vector<18x18x16xbf16> to vector<16x16x16xbf16>
    %424 = vector.extract_strided_slice %418 {offsets = [1, 2, 0], sizes = [16, 16, 16], strides = [1, 1, 1]} : vector<18x18x16xbf16> to vector<16x16x16xbf16>
    %425 = vector.extract_strided_slice %418 {offsets = [2, 0, 0], sizes = [16, 16, 16], strides = [1, 1, 1]} : vector<18x18x16xbf16> to vector<16x16x16xbf16>
    %426 = vector.extract_strided_slice %418 {offsets = [2, 1, 0], sizes = [16, 16, 16], strides = [1, 1, 1]} : vector<18x18x16xbf16> to vector<16x16x16xbf16>
    %427 = vector.extract_strided_slice %418 {offsets = [2, 2, 0], sizes = [16, 16, 16], strides = [1, 1, 1]} : vector<18x18x16xbf16> to vector<16x16x16xbf16>
    %428 = tpu.concatenate %419, %420, %421, %422, %423, %424, %425, %426, %427 in 2 : vector<16x16x16xbf16>, vector<16x16x16xbf16>, vector<16x16x16xbf16>, vector<16x16x16xbf16>, vector<16x16x16xbf16>, vector<16x16x16xbf16>, vector<16x16x16xbf16>, vector<16x16x16xbf16>, vector<16x16x16xbf16> -> vector<16x16x144xbf16>
    %429 = vector.shape_cast %428 : vector<16x16x144xbf16> to vector<256x144xbf16>
    %c0_146 = arith.constant 0 : index
    %c0_147 = arith.constant 0 : index
    %430 = vector.load %arg26[%c0_146, %c0_147] : memref<144x2xbf16, #tpu.memory_space<vmem>>, vector<144x2xbf16>
    %cst_148 = arith.constant dense<0.000000e+00> : vector<256x2xf32>
    %431 = tpu.matmul %429, %430, %cst_148 {dimension_numbers = #tpu.dot_dimension_numbers<[1], [0], [0], [1], [0, 0, 1, 1], [], []>} : vector<256x144xbf16>, vector<144x2xbf16>, vector<256x2xf32> -> vector<256x2xf32>
    %c0_149 = arith.constant 0 : index
    %c0_150 = arith.constant 0 : index
    %432 = vector.load %arg27[%c0_149, %c0_150] : memref<1x2xf32, #tpu.memory_space<vmem>>, vector<1x2xf32>
    %433 = vector.broadcast %432 : vector<1x2xf32> to vector<256x2xf32>
    %434 = arith.addf %431, %433 : vector<256x2xf32>
    %435 = vector.shape_cast %434 : vector<256x2xf32> to vector<16x16x2xf32>
    %c0_151 = arith.constant 0 : index
    %c0_152 = arith.constant 0 : index
    %c0_153 = arith.constant 0 : index
    %c0_154 = arith.constant 0 : index
    %436 = vector.load %arg36[%c0_151, %c0_152, %c0_153, %c0_154] : memref<1x16x16x2xf32, #tpu.memory_space<vmem>>, vector<1x16x16x2xf32>
    %437 = vector.shape_cast %436 : vector<1x16x16x2xf32> to vector<16x16x2xf32>
    %438 = vector.shape_cast %435 : vector<16x16x2xf32> to vector<1x16x16x2xf32>
    tpu.vector_store %arg36[%c0_151, %c0_152, %c0_153, %c0_154], %438 {strides = array<i32>} : memref<1x16x16x2xf32, #tpu.memory_space<vmem>>, vector<1x16x16x2xf32>,
    return
  }
  func.func @transform_0(%arg0: i32) -> (i32, i32, i32, i32) {
    %c0_i32 = arith.constant 0 : i32
    %c0_i32_0 = arith.constant 0 : i32
    %c0_i32_1 = arith.constant 0 : i32
    %c0_i32_2 = arith.constant 0 : i32
    return %arg0, %c0_i32, %c0_i32_0, %c0_i32_1 : i32, i32, i32, i32
  }
  func.func @transform_1(%arg0: i32) -> (i32, i32) {
    %c0_i32 = arith.constant 0 : i32
    %c0_i32_0 = arith.constant 0 : i32
    %c0_i32_1 = arith.constant 0 : i32
    return %c0_i32, %c0_i32_0 : i32, i32
  }
  func.func @transform_2(%arg0: i32) -> (i32, i32) {
    %c0_i32 = arith.constant 0 : i32
    %c0_i32_0 = arith.constant 0 : i32
    %c0_i32_1 = arith.constant 0 : i32
    return %c0_i32, %c0_i32_0 : i32, i32
  }
  func.func @transform_3(%arg0: i32) -> (i32, i32) {
    %c0_i32 = arith.constant 0 : i32
    %c0_i32_0 = arith.constant 0 : i32
    %c0_i32_1 = arith.constant 0 : i32
    return %c0_i32, %c0_i32_0 : i32, i32
  }
  func.func @transform_4(%arg0: i32) -> (i32, i32) {
    %c0_i32 = arith.constant 0 : i32
    %c0_i32_0 = arith.constant 0 : i32
    %c0_i32_1 = arith.constant 0 : i32
    return %c0_i32, %c0_i32_0 : i32, i32
  }
  func.func @transform_5(%arg0: i32) -> (i32, i32) {
    %c0_i32 = arith.constant 0 : i32
    %c0_i32_0 = arith.constant 0 : i32
    %c0_i32_1 = arith.constant 0 : i32
    return %c0_i32, %c0_i32_0 : i32, i32
  }
  func.func @transform_6(%arg0: i32) -> (i32, i32) {
    %c0_i32 = arith.constant 0 : i32
    %c0_i32_0 = arith.constant 0 : i32
    %c0_i32_1 = arith.constant 0 : i32
    return %c0_i32, %c0_i32_0 : i32, i32
  }
  func.func @transform_7(%arg0: i32) -> (i32, i32) {
    %c0_i32 = arith.constant 0 : i32
    %c0_i32_0 = arith.constant 0 : i32
    %c0_i32_1 = arith.constant 0 : i32
    return %c0_i32, %c0_i32_0 : i32, i32
  }
  func.func @transform_8(%arg0: i32) -> (i32, i32) {
    %c0_i32 = arith.constant 0 : i32
    %c0_i32_0 = arith.constant 0 : i32
    %c0_i32_1 = arith.constant 0 : i32
    return %c0_i32, %c0_i32_0 : i32, i32
  }
  func.func @transform_9(%arg0: i32) -> (i32, i32) {
    %c0_i32 = arith.constant 0 : i32
    %c0_i32_0 = arith.constant 0 : i32
    %c0_i32_1 = arith.constant 0 : i32
    return %c0_i32, %c0_i32_0 : i32, i32
  }
  func.func @transform_10(%arg0: i32) -> (i32, i32) {
    %c0_i32 = arith.constant 0 : i32
    %c0_i32_0 = arith.constant 0 : i32
    %c0_i32_1 = arith.constant 0 : i32
    return %c0_i32, %c0_i32_0 : i32, i32
  }
  func.func @transform_11(%arg0: i32) -> (i32, i32) {
    %c0_i32 = arith.constant 0 : i32
    %c0_i32_0 = arith.constant 0 : i32
    %c0_i32_1 = arith.constant 0 : i32
    return %c0_i32, %c0_i32_0 : i32, i32
  }
  func.func @transform_12(%arg0: i32) -> (i32, i32) {
    %c0_i32 = arith.constant 0 : i32
    %c0_i32_0 = arith.constant 0 : i32
    %c0_i32_1 = arith.constant 0 : i32
    return %c0_i32, %c0_i32_0 : i32, i32
  }
  func.func @transform_13(%arg0: i32) -> (i32, i32) {
    %c0_i32 = arith.constant 0 : i32
    %c0_i32_0 = arith.constant 0 : i32
    %c0_i32_1 = arith.constant 0 : i32
    return %c0_i32, %c0_i32_0 : i32, i32
  }
  func.func @transform_14(%arg0: i32) -> (i32, i32) {
    %c0_i32 = arith.constant 0 : i32
    %c0_i32_0 = arith.constant 0 : i32
    %c0_i32_1 = arith.constant 0 : i32
    return %c0_i32, %c0_i32_0 : i32, i32
  }
  func.func @transform_15(%arg0: i32) -> (i32, i32) {
    %c0_i32 = arith.constant 0 : i32
    %c0_i32_0 = arith.constant 0 : i32
    %c0_i32_1 = arith.constant 0 : i32
    return %c0_i32, %c0_i32_0 : i32, i32
  }
  func.func @transform_16(%arg0: i32) -> (i32, i32) {
    %c0_i32 = arith.constant 0 : i32
    %c0_i32_0 = arith.constant 0 : i32
    %c0_i32_1 = arith.constant 0 : i32
    return %c0_i32, %c0_i32_0 : i32, i32
  }
  func.func @transform_17(%arg0: i32) -> (i32, i32) {
    %c0_i32 = arith.constant 0 : i32
    %c0_i32_0 = arith.constant 0 : i32
    %c0_i32_1 = arith.constant 0 : i32
    return %c0_i32, %c0_i32_0 : i32, i32
  }
  func.func @transform_18(%arg0: i32) -> (i32, i32) {
    %c0_i32 = arith.constant 0 : i32
    %c0_i32_0 = arith.constant 0 : i32
    %c0_i32_1 = arith.constant 0 : i32
    return %c0_i32, %c0_i32_0 : i32, i32
  }
  func.func @transform_19(%arg0: i32) -> (i32, i32) {
    %c0_i32 = arith.constant 0 : i32
    %c0_i32_0 = arith.constant 0 : i32
    %c0_i32_1 = arith.constant 0 : i32
    return %c0_i32, %c0_i32_0 : i32, i32
  }
  func.func @transform_20(%arg0: i32) -> (i32, i32) {
    %c0_i32 = arith.constant 0 : i32
    %c0_i32_0 = arith.constant 0 : i32
    %c0_i32_1 = arith.constant 0 : i32
    return %c0_i32, %c0_i32_0 : i32, i32
  }
  func.func @transform_21(%arg0: i32) -> (i32, i32) {
    %c0_i32 = arith.constant 0 : i32
    %c0_i32_0 = arith.constant 0 : i32
    %c0_i32_1 = arith.constant 0 : i32
    return %c0_i32, %c0_i32_0 : i32, i32
  }
  func.func @transform_22(%arg0: i32) -> (i32, i32) {
    %c0_i32 = arith.constant 0 : i32
    %c0_i32_0 = arith.constant 0 : i32
    %c0_i32_1 = arith.constant 0 : i32
    return %c0_i32, %c0_i32_0 : i32, i32
  }
  func.func @transform_23(%arg0: i32) -> (i32, i32) {
    %c0_i32 = arith.constant 0 : i32
    %c0_i32_0 = arith.constant 0 : i32
    %c0_i32_1 = arith.constant 0 : i32
    return %c0_i32, %c0_i32_0 : i32, i32
  }
  func.func @transform_24(%arg0: i32) -> (i32, i32) {
    %c0_i32 = arith.constant 0 : i32
    %c0_i32_0 = arith.constant 0 : i32
    %c0_i32_1 = arith.constant 0 : i32
    return %c0_i32, %c0_i32_0 : i32, i32
  }
  func.func @transform_25(%arg0: i32) -> (i32, i32) {
    %c0_i32 = arith.constant 0 : i32
    %c0_i32_0 = arith.constant 0 : i32
    %c0_i32_1 = arith.constant 0 : i32
    return %c0_i32, %c0_i32_0 : i32, i32
  }
  func.func @transform_26(%arg0: i32) -> (i32, i32) {
    %c0_i32 = arith.constant 0 : i32
    %c0_i32_0 = arith.constant 0 : i32
    %c0_i32_1 = arith.constant 0 : i32
    return %c0_i32, %c0_i32_0 : i32, i32
  }
  func.func @transform_27(%arg0: i32) -> (i32, i32) {
    %c0_i32 = arith.constant 0 : i32
    %c0_i32_0 = arith.constant 0 : i32
    %c0_i32_1 = arith.constant 0 : i32
    return %c0_i32, %c0_i32_0 : i32, i32
  }
  func.func @transform_28(%arg0: i32) -> (i32, i32) {
    %c0_i32 = arith.constant 0 : i32
    %c0_i32_0 = arith.constant 0 : i32
    %c0_i32_1 = arith.constant 0 : i32
    return %c0_i32, %c0_i32_0 : i32, i32
  }
  func.func @transform_29(%arg0: i32) -> (i32, i32) {
    %c0_i32 = arith.constant 0 : i32
    %c0_i32_0 = arith.constant 0 : i32
    %c0_i32_1 = arith.constant 0 : i32
    return %c0_i32, %c0_i32_0 : i32, i32
  }
  func.func @transform_30(%arg0: i32) -> (i32, i32) {
    %c0_i32 = arith.constant 0 : i32
    %c0_i32_0 = arith.constant 0 : i32
    %c0_i32_1 = arith.constant 0 : i32
    return %c0_i32, %c0_i32_0 : i32, i32
  }
  func.func @transform_31(%arg0: i32) -> (i32, i32) {
    %c0_i32 = arith.constant 0 : i32
    %c0_i32_0 = arith.constant 0 : i32
    %c0_i32_1 = arith.constant 0 : i32
    return %c0_i32, %c0_i32_0 : i32, i32
  }
  func.func @transform_32(%arg0: i32) -> (i32, i32) {
    %c0_i32 = arith.constant 0 : i32
    %c0_i32_0 = arith.constant 0 : i32
    %c0_i32_1 = arith.constant 0 : i32
    return %c0_i32, %c0_i32_0 : i32, i32
  }
  func.func @transform_33(%arg0: i32) -> (i32, i32) {
    %c0_i32 = arith.constant 0 : i32
    %c0_i32_0 = arith.constant 0 : i32
    %c0_i32_1 = arith.constant 0 : i32
    return %c0_i32, %c0_i32_0 : i32, i32
  }
  func.func @transform_34(%arg0: i32) -> (i32, i32) {
    %c0_i32 = arith.constant 0 : i32
    %c0_i32_0 = arith.constant 0 : i32
    %c0_i32_1 = arith.constant 0 : i32
    return %c0_i32, %c0_i32_0 : i32, i32
  }
  func.func @transform_35(%arg0: i32) -> (i32, i32, i32, i32) {
    %c0_i32 = arith.constant 0 : i32
    %c0_i32_0 = arith.constant 0 : i32
    %c0_i32_1 = arith.constant 0 : i32
    %c0_i32_2 = arith.constant 0 : i32
    return %arg0, %c0_i32, %c0_i32_0, %c0_i32_1 : i32, i32, i32, i32
  }
}

</mosaic_0001>

<llo_original>
// kernel: vxm_forward.1
$region0: #{vxm_forward.1}
  #allocation0 [shape = 'u32[]', space=smem, size = 0x4, offset = 0x4, fixed_abs, tag = 'smem constant byte address 0x4 - core index']
  #allocation1 [shape = 'u32[144,128]{1,0:T(1,128)}', space=vmem, size = 0x12000, scoped, tag = 'internal scratch']
  %s0 = inlined_call_operand.smem [shape: u32[36], index: -1, kind: input, shape index: {}]
  %s1 = sld [smem:[%s0]]
  %s2 = scalar_lea.smem %s0, 1
  %s3 = sld [smem:[%s2]]
  %s4 = scalar_lea.smem %s0, 2
  %s5 = sld [smem:[%s4]]
  %s6 = scalar_lea.smem %s0, 3
  %s7 = sld [smem:[%s6]]
  %s8 = scalar_lea.smem %s0, 4
  %s9 = sld [smem:[%s8]]
  %s10 = scalar_lea.smem %s0, 5
  %s11 = sld [smem:[%s10]]
  %s12 = scalar_lea.smem %s0, 6
  %s13 = sld [smem:[%s12]]
  %s14 = scalar_lea.smem %s0, 7
  %s15 = sld [smem:[%s14]]
  %s16 = scalar_lea.smem %s0, 8
  %s17 = sld [smem:[%s16]]
  %s18 = scalar_lea.smem %s0, 9
  %s19 = sld [smem:[%s18]]
  %s20 = scalar_lea.smem %s0, 10
  %s21 = sld [smem:[%s20]]
  %s22 = scalar_lea.smem %s0, 11
  %s23 = sld [smem:[%s22]]
  %s24 = scalar_lea.smem %s0, 12
  %s25 = sld [smem:[%s24]]
  %s26 = scalar_lea.smem %s0, 13
  %s27 = sld [smem:[%s26]]
  %s28 = scalar_lea.smem %s0, 14
  %s29 = sld [smem:[%s28]]
  %s30 = scalar_lea.smem %s0, 15
  %s31 = sld [smem:[%s30]]
  %s32 = scalar_lea.smem %s0, 16
  %s33 = sld [smem:[%s32]]
  %s34 = scalar_lea.smem %s0, 17
  %s35 = sld [smem:[%s34]]
  %s36 = scalar_lea.smem %s0, 18
  %s37 = sld [smem:[%s36]]
  %s38 = scalar_lea.smem %s0, 19
  %s39 = sld [smem:[%s38]]
  %s40 = scalar_lea.smem %s0, 20
  %s41 = sld [smem:[%s40]]
  %s42 = scalar_lea.smem %s0, 21
  %s43 = sld [smem:[%s42]]
  %s44 = scalar_lea.smem %s0, 22
  %s45 = sld [smem:[%s44]]
  %s46 = scalar_lea.smem %s0, 23
  %s47 = sld [smem:[%s46]]
  %s48 = scalar_lea.smem %s0, 24
  %s49 = sld [smem:[%s48]]
  %s50 = scalar_lea.smem %s0, 25
  %s51 = sld [smem:[%s50]]
  %s52 = scalar_lea.smem %s0, 26
  %s53 = sld [smem:[%s52]]
  %s54 = scalar_lea.smem %s0, 27
  %s55 = sld [smem:[%s54]]
  %s56 = scalar_lea.smem %s0, 28
  %s57 = sld [smem:[%s56]]
  %s58 = scalar_lea.smem %s0, 29
  %s59 = sld [smem:[%s58]]
  %s60 = scalar_lea.smem %s0, 30
  %s61 = sld [smem:[%s60]]
  %s62 = scalar_lea.smem %s0, 31
  %s63 = sld [smem:[%s62]]
  %s64 = scalar_lea.smem %s0, 32
  %s65 = sld [smem:[%s64]]
  %s66 = scalar_lea.smem %s0, 33
  %s67 = sld [smem:[%s66]]
  %s68 = scalar_lea.smem %s0, 34
  %s69 = sld [smem:[%s68]]
  %s70 = scalar_lea.smem %s0, 35
  %s71 = sld [smem:[%s70]]
  %s72 = sld [smem:[#allocation0]]
  $region173: #{vxm_forward.1} parent=0
    _
  %s74 = ssub.s32 1, %s72
  %s75 = scalar_select 0, %s74, %s72
  loop: start=0, step=1, limit=4
  $region2: #{vxm_forward.1} parent=0 // loop_pre_header
    _
  $region3: #{vxm_forward.1} parent=0 // loop_header
    %s77 = sphi 0, %s81
    %p78 = scmp.ge.s32.totalorder %s77, 4
    %s87 = sphi 0, %s89
    %s90 = sphi 0, %s87
    %s91 = sphi 0, %s90
    %s107 = sphi 0, %s91
    %s111 = sphi 0, %s111
    %s113 = sphi 0, %s111
    %s114 = sphi 0, %s113
    %s128 = sphi 0, %s114
    %s132 = sphi 0, %s132
    %s134 = sphi 0, %s132
    %s135 = sphi 0, %s134
    %s149 = sphi 0, %s135
    %s153 = sphi 0, %s153
    %s155 = sphi 0, %s153
    %s156 = sphi 0, %s155
    %s170 = sphi 0, %s156
    %s174 = sphi 0, %s174
    %s176 = sphi 0, %s174
    %s177 = sphi 0, %s176
    %s191 = sphi 0, %s177
    %s195 = sphi 0, %s195
    %s197 = sphi 0, %s195
    %s198 = sphi 0, %s197
    %s212 = sphi 0, %s198
    %s216 = sphi 0, %s216
    %s218 = sphi 0, %s216
    %s219 = sphi 0, %s218
    %s233 = sphi 0, %s219
    %s237 = sphi 0, %s237
    %s239 = sphi 0, %s237
    %s240 = sphi 0, %s239
    %s254 = sphi 0, %s240
    %s258 = sphi 0, %s258
    %s260 = sphi 0, %s258
    %s261 = sphi 0, %s260
    %s275 = sphi 0, %s261
    %s279 = sphi 0, %s279
    %s281 = sphi 0, %s279
    %s282 = sphi 0, %s281
    %s296 = sphi 0, %s282
    %s300 = sphi 0, %s300
    %s302 = sphi 0, %s300
    %s303 = sphi 0, %s302
    %s317 = sphi 0, %s303
    %s321 = sphi 0, %s321
    %s323 = sphi 0, %s321
    %s324 = sphi 0, %s323
    %s338 = sphi 0, %s324
    %s342 = sphi 0, %s342
    %s344 = sphi 0, %s342
    %s345 = sphi 0, %s344
    %s359 = sphi 0, %s345
    %s363 = sphi 0, %s363
    %s365 = sphi 0, %s363
    %s366 = sphi 0, %s365
    %s380 = sphi 0, %s366
    %s384 = sphi 0, %s384
    %s386 = sphi 0, %s384
    %s387 = sphi 0, %s386
    %s401 = sphi 0, %s387
    %s405 = sphi 0, %s405
    %s407 = sphi 0, %s405
    %s408 = sphi 0, %s407
    %s422 = sphi 0, %s408
    %s426 = sphi 0, %s426
    %s428 = sphi 0, %s426
    %s429 = sphi 0, %s428
    %s443 = sphi 0, %s429
    %s447 = sphi 0, %s447
    %s449 = sphi 0, %s447
    %s450 = sphi 0, %s449
    %s464 = sphi 0, %s450
    %s468 = sphi 0, %s468
    %s470 = sphi 0, %s468
    %s471 = sphi 0, %s470
    %s485 = sphi 0, %s471
    %s489 = sphi 0, %s489
    %s491 = sphi 0, %s489
    %s492 = sphi 0, %s491
    %s506 = sphi 0, %s492
    %s510 = sphi 0, %s510
    %s512 = sphi 0, %s510
    %s513 = sphi 0, %s512
    %s527 = sphi 0, %s513
    %s531 = sphi 0, %s531
    %s533 = sphi 0, %s531
    %s534 = sphi 0, %s533
    %s548 = sphi 0, %s534
    %s552 = sphi 0, %s552
    %s554 = sphi 0, %s552
    %s555 = sphi 0, %s554
    %s569 = sphi 0, %s555
    %s573 = sphi 0, %s573
    %s575 = sphi 0, %s573
    %s576 = sphi 0, %s575
    %s590 = sphi 0, %s576
    %s594 = sphi 0, %s594
    %s596 = sphi 0, %s594
    %s597 = sphi 0, %s596
    %s611 = sphi 0, %s597
    %s615 = sphi 0, %s615
    %s617 = sphi 0, %s615
    %s618 = sphi 0, %s617
    %s632 = sphi 0, %s618
    %s636 = sphi 0, %s636
    %s638 = sphi 0, %s636
    %s639 = sphi 0, %s638
    %s653 = sphi 0, %s639
    %s657 = sphi 0, %s657
    %s659 = sphi 0, %s657
    %s660 = sphi 0, %s659
    %s674 = sphi 0, %s660
    %s678 = sphi 0, %s678
    %s680 = sphi 0, %s678
    %s681 = sphi 0, %s680
    %s695 = sphi 0, %s681
    %s699 = sphi 0, %s699
    %s701 = sphi 0, %s699
    %s702 = sphi 0, %s701
    %s716 = sphi 0, %s702
    %s720 = sphi 0, %s720
    %s722 = sphi 0, %s720
    %s723 = sphi 0, %s722
    %s737 = sphi 0, %s723
    %s741 = sphi 0, %s741
    %s743 = sphi 0, %s741
    %s744 = sphi 0, %s743
    %s758 = sphi 0, %s744
    %s762 = sphi 0, %s762
    %s764 = sphi 0, %s762
    %s765 = sphi 0, %s764
    %s779 = sphi 0, %s765
    %s783 = sphi 0, %s783
    %s785 = sphi 0, %s783
    %s786 = sphi 0, %s785
    %s800 = sphi 0, %s786
    %s804 = sphi 0, %s804
    %s806 = sphi 0, %s804
    %s807 = sphi 0, %s806
    %s821 = sphi 0, %s807
    %s827 = sphi 0, %s829
    %s830 = sphi 0, %s827
    %s831 = sphi 0, %s830
    %s847 = sphi 0, %s831
  $region4: #{vxm_forward.1} parent=0 // loop_header_branch
    %80 = sbr.rel (%p78) target = $region8
  $region5: #{vxm_forward.1} parent=0 // loop_body
    %s82 = ssub.s32 %s77, 1
    %s83 = ssub.s32 %s77, 2
    %s84 = sadd.s32 %s77, 1
    %s85 = ssub.s32 %s77, %s84
    %p86 = scmp.eq.s32.totalorder %s85, 0
    %s88 = sadd.s32 %s87, 1
    %s89 = scalar_select %p86, %s87, %s88
    %p92 = pneg %p86
    %p93 = scmp.eq.s32.totalorder %s77, 1
    %p94 = por %p92, %p93
    %p95 = scmp.ne.s32.totalorder %s87, %s90
    %p96 = scmp.eq.s32.totalorder %s77, 0
    %p97 = por %p95, %p96
    %p98 = scmp.ne.s32.totalorder %s87, %s90
    %p99 = scmp.eq.s32.totalorder %s82, 1
    %p100 = por %p98, %p99
    %p101 = scmp.ne.s32.totalorder %s90, %s91
    %p102 = scmp.eq.s32.totalorder %s82, 0
    %p103 = por %p101, %p102
    %p104 = scmp.ne.s32.totalorder %s90, %s91
    %p105 = scmp.eq.s32.totalorder %s83, 1
    %p106 = por %p104, %p105
    %p108 = scmp.ne.s32.totalorder %s91, %s107
    %p109 = scmp.eq.s32.totalorder %s83, 0
    %p110 = por %p108, %p109
    %s112 = sadd.s32 %s111, 1
    %p115 = scmp.eq.s32.totalorder %s77, 1
    %p116 = scmp.ne.s32.totalorder %s111, %s113
    %p117 = scmp.eq.s32.totalorder %s77, 0
    %p118 = por %p116, %p117
    %p119 = scmp.ne.s32.totalorder %s111, %s113
    %p120 = scmp.eq.s32.totalorder %s82, 1
    %p121 = por %p119, %p120
    %p122 = scmp.ne.s32.totalorder %s113, %s114
    %p123 = scmp.eq.s32.totalorder %s82, 0
    %p124 = por %p122, %p123
    %p125 = scmp.ne.s32.totalorder %s113, %s114
    %p126 = scmp.eq.s32.totalorder %s83, 1
    %p127 = por %p125, %p126
    %p129 = scmp.ne.s32.totalorder %s114, %s128
    %p130 = scmp.eq.s32.totalorder %s83, 0
    %p131 = por %p129, %p130
    %s133 = sadd.s32 %s132, 1
    %p136 = scmp.eq.s32.totalorder %s77, 1
    %p137 = scmp.ne.s32.totalorder %s132, %s134
    %p138 = scmp.eq.s32.totalorder %s77, 0
    %p139 = por %p137, %p138
    %p140 = scmp.ne.s32.totalorder %s132, %s134
    %p141 = scmp.eq.s32.totalorder %s82, 1
    %p142 = por %p140, %p141
    %p143 = scmp.ne.s32.totalorder %s134, %s135
    %p144 = scmp.eq.s32.totalorder %s82, 0
    %p145 = por %p143, %p144
    %p146 = scmp.ne.s32.totalorder %s134, %s135
    %p147 = scmp.eq.s32.totalorder %s83, 1
    %p148 = por %p146, %p147
    %p150 = scmp.ne.s32.totalorder %s135, %s149
    %p151 = scmp.eq.s32.totalorder %s83, 0
    %p152 = por %p150, %p151
    %s154 = sadd.s32 %s153, 1
    %p157 = scmp.eq.s32.totalorder %s77, 1
    %p158 = scmp.ne.s32.totalorder %s153, %s155
    %p159 = scmp.eq.s32.totalorder %s77, 0
    %p160 = por %p158, %p159
    %p161 = scmp.ne.s32.totalorder %s153, %s155
    %p162 = scmp.eq.s32.totalorder %s82, 1
    %p163 = por %p161, %p162
    %p164 = scmp.ne.s32.totalorder %s155, %s156
    %p165 = scmp.eq.s32.totalorder %s82, 0
    %p166 = por %p164, %p165
    %p167 = scmp.ne.s32.totalorder %s155, %s156
    %p168 = scmp.eq.s32.totalorder %s83, 1
    %p169 = por %p167, %p168
    %p171 = scmp.ne.s32.totalorder %s156, %s170
    %p172 = scmp.eq.s32.totalorder %s83, 0
    %p173 = por %p171, %p172
    %s175 = sadd.s32 %s174, 1
    %p178 = scmp.eq.s32.totalorder %s77, 1
    %p179 = scmp.ne.s32.totalorder %s174, %s176
    %p180 = scmp.eq.s32.totalorder %s77, 0
    %p181 = por %p179, %p180
    %p182 = scmp.ne.s32.totalorder %s174, %s176
    %p183 = scmp.eq.s32.totalorder %s82, 1
    %p184 = por %p182, %p183
    %p185 = scmp.ne.s32.totalorder %s176, %s177
    %p186 = scmp.eq.s32.totalorder %s82, 0
    %p187 = por %p185, %p186
    %p188 = scmp.ne.s32.totalorder %s176, %s177
    %p189 = scmp.eq.s32.totalorder %s83, 1
    %p190 = por %p188, %p189
    %p192 = scmp.ne.s32.totalorder %s177, %s191
    %p193 = scmp.eq.s32.totalorder %s83, 0
    %p194 = por %p192, %p193
    %s196 = sadd.s32 %s195, 1
    %p199 = scmp.eq.s32.totalorder %s77, 1
    %p200 = scmp.ne.s32.totalorder %s195, %s197
    %p201 = scmp.eq.s32.totalorder %s77, 0
    %p202 = por %p200, %p201
    %p203 = scmp.ne.s32.totalorder %s195, %s197
    %p204 = scmp.eq.s32.totalorder %s82, 1
    %p205 = por %p203, %p204
    %p206 = scmp.ne.s32.totalorder %s197, %s198
    %p207 = scmp.eq.s32.totalorder %s82, 0
    %p208 = por %p206, %p207
    %p209 = scmp.ne.s32.totalorder %s197, %s198
    %p210 = scmp.eq.s32.totalorder %s83, 1
    %p211 = por %p209, %p210
    %p213 = scmp.ne.s32.totalorder %s198, %s212
    %p214 = scmp.eq.s32.totalorder %s83, 0
    %p215 = por %p213, %p214
    %s217 = sadd.s32 %s216, 1
    %p220 = scmp.eq.s32.totalorder %s77, 1
    %p221 = scmp.ne.s32.totalorder %s216, %s218
    %p222 = scmp.eq.s32.totalorder %s77, 0
    %p223 = por %p221, %p222
    %p224 = scmp.ne.s32.totalorder %s216, %s218
    %p225 = scmp.eq.s32.totalorder %s82, 1
    %p226 = por %p224, %p225
    %p227 = scmp.ne.s32.totalorder %s218, %s219
    %p228 = scmp.eq.s32.totalorder %s82, 0
    %p229 = por %p227, %p228
    %p230 = scmp.ne.s32.totalorder %s218, %s219
    %p231 = scmp.eq.s32.totalorder %s83, 1
    %p232 = por %p230, %p231
    %p234 = scmp.ne.s32.totalorder %s219, %s233
    %p235 = scmp.eq.s32.totalorder %s83, 0
    %p236 = por %p234, %p235
    %s238 = sadd.s32 %s237, 1
    %p241 = scmp.eq.s32.totalorder %s77, 1
    %p242 = scmp.ne.s32.totalorder %s237, %s239
    %p243 = scmp.eq.s32.totalorder %s77, 0
    %p244 = por %p242, %p243
    %p245 = scmp.ne.s32.totalorder %s237, %s239
    %p246 = scmp.eq.s32.totalorder %s82, 1
    %p247 = por %p245, %p246
    %p248 = scmp.ne.s32.totalorder %s239, %s240
    %p249 = scmp.eq.s32.totalorder %s82, 0
    %p250 = por %p248, %p249
    %p251 = scmp.ne.s32.totalorder %s239, %s240
    %p252 = scmp.eq.s32.totalorder %s83, 1
    %p253 = por %p251, %p252
    %p255 = scmp.ne.s32.totalorder %s240, %s254
    %p256 = scmp.eq.s32.totalorder %s83, 0
    %p257 = por %p255, %p256
    %s259 = sadd.s32 %s258, 1
    %p262 = scmp.eq.s32.totalorder %s77, 1
    %p263 = scmp.ne.s32.totalorder %s258, %s260
    %p264 = scmp.eq.s32.totalorder %s77, 0
    %p265 = por %p263, %p264
    %p266 = scmp.ne.s32.totalorder %s258, %s260
    %p267 = scmp.eq.s32.totalorder %s82, 1
    %p268 = por %p266, %p267
    %p269 = scmp.ne.s32.totalorder %s260, %s261
    %p270 = scmp.eq.s32.totalorder %s82, 0
    %p271 = por %p269, %p270
    %p272 = scmp.ne.s32.totalorder %s260, %s261
    %p273 = scmp.eq.s32.totalorder %s83, 1
    %p274 = por %p272, %p273
    %p276 = scmp.ne.s32.totalorder %s261, %s275
    %p277 = scmp.eq.s32.totalorder %s83, 0
    %p278 = por %p276, %p277
    %s280 = sadd.s32 %s279, 1
    %p283 = scmp.eq.s32.totalorder %s77, 1
    %p284 = scmp.ne.s32.totalorder %s279, %s281
    %p285 = scmp.eq.s32.totalorder %s77, 0
    %p286 = por %p284, %p285
    %p287 = scmp.ne.s32.totalorder %s279, %s281
    %p288 = scmp.eq.s32.totalorder %s82, 1
    %p289 = por %p287, %p288
    %p290 = scmp.ne.s32.totalorder %s281, %s282
    %p291 = scmp.eq.s32.totalorder %s82, 0
    %p292 = por %p290, %p291
    %p293 = scmp.ne.s32.totalorder %s281, %s282
    %p294 = scmp.eq.s32.totalorder %s83, 1
    %p295 = por %p293, %p294
    %p297 = scmp.ne.s32.totalorder %s282, %s296
    %p298 = scmp.eq.s32.totalorder %s83, 0
    %p299 = por %p297, %p298
    %s301 = sadd.s32 %s300, 1
    %p304 = scmp.eq.s32.totalorder %s77, 1
    %p305 = scmp.ne.s32.totalorder %s300, %s302
    %p306 = scmp.eq.s32.totalorder %s77, 0
    %p307 = por %p305, %p306
    %p308 = scmp.ne.s32.totalorder %s300, %s302
    %p309 = scmp.eq.s32.totalorder %s82, 1
    %p310 = por %p308, %p309
    %p311 = scmp.ne.s32.totalorder %s302, %s303
    %p312 = scmp.eq.s32.totalorder %s82, 0
    %p313 = por %p311, %p312
    %p314 = scmp.ne.s32.totalorder %s302, %s303
    %p315 = scmp.eq.s32.totalorder %s83, 1
    %p316 = por %p314, %p315
    %p318 = scmp.ne.s32.totalorder %s303, %s317
    %p319 = scmp.eq.s32.totalorder %s83, 0
    %p320 = por %p318, %p319
    %s322 = sadd.s32 %s321, 1
    %p325 = scmp.eq.s32.totalorder %s77, 1
    %p326 = scmp.ne.s32.totalorder %s321, %s323
    %p327 = scmp.eq.s32.totalorder %s77, 0
    %p328 = por %p326, %p327
    %p329 = scmp.ne.s32.totalorder %s321, %s323
    %p330 = scmp.eq.s32.totalorder %s82, 1
    %p331 = por %p329, %p330
    %p332 = scmp.ne.s32.totalorder %s323, %s324
    %p333 = scmp.eq.s32.totalorder %s82, 0
    %p334 = por %p332, %p333
    %p335 = scmp.ne.s32.totalorder %s323, %s324
    %p336 = scmp.eq.s32.totalorder %s83, 1
    %p337 = por %p335, %p336
    %p339 = scmp.ne.s32.totalorder %s324, %s338
    %p340 = scmp.eq.s32.totalorder %s83, 0
    %p341 = por %p339, %p340
    %s343 = sadd.s32 %s342, 1
    %p346 = scmp.eq.s32.totalorder %s77, 1
    %p347 = scmp.ne.s32.totalorder %s342, %s344
    %p348 = scmp.eq.s32.totalorder %s77, 0
    %p349 = por %p347, %p348
    %p350 = scmp.ne.s32.totalorder %s342, %s344
    %p351 = scmp.eq.s32.totalorder %s82, 1
    %p352 = por %p350, %p351
    %p353 = scmp.ne.s32.totalorder %s344, %s345
    %p354 = scmp.eq.s32.totalorder %s82, 0
    %p355 = por %p353, %p354
    %p356 = scmp.ne.s32.totalorder %s344, %s345
    %p357 = scmp.eq.s32.totalorder %s83, 1
    %p358 = por %p356, %p357
    %p360 = scmp.ne.s32.totalorder %s345, %s359
    %p361 = scmp.eq.s32.totalorder %s83, 0
    %p362 = por %p360, %p361
    %s364 = sadd.s32 %s363, 1
    %p367 = scmp.eq.s32.totalorder %s77, 1
    %p368 = scmp.ne.s32.totalorder %s363, %s365
    %p369 = scmp.eq.s32.totalorder %s77, 0
    %p370 = por %p368, %p369
    %p371 = scmp.ne.s32.totalorder %s363, %s365
    %p372 = scmp.eq.s32.totalorder %s82, 1
    %p373 = por %p371, %p372
    %p374 = scmp.ne.s32.totalorder %s365, %s366
    %p375 = scmp.eq.s32.totalorder %s82, 0
    %p376 = por %p374, %p375
    %p377 = scmp.ne.s32.totalorder %s365, %s366
    %p378 = scmp.eq.s32.totalorder %s83, 1
    %p379 = por %p377, %p378
    %p381 = scmp.ne.s32.totalorder %s366, %s380
    %p382 = scmp.eq.s32.totalorder %s83, 0
    %p383 = por %p381, %p382
    %s385 = sadd.s32 %s384, 1
    %p388 = scmp.eq.s32.totalorder %s77, 1
    %p389 = scmp.ne.s32.totalorder %s384, %s386
    %p390 = scmp.eq.s32.totalorder %s77, 0
    %p391 = por %p389, %p390
    %p392 = scmp.ne.s32.totalorder %s384, %s386
    %p393 = scmp.eq.s32.totalorder %s82, 1
    %p394 = por %p392, %p393
    %p395 = scmp.ne.s32.totalorder %s386, %s387
    %p396 = scmp.eq.s32.totalorder %s82, 0
    %p397 = por %p395, %p396
    %p398 = scmp.ne.s32.totalorder %s386, %s387
    %p399 = scmp.eq.s32.totalorder %s83, 1
    %p400 = por %p398, %p399
    %p402 = scmp.ne.s32.totalorder %s387, %s401
    %p403 = scmp.eq.s32.totalorder %s83, 0
    %p404 = por %p402, %p403
    %s406 = sadd.s32 %s405, 1
    %p409 = scmp.eq.s32.totalorder %s77, 1
    %p410 = scmp.ne.s32.totalorder %s405, %s407
    %p411 = scmp.eq.s32.totalorder %s77, 0
    %p412 = por %p410, %p411
    %p413 = scmp.ne.s32.totalorder %s405, %s407
    %p414 = scmp.eq.s32.totalorder %s82, 1
    %p415 = por %p413, %p414
    %p416 = scmp.ne.s32.totalorder %s407, %s408
    %p417 = scmp.eq.s32.totalorder %s82, 0
    %p418 = por %p416, %p417
    %p419 = scmp.ne.s32.totalorder %s407, %s408
    %p420 = scmp.eq.s32.totalorder %s83, 1
    %p421 = por %p419, %p420
    %p423 = scmp.ne.s32.totalorder %s408, %s422
    %p424 = scmp.eq.s32.totalorder %s83, 0
    %p425 = por %p423, %p424
    %s427 = sadd.s32 %s426, 1
    %p430 = scmp.eq.s32.totalorder %s77, 1
    %p431 = scmp.ne.s32.totalorder %s426, %s428
    %p432 = scmp.eq.s32.totalorder %s77, 0
    %p433 = por %p431, %p432
    %p434 = scmp.ne.s32.totalorder %s426, %s428
    %p435 = scmp.eq.s32.totalorder %s82, 1
    %p436 = por %p434, %p435
    %p437 = scmp.ne.s32.totalorder %s428, %s429
    %p438 = scmp.eq.s32.totalorder %s82, 0
    %p439 = por %p437, %p438
    %p440 = scmp.ne.s32.totalorder %s428, %s429
    %p441 = scmp.eq.s32.totalorder %s83, 1
    %p442 = por %p440, %p441
    %p444 = scmp.ne.s32.totalorder %s429, %s443
    %p445 = scmp.eq.s32.totalorder %s83, 0
    %p446 = por %p444, %p445
    %s448 = sadd.s32 %s447, 1
    %p451 = scmp.eq.s32.totalorder %s77, 1
    %p452 = scmp.ne.s32.totalorder %s447, %s449
    %p453 = scmp.eq.s32.totalorder %s77, 0
    %p454 = por %p452, %p453
    %p455 = scmp.ne.s32.totalorder %s447, %s449
    %p456 = scmp.eq.s32.totalorder %s82, 1
    %p457 = por %p455, %p456
    %p458 = scmp.ne.s32.totalorder %s449, %s450
    %p459 = scmp.eq.s32.totalorder %s82, 0
    %p460 = por %p458, %p459
    %p461 = scmp.ne.s32.totalorder %s449, %s450
    %p462 = scmp.eq.s32.totalorder %s83, 1
    %p463 = por %p461, %p462
    %p465 = scmp.ne.s32.totalorder %s450, %s464
    %p466 = scmp.eq.s32.totalorder %s83, 0
    %p467 = por %p465, %p466
    %s469 = sadd.s32 %s468, 1
    %p472 = scmp.eq.s32.totalorder %s77, 1
    %p473 = scmp.ne.s32.totalorder %s468, %s470
    %p474 = scmp.eq.s32.totalorder %s77, 0
    %p475 = por %p473, %p474
    %p476 = scmp.ne.s32.totalorder %s468, %s470
    %p477 = scmp.eq.s32.totalorder %s82, 1
    %p478 = por %p476, %p477
    %p479 = scmp.ne.s32.totalorder %s470, %s471
    %p480 = scmp.eq.s32.totalorder %s82, 0
    %p481 = por %p479, %p480
    %p482 = scmp.ne.s32.totalorder %s470, %s471
    %p483 = scmp.eq.s32.totalorder %s83, 1
    %p484 = por %p482, %p483
    %p486 = scmp.ne.s32.totalorder %s471, %s485
    %p487 = scmp.eq.s32.totalorder %s83, 0
    %p488 = por %p486, %p487
    %s490 = sadd.s32 %s489, 1
    %p493 = scmp.eq.s32.totalorder %s77, 1
    %p494 = scmp.ne.s32.totalorder %s489, %s491
    %p495 = scmp.eq.s32.totalorder %s77, 0
    %p496 = por %p494, %p495
    %p497 = scmp.ne.s32.totalorder %s489, %s491
    %p498 = scmp.eq.s32.totalorder %s82, 1
    %p499 = por %p497, %p498
    %p500 = scmp.ne.s32.totalorder %s491, %s492
    %p501 = scmp.eq.s32.totalorder %s82, 0
    %p502 = por %p500, %p501
    %p503 = scmp.ne.s32.totalorder %s491, %s492
    %p504 = scmp.eq.s32.totalorder %s83, 1
    %p505 = por %p503, %p504
    %p507 = scmp.ne.s32.totalorder %s492, %s506
    %p508 = scmp.eq.s32.totalorder %s83, 0
    %p509 = por %p507, %p508
    %s511 = sadd.s32 %s510, 1
    %p514 = scmp.eq.s32.totalorder %s77, 1
    %p515 = scmp.ne.s32.totalorder %s510, %s512
    %p516 = scmp.eq.s32.totalorder %s77, 0
    %p517 = por %p515, %p516
    %p518 = scmp.ne.s32.totalorder %s510, %s512
    %p519 = scmp.eq.s32.totalorder %s82, 1
    %p520 = por %p518, %p519
    %p521 = scmp.ne.s32.totalorder %s512, %s513
    %p522 = scmp.eq.s32.totalorder %s82, 0
    %p523 = por %p521, %p522
    %p524 = scmp.ne.s32.totalorder %s512, %s513
    %p525 = scmp.eq.s32.totalorder %s83, 1
    %p526 = por %p524, %p525
    %p528 = scmp.ne.s32.totalorder %s513, %s527
    %p529 = scmp.eq.s32.totalorder %s83, 0
    %p530 = por %p528, %p529
    %s532 = sadd.s32 %s531, 1
    %p535 = scmp.eq.s32.totalorder %s77, 1
    %p536 = scmp.ne.s32.totalorder %s531, %s533
    %p537 = scmp.eq.s32.totalorder %s77, 0
    %p538 = por %p536, %p537
    %p539 = scmp.ne.s32.totalorder %s531, %s533
    %p540 = scmp.eq.s32.totalorder %s82, 1
    %p541 = por %p539, %p540
    %p542 = scmp.ne.s32.totalorder %s533, %s534
    %p543 = scmp.eq.s32.totalorder %s82, 0
    %p544 = por %p542, %p543
    %p545 = scmp.ne.s32.totalorder %s533, %s534
    %p546 = scmp.eq.s32.totalorder %s83, 1
    %p547 = por %p545, %p546
    %p549 = scmp.ne.s32.totalorder %s534, %s548
    %p550 = scmp.eq.s32.totalorder %s83, 0
    %p551 = por %p549, %p550
    %s553 = sadd.s32 %s552, 1
    %p556 = scmp.eq.s32.totalorder %s77, 1
    %p557 = scmp.ne.s32.totalorder %s552, %s554
    %p558 = scmp.eq.s32.totalorder %s77, 0
    %p559 = por %p557, %p558
    %p560 = scmp.ne.s32.totalorder %s552, %s554
    %p561 = scmp.eq.s32.totalorder %s82, 1
    %p562 = por %p560, %p561
    %p563 = scmp.ne.s32.totalorder %s554, %s555
    %p564 = scmp.eq.s32.totalorder %s82, 0
    %p565 = por %p563, %p564
    %p566 = scmp.ne.s32.totalorder %s554, %s555
    %p567 = scmp.eq.s32.totalorder %s83, 1
    %p568 = por %p566, %p567
    %p570 = scmp.ne.s32.totalorder %s555, %s569
    %p571 = scmp.eq.s32.totalorder %s83, 0
    %p572 = por %p570, %p571
    %s574 = sadd.s32 %s573, 1
    %p577 = scmp.eq.s32.totalorder %s77, 1
    %p578 = scmp.ne.s32.totalorder %s573, %s575
    %p579 = scmp.eq.s32.totalorder %s77, 0
    %p580 = por %p578, %p579
    %p581 = scmp.ne.s32.totalorder %s573, %s575
    %p582 = scmp.eq.s32.totalorder %s82, 1
    %p583 = por %p581, %p582
    %p584 = scmp.ne.s32.totalorder %s575, %s576
    %p585 = scmp.eq.s32.totalorder %s82, 0
    %p586 = por %p584, %p585
    %p587 = scmp.ne.s32.totalorder %s575, %s576
    %p588 = scmp.eq.s32.totalorder %s83, 1
    %p589 = por %p587, %p588
    %p591 = scmp.ne.s32.totalorder %s576, %s590
    %p592 = scmp.eq.s32.totalorder %s83, 0
    %p593 = por %p591, %p592
    %s595 = sadd.s32 %s594, 1
    %p598 = scmp.eq.s32.totalorder %s77, 1
    %p599 = scmp.ne.s32.totalorder %s594, %s596
    %p600 = scmp.eq.s32.totalorder %s77, 0
    %p601 = por %p599, %p600
    %p602 = scmp.ne.s32.totalorder %s594, %s596
    %p603 = scmp.eq.s32.totalorder %s82, 1
    %p604 = por %p602, %p603
    %p605 = scmp.ne.s32.totalorder %s596, %s597
    %p606 = scmp.eq.s32.totalorder %s82, 0
    %p607 = por %p605, %p606
    %p608 = scmp.ne.s32.totalorder %s596, %s597
    %p609 = scmp.eq.s32.totalorder %s83, 1
    %p610 = por %p608, %p609
    %p612 = scmp.ne.s32.totalorder %s597, %s611
    %p613 = scmp.eq.s32.totalorder %s83, 0
    %p614 = por %p612, %p613
    %s616 = sadd.s32 %s615, 1
    %p619 = scmp.eq.s32.totalorder %s77, 1
    %p620 = scmp.ne.s32.totalorder %s615, %s617
    %p621 = scmp.eq.s32.totalorder %s77, 0
    %p622 = por %p620, %p621
    %p623 = scmp.ne.s32.totalorder %s615, %s617
    %p624 = scmp.eq.s32.totalorder %s82, 1
    %p625 = por %p623, %p624
    %p626 = scmp.ne.s32.totalorder %s617, %s618
    %p627 = scmp.eq.s32.totalorder %s82, 0
    %p628 = por %p626, %p627
    %p629 = scmp.ne.s32.totalorder %s617, %s618
    %p630 = scmp.eq.s32.totalorder %s83, 1
    %p631 = por %p629, %p630
    %p633 = scmp.ne.s32.totalorder %s618, %s632
    %p634 = scmp.eq.s32.totalorder %s83, 0
    %p635 = por %p633, %p634
    %s637 = sadd.s32 %s636, 1
    %p640 = scmp.eq.s32.totalorder %s77, 1
    %p641 = scmp.ne.s32.totalorder %s636, %s638
    %p642 = scmp.eq.s32.totalorder %s77, 0
    %p643 = por %p641, %p642
    %p644 = scmp.ne.s32.totalorder %s636, %s638
    %p645 = scmp.eq.s32.totalorder %s82, 1
    %p646 = por %p644, %p645
    %p647 = scmp.ne.s32.totalorder %s638, %s639
    %p648 = scmp.eq.s32.totalorder %s82, 0
    %p649 = por %p647, %p648
    %p650 = scmp.ne.s32.totalorder %s638, %s639
    %p651 = scmp.eq.s32.totalorder %s83, 1
    %p652 = por %p650, %p651
    %p654 = scmp.ne.s32.totalorder %s639, %s653
    %p655 = scmp.eq.s32.totalorder %s83, 0
    %p656 = por %p654, %p655
    %s658 = sadd.s32 %s657, 1
    %p661 = scmp.eq.s32.totalorder %s77, 1
    %p662 = scmp.ne.s32.totalorder %s657, %s659
    %p663 = scmp.eq.s32.totalorder %s77, 0
    %p664 = por %p662, %p663
    %p665 = scmp.ne.s32.totalorder %s657, %s659
    %p666 = scmp.eq.s32.totalorder %s82, 1
    %p667 = por %p665, %p666
    %p668 = scmp.ne.s32.totalorder %s659, %s660
    %p669 = scmp.eq.s32.totalorder %s82, 0
    %p670 = por %p668, %p669
    %p671 = scmp.ne.s32.totalorder %s659, %s660
    %p672 = scmp.eq.s32.totalorder %s83, 1
    %p673 = por %p671, %p672
    %p675 = scmp.ne.s32.totalorder %s660, %s674
    %p676 = scmp.eq.s32.totalorder %s83, 0
    %p677 = por %p675, %p676
    %s679 = sadd.s32 %s678, 1
    %p682 = scmp.eq.s32.totalorder %s77, 1
    %p683 = scmp.ne.s32.totalorder %s678, %s680
    %p684 = scmp.eq.s32.totalorder %s77, 0
    %p685 = por %p683, %p684
    %p686 = scmp.ne.s32.totalorder %s678, %s680
    %p687 = scmp.eq.s32.totalorder %s82, 1
    %p688 = por %p686, %p687
    %p689 = scmp.ne.s32.totalorder %s680, %s681
    %p690 = scmp.eq.s32.totalorder %s82, 0
    %p691 = por %p689, %p690
    %p692 = scmp.ne.s32.totalorder %s680, %s681
    %p693 = scmp.eq.s32.totalorder %s83, 1
    %p694 = por %p692, %p693
    %p696 = scmp.ne.s32.totalorder %s681, %s695
    %p697 = scmp.eq.s32.totalorder %s83, 0
    %p698 = por %p696, %p697
    %s700 = sadd.s32 %s699, 1
    %p703 = scmp.eq.s32.totalorder %s77, 1
    %p704 = scmp.ne.s32.totalorder %s699, %s701
    %p705 = scmp.eq.s32.totalorder %s77, 0
    %p706 = por %p704, %p705
    %p707 = scmp.ne.s32.totalorder %s699, %s701
    %p708 = scmp.eq.s32.totalorder %s82, 1
    %p709 = por %p707, %p708
    %p710 = scmp.ne.s32.totalorder %s701, %s702
    %p711 = scmp.eq.s32.totalorder %s82, 0
    %p712 = por %p710, %p711
    %p713 = scmp.ne.s32.totalorder %s701, %s702
    %p714 = scmp.eq.s32.totalorder %s83, 1
    %p715 = por %p713, %p714
    %p717 = scmp.ne.s32.totalorder %s702, %s716
    %p718 = scmp.eq.s32.totalorder %s83, 0
    %p719 = por %p717, %p718
    %s721 = sadd.s32 %s720, 1
    %p724 = scmp.eq.s32.totalorder %s77, 1
    %p725 = scmp.ne.s32.totalorder %s720, %s722
    %p726 = scmp.eq.s32.totalorder %s77, 0
    %p727 = por %p725, %p726
    %p728 = scmp.ne.s32.totalorder %s720, %s722
    %p729 = scmp.eq.s32.totalorder %s82, 1
    %p730 = por %p728, %p729
    %p731 = scmp.ne.s32.totalorder %s722, %s723
    %p732 = scmp.eq.s32.totalorder %s82, 0
    %p733 = por %p731, %p732
    %p734 = scmp.ne.s32.totalorder %s722, %s723
    %p735 = scmp.eq.s32.totalorder %s83, 1
    %p736 = por %p734, %p735
    %p738 = scmp.ne.s32.totalorder %s723, %s737
    %p739 = scmp.eq.s32.totalorder %s83, 0
    %p740 = por %p738, %p739
    %s742 = sadd.s32 %s741, 1
    %p745 = scmp.eq.s32.totalorder %s77, 1
    %p746 = scmp.ne.s32.totalorder %s741, %s743
    %p747 = scmp.eq.s32.totalorder %s77, 0
    %p748 = por %p746, %p747
    %p749 = scmp.ne.s32.totalorder %s741, %s743
    %p750 = scmp.eq.s32.totalorder %s82, 1
    %p751 = por %p749, %p750
    %p752 = scmp.ne.s32.totalorder %s743, %s744
    %p753 = scmp.eq.s32.totalorder %s82, 0
    %p754 = por %p752, %p753
    %p755 = scmp.ne.s32.totalorder %s743, %s744
    %p756 = scmp.eq.s32.totalorder %s83, 1
    %p757 = por %p755, %p756
    %p759 = scmp.ne.s32.totalorder %s744, %s758
    %p760 = scmp.eq.s32.totalorder %s83, 0
    %p761 = por %p759, %p760
    %s763 = sadd.s32 %s762, 1
    %p766 = scmp.eq.s32.totalorder %s77, 1
    %p767 = scmp.ne.s32.totalorder %s762, %s764
    %p768 = scmp.eq.s32.totalorder %s77, 0
    %p769 = por %p767, %p768
    %p770 = scmp.ne.s32.totalorder %s762, %s764
    %p771 = scmp.eq.s32.totalorder %s82, 1
    %p772 = por %p770, %p771
    %p773 = scmp.ne.s32.totalorder %s764, %s765
    %p774 = scmp.eq.s32.totalorder %s82, 0
    %p775 = por %p773, %p774
    %p776 = scmp.ne.s32.totalorder %s764, %s765
    %p777 = scmp.eq.s32.totalorder %s83, 1
    %p778 = por %p776, %p777
    %p780 = scmp.ne.s32.totalorder %s765, %s779
    %p781 = scmp.eq.s32.totalorder %s83, 0
    %p782 = por %p780, %p781
    %s784 = sadd.s32 %s783, 1
    %p787 = scmp.eq.s32.totalorder %s77, 1
    %p788 = scmp.ne.s32.totalorder %s783, %s785
    %p789 = scmp.eq.s32.totalorder %s77, 0
    %p790 = por %p788, %p789
    %p791 = scmp.ne.s32.totalorder %s783, %s785
    %p792 = scmp.eq.s32.totalorder %s82, 1
    %p793 = por %p791, %p792
    %p794 = scmp.ne.s32.totalorder %s785, %s786
    %p795 = scmp.eq.s32.totalorder %s82, 0
    %p796 = por %p794, %p795
    %p797 = scmp.ne.s32.totalorder %s785, %s786
    %p798 = scmp.eq.s32.totalorder %s83, 1
    %p799 = por %p797, %p798
    %p801 = scmp.ne.s32.totalorder %s786, %s800
    %p802 = scmp.eq.s32.totalorder %s83, 0
    %p803 = por %p801, %p802
    %s805 = sadd.s32 %s804, 1
    %p808 = scmp.eq.s32.totalorder %s77, 1
    %p809 = scmp.ne.s32.totalorder %s804, %s806
    %p810 = scmp.eq.s32.totalorder %s77, 0
    %p811 = por %p809, %p810
    %p812 = scmp.ne.s32.totalorder %s804, %s806
    %p813 = scmp.eq.s32.totalorder %s82, 1
    %p814 = por %p812, %p813
    %p815 = scmp.ne.s32.totalorder %s806, %s807
    %p816 = scmp.eq.s32.totalorder %s82, 0
    %p817 = por %p815, %p816
    %p818 = scmp.ne.s32.totalorder %s806, %s807
    %p819 = scmp.eq.s32.totalorder %s83, 1
    %p820 = por %p818, %p819
    %p822 = scmp.ne.s32.totalorder %s807, %s821
    %p823 = scmp.eq.s32.totalorder %s83, 0
    %p824 = por %p822, %p823
    %s825 = ssub.s32 %s77, %s84
    %p826 = scmp.eq.s32.totalorder %s825, 0
    %s828 = sadd.s32 %s827, 1
    %s829 = scalar_select %p826, %s827, %s828
    %p832 = pneg %p826
    %p833 = scmp.eq.s32.totalorder %s77, 1
    %p834 = por %p832, %p833
    %p835 = scmp.ne.s32.totalorder %s827, %s830
    %p836 = scmp.eq.s32.totalorder %s77, 0
    %p837 = por %p835, %p836
    %p838 = scmp.ne.s32.totalorder %s827, %s830
    %p839 = scmp.eq.s32.totalorder %s82, 1
    %p840 = por %p838, %p839
    %p841 = scmp.ne.s32.totalorder %s830, %s831
    %p842 = scmp.eq.s32.totalorder %s82, 0
    %p843 = por %p841, %p842
    %p844 = scmp.ne.s32.totalorder %s830, %s831
    %p845 = scmp.eq.s32.totalorder %s83, 1
    %p846 = por %p844, %p845
    %p848 = scmp.ne.s32.totalorder %s831, %s847
    %p849 = scmp.eq.s32.totalorder %s83, 0
    %p850 = por %p848, %p849
    %p851 = scmp.le.s32.totalorder 1, %s77
    %p852 = scmp.lt.s32.totalorder %s77, 3
    %p853 = pnand %p851, %p852
    %p854 = pneg %p853
    // Predicated region
    $region9: #{vxm_forward.1} parent=5 // pred_check
      _
    $region10: #{vxm_forward.1} parent=5 // pred_check_branch
      %856 = sbr.rel (%p853) target = $region12
    $region11: #{vxm_forward.1} parent=5 // pred_region
      %s857 = ssub.s32 %s77, 1
      // Predicated region
      $region13: #{vxm_forward.1} parent=11 // pred_check
        %p858 = pneg %p124
      $region14: #{vxm_forward.1} parent=11 // pred_check_branch
        %860 = sbr.rel (%p858) target = $region16
      $region15: #{vxm_forward.1} parent=11 // pred_region
        _
      $region16: #{vxm_forward.1} parent=11 // pred_fallthru
        _
      // Predicated region
      $region17: #{vxm_forward.1} parent=11 // pred_check
        %p861 = pneg %p145
      $region18: #{vxm_forward.1} parent=11 // pred_check_branch
        %863 = sbr.rel (%p861) target = $region20
      $region19: #{vxm_forward.1} parent=11 // pred_region
        _
      $region20: #{vxm_forward.1} parent=11 // pred_fallthru
        _
      // Predicated region
      $region21: #{vxm_forward.1} parent=11 // pred_check
        %p864 = pneg %p166
      $region22: #{vxm_forward.1} parent=11 // pred_check_branch
        %866 = sbr.rel (%p864) target = $region24
      $region23: #{vxm_forward.1} parent=11 // pred_region
        _
      $region24: #{vxm_forward.1} parent=11 // pred_fallthru
        _
      // Predicated region
      $region25: #{vxm_forward.1} parent=11 // pred_check
        %p867 = pneg %p187
      $region26: #{vxm_forward.1} parent=11 // pred_check_branch
        %869 = sbr.rel (%p867) target = $region28
      $region27: #{vxm_forward.1} parent=11 // pred_region
        _
      $region28: #{vxm_forward.1} parent=11 // pred_fallthru
        _
      // Predicated region
      $region29: #{vxm_forward.1} parent=11 // pred_check
        %p870 = pneg %p208
      $region30: #{vxm_forward.1} parent=11 // pred_check_branch
        %872 = sbr.rel (%p870) target = $region32
      $region31: #{vxm_forward.1} parent=11 // pred_region
        _
      $region32: #{vxm_forward.1} parent=11 // pred_fallthru
        _
      // Predicated region
      $region33: #{vxm_forward.1} parent=11 // pred_check
        %p873 = pneg %p229
      $region34: #{vxm_forward.1} parent=11 // pred_check_branch
        %875 = sbr.rel (%p873) target = $region36
      $region35: #{vxm_forward.1} parent=11 // pred_region
        _
      $region36: #{vxm_forward.1} parent=11 // pred_fallthru
        _
      // Predicated region
      $region37: #{vxm_forward.1} parent=11 // pred_check
        %p876 = pneg %p250
      $region38: #{vxm_forward.1} parent=11 // pred_check_branch
        %878 = sbr.rel (%p876) target = $region40
      $region39: #{vxm_forward.1} parent=11 // pred_region
        _
      $region40: #{vxm_forward.1} parent=11 // pred_fallthru
        _
      // Predicated region
      $region41: #{vxm_forward.1} parent=11 // pred_check
        %p879 = pneg %p271
      $region42: #{vxm_forward.1} parent=11 // pred_check_branch
        %881 = sbr.rel (%p879) target = $region44
      $region43: #{vxm_forward.1} parent=11 // pred_region
        _
      $region44: #{vxm_forward.1} parent=11 // pred_fallthru
        _
      // Predicated region
      $region45: #{vxm_forward.1} parent=11 // pred_check
        %p882 = pneg %p292
      $region46: #{vxm_forward.1} parent=11 // pred_check_branch
        %884 = sbr.rel (%p882) target = $region48
      $region47: #{vxm_forward.1} parent=11 // pred_region
        _
      $region48: #{vxm_forward.1} parent=11 // pred_fallthru
        _
      // Predicated region
      $region49: #{vxm_forward.1} parent=11 // pred_check
        %p885 = pneg %p313
      $region50: #{vxm_forward.1} parent=11 // pred_check_branch
        %887 = sbr.rel (%p885) target = $region52
      $region51: #{vxm_forward.1} parent=11 // pred_region
        _
      $region52: #{vxm_forward.1} parent=11 // pred_fallthru
        _
      // Predicated region
      $region53: #{vxm_forward.1} parent=11 // pred_check
        %p888 = pneg %p334
      $region54: #{vxm_forward.1} parent=11 // pred_check_branch
        %890 = sbr.rel (%p888) target = $region56
      $region55: #{vxm_forward.1} parent=11 // pred_region
        _
      $region56: #{vxm_forward.1} parent=11 // pred_fallthru
        _
      // Predicated region
      $region57: #{vxm_forward.1} parent=11 // pred_check
        %p891 = pneg %p355
      $region58: #{vxm_forward.1} parent=11 // pred_check_branch
        %893 = sbr.rel (%p891) target = $region60
      $region59: #{vxm_forward.1} parent=11 // pred_region
        _
      $region60: #{vxm_forward.1} parent=11 // pred_fallthru
        _
      // Predicated region
      $region61: #{vxm_forward.1} parent=11 // pred_check
        %p894 = pneg %p376
      $region62: #{vxm_forward.1} parent=11 // pred_check_branch
        %896 = sbr.rel (%p894) target = $region64
      $region63: #{vxm_forward.1} parent=11 // pred_region
        _
      $region64: #{vxm_forward.1} parent=11 // pred_fallthru
        _
      // Predicated region
      $region65: #{vxm_forward.1} parent=11 // pred_check
        %p897 = pneg %p397
      $region66: #{vxm_forward.1} parent=11 // pred_check_branch
        %899 = sbr.rel (%p897) target = $region68
      $region67: #{vxm_forward.1} parent=11 // pred_region
        _
      $region68: #{vxm_forward.1} parent=11 // pred_fallthru
        _
      // Predicated region
      $region69: #{vxm_forward.1} parent=11 // pred_check
        %p900 = pneg %p418
      $region70: #{vxm_forward.1} parent=11 // pred_check_branch
        %902 = sbr.rel (%p900) target = $region72
      $region71: #{vxm_forward.1} parent=11 // pred_region
        _
      $region72: #{vxm_forward.1} parent=11 // pred_fallthru
        _
      // Predicated region
      $region73: #{vxm_forward.1} parent=11 // pred_check
        %p903 = pneg %p439
      $region74: #{vxm_forward.1} parent=11 // pred_check_branch
        %905 = sbr.rel (%p903) target = $region76
      $region75: #{vxm_forward.1} parent=11 // pred_region
        _
      $region76: #{vxm_forward.1} parent=11 // pred_fallthru
        _
      // Predicated region
      $region77: #{vxm_forward.1} parent=11 // pred_check
        %p906 = pneg %p460
      $region78: #{vxm_forward.1} parent=11 // pred_check_branch
        %908 = sbr.rel (%p906) target = $region80
      $region79: #{vxm_forward.1} parent=11 // pred_region
        _
      $region80: #{vxm_forward.1} parent=11 // pred_fallthru
        _
      // Predicated region
      $region81: #{vxm_forward.1} parent=11 // pred_check
        %p909 = pneg %p481
      $region82: #{vxm_forward.1} parent=11 // pred_check_branch
        %911 = sbr.rel (%p909) target = $region84
      $region83: #{vxm_forward.1} parent=11 // pred_region
        _
      $region84: #{vxm_forward.1} parent=11 // pred_fallthru
        _
      // Predicated region
      $region85: #{vxm_forward.1} parent=11 // pred_check
        %p912 = pneg %p502
      $region86: #{vxm_forward.1} parent=11 // pred_check_branch
        %914 = sbr.rel (%p912) target = $region88
      $region87: #{vxm_forward.1} parent=11 // pred_region
        _
      $region88: #{vxm_forward.1} parent=11 // pred_fallthru
        _
      // Predicated region
      $region89: #{vxm_forward.1} parent=11 // pred_check
        %p915 = pneg %p523
      $region90: #{vxm_forward.1} parent=11 // pred_check_branch
        %917 = sbr.rel (%p915) target = $region92
      $region91: #{vxm_forward.1} parent=11 // pred_region
        _
      $region92: #{vxm_forward.1} parent=11 // pred_fallthru
        _
      // Predicated region
      $region93: #{vxm_forward.1} parent=11 // pred_check
        %p918 = pneg %p544
      $region94: #{vxm_forward.1} parent=11 // pred_check_branch
        %920 = sbr.rel (%p918) target = $region96
      $region95: #{vxm_forward.1} parent=11 // pred_region
        _
      $region96: #{vxm_forward.1} parent=11 // pred_fallthru
        _
      // Predicated region
      $region97: #{vxm_forward.1} parent=11 // pred_check
        %p921 = pneg %p565
      $region98: #{vxm_forward.1} parent=11 // pred_check_branch
        %923 = sbr.rel (%p921) target = $region100
      $region99: #{vxm_forward.1} parent=11 // pred_region
        _
      $region100: #{vxm_forward.1} parent=11 // pred_fallthru
        _
      // Predicated region
      $region101: #{vxm_forward.1} parent=11 // pred_check
        %p924 = pneg %p586
      $region102: #{vxm_forward.1} parent=11 // pred_check_branch
        %926 = sbr.rel (%p924) target = $region104
      $region103: #{vxm_forward.1} parent=11 // pred_region
        _
      $region104: #{vxm_forward.1} parent=11 // pred_fallthru
        _
      // Predicated region
      $region105: #{vxm_forward.1} parent=11 // pred_check
        %p927 = pneg %p607
      $region106: #{vxm_forward.1} parent=11 // pred_check_branch
        %929 = sbr.rel (%p927) target = $region108
      $region107: #{vxm_forward.1} parent=11 // pred_region
        _
      $region108: #{vxm_forward.1} parent=11 // pred_fallthru
        _
      // Predicated region
      $region109: #{vxm_forward.1} parent=11 // pred_check
        %p930 = pneg %p628
      $region110: #{vxm_forward.1} parent=11 // pred_check_branch
        %932 = sbr.rel (%p930) target = $region112
      $region111: #{vxm_forward.1} parent=11 // pred_region
        _
      $region112: #{vxm_forward.1} parent=11 // pred_fallthru
        _
      // Predicated region
      $region113: #{vxm_forward.1} parent=11 // pred_check
        %p933 = pneg %p649
      $region114: #{vxm_forward.1} parent=11 // pred_check_branch
        %935 = sbr.rel (%p933) target = $region116
      $region115: #{vxm_forward.1} parent=11 // pred_region
        _
      $region116: #{vxm_forward.1} parent=11 // pred_fallthru
        _
      // Predicated region
      $region117: #{vxm_forward.1} parent=11 // pred_check
        %p936 = pneg %p670
      $region118: #{vxm_forward.1} parent=11 // pred_check_branch
        %938 = sbr.rel (%p936) target = $region120
      $region119: #{vxm_forward.1} parent=11 // pred_region
        _
      $region120: #{vxm_forward.1} parent=11 // pred_fallthru
        _
      // Predicated region
      $region121: #{vxm_forward.1} parent=11 // pred_check
        %p939 = pneg %p691
      $region122: #{vxm_forward.1} parent=11 // pred_check_branch
        %941 = sbr.rel (%p939) target = $region124
      $region123: #{vxm_forward.1} parent=11 // pred_region
        _
      $region124: #{vxm_forward.1} parent=11 // pred_fallthru
        _
      // Predicated region
      $region125: #{vxm_forward.1} parent=11 // pred_check
        %p942 = pneg %p712
      $region126: #{vxm_forward.1} parent=11 // pred_check_branch
        %944 = sbr.rel (%p942) target = $region128
      $region127: #{vxm_forward.1} parent=11 // pred_region
        _
      $region128: #{vxm_forward.1} parent=11 // pred_fallthru
        _
      // Predicated region
      $region129: #{vxm_forward.1} parent=11 // pred_check
        %p945 = pneg %p733
      $region130: #{vxm_forward.1} parent=11 // pred_check_branch
        %947 = sbr.rel (%p945) target = $region132
      $region131: #{vxm_forward.1} parent=11 // pred_region
        _
      $region132: #{vxm_forward.1} parent=11 // pred_fallthru
        _
      // Predicated region
      $region133: #{vxm_forward.1} parent=11 // pred_check
        %p948 = pneg %p754
      $region134: #{vxm_forward.1} parent=11 // pred_check_branch
        %950 = sbr.rel (%p948) target = $region136
      $region135: #{vxm_forward.1} parent=11 // pred_region
        _
      $region136: #{vxm_forward.1} parent=11 // pred_fallthru
        _
      // Predicated region
      $region137: #{vxm_forward.1} parent=11 // pred_check
        %p951 = pneg %p775
      $region138: #{vxm_forward.1} parent=11 // pred_check_branch
        %953 = sbr.rel (%p951) target = $region140
      $region139: #{vxm_forward.1} parent=11 // pred_region
        _
      $region140: #{vxm_forward.1} parent=11 // pred_fallthru
        _
      // Predicated region
      $region141: #{vxm_forward.1} parent=11 // pred_check
        %p954 = pneg %p796
      $region142: #{vxm_forward.1} parent=11 // pred_check_branch
        %956 = sbr.rel (%p954) target = $region144
      $region143: #{vxm_forward.1} parent=11 // pred_region
        _
      $region144: #{vxm_forward.1} parent=11 // pred_fallthru
        _
      // Predicated region
      $region145: #{vxm_forward.1} parent=11 // pred_check
        %p957 = pneg %p817
      $region146: #{vxm_forward.1} parent=11 // pred_check_branch
        %959 = sbr.rel (%p957) target = $region148
      $region147: #{vxm_forward.1} parent=11 // pred_region
        _
      $region148: #{vxm_forward.1} parent=11 // pred_fallthru
        _
    $region12: #{vxm_forward.1} parent=5 // pred_fallthru
      _
    %p960 = scmp.lt.s32.totalorder %s77, 2
    // Predicated region
    $region149: #{vxm_forward.1} parent=5 // pred_check
      %p961 = pneg %p960
    $region150: #{vxm_forward.1} parent=5 // pred_check_branch
      %963 = sbr.rel (%p961) target = $region152
    $region151: #{vxm_forward.1} parent=5 // pred_region
      // Predicated region
      $region153: #{vxm_forward.1} parent=151 // pred_check
        %p964 = pneg %p97
      $region154: #{vxm_forward.1} parent=151 // pred_check_branch
        %966 = sbr.rel (%p964) target = $region156
      $region155: #{vxm_forward.1} parent=151 // pred_region
        %p967 = scmp.lt.s32.totalorder %s77, 1
        %s968 = scalar_select %p967, %s77, 1
        %s969 = smul.addr %s968, 32
        %s970 = smul.addr %s969, 8
        %s971 = scalar_lea.vmem %s1, %s970
      $region156: #{vxm_forward.1} parent=151 // pred_fallthru
        _
    $region152: #{vxm_forward.1} parent=5 // pred_fallthru
      _
    %p972 = scmp.le.s32.totalorder 1, %s77
    %p973 = scmp.lt.s32.totalorder %s77, 3
    %p974 = pnand %p972, %p973
    %p975 = pneg %p974
    // Predicated region
    $region157: #{vxm_forward.1} parent=5 // pred_check
      _
    $region158: #{vxm_forward.1} parent=5 // pred_check_branch
      %977 = sbr.rel (%p974) target = $region160
    $region159: #{vxm_forward.1} parent=5 // pred_region
      %s978 = ssub.s32 %s77, 1
      %p979 = scmp.lt.s32.totalorder %s82, 1
      %s980 = scalar_select %p979, %s82, 1
      %s981 = smul.addr %s980, 32
      %s982 = smul.addr %s981, 8
      %s983 = scalar_lea.vmem %s1, %s982
      %p984 = pneg %p103
      %p985 = pneg %p100
      %p986 = pneg %p124
      %p987 = pneg %p121
      %p988 = pneg %p145
      %p989 = pneg %p142
      %p990 = pneg %p166
      %p991 = pneg %p163
      %p992 = pneg %p187
      %p993 = pneg %p184
      %p994 = pneg %p208
      %p995 = pneg %p205
      %p996 = pneg %p229
      %p997 = pneg %p226
      %p998 = pneg %p250
      %p999 = pneg %p247
      %p1000 = pneg %p271
      %p1001 = pneg %p268
      %p1002 = pneg %p292
      %p1003 = pneg %p289
      %p1004 = pneg %p313
      %p1005 = pneg %p310
      %p1006 = pneg %p334
      %p1007 = pneg %p331
      %p1008 = pneg %p355
      %p1009 = pneg %p352
      %p1010 = pneg %p376
      %p1011 = pneg %p373
      %p1012 = pneg %p397
      %p1013 = pneg %p394
      %p1014 = pneg %p418
      %p1015 = pneg %p415
      %p1016 = pneg %p439
      %p1017 = pneg %p436
      %p1018 = pneg %p460
      %p1019 = pneg %p457
      %p1020 = pneg %p481
      %p1021 = pneg %p478
      %p1022 = pneg %p502
      %p1023 = pneg %p499
      %p1024 = pneg %p523
      %p1025 = pneg %p520
      %p1026 = pneg %p544
      %p1027 = pneg %p541
      %p1028 = pneg %p565
      %p1029 = pneg %p562
      %p1030 = pneg %p586
      %p1031 = pneg %p583
      %p1032 = pneg %p607
      %p1033 = pneg %p604
      %p1034 = pneg %p628
      %p1035 = pneg %p625
      %p1036 = pneg %p649
      %p1037 = pneg %p646
      %p1038 = pneg %p670
      %p1039 = pneg %p667
      %p1040 = pneg %p691
      %p1041 = pneg %p688
      %p1042 = pneg %p712
      %p1043 = pneg %p709
      %p1044 = pneg %p733
      %p1045 = pneg %p730
      %p1046 = pneg %p754
      %p1047 = pneg %p751
      %p1048 = pneg %p775
      %p1049 = pneg %p772
      %p1050 = pneg %p796
      %p1051 = pneg %p793
      %p1052 = pneg %p817
      %p1053 = pneg %p814
      %p1054 = pneg %p843
      %p1055 = pneg %p840
      %p1056 = scmp.lt.s32.totalorder %s82, 1
      %s1057 = scalar_select %p1056, %s82, 1
      %s1058 = smul.addr %s1057, 32
      %s1059 = smul.addr %s1058, 8
      %s1060 = scalar_lea.vmem %s71, %s1059
      %p1061 = scmp.lt.s32.totalorder %s82, 1
      %s1062 = scalar_select %p1061, %s82, 1
      %s1063 = smul.addr %s1062, 32
      %s1064 = smul.addr %s1063, 8
      %s1065 = scalar_lea.vmem %s1, %s1064
      %p1066 = scmp.lt.s32.totalorder %s82, 1
      %s1067 = scalar_select %p1066, %s82, 1
      %s1068 = smul.addr %s1067, 32
      %s1069 = smul.addr %s1068, 8
      %s1070 = scalar_lea.vmem %s71, %s1069
      %v1072 = vld [vmem:[%s1065] sm:$0xff]
      %v1073 = vld [vmem:[%s1065 + $0x8] sm:$0xff]
      %v1074 = vld [vmem:[%s1065 + $0x10] sm:$0xff]
      %v1075 = vld [vmem:[%s1065 + $0x18] sm:$0xff]
      %v1076 = vld [vmem:[%s1065 + $0x20] sm:$0xff]
      %v1077 = vld [vmem:[%s1065 + $0x28] sm:$0xff]
      %v1078 = vld [vmem:[%s1065 + $0x30] sm:$0xff]
      %v1079 = vld [vmem:[%s1065 + $0x38] sm:$0xff]
      %v1080 = vld [vmem:[%s1065 + $0x40] sm:$0xff]
      %v1081 = vld [vmem:[%s1065 + $0x48] sm:$0xff]
      %v1082 = vld [vmem:[%s1065 + $0x50] sm:$0xff]
      %v1083 = vld [vmem:[%s1065 + $0x58] sm:$0xff]
      %v1084 = vld [vmem:[%s1065 + $0x60] sm:$0xff]
      %v1085 = vld [vmem:[%s1065 + $0x68] sm:$0xff]
      %v1086 = vld [vmem:[%s1065 + $0x70] sm:$0xff]
      %v1087 = vld [vmem:[%s1065 + $0x78] sm:$0xff]
      %v1088 = vld [vmem:[%s1065 + $0x80] sm:$0xff]
      %v1089 = vld [vmem:[%s1065 + $0x88] sm:$0xff]
      %v1090 = vld [vmem:[%s1065 + $0x90] sm:$0xff]
      %v1091 = vld [vmem:[%s1065 + $0x98] sm:$0xff]
      %v1092 = vld [vmem:[%s1065 + $0xa0] sm:$0xff]
      %v1093 = vld [vmem:[%s1065 + $0xa8] sm:$0xff]
      %v1094 = vld [vmem:[%s1065 + $0xb0] sm:$0xff]
      %v1095 = vld [vmem:[%s1065 + $0xb8] sm:$0xff]
      %v1096 = vld [vmem:[%s1065 + $0xc0] sm:$0xff]
      %v1097 = vld [vmem:[%s1065 + $0xc8] sm:$0xff]
      %v1098 = vld [vmem:[%s1065 + $0xd0] sm:$0xff]
      %v1099 = vld [vmem:[%s1065 + $0xd8] sm:$0xff]
      %v1100 = vld [vmem:[%s1065 + $0xe0] sm:$0xff]
      %v1101 = vld [vmem:[%s1065 + $0xe8] sm:$0xff]
      %v1102 = vld [vmem:[%s1065 + $0xf0] sm:$0xff]
      %v1103 = vld [vmem:[%s1065 + $0xf8] sm:$0xff]
      %v1104 = vld [vmem:[%s55] sm:$0xff]
      %v1105 = vld [vmem:[%s55 + $0x8] sm:$0xff]
      %v1106 = vld [vmem:[%s55 + $0x10] sm:$0xff]
      %v1107 = vld [vmem:[%s55 + $0x18] sm:$0xff]
      %v1108 = vld [vmem:[%s55 + $0x20] sm:$0xff]
      %v1109 = vld [vmem:[%s55 + $0x28] sm:$0xff]
      %v1110 = vld [vmem:[%s55 + $0x30] sm:$0xff]
      %v1111 = vld [vmem:[%s55 + $0x38] sm:$0xff]
      %vm1112 = vcmp.ge.f32.partialorder %v1072, 0.0
      %vm1113 = vcmp.ge.f32.partialorder %v1073, 0.0
      %vm1114 = vcmp.ge.f32.partialorder %v1074, 0.0
      %vm1115 = vcmp.ge.f32.partialorder %v1075, 0.0
      %vm1116 = vcmp.ge.f32.partialorder %v1076, 0.0
      %vm1117 = vcmp.ge.f32.partialorder %v1077, 0.0
      %vm1118 = vcmp.ge.f32.partialorder %v1078, 0.0
      %vm1119 = vcmp.ge.f32.partialorder %v1079, 0.0
      %vm1120 = vcmp.ge.f32.partialorder %v1080, 0.0
      %vm1121 = vcmp.ge.f32.partialorder %v1081, 0.0
      %vm1122 = vcmp.ge.f32.partialorder %v1082, 0.0
      %vm1123 = vcmp.ge.f32.partialorder %v1083, 0.0
      %vm1124 = vcmp.ge.f32.partialorder %v1084, 0.0
      %vm1125 = vcmp.ge.f32.partialorder %v1085, 0.0
      %vm1126 = vcmp.ge.f32.partialorder %v1086, 0.0
      %vm1127 = vcmp.ge.f32.partialorder %v1087, 0.0
      %vm1128 = vcmp.ge.f32.partialorder %v1088, 0.0
      %vm1129 = vcmp.ge.f32.partialorder %v1089, 0.0
      %vm1130 = vcmp.ge.f32.partialorder %v1090, 0.0
      %vm1131 = vcmp.ge.f32.partialorder %v1091, 0.0
      %vm1132 = vcmp.ge.f32.partialorder %v1092, 0.0
      %vm1133 = vcmp.ge.f32.partialorder %v1093, 0.0
      %vm1134 = vcmp.ge.f32.partialorder %v1094, 0.0
      %vm1135 = vcmp.ge.f32.partialorder %v1095, 0.0
      %vm1136 = vcmp.ge.f32.partialorder %v1096, 0.0
      %vm1137 = vcmp.ge.f32.partialorder %v1097, 0.0
      %vm1138 = vcmp.ge.f32.partialorder %v1098, 0.0
      %vm1139 = vcmp.ge.f32.partialorder %v1099, 0.0
      %vm1140 = vcmp.ge.f32.partialorder %v1100, 0.0
      %vm1141 = vcmp.ge.f32.partialorder %v1101, 0.0
      %vm1142 = vcmp.ge.f32.partialorder %v1102, 0.0
      %vm1143 = vcmp.ge.f32.partialorder %v1103, 0.0
      %v1144 = vmul.f32 %v1072, 0.1
      %v1145 = vmul.f32 %v1073, 0.1
      %v1146 = vmul.f32 %v1074, 0.1
      %v1147 = vmul.f32 %v1075, 0.1
      %v1148 = vmul.f32 %v1076, 0.1
      %v1149 = vmul.f32 %v1077, 0.1
      %v1150 = vmul.f32 %v1078, 0.1
      %v1151 = vmul.f32 %v1079, 0.1
      %v1152 = vmul.f32 %v1080, 0.1
      %v1153 = vmul.f32 %v1081, 0.1
      %v1154 = vmul.f32 %v1082, 0.1
      %v1155 = vmul.f32 %v1083, 0.1
      %v1156 = vmul.f32 %v1084, 0.1
      %v1157 = vmul.f32 %v1085, 0.1
      %v1158 = vmul.f32 %v1086, 0.1
      %v1159 = vmul.f32 %v1087, 0.1
      %v1160 = vmul.f32 %v1088, 0.1
      %v1161 = vmul.f32 %v1089, 0.1
      %v1162 = vmul.f32 %v1090, 0.1
      %v1163 = vmul.f32 %v1091, 0.1
      %v1164 = vmul.f32 %v1092, 0.1
      %v1165 = vmul.f32 %v1093, 0.1
      %v1166 = vmul.f32 %v1094, 0.1
      %v1167 = vmul.f32 %v1095, 0.1
      %v1168 = vmul.f32 %v1096, 0.1
      %v1169 = vmul.f32 %v1097, 0.1
      %v1170 = vmul.f32 %v1098, 0.1
      %v1171 = vmul.f32 %v1099, 0.1
      %v1172 = vmul.f32 %v1100, 0.1
      %v1173 = vmul.f32 %v1101, 0.1
      %v1174 = vmul.f32 %v1102, 0.1
      %v1175 = vmul.f32 %v1103, 0.1
      %v1176 = vsel %vm1112, %v1072, %v1144
      %v1177 = vsel %vm1113, %v1073, %v1145
      %v1178 = vsel %vm1114, %v1074, %v1146
      %v1179 = vsel %vm1115, %v1075, %v1147
      %v1180 = vsel %vm1116, %v1076, %v1148
      %v1181 = vsel %vm1117, %v1077, %v1149
      %v1182 = vsel %vm1118, %v1078, %v1150
      %v1183 = vsel %vm1119, %v1079, %v1151
      %v1184 = vsel %vm1120, %v1080, %v1152
      %v1185 = vsel %vm1121, %v1081, %v1153
      %v1186 = vsel %vm1122, %v1082, %v1154
      %v1187 = vsel %vm1123, %v1083, %v1155
      %v1188 = vsel %vm1124, %v1084, %v1156
      %v1189 = vsel %vm1125, %v1085, %v1157
      %v1190 = vsel %vm1126, %v1086, %v1158
      %v1191 = vsel %vm1127, %v1087, %v1159
      %v1192 = vsel %vm1128, %v1088, %v1160
      %v1193 = vsel %vm1129, %v1089, %v1161
      %v1194 = vsel %vm1130, %v1090, %v1162
      %v1195 = vsel %vm1131, %v1091, %v1163
      %v1196 = vsel %vm1132, %v1092, %v1164
      %v1197 = vsel %vm1133, %v1093, %v1165
      %v1198 = vsel %vm1134, %v1094, %v1166
      %v1199 = vsel %vm1135, %v1095, %v1167
      %v1200 = vsel %vm1136, %v1096, %v1168
      %v1201 = vsel %vm1137, %v1097, %v1169
      %v1202 = vsel %vm1138, %v1098, %v1170
      %v1203 = vsel %vm1139, %v1099, %v1171
      %v1204 = vsel %vm1140, %v1100, %v1172
      %v1205 = vsel %vm1141, %v1101, %v1173
      %v1206 = vsel %vm1142, %v1102, %v1174
      %v1207 = vsel %vm1143, %v1103, %v1175
      %v1208 = vpack.c.bf16 %v1177, %v1176
      %v1209 = vpack.c.bf16 %v1179, %v1178
      %v1210 = vpack.c.bf16 %v1181, %v1180
      %v1211 = vpack.c.bf16 %v1183, %v1182
      %v1212 = vpack.c.bf16 %v1185, %v1184
      %v1213 = vpack.c.bf16 %v1187, %v1186
      %v1214 = vpack.c.bf16 %v1189, %v1188
      %v1215 = vpack.c.bf16 %v1191, %v1190
      %v1216 = vpack.c.bf16 %v1193, %v1192
      %v1217 = vpack.c.bf16 %v1195, %v1194
      %v1218 = vpack.c.bf16 %v1197, %v1196
      %v1219 = vpack.c.bf16 %v1199, %v1198
      %v1220 = vpack.c.bf16 %v1201, %v1200
      %v1221 = vpack.c.bf16 %v1203, %v1202
      %v1222 = vpack.c.bf16 %v1205, %v1204
      %v1223 = vpack.c.bf16 %v1207, %v1206
      %v1225 = vshrl.u32 0, 16
      %v1227 = vrot.slane %v1225, 7
      %v1228 = vshll.u32 0, 16
      %v1230 = vor.u32 %v1227, %v1228
      %v1232 = vshrl.u32 %v1209, 16
      %v1234 = vrot.slane %v1232, 7
      %v1235 = vshll.u32 %v1209, 16
      %v1237 = vor.u32 %v1234, %v1235
      %v1239 = vshrl.u32 %v1211, 16
      %v1241 = vrot.slane %v1239, 7
      %v1242 = vshll.u32 %v1211, 16
      %v1244 = vor.u32 %v1241, %v1242
      %v1246 = vshrl.u32 %v1213, 16
      %v1248 = vrot.slane %v1246, 7
      %v1249 = vshll.u32 %v1213, 16
      %v1251 = vor.u32 %v1248, %v1249
      %v1253 = vshrl.u32 %v1215, 16
      %v1255 = vrot.slane %v1253, 7
      %v1256 = vshll.u32 %v1215, 16
      %v1258 = vor.u32 %v1255, %v1256
      %v1260 = vshrl.u32 %v1217, 16
      %v1262 = vrot.slane %v1260, 7
      %v1263 = vshll.u32 %v1217, 16
      %v1265 = vor.u32 %v1262, %v1263
      %v1267 = vshrl.u32 %v1219, 16
      %v1269 = vrot.slane %v1267, 7
      %v1270 = vshll.u32 %v1219, 16
      %v1272 = vor.u32 %v1269, %v1270
      %v1274 = vshrl.u32 %v1221, 16
      %v1276 = vrot.slane %v1274, 7
      %v1277 = vshll.u32 %v1221, 16
      %v1279 = vor.u32 %v1276, %v1277
      %vm1296 = vcmask 1040384
      %vm1297 = vsmask.f32 256
      %vm1298 = vmand %vm1296, %vm1297
      %v1299 = vsel %vm1298, 0, %v1230
      %v1300 = vsel %vm1298, 0, %v1237
      %v1301 = vsel %vm1298, 0, %v1244
      %v1302 = vsel %vm1298, 0, %v1251
      %v1303 = vsel %vm1298, 0, %v1258
      %v1304 = vsel %vm1298, 0, %v1265
      %v1305 = vsel %vm1298, 0, %v1272
      %v1306 = vsel %vm1298, 0, %v1279
      %v1307 = vsel %vm1298, %v1227, 0
      %v1308 = vsel %vm1298, %v1234, 0
      %v1309 = vsel %vm1298, %v1241, 0
      %v1310 = vsel %vm1298, %v1248, 0
      %v1311 = vsel %vm1298, %v1255, 0
      %v1312 = vsel %vm1298, %v1262, 0
      %v1313 = vsel %vm1298, %v1269, 0
      %v1314 = vsel %vm1298, %v1276, 0
      %v1316 = vshrl.u32 %v1208, 16
      %v1318 = vrot.slane %v1316, 7
      %v1319 = vshll.u32 %v1208, 16
      %v1321 = vor.u32 %v1318, %v1319
      %v1323 = vshrl.u32 %v1210, 16
      %v1325 = vrot.slane %v1323, 7
      %v1326 = vshll.u32 %v1210, 16
      %v1328 = vor.u32 %v1325, %v1326
      %v1330 = vshrl.u32 %v1212, 16
      %v1332 = vrot.slane %v1330, 7
      %v1333 = vshll.u32 %v1212, 16
      %v1335 = vor.u32 %v1332, %v1333
      %v1337 = vshrl.u32 %v1214, 16
      %v1339 = vrot.slane %v1337, 7
      %v1340 = vshll.u32 %v1214, 16
      %v1342 = vor.u32 %v1339, %v1340
      %v1344 = vshrl.u32 %v1216, 16
      %v1346 = vrot.slane %v1344, 7
      %v1347 = vshll.u32 %v1216, 16
      %v1349 = vor.u32 %v1346, %v1347
      %v1351 = vshrl.u32 %v1218, 16
      %v1353 = vrot.slane %v1351, 7
      %v1354 = vshll.u32 %v1218, 16
      %v1356 = vor.u32 %v1353, %v1354
      %v1358 = vshrl.u32 %v1220, 16
      %v1360 = vrot.slane %v1358, 7
      %v1361 = vshll.u32 %v1220, 16
      %v1363 = vor.u32 %v1360, %v1361
      %v1365 = vshrl.u32 %v1222, 16
      %v1367 = vrot.slane %v1365, 7
      %v1368 = vshll.u32 %v1222, 16
      %v1370 = vor.u32 %v1367, %v1368
      %v1387 = vsel %vm1298, 0, %v1321
      %v1388 = vsel %vm1298, 0, %v1328
      %v1389 = vsel %vm1298, 0, %v1335
      %v1390 = vsel %vm1298, 0, %v1342
      %v1391 = vsel %vm1298, 0, %v1349
      %v1392 = vsel %vm1298, 0, %v1356
      %v1393 = vsel %vm1298, 0, %v1363
      %v1394 = vsel %vm1298, 0, %v1370
      %v1395 = vsel %vm1298, %v1318, 0
      %v1396 = vsel %vm1298, %v1325, 0
      %v1397 = vsel %vm1298, %v1332, 0
      %v1398 = vsel %vm1298, %v1339, 0
      %v1399 = vsel %vm1298, %v1346, 0
      %v1400 = vsel %vm1298, %v1353, 0
      %v1401 = vsel %vm1298, %v1360, 0
      %v1402 = vsel %vm1298, %v1367, 0
      %v1404 = vshrl.u32 %v1223, 16
      %v1406 = vrot.slane %v1404, 7
      %v1407 = vshll.u32 %v1223, 16
      %v1409 = vor.u32 %v1406, %v1407
      %v1412 = vsel %vm1298, 0, %v1409
      %v1413 = vsel %vm1298, %v1406, 0
      %vm1414 = vsmask.f32 7424
      %v1416 = vshrl.u32 %v1299, 16
      %v1418 = vshll.u32 %v1299, 16
      %v1420 = vrot.slane %v1418, 1
      %v1421 = vor.u32 %v1416, %v1420
      %v1423 = vshll.u32 %v1307, 16
      %v1425 = vrot.slane %v1423, 1
      %v1426 = vsel %vm1414, %v1421, %v1425
      %v1428 = vshrl.u32 %v1300, 16
      %v1430 = vshll.u32 %v1300, 16
      %v1432 = vrot.slane %v1430, 1
      %v1433 = vor.u32 %v1428, %v1432
      %v1435 = vshll.u32 %v1308, 16
      %v1437 = vrot.slane %v1435, 1
      %v1438 = vsel %vm1414, %v1433, %v1437
      %v1440 = vshrl.u32 %v1301, 16
      %v1442 = vshll.u32 %v1301, 16
      %v1444 = vrot.slane %v1442, 1
      %v1445 = vor.u32 %v1440, %v1444
      %v1447 = vshll.u32 %v1309, 16
      %v1449 = vrot.slane %v1447, 1
      %v1450 = vsel %vm1414, %v1445, %v1449
      %v1452 = vshrl.u32 %v1302, 16
      %v1454 = vshll.u32 %v1302, 16
      %v1456 = vrot.slane %v1454, 1
      %v1457 = vor.u32 %v1452, %v1456
      %v1459 = vshll.u32 %v1310, 16
      %v1461 = vrot.slane %v1459, 1
      %v1462 = vsel %vm1414, %v1457, %v1461
      %v1464 = vshrl.u32 %v1303, 16
      %v1466 = vshll.u32 %v1303, 16
      %v1468 = vrot.slane %v1466, 1
      %v1469 = vor.u32 %v1464, %v1468
      %v1471 = vshll.u32 %v1311, 16
      %v1473 = vrot.slane %v1471, 1
      %v1474 = vsel %vm1414, %v1469, %v1473
      %v1476 = vshrl.u32 %v1304, 16
      %v1478 = vshll.u32 %v1304, 16
      %v1480 = vrot.slane %v1478, 1
      %v1481 = vor.u32 %v1476, %v1480
      %v1483 = vshll.u32 %v1312, 16
      %v1485 = vrot.slane %v1483, 1
      %v1486 = vsel %vm1414, %v1481, %v1485
      %v1488 = vshrl.u32 %v1305, 16
      %v1490 = vshll.u32 %v1305, 16
      %v1492 = vrot.slane %v1490, 1
      %v1493 = vor.u32 %v1488, %v1492
      %v1495 = vshll.u32 %v1313, 16
      %v1497 = vrot.slane %v1495, 1
      %v1498 = vsel %vm1414, %v1493, %v1497
      %v1500 = vshrl.u32 %v1306, 16
      %v1502 = vshll.u32 %v1306, 16
      %v1504 = vrot.slane %v1502, 1
      %v1505 = vor.u32 %v1500, %v1504
      %v1507 = vshll.u32 %v1314, 16
      %v1509 = vrot.slane %v1507, 1
      %v1510 = vsel %vm1414, %v1505, %v1509
      %1511 = vrot.lane.b32.xlu0 %v1426, 2
      %v1512 = vpop.permute.xlu0 %1511
      %1513 = vrot.lane.b32.xlu0 %v1438, 2
      %v1514 = vpop.permute.xlu0 %1513
      %1515 = vrot.lane.b32.xlu0 %v1450, 2
      %v1516 = vpop.permute.xlu0 %1515
      %1517 = vrot.lane.b32.xlu0 %v1462, 2
      %v1518 = vpop.permute.xlu0 %1517
      %1519 = vrot.lane.b32.xlu0 %v1474, 2
      %v1520 = vpop.permute.xlu0 %1519
      %1521 = vrot.lane.b32.xlu0 %v1486, 2
      %v1522 = vpop.permute.xlu0 %1521
      %1523 = vrot.lane.b32.xlu0 %v1498, 2
      %v1524 = vpop.permute.xlu0 %1523
      %1525 = vrot.lane.b32.xlu0 %v1510, 2
      %v1526 = vpop.permute.xlu0 %1525
      %vm1543 = vcmask 1046528
      %v1544 = vrot.slane %v1299, 1
      %v1545 = vrot.slane %v1307, 1
      %v1546 = vsel %vm1543, %v1544, %v1545
      %v1547 = vrot.slane %v1300, 1
      %v1548 = vrot.slane %v1308, 1
      %v1549 = vsel %vm1543, %v1547, %v1548
      %v1550 = vrot.slane %v1301, 1
      %v1551 = vrot.slane %v1309, 1
      %v1552 = vsel %vm1543, %v1550, %v1551
      %v1553 = vrot.slane %v1302, 1
      %v1554 = vrot.slane %v1310, 1
      %v1555 = vsel %vm1543, %v1553, %v1554
      %v1556 = vrot.slane %v1303, 1
      %v1557 = vrot.slane %v1311, 1
      %v1558 = vsel %vm1543, %v1556, %v1557
      %v1559 = vrot.slane %v1304, 1
      %v1560 = vrot.slane %v1312, 1
      %v1561 = vsel %vm1543, %v1559, %v1560
      %v1562 = vrot.slane %v1305, 1
      %v1563 = vrot.slane %v1313, 1
      %v1564 = vsel %vm1543, %v1562, %v1563
      %v1565 = vrot.slane %v1306, 1
      %v1566 = vrot.slane %v1314, 1
      %v1567 = vsel %vm1543, %v1565, %v1566
      %1568 = vrot.lane.b32.xlu0 %v1546, 4
      %v1569 = vpop.permute.xlu0 %1568
      %1570 = vrot.lane.b32.xlu0 %v1549, 4
      %v1571 = vpop.permute.xlu0 %1570
      %1572 = vrot.lane.b32.xlu0 %v1552, 4
      %v1573 = vpop.permute.xlu0 %1572
      %1574 = vrot.lane.b32.xlu0 %v1555, 4
      %v1575 = vpop.permute.xlu0 %1574
      %1576 = vrot.lane.b32.xlu0 %v1558, 4
      %v1577 = vpop.permute.xlu0 %1576
      %1578 = vrot.lane.b32.xlu0 %v1561, 4
      %v1579 = vpop.permute.xlu0 %1578
      %1580 = vrot.lane.b32.xlu0 %v1564, 4
      %v1581 = vpop.permute.xlu0 %1580
      %1582 = vrot.lane.b32.xlu0 %v1567, 4
      %v1583 = vpop.permute.xlu0 %1582
      %1592 = vrot.lane.b32.xlu0 %v1387, 6
      %v1593 = vpop.permute.xlu0 %1592
      %1594 = vrot.lane.b32.xlu0 %v1388, 6
      %v1595 = vpop.permute.xlu0 %1594
      %1596 = vrot.lane.b32.xlu0 %v1389, 6
      %v1597 = vpop.permute.xlu0 %1596
      %1598 = vrot.lane.b32.xlu0 %v1390, 6
      %v1599 = vpop.permute.xlu0 %1598
      %1600 = vrot.lane.b32.xlu0 %v1391, 6
      %v1601 = vpop.permute.xlu0 %1600
      %1602 = vrot.lane.b32.xlu0 %v1392, 6
      %v1603 = vpop.permute.xlu0 %1602
      %1604 = vrot.lane.b32.xlu0 %v1393, 6
      %v1605 = vpop.permute.xlu0 %1604
      %1606 = vrot.lane.b32.xlu0 %v1394, 6
      %v1607 = vpop.permute.xlu0 %1606
      %v1609 = vshrl.u32 %v1387, 16
      %v1611 = vshll.u32 %v1387, 16
      %v1613 = vrot.slane %v1611, 1
      %v1614 = vor.u32 %v1609, %v1613
      %v1616 = vshll.u32 %v1395, 16
      %v1618 = vrot.slane %v1616, 1
      %v1619 = vsel %vm1414, %v1614, %v1618
      %v1621 = vshrl.u32 %v1388, 16
      %v1623 = vshll.u32 %v1388, 16
      %v1625 = vrot.slane %v1623, 1
      %v1626 = vor.u32 %v1621, %v1625
      %v1628 = vshll.u32 %v1396, 16
      %v1630 = vrot.slane %v1628, 1
      %v1631 = vsel %vm1414, %v1626, %v1630
      %v1633 = vshrl.u32 %v1389, 16
      %v1635 = vshll.u32 %v1389, 16
      %v1637 = vrot.slane %v1635, 1
      %v1638 = vor.u32 %v1633, %v1637
      %v1640 = vshll.u32 %v1397, 16
      %v1642 = vrot.slane %v1640, 1
      %v1643 = vsel %vm1414, %v1638, %v1642
      %v1645 = vshrl.u32 %v1390, 16
      %v1647 = vshll.u32 %v1390, 16
      %v1649 = vrot.slane %v1647, 1
      %v1650 = vor.u32 %v1645, %v1649
      %v1652 = vshll.u32 %v1398, 16
      %v1654 = vrot.slane %v1652, 1
      %v1655 = vsel %vm1414, %v1650, %v1654
      %v1657 = vshrl.u32 %v1391, 16
      %v1659 = vshll.u32 %v1391, 16
      %v1661 = vrot.slane %v1659, 1
      %v1662 = vor.u32 %v1657, %v1661
      %v1664 = vshll.u32 %v1399, 16
      %v1666 = vrot.slane %v1664, 1
      %v1667 = vsel %vm1414, %v1662, %v1666
      %v1669 = vshrl.u32 %v1392, 16
      %v1671 = vshll.u32 %v1392, 16
      %v1673 = vrot.slane %v1671, 1
      %v1674 = vor.u32 %v1669, %v1673
      %v1676 = vshll.u32 %v1400, 16
      %v1678 = vrot.slane %v1676, 1
      %v1679 = vsel %vm1414, %v1674, %v1678
      %v1681 = vshrl.u32 %v1393, 16
      %v1683 = vshll.u32 %v1393, 16
      %v1685 = vrot.slane %v1683, 1
      %v1686 = vor.u32 %v1681, %v1685
      %v1688 = vshll.u32 %v1401, 16
      %v1690 = vrot.slane %v1688, 1
      %v1691 = vsel %vm1414, %v1686, %v1690
      %v1693 = vshrl.u32 %v1394, 16
      %v1695 = vshll.u32 %v1394, 16
      %v1697 = vrot.slane %v1695, 1
      %v1698 = vor.u32 %v1693, %v1697
      %v1700 = vshll.u32 %v1402, 16
      %v1702 = vrot.slane %v1700, 1
      %v1703 = vsel %vm1414, %v1698, %v1702
      %1704 = vrot.lane.b32.xlu0 %v1619, 8
      %v1705 = vpop.permute.xlu0 %1704
      %1706 = vrot.lane.b32.xlu0 %v1631, 8
      %v1707 = vpop.permute.xlu0 %1706
      %1708 = vrot.lane.b32.xlu0 %v1643, 8
      %v1709 = vpop.permute.xlu0 %1708
      %1710 = vrot.lane.b32.xlu0 %v1655, 8
      %v1711 = vpop.permute.xlu0 %1710
      %1712 = vrot.lane.b32.xlu0 %v1667, 8
      %v1713 = vpop.permute.xlu0 %1712
      %1714 = vrot.lane.b32.xlu0 %v1679, 8
      %v1715 = vpop.permute.xlu0 %1714
      %1716 = vrot.lane.b32.xlu0 %v1691, 8
      %v1717 = vpop.permute.xlu0 %1716
      %1718 = vrot.lane.b32.xlu0 %v1703, 8
      %v1719 = vpop.permute.xlu0 %1718
      %v1728 = vrot.slane %v1387, 1
      %v1729 = vrot.slane %v1395, 1
      %v1730 = vsel %vm1543, %v1728, %v1729
      %v1731 = vrot.slane %v1388, 1
      %v1732 = vrot.slane %v1396, 1
      %v1733 = vsel %vm1543, %v1731, %v1732
      %v1734 = vrot.slane %v1389, 1
      %v1735 = vrot.slane %v1397, 1
      %v1736 = vsel %vm1543, %v1734, %v1735
      %v1737 = vrot.slane %v1390, 1
      %v1738 = vrot.slane %v1398, 1
      %v1739 = vsel %vm1543, %v1737, %v1738
      %v1740 = vrot.slane %v1391, 1
      %v1741 = vrot.slane %v1399, 1
      %v1742 = vsel %vm1543, %v1740, %v1741
      %v1743 = vrot.slane %v1392, 1
      %v1744 = vrot.slane %v1400, 1
      %v1745 = vsel %vm1543, %v1743, %v1744
      %v1746 = vrot.slane %v1393, 1
      %v1747 = vrot.slane %v1401, 1
      %v1748 = vsel %vm1543, %v1746, %v1747
      %v1749 = vrot.slane %v1394, 1
      %v1750 = vrot.slane %v1402, 1
      %v1751 = vsel %vm1543, %v1749, %v1750
      %1752 = vrot.lane.b32.xlu0 %v1730, 10
      %v1753 = vpop.permute.xlu0 %1752
      %1754 = vrot.lane.b32.xlu0 %v1733, 10
      %v1755 = vpop.permute.xlu0 %1754
      %1756 = vrot.lane.b32.xlu0 %v1736, 10
      %v1757 = vpop.permute.xlu0 %1756
      %1758 = vrot.lane.b32.xlu0 %v1739, 10
      %v1759 = vpop.permute.xlu0 %1758
      %1760 = vrot.lane.b32.xlu0 %v1742, 10
      %v1761 = vpop.permute.xlu0 %1760
      %1762 = vrot.lane.b32.xlu0 %v1745, 10
      %v1763 = vpop.permute.xlu0 %1762
      %1764 = vrot.lane.b32.xlu0 %v1748, 10
      %v1765 = vpop.permute.xlu0 %1764
      %1766 = vrot.lane.b32.xlu0 %v1751, 10
      %v1767 = vpop.permute.xlu0 %1766
      %1769 = vrot.lane.b32.xlu0 %v1300, 12
      %v1770 = vpop.permute.xlu0 %1769
      %1771 = vrot.lane.b32.xlu0 %v1301, 12
      %v1772 = vpop.permute.xlu0 %1771
      %1773 = vrot.lane.b32.xlu0 %v1302, 12
      %v1774 = vpop.permute.xlu0 %1773
      %1775 = vrot.lane.b32.xlu0 %v1303, 12
      %v1776 = vpop.permute.xlu0 %1775
      %1777 = vrot.lane.b32.xlu0 %v1304, 12
      %v1778 = vpop.permute.xlu0 %1777
      %1779 = vrot.lane.b32.xlu0 %v1305, 12
      %v1780 = vpop.permute.xlu0 %1779
      %1781 = vrot.lane.b32.xlu0 %v1306, 12
      %v1782 = vpop.permute.xlu0 %1781
      %1783 = vrot.lane.b32.xlu0 %v1412, 12
      %v1784 = vpop.permute.xlu0 %1783
      %v1786 = vshrl.u32 %v1412, 16
      %v1788 = vshll.u32 %v1412, 16
      %v1790 = vrot.slane %v1788, 1
      %v1791 = vor.u32 %v1786, %v1790
      %v1793 = vshll.u32 %v1413, 16
      %v1795 = vrot.slane %v1793, 1
      %v1796 = vsel %vm1414, %v1791, %v1795
      %1797 = vrot.lane.b32.xlu0 %v1438, 14
      %v1798 = vpop.permute.xlu0 %1797
      %1799 = vrot.lane.b32.xlu0 %v1450, 14
      %v1800 = vpop.permute.xlu0 %1799
      %1801 = vrot.lane.b32.xlu0 %v1462, 14
      %v1802 = vpop.permute.xlu0 %1801
      %1803 = vrot.lane.b32.xlu0 %v1474, 14
      %v1804 = vpop.permute.xlu0 %1803
      %1805 = vrot.lane.b32.xlu0 %v1486, 14
      %v1806 = vpop.permute.xlu0 %1805
      %1807 = vrot.lane.b32.xlu0 %v1498, 14
      %v1808 = vpop.permute.xlu0 %1807
      %1809 = vrot.lane.b32.xlu0 %v1510, 14
      %v1810 = vpop.permute.xlu0 %1809
      %1811 = vrot.lane.b32.xlu0 %v1796, 14
      %v1812 = vpop.permute.xlu0 %1811
      %v1814 = vrot.slane %v1412, 1
      %v1815 = vrot.slane %v1413, 1
      %v1816 = vsel %vm1543, %v1814, %v1815
      %1817 = vrot.lane.b32.xlu0 %v1549, 16
      %v1818 = vpop.permute.xlu0 %1817
      %1819 = vrot.lane.b32.xlu0 %v1552, 16
      %v1820 = vpop.permute.xlu0 %1819
      %1821 = vrot.lane.b32.xlu0 %v1555, 16
      %v1822 = vpop.permute.xlu0 %1821
      %1823 = vrot.lane.b32.xlu0 %v1558, 16
      %v1824 = vpop.permute.xlu0 %1823
      %1825 = vrot.lane.b32.xlu0 %v1561, 16
      %v1826 = vpop.permute.xlu0 %1825
      %1827 = vrot.lane.b32.xlu0 %v1564, 16
      %v1828 = vpop.permute.xlu0 %1827
      %1829 = vrot.lane.b32.xlu0 %v1567, 16
      %v1830 = vpop.permute.xlu0 %1829
      %1831 = vrot.lane.b32.xlu0 %v1816, 16
      %v1832 = vpop.permute.xlu0 %1831
      %vm1833 = vcmask 15360
      %v1835 = vsel %vm1833, %v1299, %v1512
      %v1837 = vsel %vm1833, %v1300, %v1514
      %v1839 = vsel %vm1833, %v1301, %v1516
      %v1841 = vsel %vm1833, %v1302, %v1518
      %v1843 = vsel %vm1833, %v1303, %v1520
      %v1845 = vsel %vm1833, %v1304, %v1522
      %v1847 = vsel %vm1833, %v1305, %v1524
      %v1849 = vsel %vm1833, %v1306, %v1526
      %vm1850 = vcmask 31744
      %v1852 = vsel %vm1850, %v1835, %v1569
      %v1854 = vsel %vm1850, %v1837, %v1571
      %v1856 = vsel %vm1850, %v1839, %v1573
      %v1858 = vsel %vm1850, %v1841, %v1575
      %v1860 = vsel %vm1850, %v1843, %v1577
      %v1862 = vsel %vm1850, %v1845, %v1579
      %v1864 = vsel %vm1850, %v1847, %v1581
      %v1866 = vsel %vm1850, %v1849, %v1583
      %vm1867 = vcmask 48128
      %v1869 = vsel %vm1867, %v1852, %v1593
      %v1871 = vsel %vm1867, %v1854, %v1595
      %v1873 = vsel %vm1867, %v1856, %v1597
      %v1875 = vsel %vm1867, %v1858, %v1599
      %v1877 = vsel %vm1867, %v1860, %v1601
      %v1879 = vsel %vm1867, %v1862, %v1603
      %v1881 = vsel %vm1867, %v1864, %v1605
      %v1883 = vsel %vm1867, %v1866, %v1607
      %vm1884 = vcmask 64512
      %v1886 = vsel %vm1884, %v1869, %v1705
      %v1888 = vsel %vm1884, %v1871, %v1707
      %v1890 = vsel %vm1884, %v1873, %v1709
      %v1892 = vsel %vm1884, %v1875, %v1711
      %v1894 = vsel %vm1884, %v1877, %v1713
      %v1896 = vsel %vm1884, %v1879, %v1715
      %v1898 = vsel %vm1884, %v1881, %v1717
      %v1900 = vsel %vm1884, %v1883, %v1719
      %vm1901 = vcmask 80896
      %v1903 = vsel %vm1901, %v1886, %v1753
      %v1905 = vsel %vm1901, %v1888, %v1755
      %v1907 = vsel %vm1901, %v1890, %v1757
      %v1909 = vsel %vm1901, %v1892, %v1759
      %v1911 = vsel %vm1901, %v1894, %v1761
      %v1913 = vsel %vm1901, %v1896, %v1763
      %v1915 = vsel %vm1901, %v1898, %v1765
      %v1917 = vsel %vm1901, %v1900, %v1767
      %vm1918 = vcmask 97280
      %v1920 = vsel %vm1918, %v1903, %v1770
      %v1922 = vsel %vm1918, %v1905, %v1772
      %v1924 = vsel %vm1918, %v1907, %v1774
      %v1926 = vsel %vm1918, %v1909, %v1776
      %v1928 = vsel %vm1918, %v1911, %v1778
      %v1930 = vsel %vm1918, %v1913, %v1780
      %v1932 = vsel %vm1918, %v1915, %v1782
      %v1934 = vsel %vm1918, %v1917, %v1784
      %vm1935 = vcmask 113664
      %v1937 = vsel %vm1935, %v1920, %v1798
      %v1939 = vsel %vm1935, %v1922, %v1800
      %v1941 = vsel %vm1935, %v1924, %v1802
      %v1943 = vsel %vm1935, %v1926, %v1804
      %v1945 = vsel %vm1935, %v1928, %v1806
      %v1947 = vsel %vm1935, %v1930, %v1808
      %v1949 = vsel %vm1935, %v1932, %v1810
      %v1951 = vsel %vm1935, %v1934, %v1812
      %vm1952 = vcmask 130048
      %v1954 = vsel %vm1952, %v1937, %v1818
      %v1956 = vsel %vm1952, %v1939, %v1820
      %v1958 = vsel %vm1952, %v1941, %v1822
      %v1960 = vsel %vm1952, %v1943, %v1824
      %v1962 = vsel %vm1952, %v1945, %v1826
      %v1964 = vsel %vm1952, %v1947, %v1828
      %v1966 = vsel %vm1952, %v1949, %v1830
      %v1968 = vsel %vm1952, %v1951, %v1832
      %v1969 = vld [vmem:[%s3] sm:$0xf]
      %v1970 = vld [vmem:[%s3 + $0x4] sm:$0xf]
      %v1971 = vld [vmem:[%s3 + $0x8] sm:$0x1]
      %v1972 = vld [vmem:[%s5] sm:$0x1]
      %v1974 = vlaneseq
      %v1975 = vshrl.u32 %v1974, 7
      %v1976 = vsub.s32 0, %v1975
      %v1977 = vrot.slane %v1972, %v1976
      %v1982 = vunpack.c.l.b16 %v1969
      %v1983 = vunpack.c.l.b16 %v1970
      %v1984 = vunpack.c.l.b16 %v1971
      %v1985 = vpack.c.b16 %v1983, %v1982
      %v1986 = vpack.c.b16 %v1984, %v1984
      %vm1988 = vcmask 146432
      %v1989 = vsel %vm1988, %v1954, 0
      %v1991 = vsel %vm1988, %v1956, 0
      %v1993 = vsel %vm1988, %v1958, 0
      %v1995 = vsel %vm1988, %v1960, 0
      %v1997 = vsel %vm1988, %v1962, 0
      %v1999 = vsel %vm1988, %v1964, 0
      %v2001 = vsel %vm1988, %v1966, 0
      %v2003 = vsel %vm1988, %v1968, 0
      %vm2005 = vcmask 1040384
      %v2007 = vsel %vm2005, %v1986, 0
      %2009 = vmatprep.subr.bf16.mxu0 0
      %2010 = vmatpush1.bf16.msra.mxu0 0
      %2011 = vmatprep.subr.bf16.mxu0 0
      %2012 = vmatpush1.bf16.msra.mxu0 0
      %2013 = vmatprep.subr.bf16.mxu0 0
      %2014 = vmatpush1.bf16.msra.mxu0 0
      %2015 = vmatprep.subr.bf16.mxu0 0
      %2016 = vmatpush1.bf16.msra.mxu0 0
      %2017 = vmatprep.subr.bf16.mxu0 0
      %2018 = vmatpush1.bf16.msra.mxu0 0
      %2019 = vmatprep.subr.bf16.mxu0 0
      %2020 = vmatpush1.bf16.msra.mxu0 0
      %2021 = vmatprep.subr.bf16.mxu0 0
      %2022 = vmatpush1.bf16.msra.mxu0 %v2007
      %2023 = vmatprep.subr.bf16.mxu0 0
      %2024 = vmatpush1.bf16.msra.mxu0 %v1985
      %2025 = vmatprep.subr.bf16.mxu0 0
      %2026 = vmatpush2.bf16.msra.mxu0 0
      %2027 = vmatprep.subr.bf16.mxu0 0
      %2028 = vmatpush2.bf16.msra.mxu0 0
      %2029 = vmatprep.subr.bf16.mxu0 0
      %2030 = vmatpush2.bf16.msra.mxu0 0
      %2031 = vmatprep.subr.bf16.mxu0 0
      %2032 = vmatpush2.bf16.msra.mxu0 0
      %2033 = vmatprep.subr.bf16.mxu0 0
      %2034 = vmatpush2.bf16.msra.mxu0 0
      %2035 = vmatprep.subr.bf16.mxu0 0
      %2036 = vmatpush2.bf16.msra.mxu0 0
      %2037 = vmatprep.subr.bf16.mxu0 0
      %2038 = vmatpush2.bf16.msra.mxu0 0
      %2039 = vmatprep.subr.bf16.mxu0 0
      %2040 = vmatpush2.bf16.msra.mxu0 0
      %2041 = vmatprep.mubr.bf16.mxu0 0
      %2042 = vmatmul.mubr.bf16.gmra.mxu0 %v1989
      %v2043 = vpop.f32.mrf.mxu0
      %v2044 = vadd.f32 %v1977, %v2043
      %v2045 = vpop.f32.mrf.mxu0
      %v2046 = vpop.f32.mrf.mxu0
      %v2047 = vadd.f32 %v1977, %v2046
      %v2048 = vpop.f32.mrf.mxu0
      %2049 = vmatprep.mubr.bf16.mxu0 0
      %2050 = vmatmul.mubr.bf16.gmra.mxu0 %v1991
      %v2051 = vpop.f32.mrf.mxu0
      %v2052 = vadd.f32 %v1977, %v2051
      %v2053 = vpop.f32.mrf.mxu0
      %v2054 = vpop.f32.mrf.mxu0
      %v2055 = vadd.f32 %v1977, %v2054
      %v2056 = vpop.f32.mrf.mxu0
      %2057 = vmatprep.mubr.bf16.mxu0 0
      %2058 = vmatmul.mubr.bf16.gmra.mxu0 %v1993
      %v2059 = vpop.f32.mrf.mxu0
      %v2060 = vadd.f32 %v1977, %v2059
      %v2061 = vpop.f32.mrf.mxu0
      %v2062 = vpop.f32.mrf.mxu0
      %v2063 = vadd.f32 %v1977, %v2062
      %v2064 = vpop.f32.mrf.mxu0
      %2065 = vmatprep.mubr.bf16.mxu0 0
      %2066 = vmatmul.mubr.bf16.gmra.mxu0 %v1995
      %v2067 = vpop.f32.mrf.mxu0
      %v2068 = vadd.f32 %v1977, %v2067
      %v2069 = vpop.f32.mrf.mxu0
      %v2070 = vpop.f32.mrf.mxu0
      %v2071 = vadd.f32 %v1977, %v2070
      %v2072 = vpop.f32.mrf.mxu0
      %2073 = vmatprep.mubr.bf16.mxu0 0
      %2074 = vmatmul.mubr.bf16.gmra.mxu0 %v1997
      %v2075 = vpop.f32.mrf.mxu0
      %v2076 = vadd.f32 %v1977, %v2075
      %v2077 = vpop.f32.mrf.mxu0
      %v2078 = vpop.f32.mrf.mxu0
      %v2079 = vadd.f32 %v1977, %v2078
      %v2080 = vpop.f32.mrf.mxu0
      %2081 = vmatprep.mubr.bf16.mxu0 0
      %2082 = vmatmul.mubr.bf16.gmra.mxu0 %v1999
      %v2083 = vpop.f32.mrf.mxu0
      %v2084 = vadd.f32 %v1977, %v2083
      %v2085 = vpop.f32.mrf.mxu0
      %v2086 = vpop.f32.mrf.mxu0
      %v2087 = vadd.f32 %v1977, %v2086
      %v2088 = vpop.f32.mrf.mxu0
      %2089 = vmatprep.mubr.bf16.mxu0 0
      %2090 = vmatmul.mubr.bf16.gmra.mxu0 %v2001
      %v2091 = vpop.f32.mrf.mxu0
      %v2092 = vadd.f32 %v1977, %v2091
      %v2093 = vpop.f32.mrf.mxu0
      %v2094 = vpop.f32.mrf.mxu0
      %v2095 = vadd.f32 %v1977, %v2094
      %v2096 = vpop.f32.mrf.mxu0
      %2097 = vmatprep.mubr.bf16.mxu0 0
      %2098 = vmatmul.mubr.bf16.gmra.mxu0 %v2003
      %v2099 = vpop.f32.mrf.mxu0
      %v2100 = vadd.f32 %v1977, %v2099
      %v2101 = vpop.f32.mrf.mxu0
      %v2102 = vpop.f32.mrf.mxu0
      %v2103 = vadd.f32 %v1977, %v2102
      %v2104 = vpop.f32.mrf.mxu0
      %2105 = vdwg.mxu0
      %2106 = vmatprep.subr.mxu0 0.0
      %2107 = vmatpush1.msra.mxu0 %v2103
      %2108 = vmatprep.subr.mxu0 0.0
      %2109 = vmatpush1.msra.mxu0 %v2100
      %2110 = vmatprep.subr.mxu0 0.0
      %2111 = vmatpush1.msra.mxu0 %v2095
      %2112 = vmatprep.subr.mxu0 0.0
      %2113 = vmatpush1.msra.mxu0 %v2092
      %2114 = vmatprep.subr.mxu0 0.0
      %2115 = vmatpush1.msra.mxu0 %v2087
      %2116 = vmatprep.subr.mxu0 0.0
      %2117 = vmatpush1.msra.mxu0 %v2084
      %2118 = vmatprep.subr.mxu0 0.0
      %2119 = vmatpush1.msra.mxu0 %v2079
      %2120 = vmatprep.subr.mxu0 0.0
      %2121 = vmatpush1.msra.mxu0 %v2076
      %2122 = vmatprep.subr.mxu0 0.0
      %2123 = vmatpush1.msra.mxu0 %v2071
      %2124 = vmatprep.subr.mxu0 0.0
      %2125 = vmatpush1.msra.mxu0 %v2068
      %2126 = vmatprep.subr.mxu0 0.0
      %2127 = vmatpush1.msra.mxu0 %v2063
      %2128 = vmatprep.subr.mxu0 0.0
      %2129 = vmatpush1.msra.mxu0 %v2060
      %2130 = vmatprep.subr.mxu0 0.0
      %2131 = vmatpush1.msra.mxu0 %v2055
      %2132 = vmatprep.subr.mxu0 0.0
      %2133 = vmatpush1.msra.mxu0 %v2052
      %2134 = vmatprep.subr.mxu0 0.0
      %2135 = vmatpush1.msra.mxu0 %v2047
      %2136 = vmatprep.subr.mxu0 0.0
      %2137 = vmatpush1.msra.mxu0 %v2044
      %2138 = vmatprep.subr.mxu0 0.0
      %2139 = vmatpush2.msra.mxu0 0.0
      %2140 = vmatprep.subr.mxu0 0.0
      %2141 = vmatpush2.msra.mxu0 0.0
      %2142 = vmatprep.subr.mxu0 0.0
      %2143 = vmatpush2.msra.mxu0 0.0
      %2144 = vmatprep.subr.mxu0 0.0
      %2145 = vmatpush2.msra.mxu0 0.0
      %2146 = vmatprep.subr.mxu0 0.0
      %2147 = vmatpush2.msra.mxu0 0.0
      %2148 = vmatprep.subr.mxu0 0.0
      %2149 = vmatpush2.msra.mxu0 0.0
      %2150 = vmatprep.subr.mxu0 0.0
      %2151 = vmatpush2.msra.mxu0 0.0
      %2152 = vmatprep.subr.mxu0 0.0
      %2153 = vmatpush2.msra.mxu0 0.0
      %2154 = vmatprep.subr.mxu0 0.0
      %2155 = vmatpush2.msra.mxu0 0.0
      %2156 = vmatprep.subr.mxu0 0.0
      %2157 = vmatpush2.msra.mxu0 0.0
      %2158 = vmatprep.subr.mxu0 0.0
      %2159 = vmatpush2.msra.mxu0 0.0
      %2160 = vmatprep.subr.mxu0 0.0
      %2161 = vmatpush2.msra.mxu0 0.0
      %2162 = vmatprep.subr.mxu0 0.0
      %2163 = vmatpush2.msra.mxu0 0.0
      %2164 = vmatprep.subr.mxu0 0.0
      %2165 = vmatpush2.msra.mxu0 0.0
      %2166 = vmatprep.subr.mxu0 0.0
      %2167 = vmatpush2.msra.mxu0 0.0
      %2168 = vmatprep.subr.mxu0 0.0
      %2169 = vmatpush2.msra.mxu0 0.0
      %2170 = vmatprep.mubr.f32.mxu0 0.0
      %2171 = vmatmul.mubr.f32.gmra.mxu0 %v1104
      %v2172 = vpop.f32.mrf.mxu0
      %v2173 = vadd.f32 0.0, %v2172
      %v2174 = vpop.f32.mrf.mxu0
      %2175 = vmatprep.mubr.f32.mxu0 0.0
      %2176 = vmatmul.mubr.f32.gmra.mxu0 %v1105
      %v2177 = vpop.f32.mrf.mxu0
      %v2178 = vadd.f32 0.0, %v2177
      %v2179 = vpop.f32.mrf.mxu0
      %2180 = vmatprep.mubr.f32.mxu0 0.0
      %2181 = vmatmul.mubr.f32.gmra.mxu0 %v1106
      %v2182 = vpop.f32.mrf.mxu0
      %v2183 = vadd.f32 0.0, %v2182
      %v2184 = vpop.f32.mrf.mxu0
      %2185 = vmatprep.mubr.f32.mxu0 0.0
      %2186 = vmatmul.mubr.f32.gmra.mxu0 %v1107
      %v2187 = vpop.f32.mrf.mxu0
      %v2188 = vadd.f32 0.0, %v2187
      %v2189 = vpop.f32.mrf.mxu0
      %2190 = vmatprep.mubr.f32.mxu0 0.0
      %2191 = vmatmul.mubr.f32.gmra.mxu0 %v1108
      %v2192 = vpop.f32.mrf.mxu0
      %v2193 = vadd.f32 0.0, %v2192
      %v2194 = vpop.f32.mrf.mxu0
      %2195 = vmatprep.mubr.f32.mxu0 0.0
      %2196 = vmatmul.mubr.f32.gmra.mxu0 %v1109
      %v2197 = vpop.f32.mrf.mxu0
      %v2198 = vadd.f32 0.0, %v2197
      %v2199 = vpop.f32.mrf.mxu0
      %2200 = vmatprep.mubr.f32.mxu0 0.0
      %2201 = vmatmul.mubr.f32.gmra.mxu0 %v1110
      %v2202 = vpop.f32.mrf.mxu0
      %v2203 = vadd.f32 0.0, %v2202
      %v2204 = vpop.f32.mrf.mxu0
      %2205 = vmatprep.mubr.f32.mxu0 0.0
      %2206 = vmatmul.mubr.f32.gmra.mxu0 %v1111
      %v2207 = vpop.f32.mrf.mxu0
      %v2208 = vadd.f32 0.0, %v2207
      %v2209 = vpop.f32.mrf.mxu0
      %2210 = vdwg.mxu0
      %v2211 = vld [vmem:[%s57] sm:$0xff]
      %v2212 = vld [vmem:[%s57 + $0x8] sm:$0xff]
      %v2213 = vld [vmem:[%s57 + $0x10] sm:$0xff]
      %v2214 = vld [vmem:[%s57 + $0x18] sm:$0xff]
      %vm2215 = vcmp.ge.f32.partialorder %v2173, 0.0
      %vm2216 = vcmp.ge.f32.partialorder %v2178, 0.0
      %vm2217 = vcmp.ge.f32.partialorder %v2183, 0.0
      %vm2218 = vcmp.ge.f32.partialorder %v2188, 0.0
      %vm2219 = vcmp.ge.f32.partialorder %v2193, 0.0
      %vm2220 = vcmp.ge.f32.partialorder %v2198, 0.0
      %vm2221 = vcmp.ge.f32.partialorder %v2203, 0.0
      %vm2222 = vcmp.ge.f32.partialorder %v2208, 0.0
      %v2223 = vmul.f32 %v2173, 0.1
      %v2224 = vmul.f32 %v2178, 0.1
      %v2225 = vmul.f32 %v2183, 0.1
      %v2226 = vmul.f32 %v2188, 0.1
      %v2227 = vmul.f32 %v2193, 0.1
      %v2228 = vmul.f32 %v2198, 0.1
      %v2229 = vmul.f32 %v2203, 0.1
      %v2230 = vmul.f32 %v2208, 0.1
      %v2231 = vsel %vm2215, %v2173, %v2223
      %v2232 = vsel %vm2216, %v2178, %v2224
      %v2233 = vsel %vm2217, %v2183, %v2225
      %v2234 = vsel %vm2218, %v2188, %v2226
      %v2235 = vsel %vm2219, %v2193, %v2227
      %v2236 = vsel %vm2220, %v2198, %v2228
      %v2237 = vsel %vm2221, %v2203, %v2229
      %v2238 = vsel %vm2222, %v2208, %v2230
      %v2239 = vpack.c.bf16 %v2231, %v2231
      %v2240 = vpack.c.bf16 %v2232, %v2232
      %v2241 = vpack.c.bf16 %v2233, %v2233
      %v2242 = vpack.c.bf16 %v2234, %v2234
      %v2243 = vpack.c.bf16 %v2235, %v2235
      %v2244 = vpack.c.bf16 %v2236, %v2236
      %v2245 = vpack.c.bf16 %v2237, %v2237
      %v2246 = vpack.c.bf16 %v2238, %v2238
      %v2248 = vshrl.u32 %v2240, 16
      %v2250 = vrot.slane %v2248, 7
      %v2251 = vshll.u32 %v2240, 16
      %v2253 = vor.u32 %v2250, %v2251
      %v2255 = vshrl.u32 %v2242, 16
      %v2257 = vrot.slane %v2255, 7
      %v2258 = vshll.u32 %v2242, 16
      %v2260 = vor.u32 %v2257, %v2258
      %v2262 = vshrl.u32 %v2244, 16
      %v2264 = vrot.slane %v2262, 7
      %v2265 = vshll.u32 %v2244, 16
      %v2267 = vor.u32 %v2264, %v2265
      %v2271 = vsel %vm1298, 0, %v2253
      %v2272 = vsel %vm1298, 0, %v2260
      %v2273 = vsel %vm1298, 0, %v2267
      %vm2274 = vcmask 1044480
      %vm2275 = vsmask.f32 4352
      %vm2276 = vmand %vm2274, %vm2275
      %v2277 = vsel %vm2276, %v1299, 0
      %v2278 = vsel %vm2276, %v2271, 0
      %v2279 = vsel %vm2276, %v2272, 0
      %v2280 = vsel %vm2276, %v2273, 0
      %v2282 = vshrl.u32 %v2239, 16
      %v2284 = vrot.slane %v2282, 7
      %v2285 = vshll.u32 %v2239, 16
      %v2287 = vor.u32 %v2284, %v2285
      %v2289 = vshrl.u32 %v2241, 16
      %v2291 = vrot.slane %v2289, 7
      %v2292 = vshll.u32 %v2241, 16
      %v2294 = vor.u32 %v2291, %v2292
      %v2296 = vshrl.u32 %v2243, 16
      %v2298 = vrot.slane %v2296, 7
      %v2299 = vshll.u32 %v2243, 16
      %v2301 = vor.u32 %v2298, %v2299
      %v2303 = vshrl.u32 %v2245, 16
      %v2305 = vrot.slane %v2303, 7
      %v2306 = vshll.u32 %v2245, 16
      %v2308 = vor.u32 %v2305, %v2306
      %v2313 = vsel %vm1298, 0, %v2287
      %v2314 = vsel %vm1298, 0, %v2294
      %v2315 = vsel %vm1298, 0, %v2301
      %v2316 = vsel %vm1298, 0, %v2308
      %v2317 = vsel %vm2276, %v2313, 0
      %v2318 = vsel %vm2276, %v2314, 0
      %v2319 = vsel %vm2276, %v2315, 0
      %v2320 = vsel %vm2276, %v2316, 0
      %v2322 = vshrl.u32 %v2246, 16
      %v2324 = vrot.slane %v2322, 7
      %v2325 = vshll.u32 %v2246, 16
      %v2327 = vor.u32 %v2324, %v2325
      %v2329 = vsel %vm1298, 0, %v2327
      %v2330 = vsel %vm2276, %v2329, 0
      %v2332 = vshrl.u32 %v2277, 16
      %v2334 = vshll.u32 %v2277, 16
      %v2336 = vrot.slane %v2334, 1
      %v2337 = vor.u32 %v2332, %v2336
      %v2339 = vshrl.u32 %v2278, 16
      %v2341 = vshll.u32 %v2278, 16
      %v2343 = vrot.slane %v2341, 1
      %v2344 = vor.u32 %v2339, %v2343
      %v2346 = vshrl.u32 %v2279, 16
      %v2348 = vshll.u32 %v2279, 16
      %v2350 = vrot.slane %v2348, 1
      %v2351 = vor.u32 %v2346, %v2350
      %v2353 = vshrl.u32 %v2280, 16
      %v2355 = vshll.u32 %v2280, 16
      %v2357 = vrot.slane %v2355, 1
      %v2358 = vor.u32 %v2353, %v2357
      %2359 = vrot.lane.b32.xlu0 %v2337, 16
      %v2360 = vpop.permute.xlu0 %2359
      %2361 = vrot.lane.b32.xlu0 %v2344, 16
      %v2362 = vpop.permute.xlu0 %2361
      %2363 = vrot.lane.b32.xlu0 %v2351, 16
      %v2364 = vpop.permute.xlu0 %2363
      %2365 = vrot.lane.b32.xlu0 %v2358, 16
      %v2366 = vpop.permute.xlu0 %2365
      %v2371 = vrot.slane %v2277, 1
      %v2372 = vrot.slane %v2278, 1
      %v2373 = vrot.slane %v2279, 1
      %v2374 = vrot.slane %v2280, 1
      %2375 = vrot.lane.b32.xlu0 %v2371, 32
      %v2376 = vpop.permute.xlu0 %2375
      %2377 = vrot.lane.b32.xlu0 %v2372, 32
      %v2378 = vpop.permute.xlu0 %2377
      %2379 = vrot.lane.b32.xlu0 %v2373, 32
      %v2380 = vpop.permute.xlu0 %2379
      %2381 = vrot.lane.b32.xlu0 %v2374, 32
      %v2382 = vpop.permute.xlu0 %2381
      %2387 = vrot.lane.b32.xlu0 %v2317, 48
      %v2388 = vpop.permute.xlu0 %2387
      %2389 = vrot.lane.b32.xlu0 %v2318, 48
      %v2390 = vpop.permute.xlu0 %2389
      %2391 = vrot.lane.b32.xlu0 %v2319, 48
      %v2392 = vpop.permute.xlu0 %2391
      %2393 = vrot.lane.b32.xlu0 %v2320, 48
      %v2394 = vpop.permute.xlu0 %2393
      %v2396 = vshrl.u32 %v2317, 16
      %v2398 = vshll.u32 %v2317, 16
      %v2400 = vrot.slane %v2398, 1
      %v2401 = vor.u32 %v2396, %v2400
      %v2403 = vshrl.u32 %v2318, 16
      %v2405 = vshll.u32 %v2318, 16
      %v2407 = vrot.slane %v2405, 1
      %v2408 = vor.u32 %v2403, %v2407
      %v2410 = vshrl.u32 %v2319, 16
      %v2412 = vshll.u32 %v2319, 16
      %v2414 = vrot.slane %v2412, 1
      %v2415 = vor.u32 %v2410, %v2414
      %v2417 = vshrl.u32 %v2320, 16
      %v2419 = vshll.u32 %v2320, 16
      %v2421 = vrot.slane %v2419, 1
      %v2422 = vor.u32 %v2417, %v2421
      %2423 = vrot.lane.b32.xlu0 %v2401, 64
      %v2424 = vpop.permute.xlu0 %2423
      %2425 = vrot.lane.b32.xlu0 %v2408, 64
      %v2426 = vpop.permute.xlu0 %2425
      %2427 = vrot.lane.b32.xlu0 %v2415, 64
      %v2428 = vpop.permute.xlu0 %2427
      %2429 = vrot.lane.b32.xlu0 %v2422, 64
      %v2430 = vpop.permute.xlu0 %2429
      %v2431 = vrot.slane %v2317, 1
      %v2432 = vrot.slane %v2318, 1
      %v2433 = vrot.slane %v2319, 1
      %v2434 = vrot.slane %v2320, 1
      %2435 = vrot.lane.b32.xlu0 %v2431, 80
      %v2436 = vpop.permute.xlu0 %2435
      %2437 = vrot.lane.b32.xlu0 %v2432, 80
      %v2438 = vpop.permute.xlu0 %2437
      %2439 = vrot.lane.b32.xlu0 %v2433, 80
      %v2440 = vpop.permute.xlu0 %2439
      %2441 = vrot.lane.b32.xlu0 %v2434, 80
      %v2442 = vpop.permute.xlu0 %2441
      %2444 = vrot.lane.b32.xlu0 %v2278, 96
      %v2445 = vpop.permute.xlu0 %2444
      %2446 = vrot.lane.b32.xlu0 %v2279, 96
      %v2447 = vpop.permute.xlu0 %2446
      %2448 = vrot.lane.b32.xlu0 %v2280, 96
      %v2449 = vpop.permute.xlu0 %2448
      %2450 = vrot.lane.b32.xlu0 %v2330, 96
      %v2451 = vpop.permute.xlu0 %2450
      %v2453 = vshrl.u32 %v2330, 16
      %v2455 = vshll.u32 %v2330, 16
      %v2457 = vrot.slane %v2455, 1
      %v2458 = vor.u32 %v2453, %v2457
      %2459 = vrot.lane.b32.xlu0 %v2344, 112
      %v2460 = vpop.permute.xlu0 %2459
      %2461 = vrot.lane.b32.xlu0 %v2351, 112
      %v2462 = vpop.permute.xlu0 %2461
      %2463 = vrot.lane.b32.xlu0 %v2358, 112
      %v2464 = vpop.permute.xlu0 %2463
      %2465 = vrot.lane.b32.xlu0 %v2458, 112
      %v2466 = vpop.permute.xlu0 %2465
      %v2467 = vrot.slane %v2330, 1
      %v2469 = vsel %vm1952, %v2277, %v2360
      %v2471 = vsel %vm1952, %v2278, %v2362
      %v2473 = vsel %vm1952, %v2279, %v2364
      %v2475 = vsel %vm1952, %v2280, %v2366
      %vm2476 = vcmask 261120
      %v2478 = vsel %vm2476, %v2469, %v2376
      %v2480 = vsel %vm2476, %v2471, %v2378
      %v2482 = vsel %vm2476, %v2473, %v2380
      %v2484 = vsel %vm2476, %v2475, %v2382
      %vm2485 = vcmask 392192
      %v2487 = vsel %vm2485, %v2478, %v2388
      %v2489 = vsel %vm2485, %v2480, %v2390
      %v2491 = vsel %vm2485, %v2482, %v2392
      %v2493 = vsel %vm2485, %v2484, %v2394
      %vm2494 = vcmask 523264
      %v2496 = vsel %vm2494, %v2487, %v2424
      %v2498 = vsel %vm2494, %v2489, %v2426
      %v2500 = vsel %vm2494, %v2491, %v2428
      %v2502 = vsel %vm2494, %v2493, %v2430
      %vm2503 = vcmask 654336
      %v2505 = vsel %vm2503, %v2496, %v2436
      %v2507 = vsel %vm2503, %v2498, %v2438
      %v2509 = vsel %vm2503, %v2500, %v2440
      %v2511 = vsel %vm2503, %v2502, %v2442
      %vm2512 = vcmask 785408
      %v2514 = vsel %vm2512, %v2505, %v2445
      %v2516 = vsel %vm2512, %v2507, %v2447
      %v2518 = vsel %vm2512, %v2509, %v2449
      %v2520 = vsel %vm2512, %v2511, %v2451
      %vm2521 = vcmask 916480
      %v2523 = vsel %vm2521, %v2514, %v2460
      %v2525 = vsel %vm2521, %v2516, %v2462
      %v2527 = vsel %vm2521, %v2518, %v2464
      %v2529 = vsel %vm2521, %v2520, %v2466
      %v2534 = vunpack.c.l.b16 %v2523
      %v2535 = vunpack.c.l.b16 %v2372
      %v2536 = vunpack.c.l.b16 %v2525
      %v2537 = vunpack.c.l.b16 %v2373
      %v2538 = vunpack.c.l.b16 %v2527
      %v2539 = vunpack.c.l.b16 %v2374
      %v2540 = vunpack.c.l.b16 %v2529
      %v2541 = vunpack.c.l.b16 %v2467
      %v2542 = vld [vmem:[%s7] sm:$0xf]
      %v2543 = vld [vmem:[%s7 + $0x4] sm:$0xf]
      %v2544 = vld [vmem:[%s7 + $0x8] sm:$0xf]
      %v2545 = vld [vmem:[%s7 + $0xc] sm:$0xf]
      %v2546 = vld [vmem:[%s7 + $0x10] sm:$0xf]
      %v2547 = vld [vmem:[%s7 + $0x14] sm:$0xf]
      %v2548 = vld [vmem:[%s7 + $0x18] sm:$0xf]
      %v2549 = vld [vmem:[%s7 + $0x1c] sm:$0xf]
      %v2550 = vld [vmem:[%s7 + $0x20] sm:$0xf]
      %v2551 = vld [vmem:[%s7 + $0x24] sm:$0xf]
      %v2552 = vld [vmem:[%s7 + $0x28] sm:$0xf]
      %v2553 = vld [vmem:[%s7 + $0x2c] sm:$0xf]
      %v2554 = vld [vmem:[%s7 + $0x30] sm:$0xf]
      %v2555 = vld [vmem:[%s7 + $0x34] sm:$0xf]
      %v2556 = vld [vmem:[%s7 + $0x38] sm:$0xf]
      %v2557 = vld [vmem:[%s7 + $0x3c] sm:$0xf]
      %v2558 = vld [vmem:[%s7 + $0x40] sm:$0xf]
      %v2559 = vld [vmem:[%s7 + $0x44] sm:$0xf]
      %v2560 = vld [vmem:[%s9] sm:$0x1]
      %v2562 = vlaneseq
      %v2563 = vshrl.u32 %v2562, 7
      %v2564 = vsub.s32 0, %v2563
      %v2565 = vrot.slane %v2560, %v2564
      %v2567 = vpack.c.b16 %v2536, %v2534
      %v2568 = vpack.c.b16 %v2537, %v2535
      %v2569 = vpack.c.b16 %v2540, %v2538
      %v2570 = vpack.c.b16 %v2541, %v2539
      %v2591 = vunpack.c.l.b16 %v2542
      %v2592 = vunpack.c.l.b16 %v2543
      %v2593 = vunpack.c.l.b16 %v2544
      %v2594 = vunpack.c.l.b16 %v2545
      %v2595 = vunpack.c.l.b16 %v2546
      %v2596 = vunpack.c.l.b16 %v2547
      %v2597 = vunpack.c.l.b16 %v2548
      %v2598 = vunpack.c.l.b16 %v2549
      %v2599 = vunpack.c.l.b16 %v2550
      %v2600 = vunpack.c.l.b16 %v2551
      %v2601 = vunpack.c.l.b16 %v2552
      %v2602 = vunpack.c.l.b16 %v2553
      %v2603 = vunpack.c.l.b16 %v2554
      %v2604 = vunpack.c.l.b16 %v2555
      %v2605 = vunpack.c.l.b16 %v2556
      %v2606 = vunpack.c.l.b16 %v2557
      %v2607 = vunpack.c.l.b16 %v2558
      %v2608 = vunpack.c.l.b16 %v2559
      %v2609 = vpack.c.b16 %v2592, %v2591
      %v2610 = vpack.c.b16 %v2594, %v2593
      %v2611 = vpack.c.b16 %v2596, %v2595
      %v2612 = vpack.c.b16 %v2598, %v2597
      %v2613 = vpack.c.b16 %v2600, %v2599
      %v2614 = vpack.c.b16 %v2602, %v2601
      %v2615 = vpack.c.b16 %v2604, %v2603
      %v2616 = vpack.c.b16 %v2606, %v2605
      %v2617 = vpack.c.b16 %v2608, %v2607
      %v2628 = vsel %vm1952, %v2568, 0
      %v2631 = vsel %vm1952, %v2570, 0
      %2633 = vmatprep.subr.bf16.mxu0 0
      %2634 = vmatpush1.bf16.msra.mxu0 %v2616
      %2635 = vmatprep.subr.bf16.mxu0 0
      %2636 = vmatpush1.bf16.msra.mxu0 %v2615
      %2637 = vmatprep.subr.bf16.mxu0 0
      %2638 = vmatpush1.bf16.msra.mxu0 %v2614
      %2639 = vmatprep.subr.bf16.mxu0 0
      %2640 = vmatpush1.bf16.msra.mxu0 %v2613
      %2641 = vmatprep.subr.bf16.mxu0 0
      %2642 = vmatpush1.bf16.msra.mxu0 %v2612
      %2643 = vmatprep.subr.bf16.mxu0 0
      %2644 = vmatpush1.bf16.msra.mxu0 %v2611
      %2645 = vmatprep.subr.bf16.mxu0 0
      %2646 = vmatpush1.bf16.msra.mxu0 %v2610
      %2647 = vmatprep.subr.bf16.mxu0 0
      %2648 = vmatpush1.bf16.msra.mxu0 %v2609
      %2649 = vmatprep.subr.bf16.mxu0 0
      %2650 = vmatpush2.bf16.msra.mxu0 0
      %2651 = vmatprep.subr.bf16.mxu0 0
      %2652 = vmatpush2.bf16.msra.mxu0 0
      %2653 = vmatprep.subr.bf16.mxu0 0
      %2654 = vmatpush2.bf16.msra.mxu0 0
      %2655 = vmatprep.subr.bf16.mxu0 0
      %2656 = vmatpush2.bf16.msra.mxu0 0
      %2657 = vmatprep.subr.bf16.mxu0 0
      %2658 = vmatpush2.bf16.msra.mxu0 0
      %2659 = vmatprep.subr.bf16.mxu0 0
      %2660 = vmatpush2.bf16.msra.mxu0 0
      %2661 = vmatprep.subr.bf16.mxu0 0
      %2662 = vmatpush2.bf16.msra.mxu0 0
      %2663 = vmatprep.subr.bf16.mxu0 0
      %2664 = vmatpush2.bf16.msra.mxu0 %v2617
      %2665 = vmatprep.mubr.bf16.mxu0 %v2628
      %2666 = vmatmul.mubr.bf16.gmra.mxu0 %v2567
      %v2667 = vpop.f32.mrf.mxu0
      %v2668 = vadd.f32 %v2565, %v2667
      %v2669 = vpop.f32.mrf.mxu0
      %v2670 = vpop.f32.mrf.mxu0
      %v2671 = vadd.f32 %v2565, %v2670
      %v2672 = vpop.f32.mrf.mxu0
      %2673 = vmatprep.mubr.bf16.mxu0 %v2631
      %2674 = vmatmul.mubr.bf16.gmra.mxu0 %v2569
      %v2675 = vpop.f32.mrf.mxu0
      %v2676 = vadd.f32 %v2565, %v2675
      %v2677 = vpop.f32.mrf.mxu0
      %v2678 = vpop.f32.mrf.mxu0
      %v2679 = vadd.f32 %v2565, %v2678
      %v2680 = vpop.f32.mrf.mxu0
      %2681 = vdwg.mxu0
      %v2683 = vsel %vm2476, %v2211, 0
      %v2686 = vsel %vm2476, %v2212, 0
      %v2689 = vsel %vm2476, %v2213, 0
      %v2692 = vsel %vm2476, %v2214, 0
      %2694 = vmatprep.subr.mxu0 0.0
      %2695 = vmatpush1.msra.mxu0 0.0
      %2696 = vmatprep.subr.mxu0 0.0
      %2697 = vmatpush1.msra.mxu0 0.0
      %2698 = vmatprep.subr.mxu0 0.0
      %2699 = vmatpush1.msra.mxu0 0.0
      %2700 = vmatprep.subr.mxu0 0.0
      %2701 = vmatpush1.msra.mxu0 0.0
      %2702 = vmatprep.subr.mxu0 0.0
      %2703 = vmatpush1.msra.mxu0 0.0
      %2704 = vmatprep.subr.mxu0 0.0
      %2705 = vmatpush1.msra.mxu0 0.0
      %2706 = vmatprep.subr.mxu0 0.0
      %2707 = vmatpush1.msra.mxu0 0.0
      %2708 = vmatprep.subr.mxu0 0.0
      %2709 = vmatpush1.msra.mxu0 0.0
      %2710 = vmatprep.subr.mxu0 0.0
      %2711 = vmatpush1.msra.mxu0 0.0
      %2712 = vmatprep.subr.mxu0 0.0
      %2713 = vmatpush1.msra.mxu0 0.0
      %2714 = vmatprep.subr.mxu0 0.0
      %2715 = vmatpush1.msra.mxu0 0.0
      %2716 = vmatprep.subr.mxu0 0.0
      %2717 = vmatpush1.msra.mxu0 0.0
      %2718 = vmatprep.subr.mxu0 0.0
      %2719 = vmatpush1.msra.mxu0 %v2679
      %2720 = vmatprep.subr.mxu0 0.0
      %2721 = vmatpush1.msra.mxu0 %v2676
      %2722 = vmatprep.subr.mxu0 0.0
      %2723 = vmatpush1.msra.mxu0 %v2671
      %2724 = vmatprep.subr.mxu0 0.0
      %2725 = vmatpush1.msra.mxu0 %v2668
      %2726 = vmatprep.subr.mxu0 0.0
      %2727 = vmatpush2.msra.mxu0 0.0
      %2728 = vmatprep.subr.mxu0 0.0
      %2729 = vmatpush2.msra.mxu0 0.0
      %2730 = vmatprep.subr.mxu0 0.0
      %2731 = vmatpush2.msra.mxu0 0.0
      %2732 = vmatprep.subr.mxu0 0.0
      %2733 = vmatpush2.msra.mxu0 0.0
      %2734 = vmatprep.subr.mxu0 0.0
      %2735 = vmatpush2.msra.mxu0 0.0
      %2736 = vmatprep.subr.mxu0 0.0
      %2737 = vmatpush2.msra.mxu0 0.0
      %2738 = vmatprep.subr.mxu0 0.0
      %2739 = vmatpush2.msra.mxu0 0.0
      %2740 = vmatprep.subr.mxu0 0.0
      %2741 = vmatpush2.msra.mxu0 0.0
      %2742 = vmatprep.subr.mxu0 0.0
      %2743 = vmatpush2.msra.mxu0 0.0
      %2744 = vmatprep.subr.mxu0 0.0
      %2745 = vmatpush2.msra.mxu0 0.0
      %2746 = vmatprep.subr.mxu0 0.0
      %2747 = vmatpush2.msra.mxu0 0.0
      %2748 = vmatprep.subr.mxu0 0.0
      %2749 = vmatpush2.msra.mxu0 0.0
      %2750 = vmatprep.subr.mxu0 0.0
      %2751 = vmatpush2.msra.mxu0 0.0
      %2752 = vmatprep.subr.mxu0 0.0
      %2753 = vmatpush2.msra.mxu0 0.0
      %2754 = vmatprep.subr.mxu0 0.0
      %2755 = vmatpush2.msra.mxu0 0.0
      %2756 = vmatprep.subr.mxu0 0.0
      %2757 = vmatpush2.msra.mxu0 0.0
      %2758 = vmatprep.mubr.f32.mxu0 0.0
      %2759 = vmatmul.mubr.f32.gmra.mxu0 %v2683
      %v2760 = vpop.f32.mrf.mxu0
      %v2761 = vadd.f32 0.0, %v2760
      %v2762 = vpop.f32.mrf.mxu0
      %2763 = vmatprep.mubr.f32.mxu0 0.0
      %2764 = vmatmul.mubr.f32.gmra.mxu0 %v2686
      %v2765 = vpop.f32.mrf.mxu0
      %v2766 = vadd.f32 0.0, %v2765
      %v2767 = vpop.f32.mrf.mxu0
      %2768 = vmatprep.mubr.f32.mxu0 0.0
      %2769 = vmatmul.mubr.f32.gmra.mxu0 %v2689
      %v2770 = vpop.f32.mrf.mxu0
      %v2771 = vadd.f32 0.0, %v2770
      %v2772 = vpop.f32.mrf.mxu0
      %2773 = vmatprep.mubr.f32.mxu0 0.0
      %2774 = vmatmul.mubr.f32.gmra.mxu0 %v2692
      %v2775 = vpop.f32.mrf.mxu0
      %v2776 = vadd.f32 0.0, %v2775
      %v2777 = vpop.f32.mrf.mxu0
      %2778 = vdwg.mxu0
      %v2779 = vld [vmem:[%s59] sm:$0xff]
      %v2780 = vld [vmem:[%s59 + $0x8] sm:$0xff]
      %vm2781 = vcmp.ge.f32.partialorder %v2761, 0.0
      %vm2782 = vcmp.ge.f32.partialorder %v2766, 0.0
      %vm2783 = vcmp.ge.f32.partialorder %v2771, 0.0
      %vm2784 = vcmp.ge.f32.partialorder %v2776, 0.0
      %v2785 = vmul.f32 %v2761, 0.1
      %v2786 = vmul.f32 %v2766, 0.1
      %v2787 = vmul.f32 %v2771, 0.1
      %v2788 = vmul.f32 %v2776, 0.1
      %v2789 = vsel %vm2781, %v2761, %v2785
      %v2790 = vsel %vm2782, %v2766, %v2786
      %v2791 = vsel %vm2783, %v2771, %v2787
      %v2792 = vsel %vm2784, %v2776, %v2788
      %v2793 = vpack.c.bf16 %v2789, %v2789
      %v2794 = vpack.c.bf16 %v2790, %v2790
      %v2795 = vpack.c.bf16 %v2791, %v2791
      %v2796 = vpack.c.bf16 %v2792, %v2792
      %v2798 = vshrl.u32 %v2794, 16
      %v2800 = vrot.slane %v2798, 7
      %v2801 = vshll.u32 %v2794, 16
      %v2803 = vor.u32 %v2800, %v2801
      %v2805 = vsel %vm1298, 0, %v2803
      %v2806 = vsel %vm2276, %v2805, 0
      %v2808 = vshrl.u32 %v2793, 16
      %v2810 = vrot.slane %v2808, 7
      %v2811 = vshll.u32 %v2793, 16
      %v2813 = vor.u32 %v2810, %v2811
      %v2815 = vshrl.u32 %v2795, 16
      %v2817 = vrot.slane %v2815, 7
      %v2818 = vshll.u32 %v2795, 16
      %v2820 = vor.u32 %v2817, %v2818
      %v2823 = vsel %vm1298, 0, %v2813
      %v2824 = vsel %vm1298, 0, %v2820
      %v2825 = vsel %vm2276, %v2823, 0
      %v2826 = vsel %vm2276, %v2824, 0
      %v2828 = vshrl.u32 %v2796, 16
      %v2830 = vrot.slane %v2828, 7
      %v2831 = vshll.u32 %v2796, 16
      %v2833 = vor.u32 %v2830, %v2831
      %v2835 = vsel %vm1298, 0, %v2833
      %v2836 = vsel %vm2276, %v2835, 0
      %v2838 = vshrl.u32 %v2806, 16
      %v2840 = vshll.u32 %v2806, 16
      %v2842 = vrot.slane %v2840, 1
      %v2843 = vor.u32 %v2838, %v2842
      %2844 = vrot.lane.b32.xlu0 %v2337, 32
      %v2845 = vpop.permute.xlu0 %2844
      %2846 = vrot.lane.b32.xlu0 %v2843, 32
      %v2847 = vpop.permute.xlu0 %2846
      %v2849 = vrot.slane %v2806, 1
      %2850 = vrot.lane.b32.xlu0 %v2371, 64
      %v2851 = vpop.permute.xlu0 %2850
      %2852 = vrot.lane.b32.xlu0 %v2849, 64
      %v2853 = vpop.permute.xlu0 %2852
      %2856 = vrot.lane.b32.xlu0 %v2825, 96
      %v2857 = vpop.permute.xlu0 %2856
      %2858 = vrot.lane.b32.xlu0 %v2826, 96
      %v2859 = vpop.permute.xlu0 %2858
      %v2861 = vshrl.u32 %v2825, 16
      %v2863 = vshll.u32 %v2825, 16
      %v2865 = vrot.slane %v2863, 1
      %v2866 = vor.u32 %v2861, %v2865
      %v2868 = vshrl.u32 %v2826, 16
      %v2870 = vshll.u32 %v2826, 16
      %v2872 = vrot.slane %v2870, 1
      %v2873 = vor.u32 %v2868, %v2872
      %v2874 = vrot.slane %v2825, 1
      %v2875 = vrot.slane %v2826, 1
      %2876 = vrot.lane.b32.xlu0 %v2874, 32
      %v2877 = vpop.permute.xlu0 %2876
      %2878 = vrot.lane.b32.xlu0 %v2875, 32
      %v2879 = vpop.permute.xlu0 %2878
      %2881 = vrot.lane.b32.xlu0 %v2806, 64
      %v2882 = vpop.permute.xlu0 %2881
      %2883 = vrot.lane.b32.xlu0 %v2836, 64
      %v2884 = vpop.permute.xlu0 %2883
      %v2886 = vshrl.u32 %v2836, 16
      %v2888 = vshll.u32 %v2836, 16
      %v2890 = vrot.slane %v2888, 1
      %v2891 = vor.u32 %v2886, %v2890
      %2892 = vrot.lane.b32.xlu0 %v2843, 96
      %v2893 = vpop.permute.xlu0 %2892
      %2894 = vrot.lane.b32.xlu0 %v2891, 96
      %v2895 = vpop.permute.xlu0 %2894
      %v2896 = vrot.slane %v2836, 1
      %v2898 = vsel %vm2476, %v2277, %v2845
      %v2900 = vsel %vm2476, %v2806, %v2847
      %v2902 = vsel %vm2494, %v2898, %v2851
      %v2904 = vsel %vm2494, %v2900, %v2853
      %v2906 = vsel %vm2512, %v2902, %v2857
      %v2908 = vsel %vm2512, %v2904, %v2859
      %v2911 = vsel %vm2476, %v2866, %v2877
      %v2914 = vsel %vm2476, %v2873, %v2879
      %v2916 = vsel %vm2494, %v2911, %v2882
      %v2918 = vsel %vm2494, %v2914, %v2884
      %v2920 = vsel %vm2512, %v2916, %v2893
      %v2922 = vsel %vm2512, %v2918, %v2895
      %v2927 = vunpack.c.l.b16 %v2906
      %v2928 = vunpack.c.l.b16 %v2920
      %v2929 = vunpack.c.l.b16 %v2849
      %v2930 = vunpack.c.l.b16 %v2908
      %v2931 = vunpack.c.l.b16 %v2922
      %v2932 = vunpack.c.l.b16 %v2896
      %v2933 = vld [vmem:[%s11] sm:$0xf]
      %v2934 = vld [vmem:[%s11 + $0x4] sm:$0xf]
      %v2935 = vld [vmem:[%s11 + $0x8] sm:$0xf]
      %v2936 = vld [vmem:[%s11 + $0xc] sm:$0xf]
      %v2937 = vld [vmem:[%s11 + $0x10] sm:$0xf]
      %v2938 = vld [vmem:[%s11 + $0x14] sm:$0xf]
      %v2939 = vld [vmem:[%s11 + $0x18] sm:$0xf]
      %v2940 = vld [vmem:[%s11 + $0x1c] sm:$0xf]
      %v2941 = vld [vmem:[%s11 + $0x20] sm:$0xf]
      %v2942 = vld [vmem:[%s11 + $0x24] sm:$0xf]
      %v2943 = vld [vmem:[%s11 + $0x28] sm:$0xf]
      %v2944 = vld [vmem:[%s11 + $0x2c] sm:$0xf]
      %v2945 = vld [vmem:[%s11 + $0x30] sm:$0xf]
      %v2946 = vld [vmem:[%s11 + $0x34] sm:$0xf]
      %v2947 = vld [vmem:[%s11 + $0x38] sm:$0xf]
      %v2948 = vld [vmem:[%s11 + $0x3c] sm:$0xf]
      %v2949 = vld [vmem:[%s11 + $0x40] sm:$0xf]
      %v2950 = vld [vmem:[%s11 + $0x44] sm:$0xf]
      %v2951 = vld [vmem:[%s11 + $0x48] sm:$0xf]
      %v2952 = vld [vmem:[%s11 + $0x4c] sm:$0xf]
      %v2953 = vld [vmem:[%s11 + $0x50] sm:$0xf]
      %v2954 = vld [vmem:[%s11 + $0x54] sm:$0xf]
      %v2955 = vld [vmem:[%s11 + $0x58] sm:$0xf]
      %v2956 = vld [vmem:[%s11 + $0x5c] sm:$0xf]
      %v2957 = vld [vmem:[%s11 + $0x60] sm:$0xf]
      %v2958 = vld [vmem:[%s11 + $0x64] sm:$0xf]
      %v2959 = vld [vmem:[%s11 + $0x68] sm:$0xf]
      %v2960 = vld [vmem:[%s11 + $0x6c] sm:$0xf]
      %v2961 = vld [vmem:[%s11 + $0x70] sm:$0xf]
      %v2962 = vld [vmem:[%s11 + $0x74] sm:$0xf]
      %v2963 = vld [vmem:[%s11 + $0x78] sm:$0xf]
      %v2964 = vld [vmem:[%s11 + $0x7c] sm:$0xf]
      %v2965 = vld [vmem:[%s11 + $0x80] sm:$0xf]
      %v2966 = vld [vmem:[%s11 + $0x84] sm:$0xf]
      %v2967 = vld [vmem:[%s11 + $0x88] sm:$0xf]
      %v2968 = vld [vmem:[%s11 + $0x8c] sm:$0xf]
      %v2969 = vld [vmem:[%s13] sm:$0x1]
      %v2971 = vlaneseq
      %v2972 = vshrl.u32 %v2971, 7
      %v2973 = vsub.s32 0, %v2972
      %v2974 = vrot.slane %v2969, %v2973
      %v2976 = vpack.c.b16 %v2930, %v2927
      %v2977 = vpack.c.b16 %v2931, %v2928
      %v2978 = vpack.c.b16 %v2932, %v2929
      %v3017 = vunpack.c.l.b16 %v2933
      %v3018 = vunpack.c.l.b16 %v2934
      %v3019 = vunpack.c.l.b16 %v2935
      %v3020 = vunpack.c.l.b16 %v2936
      %v3021 = vunpack.c.l.b16 %v2937
      %v3022 = vunpack.c.l.b16 %v2938
      %v3023 = vunpack.c.l.b16 %v2939
      %v3024 = vunpack.c.l.b16 %v2940
      %v3025 = vunpack.c.l.b16 %v2941
      %v3026 = vunpack.c.l.b16 %v2942
      %v3027 = vunpack.c.l.b16 %v2943
      %v3028 = vunpack.c.l.b16 %v2944
      %v3029 = vunpack.c.l.b16 %v2945
      %v3030 = vunpack.c.l.b16 %v2946
      %v3031 = vunpack.c.l.b16 %v2947
      %v3032 = vunpack.c.l.b16 %v2948
      %v3033 = vunpack.c.l.b16 %v2949
      %v3034 = vunpack.c.l.b16 %v2950
      %v3035 = vunpack.c.l.b16 %v2951
      %v3036 = vunpack.c.l.b16 %v2952
      %v3037 = vunpack.c.l.b16 %v2953
      %v3038 = vunpack.c.l.b16 %v2954
      %v3039 = vunpack.c.l.b16 %v2955
      %v3040 = vunpack.c.l.b16 %v2956
      %v3041 = vunpack.c.l.b16 %v2957
      %v3042 = vunpack.c.l.b16 %v2958
      %v3043 = vunpack.c.l.b16 %v2959
      %v3044 = vunpack.c.l.b16 %v2960
      %v3045 = vunpack.c.l.b16 %v2961
      %v3046 = vunpack.c.l.b16 %v2962
      %v3047 = vunpack.c.l.b16 %v2963
      %v3048 = vunpack.c.l.b16 %v2964
      %v3049 = vunpack.c.l.b16 %v2965
      %v3050 = vunpack.c.l.b16 %v2966
      %v3051 = vunpack.c.l.b16 %v2967
      %v3052 = vunpack.c.l.b16 %v2968
      %v3053 = vpack.c.b16 %v3018, %v3017
      %v3054 = vpack.c.b16 %v3020, %v3019
      %v3055 = vpack.c.b16 %v3022, %v3021
      %v3056 = vpack.c.b16 %v3024, %v3023
      %v3057 = vpack.c.b16 %v3026, %v3025
      %v3058 = vpack.c.b16 %v3028, %v3027
      %v3059 = vpack.c.b16 %v3030, %v3029
      %v3060 = vpack.c.b16 %v3032, %v3031
      %v3061 = vpack.c.b16 %v3034, %v3033
      %v3062 = vpack.c.b16 %v3036, %v3035
      %v3063 = vpack.c.b16 %v3038, %v3037
      %v3064 = vpack.c.b16 %v3040, %v3039
      %v3065 = vpack.c.b16 %v3042, %v3041
      %v3066 = vpack.c.b16 %v3044, %v3043
      %v3067 = vpack.c.b16 %v3046, %v3045
      %v3068 = vpack.c.b16 %v3048, %v3047
      %v3069 = vpack.c.b16 %v3050, %v3049
      %v3070 = vpack.c.b16 %v3052, %v3051
      %v3090 = vsel %vm2476, %v2978, 0
      %3092 = vmatprep.subr.bf16.mxu0 0
      %3093 = vmatpush1.bf16.msra.mxu0 %v3060
      %3094 = vmatprep.subr.bf16.mxu0 0
      %3095 = vmatpush1.bf16.msra.mxu0 %v3059
      %3096 = vmatprep.subr.bf16.mxu0 0
      %3097 = vmatpush1.bf16.msra.mxu0 %v3058
      %3098 = vmatprep.subr.bf16.mxu0 0
      %3099 = vmatpush1.bf16.msra.mxu0 %v3057
      %3100 = vmatprep.subr.bf16.mxu0 0
      %3101 = vmatpush1.bf16.msra.mxu0 %v3056
      %3102 = vmatprep.subr.bf16.mxu0 0
      %3103 = vmatpush1.bf16.msra.mxu0 %v3055
      %3104 = vmatprep.subr.bf16.mxu0 0
      %3105 = vmatpush1.bf16.msra.mxu0 %v3054
      %3106 = vmatprep.subr.bf16.mxu0 0
      %3107 = vmatpush1.bf16.msra.mxu0 %v3053
      %3108 = vmatprep.subr.bf16.mxu0 0
      %3109 = vmatpush2.bf16.msra.mxu0 %v3068
      %3110 = vmatprep.subr.bf16.mxu0 0
      %3111 = vmatpush2.bf16.msra.mxu0 %v3067
      %3112 = vmatprep.subr.bf16.mxu0 0
      %3113 = vmatpush2.bf16.msra.mxu0 %v3066
      %3114 = vmatprep.subr.bf16.mxu0 0
      %3115 = vmatpush2.bf16.msra.mxu0 %v3065
      %3116 = vmatprep.subr.bf16.mxu0 0
      %3117 = vmatpush2.bf16.msra.mxu0 %v3064
      %3118 = vmatprep.subr.bf16.mxu0 0
      %3119 = vmatpush2.bf16.msra.mxu0 %v3063
      %3120 = vmatprep.subr.bf16.mxu0 0
      %3121 = vmatpush2.bf16.msra.mxu0 %v3062
      %3122 = vmatprep.subr.bf16.mxu0 0
      %3123 = vmatpush2.bf16.msra.mxu0 %v3061
      %3124 = vmatprep.mubr.bf16.mxu0 %v2977
      %3125 = vmatmul.mubr.bf16.gmra.mxu0 %v2976
      %v3126 = vpop.f32.mrf.mxu0
      %v3127 = vadd.f32 %v2974, %v3126
      %v3128 = vpop.f32.mrf.mxu0
      %v3129 = vpop.f32.mrf.mxu0
      %v3130 = vadd.f32 %v2974, %v3129
      %v3131 = vpop.f32.mrf.mxu0
      %3132 = vdwg.mxu0
      %3133 = vmatprep.subr.bf16.mxu0 0
      %3134 = vmatpush1.bf16.msra.mxu0 0
      %3135 = vmatprep.subr.bf16.mxu0 0
      %3136 = vmatpush1.bf16.msra.mxu0 0
      %3137 = vmatprep.subr.bf16.mxu0 0
      %3138 = vmatpush1.bf16.msra.mxu0 0
      %3139 = vmatprep.subr.bf16.mxu0 0
      %3140 = vmatpush1.bf16.msra.mxu0 0
      %3141 = vmatprep.subr.bf16.mxu0 0
      %3142 = vmatpush1.bf16.msra.mxu0 0
      %3143 = vmatprep.subr.bf16.mxu0 0
      %3144 = vmatpush1.bf16.msra.mxu0 0
      %3145 = vmatprep.subr.bf16.mxu0 0
      %3146 = vmatpush1.bf16.msra.mxu0 %v3070
      %3147 = vmatprep.subr.bf16.mxu0 0
      %3148 = vmatpush1.bf16.msra.mxu0 %v3069
      %3149 = vmatprep.subr.bf16.mxu0 0
      %3150 = vmatpush2.bf16.msra.mxu0 0
      %3151 = vmatprep.subr.bf16.mxu0 0
      %3152 = vmatpush2.bf16.msra.mxu0 0
      %3153 = vmatprep.subr.bf16.mxu0 0
      %3154 = vmatpush2.bf16.msra.mxu0 0
      %3155 = vmatprep.subr.bf16.mxu0 0
      %3156 = vmatpush2.bf16.msra.mxu0 0
      %3157 = vmatprep.subr.bf16.mxu0 0
      %3158 = vmatpush2.bf16.msra.mxu0 0
      %3159 = vmatprep.subr.bf16.mxu0 0
      %3160 = vmatpush2.bf16.msra.mxu0 0
      %3161 = vmatprep.subr.bf16.mxu0 0
      %3162 = vmatpush2.bf16.msra.mxu0 0
      %3163 = vmatprep.subr.bf16.mxu0 0
      %3164 = vmatpush2.bf16.msra.mxu0 0
      %3165 = vmatprep.mubr.bf16.mxu0 0
      %3166 = vmatmul.mubr.bf16.gmra.mxu0 %v3090
      %v3167 = vpop.f32.mrf.mxu0
      %v3168 = vadd.f32 %v3127, %v3167
      %v3169 = vpop.f32.mrf.mxu0
      %v3170 = vpop.f32.mrf.mxu0
      %v3171 = vadd.f32 %v3130, %v3170
      %v3172 = vpop.f32.mrf.mxu0
      %3173 = vdwg.mxu0
      %v3175 = vsel %vm1952, %v2779, 0
      %v3178 = vsel %vm1952, %v2780, 0
      %3180 = vmatprep.subr.mxu0 0.0
      %3181 = vmatpush1.msra.mxu0 0.0
      %3182 = vmatprep.subr.mxu0 0.0
      %3183 = vmatpush1.msra.mxu0 0.0
      %3184 = vmatprep.subr.mxu0 0.0
      %3185 = vmatpush1.msra.mxu0 0.0
      %3186 = vmatprep.subr.mxu0 0.0
      %3187 = vmatpush1.msra.mxu0 0.0
      %3188 = vmatprep.subr.mxu0 0.0
      %3189 = vmatpush1.msra.mxu0 0.0
      %3190 = vmatprep.subr.mxu0 0.0
      %3191 = vmatpush1.msra.mxu0 0.0
      %3192 = vmatprep.subr.mxu0 0.0
      %3193 = vmatpush1.msra.mxu0 0.0
      %3194 = vmatprep.subr.mxu0 0.0
      %3195 = vmatpush1.msra.mxu0 0.0
      %3196 = vmatprep.subr.mxu0 0.0
      %3197 = vmatpush1.msra.mxu0 0.0
      %3198 = vmatprep.subr.mxu0 0.0
      %3199 = vmatpush1.msra.mxu0 0.0
      %3200 = vmatprep.subr.mxu0 0.0
      %3201 = vmatpush1.msra.mxu0 0.0
      %3202 = vmatprep.subr.mxu0 0.0
      %3203 = vmatpush1.msra.mxu0 0.0
      %3204 = vmatprep.subr.mxu0 0.0
      %3205 = vmatpush1.msra.mxu0 0.0
      %3206 = vmatprep.subr.mxu0 0.0
      %3207 = vmatpush1.msra.mxu0 0.0
      %3208 = vmatprep.subr.mxu0 0.0
      %3209 = vmatpush1.msra.mxu0 %v3171
      %3210 = vmatprep.subr.mxu0 0.0
      %3211 = vmatpush1.msra.mxu0 %v3168
      %3212 = vmatprep.subr.mxu0 0.0
      %3213 = vmatpush2.msra.mxu0 0.0
      %3214 = vmatprep.subr.mxu0 0.0
      %3215 = vmatpush2.msra.mxu0 0.0
      %3216 = vmatprep.subr.mxu0 0.0
      %3217 = vmatpush2.msra.mxu0 0.0
      %3218 = vmatprep.subr.mxu0 0.0
      %3219 = vmatpush2.msra.mxu0 0.0
      %3220 = vmatprep.subr.mxu0 0.0
      %3221 = vmatpush2.msra.mxu0 0.0
      %3222 = vmatprep.subr.mxu0 0.0
      %3223 = vmatpush2.msra.mxu0 0.0
      %3224 = vmatprep.subr.mxu0 0.0
      %3225 = vmatpush2.msra.mxu0 0.0
      %3226 = vmatprep.subr.mxu0 0.0
      %3227 = vmatpush2.msra.mxu0 0.0
      %3228 = vmatprep.subr.mxu0 0.0
      %3229 = vmatpush2.msra.mxu0 0.0
      %3230 = vmatprep.subr.mxu0 0.0
      %3231 = vmatpush2.msra.mxu0 0.0
      %3232 = vmatprep.subr.mxu0 0.0
      %3233 = vmatpush2.msra.mxu0 0.0
      %3234 = vmatprep.subr.mxu0 0.0
      %3235 = vmatpush2.msra.mxu0 0.0
      %3236 = vmatprep.subr.mxu0 0.0
      %3237 = vmatpush2.msra.mxu0 0.0
      %3238 = vmatprep.subr.mxu0 0.0
      %3239 = vmatpush2.msra.mxu0 0.0
      %3240 = vmatprep.subr.mxu0 0.0
      %3241 = vmatpush2.msra.mxu0 0.0
      %3242 = vmatprep.subr.mxu0 0.0
      %3243 = vmatpush2.msra.mxu0 0.0
      %3244 = vmatprep.mubr.f32.mxu0 0.0
      %3245 = vmatmul.mubr.f32.gmra.mxu0 %v3175
      %v3246 = vpop.f32.mrf.mxu0
      %v3247 = vadd.f32 0.0, %v3246
      %v3248 = vpop.f32.mrf.mxu0
      %3249 = vmatprep.mubr.f32.mxu0 0.0
      %3250 = vmatmul.mubr.f32.gmra.mxu0 %v3178
      %v3251 = vpop.f32.mrf.mxu0
      %v3252 = vadd.f32 0.0, %v3251
      %v3253 = vpop.f32.mrf.mxu0
      %3254 = vdwg.mxu0
      %v3255 = vld [vmem:[%s61] sm:$0xff]
      %vm3256 = vcmp.ge.f32.partialorder %v3247, 0.0
      %vm3257 = vcmp.ge.f32.partialorder %v3252, 0.0
      %v3258 = vmul.f32 %v3247, 0.1
      %v3259 = vmul.f32 %v3252, 0.1
      %v3260 = vsel %vm3256, %v3247, %v3258
      %v3261 = vsel %vm3257, %v3252, %v3259
      %v3262 = vpack.c.bf16 %v3260, %v3260
      %v3263 = vpack.c.bf16 %v3261, %v3261
      %v3265 = vshrl.u32 %v3262, 16
      %v3267 = vrot.slane %v3265, 7
      %v3268 = vshll.u32 %v3262, 16
      %v3270 = vor.u32 %v3267, %v3268
      %v3272 = vsel %vm1298, 0, %v3270
      %v3273 = vsel %vm2276, %v3272, 0
      %v3275 = vshrl.u32 %v3263, 16
      %v3277 = vrot.slane %v3275, 7
      %v3278 = vshll.u32 %v3263, 16
      %v3280 = vor.u32 %v3277, %v3278
      %v3282 = vsel %vm1298, 0, %v3280
      %v3283 = vsel %vm2276, %v3282, 0
      %v3284 = vrot.slane %v1228, 1
      %v3285 = vor.u32 %v1225, %v3284
      %3286 = vrot.lane.b32.xlu0 %v3285, 32
      %v3287 = vpop.permute.xlu0 %3286
      %v3289 = vrot.slane 0, 1
      %3290 = vrot.lane.b32.xlu0 %v3289, 64
      %v3291 = vpop.permute.xlu0 %3290
      %3293 = vrot.lane.b32.xlu0 %v3273, 96
      %v3294 = vpop.permute.xlu0 %3293
      %v3296 = vshrl.u32 %v3273, 16
      %v3298 = vshll.u32 %v3273, 16
      %v3300 = vrot.slane %v3298, 1
      %v3301 = vor.u32 %v3296, %v3300
      %v3302 = vrot.slane %v3273, 1
      %3303 = vrot.lane.b32.xlu0 %v3302, 32
      %v3304 = vpop.permute.xlu0 %3303
      %3306 = vrot.lane.b32.xlu0 %v3283, 64
      %v3307 = vpop.permute.xlu0 %3306
      %v3309 = vshrl.u32 %v3283, 16
      %v3311 = vshll.u32 %v3283, 16
      %v3313 = vrot.slane %v3311, 1
      %v3314 = vor.u32 %v3309, %v3313
      %3315 = vrot.lane.b32.xlu0 %v3314, 96
      %v3316 = vpop.permute.xlu0 %3315
      %v3317 = vrot.slane %v3283, 1
      %v3319 = vsel %vm2476, 0, %v3287
      %v3321 = vsel %vm2494, %v3319, %v3291
      %v3323 = vsel %vm2512, %v3321, %v3294
      %v3327 = vsel %vm2476, %v3301, %v3304
      %v3329 = vsel %vm2494, %v3327, %v3307
      %v3331 = vsel %vm2512, %v3329, %v3316
      %v3333 = vld [vmem:[%s15] sm:$0xf]
      %v3334 = vld [vmem:[%s15 + $0x4] sm:$0xf]
      %v3335 = vld [vmem:[%s15 + $0x8] sm:$0xf]
      %v3336 = vld [vmem:[%s15 + $0xc] sm:$0xf]
      %v3337 = vld [vmem:[%s15 + $0x10] sm:$0xf]
      %v3338 = vld [vmem:[%s15 + $0x14] sm:$0xf]
      %v3339 = vld [vmem:[%s15 + $0x18] sm:$0xf]
      %v3340 = vld [vmem:[%s15 + $0x1c] sm:$0xf]
      %v3341 = vld [vmem:[%s15 + $0x20] sm:$0xf]
      %v3342 = vld [vmem:[%s15 + $0x24] sm:$0xf]
      %v3343 = vld [vmem:[%s15 + $0x28] sm:$0xf]
      %v3344 = vld [vmem:[%s15 + $0x2c] sm:$0xf]
      %v3345 = vld [vmem:[%s15 + $0x30] sm:$0xf]
      %v3346 = vld [vmem:[%s15 + $0x34] sm:$0xf]
      %v3347 = vld [vmem:[%s15 + $0x38] sm:$0xf]
      %v3348 = vld [vmem:[%s15 + $0x3c] sm:$0xf]
      %v3349 = vld [vmem:[%s15 + $0x40] sm:$0xf]
      %v3350 = vld [vmem:[%s15 + $0x44] sm:$0xf]
      %v3351 = vld [vmem:[%s15 + $0x48] sm:$0xf]
      %v3352 = vld [vmem:[%s15 + $0x4c] sm:$0xf]
      %v3353 = vld [vmem:[%s15 + $0x50] sm:$0xf]
      %v3354 = vld [vmem:[%s15 + $0x54] sm:$0xf]
      %v3355 = vld [vmem:[%s15 + $0x58] sm:$0xf]
      %v3356 = vld [vmem:[%s15 + $0x5c] sm:$0xf]
      %v3357 = vld [vmem:[%s15 + $0x60] sm:$0xf]
      %v3358 = vld [vmem:[%s15 + $0x64] sm:$0xf]
      %v3359 = vld [vmem:[%s15 + $0x68] sm:$0xf]
      %v3360 = vld [vmem:[%s15 + $0x6c] sm:$0xf]
      %v3361 = vld [vmem:[%s15 + $0x70] sm:$0xf]
      %v3362 = vld [vmem:[%s15 + $0x74] sm:$0xf]
      %v3363 = vld [vmem:[%s15 + $0x78] sm:$0xf]
      %v3364 = vld [vmem:[%s15 + $0x7c] sm:$0xf]
      %v3365 = vld [vmem:[%s15 + $0x80] sm:$0xf]
      %v3366 = vld [vmem:[%s15 + $0x84] sm:$0xf]
      %v3367 = vld [vmem:[%s15 + $0x88] sm:$0xf]
      %v3368 = vld [vmem:[%s15 + $0x8c] sm:$0xf]
      %v3369 = vld [vmem:[%s17] sm:$0x1]
      %v3371 = vlaneseq
      %v3372 = vshrl.u32 %v3371, 7
      %v3373 = vsub.s32 0, %v3372
      %v3374 = vrot.slane %v3369, %v3373
      %v3412 = vunpack.c.l.b16 %v3333
      %v3413 = vunpack.c.l.b16 %v3334
      %v3414 = vunpack.c.l.b16 %v3335
      %v3415 = vunpack.c.l.b16 %v3336
      %v3416 = vunpack.c.l.b16 %v3337
      %v3417 = vunpack.c.l.b16 %v3338
      %v3418 = vunpack.c.l.b16 %v3339
      %v3419 = vunpack.c.l.b16 %v3340
      %v3420 = vunpack.c.l.b16 %v3341
      %v3421 = vunpack.c.l.b16 %v3342
      %v3422 = vunpack.c.l.b16 %v3343
      %v3423 = vunpack.c.l.b16 %v3344
      %v3424 = vunpack.c.l.b16 %v3345
      %v3425 = vunpack.c.l.b16 %v3346
      %v3426 = vunpack.c.l.b16 %v3347
      %v3427 = vunpack.c.l.b16 %v3348
      %v3428 = vunpack.c.l.b16 %v3349
      %v3429 = vunpack.c.l.b16 %v3350
      %v3430 = vunpack.c.l.b16 %v3351
      %v3431 = vunpack.c.l.b16 %v3352
      %v3432 = vunpack.c.l.b16 %v3353
      %v3433 = vunpack.c.l.b16 %v3354
      %v3434 = vunpack.c.l.b16 %v3355
      %v3435 = vunpack.c.l.b16 %v3356
      %v3436 = vunpack.c.l.b16 %v3357
      %v3437 = vunpack.c.l.b16 %v3358
      %v3438 = vunpack.c.l.b16 %v3359
      %v3439 = vunpack.c.l.b16 %v3360
      %v3440 = vunpack.c.l.b16 %v3361
      %v3441 = vunpack.c.l.b16 %v3362
      %v3442 = vunpack.c.l.b16 %v3363
      %v3443 = vunpack.c.l.b16 %v3364
      %v3444 = vunpack.c.l.b16 %v3365
      %v3445 = vunpack.c.l.b16 %v3366
      %v3446 = vunpack.c.l.b16 %v3367
      %v3447 = vunpack.c.l.b16 %v3368
      %v3448 = vpack.c.b16 %v3413, %v3412
      %v3449 = vpack.c.b16 %v3415, %v3414
      %v3450 = vpack.c.b16 %v3417, %v3416
      %v3451 = vpack.c.b16 %v3419, %v3418
      %v3452 = vpack.c.b16 %v3421, %v3420
      %v3453 = vpack.c.b16 %v3423, %v3422
      %v3454 = vpack.c.b16 %v3425, %v3424
      %v3455 = vpack.c.b16 %v3427, %v3426
      %v3456 = vpack.c.b16 %v3429, %v3428
      %v3457 = vpack.c.b16 %v3431, %v3430
      %v3458 = vpack.c.b16 %v3433, %v3432
      %v3459 = vpack.c.b16 %v3435, %v3434
      %v3460 = vpack.c.b16 %v3437, %v3436
      %v3461 = vpack.c.b16 %v3439, %v3438
      %v3462 = vpack.c.b16 %v3441, %v3440
      %v3463 = vpack.c.b16 %v3443, %v3442
      %v3464 = vpack.c.b16 %v3445, %v3444
      %v3465 = vpack.c.b16 %v3447, %v3446
      %v3485 = vsel %vm2476, %v3317, 0
      %3487 = vmatprep.subr.bf16.mxu0 0
      %3488 = vmatpush1.bf16.msra.mxu0 %v3455
      %3489 = vmatprep.subr.bf16.mxu0 0
      %3490 = vmatpush1.bf16.msra.mxu0 %v3454
      %3491 = vmatprep.subr.bf16.mxu0 0
      %3492 = vmatpush1.bf16.msra.mxu0 %v3453
      %3493 = vmatprep.subr.bf16.mxu0 0
      %3494 = vmatpush1.bf16.msra.mxu0 %v3452
      %3495 = vmatprep.subr.bf16.mxu0 0
      %3496 = vmatpush1.bf16.msra.mxu0 %v3451
      %3497 = vmatprep.subr.bf16.mxu0 0
      %3498 = vmatpush1.bf16.msra.mxu0 %v3450
      %3499 = vmatprep.subr.bf16.mxu0 0
      %3500 = vmatpush1.bf16.msra.mxu0 %v3449
      %3501 = vmatprep.subr.bf16.mxu0 0
      %3502 = vmatpush1.bf16.msra.mxu0 %v3448
      %3503 = vmatprep.subr.bf16.mxu0 0
      %3504 = vmatpush2.bf16.msra.mxu0 %v3463
      %3505 = vmatprep.subr.bf16.mxu0 0
      %3506 = vmatpush2.bf16.msra.mxu0 %v3462
      %3507 = vmatprep.subr.bf16.mxu0 0
      %3508 = vmatpush2.bf16.msra.mxu0 %v3461
      %3509 = vmatprep.subr.bf16.mxu0 0
      %3510 = vmatpush2.bf16.msra.mxu0 %v3460
      %3511 = vmatprep.subr.bf16.mxu0 0
      %3512 = vmatpush2.bf16.msra.mxu0 %v3459
      %3513 = vmatprep.subr.bf16.mxu0 0
      %3514 = vmatpush2.bf16.msra.mxu0 %v3458
      %3515 = vmatprep.subr.bf16.mxu0 0
      %3516 = vmatpush2.bf16.msra.mxu0 %v3457
      %3517 = vmatprep.subr.bf16.mxu0 0
      %3518 = vmatpush2.bf16.msra.mxu0 %v3456
      %3519 = vmatprep.mubr.bf16.mxu0 %v3331
      %3520 = vmatmul.mubr.bf16.gmra.mxu0 %v3323
      %v3521 = vpop.f32.mrf.mxu0
      %v3522 = vadd.f32 %v3374, %v3521
      %v3523 = vpop.f32.mrf.mxu0
      %v3524 = vpop.f32.mrf.mxu0
      %v3525 = vpop.f32.mrf.mxu0
      %3526 = vdwg.mxu0
      %3527 = vmatprep.subr.bf16.mxu0 0
      %3528 = vmatpush1.bf16.msra.mxu0 0
      %3529 = vmatprep.subr.bf16.mxu0 0
      %3530 = vmatpush1.bf16.msra.mxu0 0
      %3531 = vmatprep.subr.bf16.mxu0 0
      %3532 = vmatpush1.bf16.msra.mxu0 0
      %3533 = vmatprep.subr.bf16.mxu0 0
      %3534 = vmatpush1.bf16.msra.mxu0 0
      %3535 = vmatprep.subr.bf16.mxu0 0
      %3536 = vmatpush1.bf16.msra.mxu0 0
      %3537 = vmatprep.subr.bf16.mxu0 0
      %3538 = vmatpush1.bf16.msra.mxu0 0
      %3539 = vmatprep.subr.bf16.mxu0 0
      %3540 = vmatpush1.bf16.msra.mxu0 %v3465
      %3541 = vmatprep.subr.bf16.mxu0 0
      %3542 = vmatpush1.bf16.msra.mxu0 %v3464
      %3543 = vmatprep.subr.bf16.mxu0 0
      %3544 = vmatpush2.bf16.msra.mxu0 0
      %3545 = vmatprep.subr.bf16.mxu0 0
      %3546 = vmatpush2.bf16.msra.mxu0 0
      %3547 = vmatprep.subr.bf16.mxu0 0
      %3548 = vmatpush2.bf16.msra.mxu0 0
      %3549 = vmatprep.subr.bf16.mxu0 0
      %3550 = vmatpush2.bf16.msra.mxu0 0
      %3551 = vmatprep.subr.bf16.mxu0 0
      %3552 = vmatpush2.bf16.msra.mxu0 0
      %3553 = vmatprep.subr.bf16.mxu0 0
      %3554 = vmatpush2.bf16.msra.mxu0 0
      %3555 = vmatprep.subr.bf16.mxu0 0
      %3556 = vmatpush2.bf16.msra.mxu0 0
      %3557 = vmatprep.subr.bf16.mxu0 0
      %3558 = vmatpush2.bf16.msra.mxu0 0
      %3559 = vmatprep.mubr.bf16.mxu0 0
      %3560 = vmatmul.mubr.bf16.gmra.mxu0 %v3485
      %v3561 = vpop.f32.mrf.mxu0
      %v3562 = vadd.f32 %v3522, %v3561
      %v3563 = vpop.f32.mrf.mxu0
      %v3564 = vpop.f32.mrf.mxu0
      %v3565 = vpop.f32.mrf.mxu0
      %3566 = vdwg.mxu0
      %v3568 = vsel %vm1884, %v3255, 0
      %3570 = vmatprep.subr.mxu0 0.0
      %3571 = vmatpush1.msra.mxu0 0.0
      %3572 = vmatprep.subr.mxu0 0.0
      %3573 = vmatpush1.msra.mxu0 0.0
      %3574 = vmatprep.subr.mxu0 0.0
      %3575 = vmatpush1.msra.mxu0 0.0
      %3576 = vmatprep.subr.mxu0 0.0
      %3577 = vmatpush1.msra.mxu0 0.0
      %3578 = vmatprep.subr.mxu0 0.0
      %3579 = vmatpush1.msra.mxu0 0.0
      %3580 = vmatprep.subr.mxu0 0.0
      %3581 = vmatpush1.msra.mxu0 0.0
      %3582 = vmatprep.subr.mxu0 0.0
      %3583 = vmatpush1.msra.mxu0 0.0
      %3584 = vmatprep.subr.mxu0 0.0
      %3585 = vmatpush1.msra.mxu0 0.0
      %3586 = vmatprep.subr.mxu0 0.0
      %3587 = vmatpush1.msra.mxu0 0.0
      %3588 = vmatprep.subr.mxu0 0.0
      %3589 = vmatpush1.msra.mxu0 0.0
      %3590 = vmatprep.subr.mxu0 0.0
      %3591 = vmatpush1.msra.mxu0 0.0
      %3592 = vmatprep.subr.mxu0 0.0
      %3593 = vmatpush1.msra.mxu0 0.0
      %3594 = vmatprep.subr.mxu0 0.0
      %3595 = vmatpush1.msra.mxu0 0.0
      %3596 = vmatprep.subr.mxu0 0.0
      %3597 = vmatpush1.msra.mxu0 0.0
      %3598 = vmatprep.subr.mxu0 0.0
      %3599 = vmatpush1.msra.mxu0 0.0
      %3600 = vmatprep.subr.mxu0 0.0
      %3601 = vmatpush1.msra.mxu0 %v3562
      %3602 = vmatprep.subr.mxu0 0.0
      %3603 = vmatpush2.msra.mxu0 0.0
      %3604 = vmatprep.subr.mxu0 0.0
      %3605 = vmatpush2.msra.mxu0 0.0
      %3606 = vmatprep.subr.mxu0 0.0
      %3607 = vmatpush2.msra.mxu0 0.0
      %3608 = vmatprep.subr.mxu0 0.0
      %3609 = vmatpush2.msra.mxu0 0.0
      %3610 = vmatprep.subr.mxu0 0.0
      %3611 = vmatpush2.msra.mxu0 0.0
      %3612 = vmatprep.subr.mxu0 0.0
      %3613 = vmatpush2.msra.mxu0 0.0
      %3614 = vmatprep.subr.mxu0 0.0
      %3615 = vmatpush2.msra.mxu0 0.0
      %3616 = vmatprep.subr.mxu0 0.0
      %3617 = vmatpush2.msra.mxu0 0.0
      %3618 = vmatprep.subr.mxu0 0.0
      %3619 = vmatpush2.msra.mxu0 0.0
      %3620 = vmatprep.subr.mxu0 0.0
      %3621 = vmatpush2.msra.mxu0 0.0
      %3622 = vmatprep.subr.mxu0 0.0
      %3623 = vmatpush2.msra.mxu0 0.0
      %3624 = vmatprep.subr.mxu0 0.0
      %3625 = vmatpush2.msra.mxu0 0.0
      %3626 = vmatprep.subr.mxu0 0.0
      %3627 = vmatpush2.msra.mxu0 0.0
      %3628 = vmatprep.subr.mxu0 0.0
      %3629 = vmatpush2.msra.mxu0 0.0
      %3630 = vmatprep.subr.mxu0 0.0
      %3631 = vmatpush2.msra.mxu0 0.0
      %3632 = vmatprep.subr.mxu0 0.0
      %3633 = vmatpush2.msra.mxu0 0.0
      %3634 = vmatprep.mubr.f32.mxu0 0.0
      %3635 = vmatmul.mubr.f32.gmra.mxu0 %v3568
      %v3636 = vpop.f32.mrf.mxu0
      %v3637 = vadd.f32 0.0, %v3636
      %v3638 = vpop.f32.mrf.mxu0
      %3639 = vdwg.mxu0
      %vm3640 = vcmp.ge.f32.partialorder %v3637, 0.0
      %v3641 = vmul.f32 %v3637, 0.1
      %v3642 = vsel %vm3640, %v3637, %v3641
      %v3643 = vpack.c.bf16 %v3642, %v3642
      %v3645 = vshrl.u32 %v3643, 16
      %v3647 = vrot.slane %v3645, 7
      %v3648 = vshll.u32 %v3643, 16
      %v3650 = vor.u32 %v3647, %v3648
      %v3652 = vsel %vm1298, 0, %v3650
      %v3653 = vsel %vm2276, %v3652, 0
      %3655 = vrot.lane.b32.xlu0 %v3653, 96
      %v3656 = vpop.permute.xlu0 %3655
      %v3658 = vshrl.u32 %v3653, 16
      %v3660 = vshll.u32 %v3653, 16
      %v3662 = vrot.slane %v3660, 1
      %v3663 = vor.u32 %v3658, %v3662
      %v3664 = vrot.slane %v3653, 1
      %3665 = vrot.lane.b32.xlu0 %v3664, 32
      %v3666 = vpop.permute.xlu0 %3665
      %3667 = vrot.lane.b32.xlu0 0, 64
      %v3668 = vpop.permute.xlu0 %3667
      %3669 = vrot.lane.b32.xlu0 %v3285, 96
      %v3670 = vpop.permute.xlu0 %3669
      %v3672 = vsel %vm2512, %v3321, %v3656
      %v3676 = vsel %vm2476, %v3663, %v3666
      %v3678 = vsel %vm2494, %v3676, %v3668
      %v3680 = vsel %vm2512, %v3678, %v3670
      %v3682 = vld [vmem:[%s19] sm:$0xf]
      %v3683 = vld [vmem:[%s19 + $0x4] sm:$0xf]
      %v3684 = vld [vmem:[%s19 + $0x8] sm:$0xf]
      %v3685 = vld [vmem:[%s19 + $0xc] sm:$0xf]
      %v3686 = vld [vmem:[%s19 + $0x10] sm:$0xf]
      %v3687 = vld [vmem:[%s19 + $0x14] sm:$0xf]
      %v3688 = vld [vmem:[%s19 + $0x18] sm:$0xf]
      %v3689 = vld [vmem:[%s19 + $0x1c] sm:$0xf]
      %v3690 = vld [vmem:[%s19 + $0x20] sm:$0xf]
      %v3691 = vld [vmem:[%s19 + $0x24] sm:$0xf]
      %v3692 = vld [vmem:[%s19 + $0x28] sm:$0xf]
      %v3693 = vld [vmem:[%s19 + $0x2c] sm:$0xf]
      %v3694 = vld [vmem:[%s19 + $0x30] sm:$0xf]
      %v3695 = vld [vmem:[%s19 + $0x34] sm:$0xf]
      %v3696 = vld [vmem:[%s19 + $0x38] sm:$0xf]
      %v3697 = vld [vmem:[%s19 + $0x3c] sm:$0xf]
      %v3698 = vld [vmem:[%s19 + $0x40] sm:$0xf]
      %v3699 = vld [vmem:[%s19 + $0x44] sm:$0xf]
      %v3700 = vld [vmem:[%s19 + $0x48] sm:$0xf]
      %v3701 = vld [vmem:[%s19 + $0x4c] sm:$0xf]
      %v3702 = vld [vmem:[%s19 + $0x50] sm:$0xf]
      %v3703 = vld [vmem:[%s19 + $0x54] sm:$0xf]
      %v3704 = vld [vmem:[%s19 + $0x58] sm:$0xf]
      %v3705 = vld [vmem:[%s19 + $0x5c] sm:$0xf]
      %v3706 = vld [vmem:[%s19 + $0x60] sm:$0xf]
      %v3707 = vld [vmem:[%s19 + $0x64] sm:$0xf]
      %v3708 = vld [vmem:[%s19 + $0x68] sm:$0xf]
      %v3709 = vld [vmem:[%s19 + $0x6c] sm:$0xf]
      %v3710 = vld [vmem:[%s19 + $0x70] sm:$0xf]
      %v3711 = vld [vmem:[%s19 + $0x74] sm:$0xf]
      %v3712 = vld [vmem:[%s19 + $0x78] sm:$0xf]
      %v3713 = vld [vmem:[%s19 + $0x7c] sm:$0xf]
      %v3714 = vld [vmem:[%s19 + $0x80] sm:$0xf]
      %v3715 = vld [vmem:[%s19 + $0x84] sm:$0xf]
      %v3716 = vld [vmem:[%s19 + $0x88] sm:$0xf]
      %v3717 = vld [vmem:[%s19 + $0x8c] sm:$0xf]
      %v3718 = vld [vmem:[%s21] sm:$0x1]
      %v3720 = vlaneseq
      %v3721 = vshrl.u32 %v3720, 7
      %v3722 = vsub.s32 0, %v3721
      %v3723 = vrot.slane %v3718, %v3722
      %v3761 = vunpack.c.l.b16 %v3682
      %v3762 = vunpack.c.l.b16 %v3683
      %v3763 = vunpack.c.l.b16 %v3684
      %v3764 = vunpack.c.l.b16 %v3685
      %v3765 = vunpack.c.l.b16 %v3686
      %v3766 = vunpack.c.l.b16 %v3687
      %v3767 = vunpack.c.l.b16 %v3688
      %v3768 = vunpack.c.l.b16 %v3689
      %v3769 = vunpack.c.l.b16 %v3690
      %v3770 = vunpack.c.l.b16 %v3691
      %v3771 = vunpack.c.l.b16 %v3692
      %v3772 = vunpack.c.l.b16 %v3693
      %v3773 = vunpack.c.l.b16 %v3694
      %v3774 = vunpack.c.l.b16 %v3695
      %v3775 = vunpack.c.l.b16 %v3696
      %v3776 = vunpack.c.l.b16 %v3697
      %v3777 = vunpack.c.l.b16 %v3698
      %v3778 = vunpack.c.l.b16 %v3699
      %v3779 = vunpack.c.l.b16 %v3700
      %v3780 = vunpack.c.l.b16 %v3701
      %v3781 = vunpack.c.l.b16 %v3702
      %v3782 = vunpack.c.l.b16 %v3703
      %v3783 = vunpack.c.l.b16 %v3704
      %v3784 = vunpack.c.l.b16 %v3705
      %v3785 = vunpack.c.l.b16 %v3706
      %v3786 = vunpack.c.l.b16 %v3707
      %v3787 = vunpack.c.l.b16 %v3708
      %v3788 = vunpack.c.l.b16 %v3709
      %v3789 = vunpack.c.l.b16 %v3710
      %v3790 = vunpack.c.l.b16 %v3711
      %v3791 = vunpack.c.l.b16 %v3712
      %v3792 = vunpack.c.l.b16 %v3713
      %v3793 = vunpack.c.l.b16 %v3714
      %v3794 = vunpack.c.l.b16 %v3715
      %v3795 = vunpack.c.l.b16 %v3716
      %v3796 = vunpack.c.l.b16 %v3717
      %v3797 = vpack.c.b16 %v3762, %v3761
      %v3798 = vpack.c.b16 %v3764, %v3763
      %v3799 = vpack.c.b16 %v3766, %v3765
      %v3800 = vpack.c.b16 %v3768, %v3767
      %v3801 = vpack.c.b16 %v3770, %v3769
      %v3802 = vpack.c.b16 %v3772, %v3771
      %v3803 = vpack.c.b16 %v3774, %v3773
      %v3804 = vpack.c.b16 %v3776, %v3775
      %v3805 = vpack.c.b16 %v3778, %v3777
      %v3806 = vpack.c.b16 %v3780, %v3779
      %v3807 = vpack.c.b16 %v3782, %v3781
      %v3808 = vpack.c.b16 %v3784, %v3783
      %v3809 = vpack.c.b16 %v3786, %v3785
      %v3810 = vpack.c.b16 %v3788, %v3787
      %v3811 = vpack.c.b16 %v3790, %v3789
      %v3812 = vpack.c.b16 %v3792, %v3791
      %v3813 = vpack.c.b16 %v3794, %v3793
      %v3814 = vpack.c.b16 %v3796, %v3795
      %v3834 = vsel %vm2476, %v3289, 0
      %3836 = vmatprep.subr.bf16.mxu0 0
      %3837 = vmatpush1.bf16.msra.mxu0 %v3804
      %3838 = vmatprep.subr.bf16.mxu0 0
      %3839 = vmatpush1.bf16.msra.mxu0 %v3803
      %3840 = vmatprep.subr.bf16.mxu0 0
      %3841 = vmatpush1.bf16.msra.mxu0 %v3802
      %3842 = vmatprep.subr.bf16.mxu0 0
      %3843 = vmatpush1.bf16.msra.mxu0 %v3801
      %3844 = vmatprep.subr.bf16.mxu0 0
      %3845 = vmatpush1.bf16.msra.mxu0 %v3800
      %3846 = vmatprep.subr.bf16.mxu0 0
      %3847 = vmatpush1.bf16.msra.mxu0 %v3799
      %3848 = vmatprep.subr.bf16.mxu0 0
      %3849 = vmatpush1.bf16.msra.mxu0 %v3798
      %3850 = vmatprep.subr.bf16.mxu0 0
      %3851 = vmatpush1.bf16.msra.mxu0 %v3797
      %3852 = vmatprep.subr.bf16.mxu0 0
      %3853 = vmatpush2.bf16.msra.mxu0 %v3812
      %3854 = vmatprep.subr.bf16.mxu0 0
      %3855 = vmatpush2.bf16.msra.mxu0 %v3811
      %3856 = vmatprep.subr.bf16.mxu0 0
      %3857 = vmatpush2.bf16.msra.mxu0 %v3810
      %3858 = vmatprep.subr.bf16.mxu0 0
      %3859 = vmatpush2.bf16.msra.mxu0 %v3809
      %3860 = vmatprep.subr.bf16.mxu0 0
      %3861 = vmatpush2.bf16.msra.mxu0 %v3808
      %3862 = vmatprep.subr.bf16.mxu0 0
      %3863 = vmatpush2.bf16.msra.mxu0 %v3807
      %3864 = vmatprep.subr.bf16.mxu0 0
      %3865 = vmatpush2.bf16.msra.mxu0 %v3806
      %3866 = vmatprep.subr.bf16.mxu0 0
      %3867 = vmatpush2.bf16.msra.mxu0 %v3805
      %3868 = vmatprep.mubr.bf16.mxu0 %v3680
      %3869 = vmatmul.mubr.bf16.gmra.mxu0 %v3672
      %v3870 = vpop.f32.mrf.mxu0
      %v3871 = vadd.f32 %v3723, %v3870
      %v3872 = vpop.f32.mrf.mxu0
      %v3873 = vpop.f32.mrf.mxu0
      %v3874 = vpop.f32.mrf.mxu0
      %3875 = vdwg.mxu0
      %3876 = vmatprep.subr.bf16.mxu0 0
      %3877 = vmatpush1.bf16.msra.mxu0 0
      %3878 = vmatprep.subr.bf16.mxu0 0
      %3879 = vmatpush1.bf16.msra.mxu0 0
      %3880 = vmatprep.subr.bf16.mxu0 0
      %3881 = vmatpush1.bf16.msra.mxu0 0
      %3882 = vmatprep.subr.bf16.mxu0 0
      %3883 = vmatpush1.bf16.msra.mxu0 0
      %3884 = vmatprep.subr.bf16.mxu0 0
      %3885 = vmatpush1.bf16.msra.mxu0 0
      %3886 = vmatprep.subr.bf16.mxu0 0
      %3887 = vmatpush1.bf16.msra.mxu0 0
      %3888 = vmatprep.subr.bf16.mxu0 0
      %3889 = vmatpush1.bf16.msra.mxu0 %v3814
      %3890 = vmatprep.subr.bf16.mxu0 0
      %3891 = vmatpush1.bf16.msra.mxu0 %v3813
      %3892 = vmatprep.subr.bf16.mxu0 0
      %3893 = vmatpush2.bf16.msra.mxu0 0
      %3894 = vmatprep.subr.bf16.mxu0 0
      %3895 = vmatpush2.bf16.msra.mxu0 0
      %3896 = vmatprep.subr.bf16.mxu0 0
      %3897 = vmatpush2.bf16.msra.mxu0 0
      %3898 = vmatprep.subr.bf16.mxu0 0
      %3899 = vmatpush2.bf16.msra.mxu0 0
      %3900 = vmatprep.subr.bf16.mxu0 0
      %3901 = vmatpush2.bf16.msra.mxu0 0
      %3902 = vmatprep.subr.bf16.mxu0 0
      %3903 = vmatpush2.bf16.msra.mxu0 0
      %3904 = vmatprep.subr.bf16.mxu0 0
      %3905 = vmatpush2.bf16.msra.mxu0 0
      %3906 = vmatprep.subr.bf16.mxu0 0
      %3907 = vmatpush2.bf16.msra.mxu0 0
      %3908 = vmatprep.mubr.bf16.mxu0 0
      %3909 = vmatmul.mubr.bf16.gmra.mxu0 %v3834
      %v3910 = vpop.f32.mrf.mxu0
      %v3911 = vadd.f32 %v3871, %v3910
      %v3912 = vpop.f32.mrf.mxu0
      %v3913 = vpop.f32.mrf.mxu0
      %v3914 = vpop.f32.mrf.mxu0
      %3915 = vdwg.mxu0
      %v3916 = vld [vmem:[%s63] sm:$0xff]
      %v3917 = vld [vmem:[%s63 + $0x8] sm:$0xff]
      %v3919 = vsel %vm1884, %v3916, 0
      %v3922 = vsel %vm1884, %v3917, 0
      %3924 = vmatprep.subr.mxu0 0.0
      %3925 = vmatpush1.msra.mxu0 0.0
      %3926 = vmatprep.subr.mxu0 0.0
      %3927 = vmatpush1.msra.mxu0 0.0
      %3928 = vmatprep.subr.mxu0 0.0
      %3929 = vmatpush1.msra.mxu0 0.0
      %3930 = vmatprep.subr.mxu0 0.0
      %3931 = vmatpush1.msra.mxu0 0.0
      %3932 = vmatprep.subr.mxu0 0.0
      %3933 = vmatpush1.msra.mxu0 0.0
      %3934 = vmatprep.subr.mxu0 0.0
      %3935 = vmatpush1.msra.mxu0 0.0
      %3936 = vmatprep.subr.mxu0 0.0
      %3937 = vmatpush1.msra.mxu0 0.0
      %3938 = vmatprep.subr.mxu0 0.0
      %3939 = vmatpush1.msra.mxu0 0.0
      %3940 = vmatprep.subr.mxu0 0.0
      %3941 = vmatpush1.msra.mxu0 0.0
      %3942 = vmatprep.subr.mxu0 0.0
      %3943 = vmatpush1.msra.mxu0 0.0
      %3944 = vmatprep.subr.mxu0 0.0
      %3945 = vmatpush1.msra.mxu0 0.0
      %3946 = vmatprep.subr.mxu0 0.0
      %3947 = vmatpush1.msra.mxu0 0.0
      %3948 = vmatprep.subr.mxu0 0.0
      %3949 = vmatpush1.msra.mxu0 0.0
      %3950 = vmatprep.subr.mxu0 0.0
      %3951 = vmatpush1.msra.mxu0 0.0
      %3952 = vmatprep.subr.mxu0 0.0
      %3953 = vmatpush1.msra.mxu0 0.0
      %3954 = vmatprep.subr.mxu0 0.0
      %3955 = vmatpush1.msra.mxu0 %v3911
      %3956 = vmatprep.subr.mxu0 0.0
      %3957 = vmatpush2.msra.mxu0 0.0
      %3958 = vmatprep.subr.mxu0 0.0
      %3959 = vmatpush2.msra.mxu0 0.0
      %3960 = vmatprep.subr.mxu0 0.0
      %3961 = vmatpush2.msra.mxu0 0.0
      %3962 = vmatprep.subr.mxu0 0.0
      %3963 = vmatpush2.msra.mxu0 0.0
      %3964 = vmatprep.subr.mxu0 0.0
      %3965 = vmatpush2.msra.mxu0 0.0
      %3966 = vmatprep.subr.mxu0 0.0
      %3967 = vmatpush2.msra.mxu0 0.0
      %3968 = vmatprep.subr.mxu0 0.0
      %3969 = vmatpush2.msra.mxu0 0.0
      %3970 = vmatprep.subr.mxu0 0.0
      %3971 = vmatpush2.msra.mxu0 0.0
      %3972 = vmatprep.subr.mxu0 0.0
      %3973 = vmatpush2.msra.mxu0 0.0
      %3974 = vmatprep.subr.mxu0 0.0
      %3975 = vmatpush2.msra.mxu0 0.0
      %3976 = vmatprep.subr.mxu0 0.0
      %3977 = vmatpush2.msra.mxu0 0.0
      %3978 = vmatprep.subr.mxu0 0.0
      %3979 = vmatpush2.msra.mxu0 0.0
      %3980 = vmatprep.subr.mxu0 0.0
      %3981 = vmatpush2.msra.mxu0 0.0
      %3982 = vmatprep.subr.mxu0 0.0
      %3983 = vmatpush2.msra.mxu0 0.0
      %3984 = vmatprep.subr.mxu0 0.0
      %3985 = vmatpush2.msra.mxu0 0.0
      %3986 = vmatprep.subr.mxu0 0.0
      %3987 = vmatpush2.msra.mxu0 0.0
      %3988 = vmatprep.mubr.f32.mxu0 0.0
      %3989 = vmatmul.mubr.f32.gmra.mxu0 %v3919
      %v3990 = vpop.f32.mrf.mxu0
      %v3991 = vadd.f32 0.0, %v3990
      %v3992 = vpop.f32.mrf.mxu0
      %3993 = vmatprep.mubr.f32.mxu0 0.0
      %3994 = vmatmul.mubr.f32.gmra.mxu0 %v3922
      %v3995 = vpop.f32.mrf.mxu0
      %v3996 = vadd.f32 0.0, %v3995
      %v3997 = vpop.f32.mrf.mxu0
      %3998 = vdwg.mxu0
      %vm3999 = vcmp.ge.f32.partialorder %v3991, 0.0
      %vm4000 = vcmp.ge.f32.partialorder %v3996, 0.0
      %v4001 = vmul.f32 %v3991, 0.1
      %v4002 = vmul.f32 %v3996, 0.1
      %v4003 = vsel %vm3999, %v3991, %v4001
      %v4004 = vsel %vm4000, %v3996, %v4002
      %v4005 = vpack.c.bf16 %v4003, %v4003
      %v4006 = vpack.c.bf16 %v4004, %v4004
      %v4008 = vshrl.u32 %v4005, 16
      %v4010 = vrot.slane %v4008, 7
      %v4011 = vshll.u32 %v4005, 16
      %v4013 = vor.u32 %v4010, %v4011
      %v4015 = vshrl.u32 %v4006, 16
      %v4017 = vrot.slane %v4015, 7
      %v4018 = vshll.u32 %v4006, 16
      %v4020 = vor.u32 %v4017, %v4018
      %v4023 = vsel %vm1298, 0, %v4013
      %v4024 = vsel %vm1298, 0, %v4020
      %v4025 = vsel %vm2276, %v4023, 0
      %v4026 = vsel %vm2276, %v4024, 0
      %v4028 = vshrl.u32 %v4025, 16
      %v4030 = vshll.u32 %v4025, 16
      %v4032 = vrot.slane %v4030, 1
      %v4033 = vor.u32 %v4028, %v4032
      %4034 = vrot.lane.b32.xlu0 %v4033, 32
      %v4035 = vpop.permute.xlu0 %4034
      %v4037 = vrot.slane %v4025, 1
      %4038 = vrot.lane.b32.xlu0 %v4037, 64
      %v4039 = vpop.permute.xlu0 %4038
      %4041 = vrot.lane.b32.xlu0 %v4025, 96
      %v4042 = vpop.permute.xlu0 %4041
      %4043 = vrot.lane.b32.xlu0 %v4026, 96
      %v4044 = vpop.permute.xlu0 %4043
      %v4046 = vshrl.u32 %v4026, 16
      %v4048 = vshll.u32 %v4026, 16
      %v4050 = vrot.slane %v4048, 1
      %v4051 = vor.u32 %v4046, %v4050
      %v4052 = vrot.slane %v4026, 1
      %4053 = vrot.lane.b32.xlu0 %v4037, 32
      %v4054 = vpop.permute.xlu0 %4053
      %4055 = vrot.lane.b32.xlu0 %v4052, 32
      %v4056 = vpop.permute.xlu0 %4055
      %4057 = vrot.lane.b32.xlu0 %v4026, 64
      %v4058 = vpop.permute.xlu0 %4057
      %4059 = vrot.lane.b32.xlu0 %v4051, 96
      %v4060 = vpop.permute.xlu0 %4059
      %v4062 = vsel %vm2476, %v4025, %v4035
      %v4064 = vsel %vm2494, %v4062, %v4039
      %v4066 = vsel %vm2512, %v3321, %v4042
      %v4068 = vsel %vm2512, %v4064, %v4044
      %v4071 = vsel %vm2476, %v4033, %v4054
      %v4074 = vsel %vm2476, %v4051, %v4056
      %v4076 = vsel %vm2494, %v4071, %v4058
      %v4077 = vsel %vm2494, %v4074, %v3668
      %v4079 = vsel %vm2512, %v4076, %v4060
      %v4080 = vsel %vm2512, %v4077, %v3670
      %v4085 = vunpack.c.l.b16 %v4066
      %v4086 = vunpack.c.l.b16 %v4079
      %v4087 = vunpack.c.l.b16 %v4052
      %v4088 = vunpack.c.l.b16 %v4068
      %v4089 = vunpack.c.l.b16 %v4080
      %v4090 = vunpack.c.l.b16 %v3289
      %v4091 = vld [vmem:[%s23] sm:$0xf]
      %v4092 = vld [vmem:[%s23 + $0x4] sm:$0xf]
      %v4093 = vld [vmem:[%s23 + $0x8] sm:$0xf]
      %v4094 = vld [vmem:[%s23 + $0xc] sm:$0xf]
      %v4095 = vld [vmem:[%s23 + $0x10] sm:$0xf]
      %v4096 = vld [vmem:[%s23 + $0x14] sm:$0xf]
      %v4097 = vld [vmem:[%s23 + $0x18] sm:$0xf]
      %v4098 = vld [vmem:[%s23 + $0x1c] sm:$0xf]
      %v4099 = vld [vmem:[%s23 + $0x20] sm:$0xf]
      %v4100 = vld [vmem:[%s23 + $0x24] sm:$0xf]
      %v4101 = vld [vmem:[%s23 + $0x28] sm:$0xf]
      %v4102 = vld [vmem:[%s23 + $0x2c] sm:$0xf]
      %v4103 = vld [vmem:[%s23 + $0x30] sm:$0xf]
      %v4104 = vld [vmem:[%s23 + $0x34] sm:$0xf]
      %v4105 = vld [vmem:[%s23 + $0x38] sm:$0xf]
      %v4106 = vld [vmem:[%s23 + $0x3c] sm:$0xf]
      %v4107 = vld [vmem:[%s23 + $0x40] sm:$0xf]
      %v4108 = vld [vmem:[%s23 + $0x44] sm:$0xf]
      %v4109 = vld [vmem:[%s23 + $0x48] sm:$0xf]
      %v4110 = vld [vmem:[%s23 + $0x4c] sm:$0xf]
      %v4111 = vld [vmem:[%s23 + $0x50] sm:$0xf]
      %v4112 = vld [vmem:[%s23 + $0x54] sm:$0xf]
      %v4113 = vld [vmem:[%s23 + $0x58] sm:$0xf]
      %v4114 = vld [vmem:[%s23 + $0x5c] sm:$0xf]
      %v4115 = vld [vmem:[%s23 + $0x60] sm:$0xf]
      %v4116 = vld [vmem:[%s23 + $0x64] sm:$0xf]
      %v4117 = vld [vmem:[%s23 + $0x68] sm:$0xf]
      %v4118 = vld [vmem:[%s23 + $0x6c] sm:$0xf]
      %v4119 = vld [vmem:[%s23 + $0x70] sm:$0xf]
      %v4120 = vld [vmem:[%s23 + $0x74] sm:$0xf]
      %v4121 = vld [vmem:[%s23 + $0x78] sm:$0xf]
      %v4122 = vld [vmem:[%s23 + $0x7c] sm:$0xf]
      %v4123 = vld [vmem:[%s23 + $0x80] sm:$0xf]
      %v4124 = vld [vmem:[%s23 + $0x84] sm:$0xf]
      %v4125 = vld [vmem:[%s23 + $0x88] sm:$0xf]
      %v4126 = vld [vmem:[%s23 + $0x8c] sm:$0xf]
      %4127 = vrot.lane.b32.xlu0 %v3301, 32
      %v4128 = vpop.permute.xlu0 %4127
      %4129 = vrot.lane.b32.xlu0 %v3302, 64
      %v4130 = vpop.permute.xlu0 %4129
      %4131 = vrot.lane.b32.xlu0 %v3283, 96
      %v4132 = vpop.permute.xlu0 %4131
      %4133 = vrot.lane.b32.xlu0 %v3317, 32
      %v4134 = vpop.permute.xlu0 %4133
      %v4136 = vsel %vm2476, %v3273, %v4128
      %v4138 = vsel %vm2494, %v4136, %v4130
      %v4140 = vsel %vm2512, %v4138, %v4132
      %v4143 = vsel %vm2476, %v3314, %v4134
      %v4144 = vsel %vm2494, %v4143, %v3668
      %v4145 = vsel %vm2512, %v4144, %v3670
      %v4150 = vunpack.c.l.b16 %v3323
      %v4151 = vunpack.c.l.b16 %v3331
      %v4152 = vunpack.c.l.b16 %v3317
      %v4153 = vunpack.c.l.b16 %v4140
      %v4154 = vunpack.c.l.b16 %v4145
      %v4155 = vld [vmem:[%s25] sm:$0xf]
      %v4156 = vld [vmem:[%s25 + $0x4] sm:$0xf]
      %v4157 = vld [vmem:[%s25 + $0x8] sm:$0xf]
      %v4158 = vld [vmem:[%s25 + $0xc] sm:$0xf]
      %v4159 = vld [vmem:[%s25 + $0x10] sm:$0xf]
      %v4160 = vld [vmem:[%s25 + $0x14] sm:$0xf]
      %v4161 = vld [vmem:[%s25 + $0x18] sm:$0xf]
      %v4162 = vld [vmem:[%s25 + $0x1c] sm:$0xf]
      %v4163 = vld [vmem:[%s25 + $0x20] sm:$0xf]
      %v4164 = vld [vmem:[%s25 + $0x24] sm:$0xf]
      %v4165 = vld [vmem:[%s25 + $0x28] sm:$0xf]
      %v4166 = vld [vmem:[%s25 + $0x2c] sm:$0xf]
      %v4167 = vld [vmem:[%s25 + $0x30] sm:$0xf]
      %v4168 = vld [vmem:[%s25 + $0x34] sm:$0xf]
      %v4169 = vld [vmem:[%s25 + $0x38] sm:$0xf]
      %v4170 = vld [vmem:[%s25 + $0x3c] sm:$0xf]
      %v4171 = vld [vmem:[%s25 + $0x40] sm:$0xf]
      %v4172 = vld [vmem:[%s25 + $0x44] sm:$0xf]
      %v4173 = vld [vmem:[%s25 + $0x48] sm:$0xf]
      %v4174 = vld [vmem:[%s25 + $0x4c] sm:$0xf]
      %v4175 = vld [vmem:[%s25 + $0x50] sm:$0xf]
      %v4176 = vld [vmem:[%s25 + $0x54] sm:$0xf]
      %v4177 = vld [vmem:[%s25 + $0x58] sm:$0xf]
      %v4178 = vld [vmem:[%s25 + $0x5c] sm:$0xf]
      %v4179 = vld [vmem:[%s25 + $0x60] sm:$0xf]
      %v4180 = vld [vmem:[%s25 + $0x64] sm:$0xf]
      %v4181 = vld [vmem:[%s25 + $0x68] sm:$0xf]
      %v4182 = vld [vmem:[%s25 + $0x6c] sm:$0xf]
      %v4183 = vld [vmem:[%s25 + $0x70] sm:$0xf]
      %v4184 = vld [vmem:[%s25 + $0x74] sm:$0xf]
      %v4185 = vld [vmem:[%s25 + $0x78] sm:$0xf]
      %v4186 = vld [vmem:[%s25 + $0x7c] sm:$0xf]
      %v4187 = vld [vmem:[%s25 + $0x80] sm:$0xf]
      %v4188 = vld [vmem:[%s25 + $0x84] sm:$0xf]
      %v4189 = vld [vmem:[%s25 + $0x88] sm:$0xf]
      %v4190 = vld [vmem:[%s25 + $0x8c] sm:$0xf]
      %v4191 = vpack.c.b16 %v4153, %v4150
      %v4192 = vpack.c.b16 %v4154, %v4151
      %v4193 = vpack.c.b16 %v4090, %v4152
      %v4232 = vunpack.c.l.b16 %v4155
      %v4233 = vunpack.c.l.b16 %v4156
      %v4234 = vunpack.c.l.b16 %v4157
      %v4235 = vunpack.c.l.b16 %v4158
      %v4236 = vunpack.c.l.b16 %v4159
      %v4237 = vunpack.c.l.b16 %v4160
      %v4238 = vunpack.c.l.b16 %v4161
      %v4239 = vunpack.c.l.b16 %v4162
      %v4240 = vunpack.c.l.b16 %v4163
      %v4241 = vunpack.c.l.b16 %v4164
      %v4242 = vunpack.c.l.b16 %v4165
      %v4243 = vunpack.c.l.b16 %v4166
      %v4244 = vunpack.c.l.b16 %v4167
      %v4245 = vunpack.c.l.b16 %v4168
      %v4246 = vunpack.c.l.b16 %v4169
      %v4247 = vunpack.c.l.b16 %v4170
      %v4248 = vunpack.c.l.b16 %v4171
      %v4249 = vunpack.c.l.b16 %v4172
      %v4250 = vunpack.c.l.b16 %v4173
      %v4251 = vunpack.c.l.b16 %v4174
      %v4252 = vunpack.c.l.b16 %v4175
      %v4253 = vunpack.c.l.b16 %v4176
      %v4254 = vunpack.c.l.b16 %v4177
      %v4255 = vunpack.c.l.b16 %v4178
      %v4256 = vunpack.c.l.b16 %v4179
      %v4257 = vunpack.c.l.b16 %v4180
      %v4258 = vunpack.c.l.b16 %v4181
      %v4259 = vunpack.c.l.b16 %v4182
      %v4260 = vunpack.c.l.b16 %v4183
      %v4261 = vunpack.c.l.b16 %v4184
      %v4262 = vunpack.c.l.b16 %v4185
      %v4263 = vunpack.c.l.b16 %v4186
      %v4264 = vunpack.c.l.b16 %v4187
      %v4265 = vunpack.c.l.b16 %v4188
      %v4266 = vunpack.c.l.b16 %v4189
      %v4267 = vunpack.c.l.b16 %v4190
      %v4268 = vpack.c.b16 %v4233, %v4232
      %v4269 = vpack.c.b16 %v4235, %v4234
      %v4270 = vpack.c.b16 %v4237, %v4236
      %v4271 = vpack.c.b16 %v4239, %v4238
      %v4272 = vpack.c.b16 %v4241, %v4240
      %v4273 = vpack.c.b16 %v4243, %v4242
      %v4274 = vpack.c.b16 %v4245, %v4244
      %v4275 = vpack.c.b16 %v4247, %v4246
      %v4276 = vpack.c.b16 %v4249, %v4248
      %v4277 = vpack.c.b16 %v4251, %v4250
      %v4278 = vpack.c.b16 %v4253, %v4252
      %v4279 = vpack.c.b16 %v4255, %v4254
      %v4280 = vpack.c.b16 %v4257, %v4256
      %v4281 = vpack.c.b16 %v4259, %v4258
      %v4282 = vpack.c.b16 %v4261, %v4260
      %v4283 = vpack.c.b16 %v4263, %v4262
      %v4284 = vpack.c.b16 %v4265, %v4264
      %v4285 = vpack.c.b16 %v4267, %v4266
      %v4305 = vsel %vm2476, %v4193, 0
      %4307 = vmatprep.subr.bf16.mxu0 0
      %4308 = vmatpush1.bf16.msra.mxu0 %v4275
      %4309 = vmatprep.subr.bf16.mxu0 0
      %4310 = vmatpush1.bf16.msra.mxu0 %v4274
      %4311 = vmatprep.subr.bf16.mxu0 0
      %4312 = vmatpush1.bf16.msra.mxu0 %v4273
      %4313 = vmatprep.subr.bf16.mxu0 0
      %4314 = vmatpush1.bf16.msra.mxu0 %v4272
      %4315 = vmatprep.subr.bf16.mxu0 0
      %4316 = vmatpush1.bf16.msra.mxu0 %v4271
      %4317 = vmatprep.subr.bf16.mxu0 0
      %4318 = vmatpush1.bf16.msra.mxu0 %v4270
      %4319 = vmatprep.subr.bf16.mxu0 0
      %4320 = vmatpush1.bf16.msra.mxu0 %v4269
      %4321 = vmatprep.subr.bf16.mxu0 0
      %4322 = vmatpush1.bf16.msra.mxu0 %v4268
      %4323 = vmatprep.subr.bf16.mxu0 0
      %4324 = vmatpush2.bf16.msra.mxu0 %v4283
      %4325 = vmatprep.subr.bf16.mxu0 0
      %4326 = vmatpush2.bf16.msra.mxu0 %v4282
      %4327 = vmatprep.subr.bf16.mxu0 0
      %4328 = vmatpush2.bf16.msra.mxu0 %v4281
      %4329 = vmatprep.subr.bf16.mxu0 0
      %4330 = vmatpush2.bf16.msra.mxu0 %v4280
      %4331 = vmatprep.subr.bf16.mxu0 0
      %4332 = vmatpush2.bf16.msra.mxu0 %v4279
      %4333 = vmatprep.subr.bf16.mxu0 0
      %4334 = vmatpush2.bf16.msra.mxu0 %v4278
      %4335 = vmatprep.subr.bf16.mxu0 0
      %4336 = vmatpush2.bf16.msra.mxu0 %v4277
      %4337 = vmatprep.subr.bf16.mxu0 0
      %4338 = vmatpush2.bf16.msra.mxu0 %v4276
      %4339 = vmatprep.mubr.bf16.mxu0 %v4192
      %4340 = vmatmul.mubr.bf16.gmra.mxu0 %v4191
      %v4341 = vpop.f32.mrf.mxu0
      %v4342 = vadd.f32 0.0, %v4341
      %v4343 = vpop.f32.mrf.mxu0
      %v4344 = vpop.f32.mrf.mxu0
      %v4345 = vadd.f32 0.0, %v4344
      %v4346 = vpop.f32.mrf.mxu0
      %4347 = vdwg.mxu0
      %4348 = vmatprep.subr.bf16.mxu0 0
      %4349 = vmatpush1.bf16.msra.mxu0 0
      %4350 = vmatprep.subr.bf16.mxu0 0
      %4351 = vmatpush1.bf16.msra.mxu0 0
      %4352 = vmatprep.subr.bf16.mxu0 0
      %4353 = vmatpush1.bf16.msra.mxu0 0
      %4354 = vmatprep.subr.bf16.mxu0 0
      %4355 = vmatpush1.bf16.msra.mxu0 0
      %4356 = vmatprep.subr.bf16.mxu0 0
      %4357 = vmatpush1.bf16.msra.mxu0 0
      %4358 = vmatprep.subr.bf16.mxu0 0
      %4359 = vmatpush1.bf16.msra.mxu0 0
      %4360 = vmatprep.subr.bf16.mxu0 0
      %4361 = vmatpush1.bf16.msra.mxu0 %v4285
      %4362 = vmatprep.subr.bf16.mxu0 0
      %4363 = vmatpush1.bf16.msra.mxu0 %v4284
      %4364 = vmatprep.subr.bf16.mxu0 0
      %4365 = vmatpush2.bf16.msra.mxu0 0
      %4366 = vmatprep.subr.bf16.mxu0 0
      %4367 = vmatpush2.bf16.msra.mxu0 0
      %4368 = vmatprep.subr.bf16.mxu0 0
      %4369 = vmatpush2.bf16.msra.mxu0 0
      %4370 = vmatprep.subr.bf16.mxu0 0
      %4371 = vmatpush2.bf16.msra.mxu0 0
      %4372 = vmatprep.subr.bf16.mxu0 0
      %4373 = vmatpush2.bf16.msra.mxu0 0
      %4374 = vmatprep.subr.bf16.mxu0 0
      %4375 = vmatpush2.bf16.msra.mxu0 0
      %4376 = vmatprep.subr.bf16.mxu0 0
      %4377 = vmatpush2.bf16.msra.mxu0 0
      %4378 = vmatprep.subr.bf16.mxu0 0
      %4379 = vmatpush2.bf16.msra.mxu0 0
      %4380 = vmatprep.mubr.bf16.mxu0 0
      %4381 = vmatmul.mubr.bf16.gmra.mxu0 %v4305
      %v4382 = vpop.f32.mrf.mxu0
      %v4383 = vadd.f32 %v4342, %v4382
      %v4384 = vpop.f32.mrf.mxu0
      %v4385 = vpop.f32.mrf.mxu0
      %v4386 = vadd.f32 %v4345, %v4385
      %v4387 = vpop.f32.mrf.mxu0
      %4388 = vdwg.mxu0
      %v4389 = vpack.c.b16 %v4088, %v4085
      %v4390 = vpack.c.b16 %v4089, %v4086
      %v4391 = vpack.c.b16 %v4090, %v4087
      %v4430 = vunpack.c.l.b16 %v4091
      %v4431 = vunpack.c.l.b16 %v4092
      %v4432 = vunpack.c.l.b16 %v4093
      %v4433 = vunpack.c.l.b16 %v4094
      %v4434 = vunpack.c.l.b16 %v4095
      %v4435 = vunpack.c.l.b16 %v4096
      %v4436 = vunpack.c.l.b16 %v4097
      %v4437 = vunpack.c.l.b16 %v4098
      %v4438 = vunpack.c.l.b16 %v4099
      %v4439 = vunpack.c.l.b16 %v4100
      %v4440 = vunpack.c.l.b16 %v4101
      %v4441 = vunpack.c.l.b16 %v4102
      %v4442 = vunpack.c.l.b16 %v4103
      %v4443 = vunpack.c.l.b16 %v4104
      %v4444 = vunpack.c.l.b16 %v4105
      %v4445 = vunpack.c.l.b16 %v4106
      %v4446 = vunpack.c.l.b16 %v4107
      %v4447 = vunpack.c.l.b16 %v4108
      %v4448 = vunpack.c.l.b16 %v4109
      %v4449 = vunpack.c.l.b16 %v4110
      %v4450 = vunpack.c.l.b16 %v4111
      %v4451 = vunpack.c.l.b16 %v4112
      %v4452 = vunpack.c.l.b16 %v4113
      %v4453 = vunpack.c.l.b16 %v4114
      %v4454 = vunpack.c.l.b16 %v4115
      %v4455 = vunpack.c.l.b16 %v4116
      %v4456 = vunpack.c.l.b16 %v4117
      %v4457 = vunpack.c.l.b16 %v4118
      %v4458 = vunpack.c.l.b16 %v4119
      %v4459 = vunpack.c.l.b16 %v4120
      %v4460 = vunpack.c.l.b16 %v4121
      %v4461 = vunpack.c.l.b16 %v4122
      %v4462 = vunpack.c.l.b16 %v4123
      %v4463 = vunpack.c.l.b16 %v4124
      %v4464 = vunpack.c.l.b16 %v4125
      %v4465 = vunpack.c.l.b16 %v4126
      %v4466 = vpack.c.b16 %v4431, %v4430
      %v4467 = vpack.c.b16 %v4433, %v4432
      %v4468 = vpack.c.b16 %v4435, %v4434
      %v4469 = vpack.c.b16 %v4437, %v4436
      %v4470 = vpack.c.b16 %v4439, %v4438
      %v4471 = vpack.c.b16 %v4441, %v4440
      %v4472 = vpack.c.b16 %v4443, %v4442
      %v4473 = vpack.c.b16 %v4445, %v4444
      %v4474 = vpack.c.b16 %v4447, %v4446
      %v4475 = vpack.c.b16 %v4449, %v4448
      %v4476 = vpack.c.b16 %v4451, %v4450
      %v4477 = vpack.c.b16 %v4453, %v4452
      %v4478 = vpack.c.b16 %v4455, %v4454
      %v4479 = vpack.c.b16 %v4457, %v4456
      %v4480 = vpack.c.b16 %v4459, %v4458
      %v4481 = vpack.c.b16 %v4461, %v4460
      %v4482 = vpack.c.b16 %v4463, %v4462
      %v4483 = vpack.c.b16 %v4465, %v4464
      %v4503 = vsel %vm2476, %v4391, 0
      %4505 = vmatprep.subr.bf16.mxu0 0
      %4506 = vmatpush1.bf16.msra.mxu0 %v4473
      %4507 = vmatprep.subr.bf16.mxu0 0
      %4508 = vmatpush1.bf16.msra.mxu0 %v4472
      %4509 = vmatprep.subr.bf16.mxu0 0
      %4510 = vmatpush1.bf16.msra.mxu0 %v4471
      %4511 = vmatprep.subr.bf16.mxu0 0
      %4512 = vmatpush1.bf16.msra.mxu0 %v4470
      %4513 = vmatprep.subr.bf16.mxu0 0
      %4514 = vmatpush1.bf16.msra.mxu0 %v4469
      %4515 = vmatprep.subr.bf16.mxu0 0
      %4516 = vmatpush1.bf16.msra.mxu0 %v4468
      %4517 = vmatprep.subr.bf16.mxu0 0
      %4518 = vmatpush1.bf16.msra.mxu0 %v4467
      %4519 = vmatprep.subr.bf16.mxu0 0
      %4520 = vmatpush1.bf16.msra.mxu0 %v4466
      %4521 = vmatprep.subr.bf16.mxu0 0
      %4522 = vmatpush2.bf16.msra.mxu0 %v4481
      %4523 = vmatprep.subr.bf16.mxu0 0
      %4524 = vmatpush2.bf16.msra.mxu0 %v4480
      %4525 = vmatprep.subr.bf16.mxu0 0
      %4526 = vmatpush2.bf16.msra.mxu0 %v4479
      %4527 = vmatprep.subr.bf16.mxu0 0
      %4528 = vmatpush2.bf16.msra.mxu0 %v4478
      %4529 = vmatprep.subr.bf16.mxu0 0
      %4530 = vmatpush2.bf16.msra.mxu0 %v4477
      %4531 = vmatprep.subr.bf16.mxu0 0
      %4532 = vmatpush2.bf16.msra.mxu0 %v4476
      %4533 = vmatprep.subr.bf16.mxu0 0
      %4534 = vmatpush2.bf16.msra.mxu0 %v4475
      %4535 = vmatprep.subr.bf16.mxu0 0
      %4536 = vmatpush2.bf16.msra.mxu0 %v4474
      %4537 = vmatprep.mubr.bf16.mxu0 %v4390
      %4538 = vmatmul.mubr.bf16.gmra.mxu0 %v4389
      %v4539 = vpop.f32.mrf.mxu0
      %v4540 = vadd.f32 %v4383, %v4539
      %v4541 = vpop.f32.mrf.mxu0
      %v4542 = vpop.f32.mrf.mxu0
      %v4543 = vadd.f32 %v4386, %v4542
      %v4544 = vpop.f32.mrf.mxu0
      %4545 = vdwg.mxu0
      %4546 = vmatprep.subr.bf16.mxu0 0
      %4547 = vmatpush1.bf16.msra.mxu0 0
      %4548 = vmatprep.subr.bf16.mxu0 0
      %4549 = vmatpush1.bf16.msra.mxu0 0
      %4550 = vmatprep.subr.bf16.mxu0 0
      %4551 = vmatpush1.bf16.msra.mxu0 0
      %4552 = vmatprep.subr.bf16.mxu0 0
      %4553 = vmatpush1.bf16.msra.mxu0 0
      %4554 = vmatprep.subr.bf16.mxu0 0
      %4555 = vmatpush1.bf16.msra.mxu0 0
      %4556 = vmatprep.subr.bf16.mxu0 0
      %4557 = vmatpush1.bf16.msra.mxu0 0
      %4558 = vmatprep.subr.bf16.mxu0 0
      %4559 = vmatpush1.bf16.msra.mxu0 %v4483
      %4560 = vmatprep.subr.bf16.mxu0 0
      %4561 = vmatpush1.bf16.msra.mxu0 %v4482
      %4562 = vmatprep.subr.bf16.mxu0 0
      %4563 = vmatpush2.bf16.msra.mxu0 0
      %4564 = vmatprep.subr.bf16.mxu0 0
      %4565 = vmatpush2.bf16.msra.mxu0 0
      %4566 = vmatprep.subr.bf16.mxu0 0
      %4567 = vmatpush2.bf16.msra.mxu0 0
      %4568 = vmatprep.subr.bf16.mxu0 0
      %4569 = vmatpush2.bf16.msra.mxu0 0
      %4570 = vmatprep.subr.bf16.mxu0 0
      %4571 = vmatpush2.bf16.msra.mxu0 0
      %4572 = vmatprep.subr.bf16.mxu0 0
      %4573 = vmatpush2.bf16.msra.mxu0 0
      %4574 = vmatprep.subr.bf16.mxu0 0
      %4575 = vmatpush2.bf16.msra.mxu0 0
      %4576 = vmatprep.subr.bf16.mxu0 0
      %4577 = vmatpush2.bf16.msra.mxu0 0
      %4578 = vmatprep.mubr.bf16.mxu0 0
      %4579 = vmatmul.mubr.bf16.gmra.mxu0 %v4503
      %v4580 = vpop.f32.mrf.mxu0
      %v4581 = vadd.f32 %v4540, %v4580
      %v4582 = vpop.f32.mrf.mxu0
      %v4583 = vpop.f32.mrf.mxu0
      %v4584 = vadd.f32 %v4543, %v4583
      %v4585 = vpop.f32.mrf.mxu0
      %4586 = vdwg.mxu0
      %v4587 = vld [vmem:[%s27] sm:$0x1]
      %v4589 = vlaneseq
      %v4590 = vshrl.u32 %v4589, 7
      %v4591 = vsub.s32 0, %v4590
      %v4592 = vrot.slane %v4587, %v4591
      %v4594 = vadd.f32 %v4581, %v4592
      %v4595 = vadd.f32 %v4584, %v4592
      %v4596 = vld [vmem:[%s65] sm:$0xff]
      %v4597 = vld [vmem:[%s65 + $0x8] sm:$0xff]
      %v4598 = vld [vmem:[%s65 + $0x10] sm:$0xff]
      %v4599 = vld [vmem:[%s65 + $0x18] sm:$0xff]
      %v4601 = vsel %vm1952, %v4596, 0
      %v4604 = vsel %vm1952, %v4597, 0
      %v4607 = vsel %vm1952, %v4598, 0
      %v4610 = vsel %vm1952, %v4599, 0
      %4612 = vmatprep.subr.mxu0 0.0
      %4613 = vmatpush1.msra.mxu0 0.0
      %4614 = vmatprep.subr.mxu0 0.0
      %4615 = vmatpush1.msra.mxu0 0.0
      %4616 = vmatprep.subr.mxu0 0.0
      %4617 = vmatpush1.msra.mxu0 0.0
      %4618 = vmatprep.subr.mxu0 0.0
      %4619 = vmatpush1.msra.mxu0 0.0
      %4620 = vmatprep.subr.mxu0 0.0
      %4621 = vmatpush1.msra.mxu0 0.0
      %4622 = vmatprep.subr.mxu0 0.0
      %4623 = vmatpush1.msra.mxu0 0.0
      %4624 = vmatprep.subr.mxu0 0.0
      %4625 = vmatpush1.msra.mxu0 0.0
      %4626 = vmatprep.subr.mxu0 0.0
      %4627 = vmatpush1.msra.mxu0 0.0
      %4628 = vmatprep.subr.mxu0 0.0
      %4629 = vmatpush1.msra.mxu0 0.0
      %4630 = vmatprep.subr.mxu0 0.0
      %4631 = vmatpush1.msra.mxu0 0.0
      %4632 = vmatprep.subr.mxu0 0.0
      %4633 = vmatpush1.msra.mxu0 0.0
      %4634 = vmatprep.subr.mxu0 0.0
      %4635 = vmatpush1.msra.mxu0 0.0
      %4636 = vmatprep.subr.mxu0 0.0
      %4637 = vmatpush1.msra.mxu0 0.0
      %4638 = vmatprep.subr.mxu0 0.0
      %4639 = vmatpush1.msra.mxu0 0.0
      %4640 = vmatprep.subr.mxu0 0.0
      %4641 = vmatpush1.msra.mxu0 %v4595
      %4642 = vmatprep.subr.mxu0 0.0
      %4643 = vmatpush1.msra.mxu0 %v4594
      %4644 = vmatprep.subr.mxu0 0.0
      %4645 = vmatpush2.msra.mxu0 0.0
      %4646 = vmatprep.subr.mxu0 0.0
      %4647 = vmatpush2.msra.mxu0 0.0
      %4648 = vmatprep.subr.mxu0 0.0
      %4649 = vmatpush2.msra.mxu0 0.0
      %4650 = vmatprep.subr.mxu0 0.0
      %4651 = vmatpush2.msra.mxu0 0.0
      %4652 = vmatprep.subr.mxu0 0.0
      %4653 = vmatpush2.msra.mxu0 0.0
      %4654 = vmatprep.subr.mxu0 0.0
      %4655 = vmatpush2.msra.mxu0 0.0
      %4656 = vmatprep.subr.mxu0 0.0
      %4657 = vmatpush2.msra.mxu0 0.0
      %4658 = vmatprep.subr.mxu0 0.0
      %4659 = vmatpush2.msra.mxu0 0.0
      %4660 = vmatprep.subr.mxu0 0.0
      %4661 = vmatpush2.msra.mxu0 0.0
      %4662 = vmatprep.subr.mxu0 0.0
      %4663 = vmatpush2.msra.mxu0 0.0
      %4664 = vmatprep.subr.mxu0 0.0
      %4665 = vmatpush2.msra.mxu0 0.0
      %4666 = vmatprep.subr.mxu0 0.0
      %4667 = vmatpush2.msra.mxu0 0.0
      %4668 = vmatprep.subr.mxu0 0.0
      %4669 = vmatpush2.msra.mxu0 0.0
      %4670 = vmatprep.subr.mxu0 0.0
      %4671 = vmatpush2.msra.mxu0 0.0
      %4672 = vmatprep.subr.mxu0 0.0
      %4673 = vmatpush2.msra.mxu0 0.0
      %4674 = vmatprep.subr.mxu0 0.0
      %4675 = vmatpush2.msra.mxu0 0.0
      %4676 = vmatprep.mubr.f32.mxu0 0.0
      %4677 = vmatmul.mubr.f32.gmra.mxu0 %v4601
      %v4678 = vpop.f32.mrf.mxu0
      %v4679 = vadd.f32 0.0, %v4678
      %v4680 = vpop.f32.mrf.mxu0
      %4681 = vmatprep.mubr.f32.mxu0 0.0
      %4682 = vmatmul.mubr.f32.gmra.mxu0 %v4604
      %v4683 = vpop.f32.mrf.mxu0
      %v4684 = vadd.f32 0.0, %v4683
      %v4685 = vpop.f32.mrf.mxu0
      %4686 = vmatprep.mubr.f32.mxu0 0.0
      %4687 = vmatmul.mubr.f32.gmra.mxu0 %v4607
      %v4688 = vpop.f32.mrf.mxu0
      %v4689 = vadd.f32 0.0, %v4688
      %v4690 = vpop.f32.mrf.mxu0
      %4691 = vmatprep.mubr.f32.mxu0 0.0
      %4692 = vmatmul.mubr.f32.gmra.mxu0 %v4610
      %v4693 = vpop.f32.mrf.mxu0
      %v4694 = vadd.f32 0.0, %v4693
      %v4695 = vpop.f32.mrf.mxu0
      %4696 = vdwg.mxu0
      %vm4697 = vcmp.ge.f32.partialorder %v4679, 0.0
      %vm4698 = vcmp.ge.f32.partialorder %v4684, 0.0
      %vm4699 = vcmp.ge.f32.partialorder %v4689, 0.0
      %vm4700 = vcmp.ge.f32.partialorder %v4694, 0.0
      %v4701 = vmul.f32 %v4679, 0.1
      %v4702 = vmul.f32 %v4684, 0.1
      %v4703 = vmul.f32 %v4689, 0.1
      %v4704 = vmul.f32 %v4694, 0.1
      %v4705 = vsel %vm4697, %v4679, %v4701
      %v4706 = vsel %vm4698, %v4684, %v4702
      %v4707 = vsel %vm4699, %v4689, %v4703
      %v4708 = vsel %vm4700, %v4694, %v4704
      %v4709 = vpack.c.bf16 %v4705, %v4705
      %v4710 = vpack.c.bf16 %v4706, %v4706
      %v4711 = vpack.c.bf16 %v4707, %v4707
      %v4712 = vpack.c.bf16 %v4708, %v4708
      %v4714 = vshrl.u32 %v4709, 16
      %v4716 = vrot.slane %v4714, 7
      %v4717 = vshll.u32 %v4709, 16
      %v4719 = vor.u32 %v4716, %v4717
      %v4721 = vshrl.u32 %v4710, 16
      %v4723 = vrot.slane %v4721, 7
      %v4724 = vshll.u32 %v4710, 16
      %v4726 = vor.u32 %v4723, %v4724
      %v4728 = vshrl.u32 %v4711, 16
      %v4730 = vrot.slane %v4728, 7
      %v4731 = vshll.u32 %v4711, 16
      %v4733 = vor.u32 %v4730, %v4731
      %v4735 = vshrl.u32 %v4712, 16
      %v4737 = vrot.slane %v4735, 7
      %v4738 = vshll.u32 %v4712, 16
      %v4740 = vor.u32 %v4737, %v4738
      %v4745 = vsel %vm1298, 0, %v4719
      %v4746 = vsel %vm1298, 0, %v4726
      %v4747 = vsel %vm1298, 0, %v4733
      %v4748 = vsel %vm1298, 0, %v4740
      %v4749 = vsel %vm2276, %v4745, 0
      %v4750 = vsel %vm2276, %v4746, 0
      %v4751 = vsel %vm2276, %v4747, 0
      %v4752 = vsel %vm2276, %v4748, 0
      %v4754 = vshrl.u32 %v4749, 16
      %v4756 = vshll.u32 %v4749, 16
      %v4758 = vrot.slane %v4756, 1
      %v4759 = vor.u32 %v4754, %v4758
      %v4761 = vshrl.u32 %v4750, 16
      %v4763 = vshll.u32 %v4750, 16
      %v4765 = vrot.slane %v4763, 1
      %v4766 = vor.u32 %v4761, %v4765
      %v4768 = vshrl.u32 %v4751, 16
      %v4770 = vshll.u32 %v4751, 16
      %v4772 = vrot.slane %v4770, 1
      %v4773 = vor.u32 %v4768, %v4772
      %4774 = vrot.lane.b32.xlu0 %v4759, 32
      %v4775 = vpop.permute.xlu0 %4774
      %4776 = vrot.lane.b32.xlu0 %v4766, 32
      %v4777 = vpop.permute.xlu0 %4776
      %4778 = vrot.lane.b32.xlu0 %v4773, 32
      %v4779 = vpop.permute.xlu0 %4778
      %v4783 = vrot.slane %v4749, 1
      %v4784 = vrot.slane %v4750, 1
      %v4785 = vrot.slane %v4751, 1
      %4786 = vrot.lane.b32.xlu0 %v4783, 64
      %v4787 = vpop.permute.xlu0 %4786
      %4788 = vrot.lane.b32.xlu0 %v4784, 64
      %v4789 = vpop.permute.xlu0 %4788
      %4790 = vrot.lane.b32.xlu0 %v4785, 64
      %v4791 = vpop.permute.xlu0 %4790
      %4793 = vrot.lane.b32.xlu0 %v4749, 96
      %v4794 = vpop.permute.xlu0 %4793
      %4795 = vrot.lane.b32.xlu0 %v4750, 96
      %v4796 = vpop.permute.xlu0 %4795
      %4797 = vrot.lane.b32.xlu0 %v4751, 96
      %v4798 = vpop.permute.xlu0 %4797
      %4799 = vrot.lane.b32.xlu0 %v4752, 96
      %v4800 = vpop.permute.xlu0 %4799
      %v4802 = vshrl.u32 %v4752, 16
      %v4804 = vshll.u32 %v4752, 16
      %v4806 = vrot.slane %v4804, 1
      %v4807 = vor.u32 %v4802, %v4806
      %v4808 = vrot.slane %v4752, 1
      %4809 = vrot.lane.b32.xlu0 %v4783, 32
      %v4810 = vpop.permute.xlu0 %4809
      %4811 = vrot.lane.b32.xlu0 %v4784, 32
      %v4812 = vpop.permute.xlu0 %4811
      %4813 = vrot.lane.b32.xlu0 %v4785, 32
      %v4814 = vpop.permute.xlu0 %4813
      %4815 = vrot.lane.b32.xlu0 %v4808, 32
      %v4816 = vpop.permute.xlu0 %4815
      %4817 = vrot.lane.b32.xlu0 %v4750, 64
      %v4818 = vpop.permute.xlu0 %4817
      %4819 = vrot.lane.b32.xlu0 %v4751, 64
      %v4820 = vpop.permute.xlu0 %4819
      %4821 = vrot.lane.b32.xlu0 %v4752, 64
      %v4822 = vpop.permute.xlu0 %4821
      %4823 = vrot.lane.b32.xlu0 %v4766, 96
      %v4824 = vpop.permute.xlu0 %4823
      %4825 = vrot.lane.b32.xlu0 %v4773, 96
      %v4826 = vpop.permute.xlu0 %4825
      %4827 = vrot.lane.b32.xlu0 %v4807, 96
      %v4828 = vpop.permute.xlu0 %4827
      %v4830 = vsel %vm2476, %v4749, %v4775
      %v4832 = vsel %vm2476, %v4750, %v4777
      %v4834 = vsel %vm2476, %v4751, %v4779
      %v4836 = vsel %vm2494, %v4830, %v4787
      %v4838 = vsel %vm2494, %v4832, %v4789
      %v4840 = vsel %vm2494, %v4834, %v4791
      %v4842 = vsel %vm2512, %v3321, %v4794
      %v4844 = vsel %vm2512, %v4836, %v4796
      %v4846 = vsel %vm2512, %v4838, %v4798
      %v4848 = vsel %vm2512, %v4840, %v4800
      %v4851 = vsel %vm2476, %v4759, %v4810
      %v4854 = vsel %vm2476, %v4766, %v4812
      %v4857 = vsel %vm2476, %v4773, %v4814
      %v4860 = vsel %vm2476, %v4807, %v4816
      %v4862 = vsel %vm2494, %v4851, %v4818
      %v4864 = vsel %vm2494, %v4854, %v4820
      %v4866 = vsel %vm2494, %v4857, %v4822
      %v4867 = vsel %vm2494, %v4860, %v3668
      %v4869 = vsel %vm2512, %v4862, %v4824
      %v4871 = vsel %vm2512, %v4864, %v4826
      %v4873 = vsel %vm2512, %v4866, %v4828
      %v4874 = vsel %vm2512, %v4867, %v3670
      %v4883 = vunpack.c.l.b16 %v4842
      %v4884 = vunpack.c.l.b16 %v4869
      %v4885 = vunpack.c.l.b16 %v4784
      %v4886 = vunpack.c.l.b16 %v4844
      %v4887 = vunpack.c.l.b16 %v4871
      %v4888 = vunpack.c.l.b16 %v4785
      %v4889 = vunpack.c.l.b16 %v4846
      %v4890 = vunpack.c.l.b16 %v4873
      %v4891 = vunpack.c.l.b16 %v4808
      %v4892 = vunpack.c.l.b16 %v4848
      %v4893 = vunpack.c.l.b16 %v4874
      %v4894 = vld [vmem:[%s29] sm:$0xf]
      %v4895 = vld [vmem:[%s29 + $0x4] sm:$0xf]
      %v4896 = vld [vmem:[%s29 + $0x8] sm:$0xf]
      %v4897 = vld [vmem:[%s29 + $0xc] sm:$0xf]
      %v4898 = vld [vmem:[%s29 + $0x10] sm:$0xf]
      %v4899 = vld [vmem:[%s29 + $0x14] sm:$0xf]
      %v4900 = vld [vmem:[%s29 + $0x18] sm:$0xf]
      %v4901 = vld [vmem:[%s29 + $0x1c] sm:$0xf]
      %v4902 = vld [vmem:[%s29 + $0x20] sm:$0xf]
      %v4903 = vld [vmem:[%s29 + $0x24] sm:$0xf]
      %v4904 = vld [vmem:[%s29 + $0x28] sm:$0xf]
      %v4905 = vld [vmem:[%s29 + $0x2c] sm:$0xf]
      %v4906 = vld [vmem:[%s29 + $0x30] sm:$0xf]
      %v4907 = vld [vmem:[%s29 + $0x34] sm:$0xf]
      %v4908 = vld [vmem:[%s29 + $0x38] sm:$0xf]
      %v4909 = vld [vmem:[%s29 + $0x3c] sm:$0xf]
      %v4910 = vld [vmem:[%s29 + $0x40] sm:$0xf]
      %v4911 = vld [vmem:[%s29 + $0x44] sm:$0xf]
      %v4912 = vld [vmem:[%s29 + $0x48] sm:$0xf]
      %v4913 = vld [vmem:[%s29 + $0x4c] sm:$0xf]
      %v4914 = vld [vmem:[%s29 + $0x50] sm:$0xf]
      %v4915 = vld [vmem:[%s29 + $0x54] sm:$0xf]
      %v4916 = vld [vmem:[%s29 + $0x58] sm:$0xf]
      %v4917 = vld [vmem:[%s29 + $0x5c] sm:$0xf]
      %v4918 = vld [vmem:[%s29 + $0x60] sm:$0xf]
      %v4919 = vld [vmem:[%s29 + $0x64] sm:$0xf]
      %v4920 = vld [vmem:[%s29 + $0x68] sm:$0xf]
      %v4921 = vld [vmem:[%s29 + $0x6c] sm:$0xf]
      %v4922 = vld [vmem:[%s29 + $0x70] sm:$0xf]
      %v4923 = vld [vmem:[%s29 + $0x74] sm:$0xf]
      %v4924 = vld [vmem:[%s29 + $0x78] sm:$0xf]
      %v4925 = vld [vmem:[%s29 + $0x7c] sm:$0xf]
      %v4926 = vld [vmem:[%s29 + $0x80] sm:$0xf]
      %v4927 = vld [vmem:[%s29 + $0x84] sm:$0xf]
      %v4928 = vld [vmem:[%s29 + $0x88] sm:$0xf]
      %v4929 = vld [vmem:[%s29 + $0x8c] sm:$0xf]
      %4930 = vrot.lane.b32.xlu0 %v2866, 32
      %v4931 = vpop.permute.xlu0 %4930
      %4932 = vrot.lane.b32.xlu0 %v2873, 32
      %v4933 = vpop.permute.xlu0 %4932
      %4934 = vrot.lane.b32.xlu0 %v2874, 64
      %v4935 = vpop.permute.xlu0 %4934
      %4936 = vrot.lane.b32.xlu0 %v2875, 64
      %v4937 = vpop.permute.xlu0 %4936
      %4938 = vrot.lane.b32.xlu0 %v2806, 96
      %v4939 = vpop.permute.xlu0 %4938
      %4940 = vrot.lane.b32.xlu0 %v2836, 96
      %v4941 = vpop.permute.xlu0 %4940
      %4942 = vrot.lane.b32.xlu0 %v2849, 32
      %v4943 = vpop.permute.xlu0 %4942
      %4944 = vrot.lane.b32.xlu0 %v2896, 32
      %v4945 = vpop.permute.xlu0 %4944
      %4946 = vrot.lane.b32.xlu0 %v2826, 64
      %v4947 = vpop.permute.xlu0 %4946
      %4948 = vrot.lane.b32.xlu0 %v2873, 96
      %v4949 = vpop.permute.xlu0 %4948
      %v4951 = vsel %vm2476, %v2825, %v4931
      %v4953 = vsel %vm2476, %v2826, %v4933
      %v4955 = vsel %vm2494, %v4951, %v4935
      %v4957 = vsel %vm2494, %v4953, %v4937
      %v4958 = vsel %vm2512, %v3321, %v2857
      %v4960 = vsel %vm2512, %v4955, %v4939
      %v4962 = vsel %vm2512, %v4957, %v4941
      %v4965 = vsel %vm2476, %v2843, %v4943
      %v4968 = vsel %vm2476, %v2891, %v4945
      %v4970 = vsel %vm2494, %v4965, %v4947
      %v4971 = vsel %vm2494, %v4968, %v3668
      %v4973 = vsel %vm2512, %v4970, %v4949
      %v4974 = vsel %vm2512, %v4971, %v3670
      %v4980 = vunpack.c.l.b16 %v4958
      %v4981 = vunpack.c.l.b16 %v4960
      %v4982 = vunpack.c.l.b16 %v4973
      %v4983 = vunpack.c.l.b16 %v2875
      %v4984 = vunpack.c.l.b16 %v4962
      %v4985 = vunpack.c.l.b16 %v4974
      %v4986 = vld [vmem:[%s31] sm:$0xf]
      %v4987 = vld [vmem:[%s31 + $0x4] sm:$0xf]
      %v4988 = vld [vmem:[%s31 + $0x8] sm:$0xf]
      %v4989 = vld [vmem:[%s31 + $0xc] sm:$0xf]
      %v4990 = vld [vmem:[%s31 + $0x10] sm:$0xf]
      %v4991 = vld [vmem:[%s31 + $0x14] sm:$0xf]
      %v4992 = vld [vmem:[%s31 + $0x18] sm:$0xf]
      %v4993 = vld [vmem:[%s31 + $0x1c] sm:$0xf]
      %v4994 = vld [vmem:[%s31 + $0x20] sm:$0xf]
      %v4995 = vld [vmem:[%s31 + $0x24] sm:$0xf]
      %v4996 = vld [vmem:[%s31 + $0x28] sm:$0xf]
      %v4997 = vld [vmem:[%s31 + $0x2c] sm:$0xf]
      %v4998 = vld [vmem:[%s31 + $0x30] sm:$0xf]
      %v4999 = vld [vmem:[%s31 + $0x34] sm:$0xf]
      %v5000 = vld [vmem:[%s31 + $0x38] sm:$0xf]
      %v5001 = vld [vmem:[%s31 + $0x3c] sm:$0xf]
      %v5002 = vld [vmem:[%s31 + $0x40] sm:$0xf]
      %v5003 = vld [vmem:[%s31 + $0x44] sm:$0xf]
      %v5004 = vld [vmem:[%s31 + $0x48] sm:$0xf]
      %v5005 = vld [vmem:[%s31 + $0x4c] sm:$0xf]
      %v5006 = vld [vmem:[%s31 + $0x50] sm:$0xf]
      %v5007 = vld [vmem:[%s31 + $0x54] sm:$0xf]
      %v5008 = vld [vmem:[%s31 + $0x58] sm:$0xf]
      %v5009 = vld [vmem:[%s31 + $0x5c] sm:$0xf]
      %v5010 = vld [vmem:[%s31 + $0x60] sm:$0xf]
      %v5011 = vld [vmem:[%s31 + $0x64] sm:$0xf]
      %v5012 = vld [vmem:[%s31 + $0x68] sm:$0xf]
      %v5013 = vld [vmem:[%s31 + $0x6c] sm:$0xf]
      %v5014 = vld [vmem:[%s31 + $0x70] sm:$0xf]
      %v5015 = vld [vmem:[%s31 + $0x74] sm:$0xf]
      %v5016 = vld [vmem:[%s31 + $0x78] sm:$0xf]
      %v5017 = vld [vmem:[%s31 + $0x7c] sm:$0xf]
      %v5018 = vld [vmem:[%s31 + $0x80] sm:$0xf]
      %v5019 = vld [vmem:[%s31 + $0x84] sm:$0xf]
      %v5020 = vld [vmem:[%s31 + $0x88] sm:$0xf]
      %v5021 = vld [vmem:[%s31 + $0x8c] sm:$0xf]
      %v5022 = vpack.c.b16 %v4981, %v4980
      %v5023 = vpack.c.b16 %v4982, %v2928
      %v5024 = vpack.c.b16 %v4983, %v2929
      %v5025 = vpack.c.b16 %v4984, %v2930
      %v5026 = vpack.c.b16 %v4985, %v2931
      %v5027 = vpack.c.b16 %v4090, %v2932
      %v5068 = vunpack.c.l.b16 %v4986
      %v5069 = vunpack.c.l.b16 %v4987
      %v5070 = vunpack.c.l.b16 %v4988
      %v5071 = vunpack.c.l.b16 %v4989
      %v5072 = vunpack.c.l.b16 %v4990
      %v5073 = vunpack.c.l.b16 %v4991
      %v5074 = vunpack.c.l.b16 %v4992
      %v5075 = vunpack.c.l.b16 %v4993
      %v5076 = vunpack.c.l.b16 %v4994
      %v5077 = vunpack.c.l.b16 %v4995
      %v5078 = vunpack.c.l.b16 %v4996
      %v5079 = vunpack.c.l.b16 %v4997
      %v5080 = vunpack.c.l.b16 %v4998
      %v5081 = vunpack.c.l.b16 %v4999
      %v5082 = vunpack.c.l.b16 %v5000
      %v5083 = vunpack.c.l.b16 %v5001
      %v5084 = vunpack.c.l.b16 %v5002
      %v5085 = vunpack.c.l.b16 %v5003
      %v5086 = vunpack.c.l.b16 %v5004
      %v5087 = vunpack.c.l.b16 %v5005
      %v5088 = vunpack.c.l.b16 %v5006
      %v5089 = vunpack.c.l.b16 %v5007
      %v5090 = vunpack.c.l.b16 %v5008
      %v5091 = vunpack.c.l.b16 %v5009
      %v5092 = vunpack.c.l.b16 %v5010
      %v5093 = vunpack.c.l.b16 %v5011
      %v5094 = vunpack.c.l.b16 %v5012
      %v5095 = vunpack.c.l.b16 %v5013
      %v5096 = vunpack.c.l.b16 %v5014
      %v5097 = vunpack.c.l.b16 %v5015
      %v5098 = vunpack.c.l.b16 %v5016
      %v5099 = vunpack.c.l.b16 %v5017
      %v5100 = vunpack.c.l.b16 %v5018
      %v5101 = vunpack.c.l.b16 %v5019
      %v5102 = vunpack.c.l.b16 %v5020
      %v5103 = vunpack.c.l.b16 %v5021
      %v5104 = vpack.c.b16 %v5069, %v5068
      %v5105 = vpack.c.b16 %v5071, %v5070
      %v5106 = vpack.c.b16 %v5073, %v5072
      %v5107 = vpack.c.b16 %v5075, %v5074
      %v5108 = vpack.c.b16 %v5077, %v5076
      %v5109 = vpack.c.b16 %v5079, %v5078
      %v5110 = vpack.c.b16 %v5081, %v5080
      %v5111 = vpack.c.b16 %v5083, %v5082
      %v5112 = vpack.c.b16 %v5085, %v5084
      %v5113 = vpack.c.b16 %v5087, %v5086
      %v5114 = vpack.c.b16 %v5089, %v5088
      %v5115 = vpack.c.b16 %v5091, %v5090
      %v5116 = vpack.c.b16 %v5093, %v5092
      %v5117 = vpack.c.b16 %v5095, %v5094
      %v5118 = vpack.c.b16 %v5097, %v5096
      %v5119 = vpack.c.b16 %v5099, %v5098
      %v5120 = vpack.c.b16 %v5101, %v5100
      %v5121 = vpack.c.b16 %v5103, %v5102
      %v5141 = vsel %vm2476, %v5024, 0
      %v5144 = vsel %vm2476, %v5027, 0
      %5146 = vmatprep.subr.bf16.mxu0 0
      %5147 = vmatpush1.bf16.msra.mxu0 %v5111
      %5148 = vmatprep.subr.bf16.mxu0 0
      %5149 = vmatpush1.bf16.msra.mxu0 %v5110
      %5150 = vmatprep.subr.bf16.mxu0 0
      %5151 = vmatpush1.bf16.msra.mxu0 %v5109
      %5152 = vmatprep.subr.bf16.mxu0 0
      %5153 = vmatpush1.bf16.msra.mxu0 %v5108
      %5154 = vmatprep.subr.bf16.mxu0 0
      %5155 = vmatpush1.bf16.msra.mxu0 %v5107
      %5156 = vmatprep.subr.bf16.mxu0 0
      %5157 = vmatpush1.bf16.msra.mxu0 %v5106
      %5158 = vmatprep.subr.bf16.mxu0 0
      %5159 = vmatpush1.bf16.msra.mxu0 %v5105
      %5160 = vmatprep.subr.bf16.mxu0 0
      %5161 = vmatpush1.bf16.msra.mxu0 %v5104
      %5162 = vmatprep.subr.bf16.mxu0 0
      %5163 = vmatpush2.bf16.msra.mxu0 %v5119
      %5164 = vmatprep.subr.bf16.mxu0 0
      %5165 = vmatpush2.bf16.msra.mxu0 %v5118
      %5166 = vmatprep.subr.bf16.mxu0 0
      %5167 = vmatpush2.bf16.msra.mxu0 %v5117
      %5168 = vmatprep.subr.bf16.mxu0 0
      %5169 = vmatpush2.bf16.msra.mxu0 %v5116
      %5170 = vmatprep.subr.bf16.mxu0 0
      %5171 = vmatpush2.bf16.msra.mxu0 %v5115
      %5172 = vmatprep.subr.bf16.mxu0 0
      %5173 = vmatpush2.bf16.msra.mxu0 %v5114
      %5174 = vmatprep.subr.bf16.mxu0 0
      %5175 = vmatpush2.bf16.msra.mxu0 %v5113
      %5176 = vmatprep.subr.bf16.mxu0 0
      %5177 = vmatpush2.bf16.msra.mxu0 %v5112
      %5178 = vmatprep.mubr.bf16.mxu0 %v5023
      %5179 = vmatmul.mubr.bf16.gmra.mxu0 %v5022
      %v5180 = vpop.f32.mrf.mxu0
      %v5181 = vadd.f32 0.0, %v5180
      %v5182 = vpop.f32.mrf.mxu0
      %v5183 = vpop.f32.mrf.mxu0
      %v5184 = vadd.f32 0.0, %v5183
      %v5185 = vpop.f32.mrf.mxu0
      %5186 = vmatprep.mubr.bf16.mxu0 %v5026
      %5187 = vmatmul.mubr.bf16.gmra.mxu0 %v5025
      %v5188 = vpop.f32.mrf.mxu0
      %v5189 = vadd.f32 0.0, %v5188
      %v5190 = vpop.f32.mrf.mxu0
      %v5191 = vpop.f32.mrf.mxu0
      %v5192 = vadd.f32 0.0, %v5191
      %v5193 = vpop.f32.mrf.mxu0
      %5194 = vdwg.mxu0
      %5195 = vmatprep.subr.bf16.mxu0 0
      %5196 = vmatpush1.bf16.msra.mxu0 0
      %5197 = vmatprep.subr.bf16.mxu0 0
      %5198 = vmatpush1.bf16.msra.mxu0 0
      %5199 = vmatprep.subr.bf16.mxu0 0
      %5200 = vmatpush1.bf16.msra.mxu0 0
      %5201 = vmatprep.subr.bf16.mxu0 0
      %5202 = vmatpush1.bf16.msra.mxu0 0
      %5203 = vmatprep.subr.bf16.mxu0 0
      %5204 = vmatpush1.bf16.msra.mxu0 0
      %5205 = vmatprep.subr.bf16.mxu0 0
      %5206 = vmatpush1.bf16.msra.mxu0 0
      %5207 = vmatprep.subr.bf16.mxu0 0
      %5208 = vmatpush1.bf16.msra.mxu0 %v5121
      %5209 = vmatprep.subr.bf16.mxu0 0
      %5210 = vmatpush1.bf16.msra.mxu0 %v5120
      %5211 = vmatprep.subr.bf16.mxu0 0
      %5212 = vmatpush2.bf16.msra.mxu0 0
      %5213 = vmatprep.subr.bf16.mxu0 0
      %5214 = vmatpush2.bf16.msra.mxu0 0
      %5215 = vmatprep.subr.bf16.mxu0 0
      %5216 = vmatpush2.bf16.msra.mxu0 0
      %5217 = vmatprep.subr.bf16.mxu0 0
      %5218 = vmatpush2.bf16.msra.mxu0 0
      %5219 = vmatprep.subr.bf16.mxu0 0
      %5220 = vmatpush2.bf16.msra.mxu0 0
      %5221 = vmatprep.subr.bf16.mxu0 0
      %5222 = vmatpush2.bf16.msra.mxu0 0
      %5223 = vmatprep.subr.bf16.mxu0 0
      %5224 = vmatpush2.bf16.msra.mxu0 0
      %5225 = vmatprep.subr.bf16.mxu0 0
      %5226 = vmatpush2.bf16.msra.mxu0 0
      %5227 = vmatprep.mubr.bf16.mxu0 0
      %5228 = vmatmul.mubr.bf16.gmra.mxu0 %v5141
      %v5229 = vpop.f32.mrf.mxu0
      %v5230 = vadd.f32 %v5181, %v5229
      %v5231 = vpop.f32.mrf.mxu0
      %v5232 = vpop.f32.mrf.mxu0
      %v5233 = vadd.f32 %v5184, %v5232
      %v5234 = vpop.f32.mrf.mxu0
      %5235 = vmatprep.mubr.bf16.mxu0 0
      %5236 = vmatmul.mubr.bf16.gmra.mxu0 %v5144
      %v5237 = vpop.f32.mrf.mxu0
      %v5238 = vadd.f32 %v5189, %v5237
      %v5239 = vpop.f32.mrf.mxu0
      %v5240 = vpop.f32.mrf.mxu0
      %v5241 = vadd.f32 %v5192, %v5240
      %v5242 = vpop.f32.mrf.mxu0
      %5243 = vdwg.mxu0
      %v5244 = vpack.c.b16 %v4886, %v4883
      %v5245 = vpack.c.b16 %v4887, %v4884
      %v5246 = vpack.c.b16 %v4888, %v4885
      %v5247 = vpack.c.b16 %v4892, %v4889
      %v5248 = vpack.c.b16 %v4893, %v4890
      %v5249 = vpack.c.b16 %v4090, %v4891
      %v5290 = vunpack.c.l.b16 %v4894
      %v5291 = vunpack.c.l.b16 %v4895
      %v5292 = vunpack.c.l.b16 %v4896
      %v5293 = vunpack.c.l.b16 %v4897
      %v5294 = vunpack.c.l.b16 %v4898
      %v5295 = vunpack.c.l.b16 %v4899
      %v5296 = vunpack.c.l.b16 %v4900
      %v5297 = vunpack.c.l.b16 %v4901
      %v5298 = vunpack.c.l.b16 %v4902
      %v5299 = vunpack.c.l.b16 %v4903
      %v5300 = vunpack.c.l.b16 %v4904
      %v5301 = vunpack.c.l.b16 %v4905
      %v5302 = vunpack.c.l.b16 %v4906
      %v5303 = vunpack.c.l.b16 %v4907
      %v5304 = vunpack.c.l.b16 %v4908
      %v5305 = vunpack.c.l.b16 %v4909
      %v5306 = vunpack.c.l.b16 %v4910
      %v5307 = vunpack.c.l.b16 %v4911
      %v5308 = vunpack.c.l.b16 %v4912
      %v5309 = vunpack.c.l.b16 %v4913
      %v5310 = vunpack.c.l.b16 %v4914
      %v5311 = vunpack.c.l.b16 %v4915
      %v5312 = vunpack.c.l.b16 %v4916
      %v5313 = vunpack.c.l.b16 %v4917
      %v5314 = vunpack.c.l.b16 %v4918
      %v5315 = vunpack.c.l.b16 %v4919
      %v5316 = vunpack.c.l.b16 %v4920
      %v5317 = vunpack.c.l.b16 %v4921
      %v5318 = vunpack.c.l.b16 %v4922
      %v5319 = vunpack.c.l.b16 %v4923
      %v5320 = vunpack.c.l.b16 %v4924
      %v5321 = vunpack.c.l.b16 %v4925
      %v5322 = vunpack.c.l.b16 %v4926
      %v5323 = vunpack.c.l.b16 %v4927
      %v5324 = vunpack.c.l.b16 %v4928
      %v5325 = vunpack.c.l.b16 %v4929
      %v5326 = vpack.c.b16 %v5291, %v5290
      %v5327 = vpack.c.b16 %v5293, %v5292
      %v5328 = vpack.c.b16 %v5295, %v5294
      %v5329 = vpack.c.b16 %v5297, %v5296
      %v5330 = vpack.c.b16 %v5299, %v5298
      %v5331 = vpack.c.b16 %v5301, %v5300
      %v5332 = vpack.c.b16 %v5303, %v5302
      %v5333 = vpack.c.b16 %v5305, %v5304
      %v5334 = vpack.c.b16 %v5307, %v5306
      %v5335 = vpack.c.b16 %v5309, %v5308
      %v5336 = vpack.c.b16 %v5311, %v5310
      %v5337 = vpack.c.b16 %v5313, %v5312
      %v5338 = vpack.c.b16 %v5315, %v5314
      %v5339 = vpack.c.b16 %v5317, %v5316
      %v5340 = vpack.c.b16 %v5319, %v5318
      %v5341 = vpack.c.b16 %v5321, %v5320
      %v5342 = vpack.c.b16 %v5323, %v5322
      %v5343 = vpack.c.b16 %v5325, %v5324
      %v5363 = vsel %vm2476, %v5246, 0
      %v5366 = vsel %vm2476, %v5249, 0
      %5368 = vmatprep.subr.bf16.mxu0 0
      %5369 = vmatpush1.bf16.msra.mxu0 %v5333
      %5370 = vmatprep.subr.bf16.mxu0 0
      %5371 = vmatpush1.bf16.msra.mxu0 %v5332
      %5372 = vmatprep.subr.bf16.mxu0 0
      %5373 = vmatpush1.bf16.msra.mxu0 %v5331
      %5374 = vmatprep.subr.bf16.mxu0 0
      %5375 = vmatpush1.bf16.msra.mxu0 %v5330
      %5376 = vmatprep.subr.bf16.mxu0 0
      %5377 = vmatpush1.bf16.msra.mxu0 %v5329
      %5378 = vmatprep.subr.bf16.mxu0 0
      %5379 = vmatpush1.bf16.msra.mxu0 %v5328
      %5380 = vmatprep.subr.bf16.mxu0 0
      %5381 = vmatpush1.bf16.msra.mxu0 %v5327
      %5382 = vmatprep.subr.bf16.mxu0 0
      %5383 = vmatpush1.bf16.msra.mxu0 %v5326
      %5384 = vmatprep.subr.bf16.mxu0 0
      %5385 = vmatpush2.bf16.msra.mxu0 %v5341
      %5386 = vmatprep.subr.bf16.mxu0 0
      %5387 = vmatpush2.bf16.msra.mxu0 %v5340
      %5388 = vmatprep.subr.bf16.mxu0 0
      %5389 = vmatpush2.bf16.msra.mxu0 %v5339
      %5390 = vmatprep.subr.bf16.mxu0 0
      %5391 = vmatpush2.bf16.msra.mxu0 %v5338
      %5392 = vmatprep.subr.bf16.mxu0 0
      %5393 = vmatpush2.bf16.msra.mxu0 %v5337
      %5394 = vmatprep.subr.bf16.mxu0 0
      %5395 = vmatpush2.bf16.msra.mxu0 %v5336
      %5396 = vmatprep.subr.bf16.mxu0 0
      %5397 = vmatpush2.bf16.msra.mxu0 %v5335
      %5398 = vmatprep.subr.bf16.mxu0 0
      %5399 = vmatpush2.bf16.msra.mxu0 %v5334
      %5400 = vmatprep.mubr.bf16.mxu0 %v5245
      %5401 = vmatmul.mubr.bf16.gmra.mxu0 %v5244
      %v5402 = vpop.f32.mrf.mxu0
      %v5403 = vadd.f32 %v5230, %v5402
      %v5404 = vpop.f32.mrf.mxu0
      %v5405 = vpop.f32.mrf.mxu0
      %v5406 = vadd.f32 %v5233, %v5405
      %v5407 = vpop.f32.mrf.mxu0
      %5408 = vmatprep.mubr.bf16.mxu0 %v5248
      %5409 = vmatmul.mubr.bf16.gmra.mxu0 %v5247
      %v5410 = vpop.f32.mrf.mxu0
      %v5411 = vadd.f32 %v5238, %v5410
      %v5412 = vpop.f32.mrf.mxu0
      %v5413 = vpop.f32.mrf.mxu0
      %v5414 = vadd.f32 %v5241, %v5413
      %v5415 = vpop.f32.mrf.mxu0
      %5416 = vdwg.mxu0
      %5417 = vmatprep.subr.bf16.mxu0 0
      %5418 = vmatpush1.bf16.msra.mxu0 0
      %5419 = vmatprep.subr.bf16.mxu0 0
      %5420 = vmatpush1.bf16.msra.mxu0 0
      %5421 = vmatprep.subr.bf16.mxu0 0
      %5422 = vmatpush1.bf16.msra.mxu0 0
      %5423 = vmatprep.subr.bf16.mxu0 0
      %5424 = vmatpush1.bf16.msra.mxu0 0
      %5425 = vmatprep.subr.bf16.mxu0 0
      %5426 = vmatpush1.bf16.msra.mxu0 0
      %5427 = vmatprep.subr.bf16.mxu0 0
      %5428 = vmatpush1.bf16.msra.mxu0 0
      %5429 = vmatprep.subr.bf16.mxu0 0
      %5430 = vmatpush1.bf16.msra.mxu0 %v5343
      %5431 = vmatprep.subr.bf16.mxu0 0
      %5432 = vmatpush1.bf16.msra.mxu0 %v5342
      %5433 = vmatprep.subr.bf16.mxu0 0
      %5434 = vmatpush2.bf16.msra.mxu0 0
      %5435 = vmatprep.subr.bf16.mxu0 0
      %5436 = vmatpush2.bf16.msra.mxu0 0
      %5437 = vmatprep.subr.bf16.mxu0 0
      %5438 = vmatpush2.bf16.msra.mxu0 0
      %5439 = vmatprep.subr.bf16.mxu0 0
      %5440 = vmatpush2.bf16.msra.mxu0 0
      %5441 = vmatprep.subr.bf16.mxu0 0
      %5442 = vmatpush2.bf16.msra.mxu0 0
      %5443 = vmatprep.subr.bf16.mxu0 0
      %5444 = vmatpush2.bf16.msra.mxu0 0
      %5445 = vmatprep.subr.bf16.mxu0 0
      %5446 = vmatpush2.bf16.msra.mxu0 0
      %5447 = vmatprep.subr.bf16.mxu0 0
      %5448 = vmatpush2.bf16.msra.mxu0 0
      %5449 = vmatprep.mubr.bf16.mxu0 0
      %5450 = vmatmul.mubr.bf16.gmra.mxu0 %v5363
      %v5451 = vpop.f32.mrf.mxu0
      %v5452 = vadd.f32 %v5403, %v5451
      %v5453 = vpop.f32.mrf.mxu0
      %v5454 = vpop.f32.mrf.mxu0
      %v5455 = vadd.f32 %v5406, %v5454
      %v5456 = vpop.f32.mrf.mxu0
      %5457 = vmatprep.mubr.bf16.mxu0 0
      %5458 = vmatmul.mubr.bf16.gmra.mxu0 %v5366
      %v5459 = vpop.f32.mrf.mxu0
      %v5460 = vadd.f32 %v5411, %v5459
      %v5461 = vpop.f32.mrf.mxu0
      %v5462 = vpop.f32.mrf.mxu0
      %v5463 = vadd.f32 %v5414, %v5462
      %v5464 = vpop.f32.mrf.mxu0
      %5465 = vdwg.mxu0
      %v5466 = vld [vmem:[%s33] sm:$0x1]
      %v5468 = vlaneseq
      %v5469 = vshrl.u32 %v5468, 7
      %v5470 = vsub.s32 0, %v5469
      %v5471 = vrot.slane %v5466, %v5470
      %v5473 = vadd.f32 %v5452, %v5471
      %v5474 = vadd.f32 %v5455, %v5471
      %v5475 = vadd.f32 %v5460, %v5471
      %v5476 = vadd.f32 %v5463, %v5471
      %v5477 = vld [vmem:[%s67] sm:$0xff]
      %v5478 = vld [vmem:[%s67 + $0x8] sm:$0xff]
      %v5479 = vld [vmem:[%s67 + $0x10] sm:$0xff]
      %v5480 = vld [vmem:[%s67 + $0x18] sm:$0xff]
      %v5481 = vld [vmem:[%s67 + $0x20] sm:$0xff]
      %v5482 = vld [vmem:[%s67 + $0x28] sm:$0xff]
      %v5483 = vld [vmem:[%s67 + $0x30] sm:$0xff]
      %v5484 = vld [vmem:[%s67 + $0x38] sm:$0xff]
      %v5486 = vsel %vm2476, %v5477, 0
      %v5489 = vsel %vm2476, %v5478, 0
      %v5492 = vsel %vm2476, %v5479, 0
      %v5495 = vsel %vm2476, %v5480, 0
      %v5498 = vsel %vm2476, %v5481, 0
      %v5501 = vsel %vm2476, %v5482, 0
      %v5504 = vsel %vm2476, %v5483, 0
      %v5507 = vsel %vm2476, %v5484, 0
      %5509 = vmatprep.subr.mxu0 0.0
      %5510 = vmatpush1.msra.mxu0 0.0
      %5511 = vmatprep.subr.mxu0 0.0
      %5512 = vmatpush1.msra.mxu0 0.0
      %5513 = vmatprep.subr.mxu0 0.0
      %5514 = vmatpush1.msra.mxu0 0.0
      %5515 = vmatprep.subr.mxu0 0.0
      %5516 = vmatpush1.msra.mxu0 0.0
      %5517 = vmatprep.subr.mxu0 0.0
      %5518 = vmatpush1.msra.mxu0 0.0
      %5519 = vmatprep.subr.mxu0 0.0
      %5520 = vmatpush1.msra.mxu0 0.0
      %5521 = vmatprep.subr.mxu0 0.0
      %5522 = vmatpush1.msra.mxu0 0.0
      %5523 = vmatprep.subr.mxu0 0.0
      %5524 = vmatpush1.msra.mxu0 0.0
      %5525 = vmatprep.subr.mxu0 0.0
      %5526 = vmatpush1.msra.mxu0 0.0
      %5527 = vmatprep.subr.mxu0 0.0
      %5528 = vmatpush1.msra.mxu0 0.0
      %5529 = vmatprep.subr.mxu0 0.0
      %5530 = vmatpush1.msra.mxu0 0.0
      %5531 = vmatprep.subr.mxu0 0.0
      %5532 = vmatpush1.msra.mxu0 0.0
      %5533 = vmatprep.subr.mxu0 0.0
      %5534 = vmatpush1.msra.mxu0 %v5476
      %5535 = vmatprep.subr.mxu0 0.0
      %5536 = vmatpush1.msra.mxu0 %v5475
      %5537 = vmatprep.subr.mxu0 0.0
      %5538 = vmatpush1.msra.mxu0 %v5474
      %5539 = vmatprep.subr.mxu0 0.0
      %5540 = vmatpush1.msra.mxu0 %v5473
      %5541 = vmatprep.subr.mxu0 0.0
      %5542 = vmatpush2.msra.mxu0 0.0
      %5543 = vmatprep.subr.mxu0 0.0
      %5544 = vmatpush2.msra.mxu0 0.0
      %5545 = vmatprep.subr.mxu0 0.0
      %5546 = vmatpush2.msra.mxu0 0.0
      %5547 = vmatprep.subr.mxu0 0.0
      %5548 = vmatpush2.msra.mxu0 0.0
      %5549 = vmatprep.subr.mxu0 0.0
      %5550 = vmatpush2.msra.mxu0 0.0
      %5551 = vmatprep.subr.mxu0 0.0
      %5552 = vmatpush2.msra.mxu0 0.0
      %5553 = vmatprep.subr.mxu0 0.0
      %5554 = vmatpush2.msra.mxu0 0.0
      %5555 = vmatprep.subr.mxu0 0.0
      %5556 = vmatpush2.msra.mxu0 0.0
      %5557 = vmatprep.subr.mxu0 0.0
      %5558 = vmatpush2.msra.mxu0 0.0
      %5559 = vmatprep.subr.mxu0 0.0
      %5560 = vmatpush2.msra.mxu0 0.0
      %5561 = vmatprep.subr.mxu0 0.0
      %5562 = vmatpush2.msra.mxu0 0.0
      %5563 = vmatprep.subr.mxu0 0.0
      %5564 = vmatpush2.msra.mxu0 0.0
      %5565 = vmatprep.subr.mxu0 0.0
      %5566 = vmatpush2.msra.mxu0 0.0
      %5567 = vmatprep.subr.mxu0 0.0
      %5568 = vmatpush2.msra.mxu0 0.0
      %5569 = vmatprep.subr.mxu0 0.0
      %5570 = vmatpush2.msra.mxu0 0.0
      %5571 = vmatprep.subr.mxu0 0.0
      %5572 = vmatpush2.msra.mxu0 0.0
      %5573 = vmatprep.mubr.f32.mxu0 0.0
      %5574 = vmatmul.mubr.f32.gmra.mxu0 %v5486
      %v5575 = vpop.f32.mrf.mxu0
      %v5576 = vadd.f32 0.0, %v5575
      %v5577 = vpop.f32.mrf.mxu0
      %5578 = vmatprep.mubr.f32.mxu0 0.0
      %5579 = vmatmul.mubr.f32.gmra.mxu0 %v5489
      %v5580 = vpop.f32.mrf.mxu0
      %v5581 = vadd.f32 0.0, %v5580
      %v5582 = vpop.f32.mrf.mxu0
      %5583 = vmatprep.mubr.f32.mxu0 0.0
      %5584 = vmatmul.mubr.f32.gmra.mxu0 %v5492
      %v5585 = vpop.f32.mrf.mxu0
      %v5586 = vadd.f32 0.0, %v5585
      %v5587 = vpop.f32.mrf.mxu0
      %5588 = vmatprep.mubr.f32.mxu0 0.0
      %5589 = vmatmul.mubr.f32.gmra.mxu0 %v5495
      %v5590 = vpop.f32.mrf.mxu0
      %v5591 = vadd.f32 0.0, %v5590
      %v5592 = vpop.f32.mrf.mxu0
      %5593 = vmatprep.mubr.f32.mxu0 0.0
      %5594 = vmatmul.mubr.f32.gmra.mxu0 %v5498
      %v5595 = vpop.f32.mrf.mxu0
      %v5596 = vadd.f32 0.0, %v5595
      %v5597 = vpop.f32.mrf.mxu0
      %5598 = vmatprep.mubr.f32.mxu0 0.0
      %5599 = vmatmul.mubr.f32.gmra.mxu0 %v5501
      %v5600 = vpop.f32.mrf.mxu0
      %v5601 = vadd.f32 0.0, %v5600
      %v5602 = vpop.f32.mrf.mxu0
      %5603 = vmatprep.mubr.f32.mxu0 0.0
      %5604 = vmatmul.mubr.f32.gmra.mxu0 %v5504
      %v5605 = vpop.f32.mrf.mxu0
      %v5606 = vadd.f32 0.0, %v5605
      %v5607 = vpop.f32.mrf.mxu0
      %5608 = vmatprep.mubr.f32.mxu0 0.0
      %5609 = vmatmul.mubr.f32.gmra.mxu0 %v5507
      %v5610 = vpop.f32.mrf.mxu0
      %v5611 = vadd.f32 0.0, %v5610
      %v5612 = vpop.f32.mrf.mxu0
      %5613 = vdwg.mxu0
      %vm5614 = vcmp.ge.f32.partialorder %v5576, 0.0
      %vm5615 = vcmp.ge.f32.partialorder %v5581, 0.0
      %vm5616 = vcmp.ge.f32.partialorder %v5586, 0.0
      %vm5617 = vcmp.ge.f32.partialorder %v5591, 0.0
      %vm5618 = vcmp.ge.f32.partialorder %v5596, 0.0
      %vm5619 = vcmp.ge.f32.partialorder %v5601, 0.0
      %vm5620 = vcmp.ge.f32.partialorder %v5606, 0.0
      %vm5621 = vcmp.ge.f32.partialorder %v5611, 0.0
      %v5622 = vmul.f32 %v5576, 0.1
      %v5623 = vmul.f32 %v5581, 0.1
      %v5624 = vmul.f32 %v5586, 0.1
      %v5625 = vmul.f32 %v5591, 0.1
      %v5626 = vmul.f32 %v5596, 0.1
      %v5627 = vmul.f32 %v5601, 0.1
      %v5628 = vmul.f32 %v5606, 0.1
      %v5629 = vmul.f32 %v5611, 0.1
      %v5630 = vsel %vm5614, %v5576, %v5622
      %v5631 = vsel %vm5615, %v5581, %v5623
      %v5632 = vsel %vm5616, %v5586, %v5624
      %v5633 = vsel %vm5617, %v5591, %v5625
      %v5634 = vsel %vm5618, %v5596, %v5626
      %v5635 = vsel %vm5619, %v5601, %v5627
      %v5636 = vsel %vm5620, %v5606, %v5628
      %v5637 = vsel %vm5621, %v5611, %v5629
      %v5638 = vpack.c.bf16 %v5630, %v5630
      %v5639 = vpack.c.bf16 %v5631, %v5631
      %v5640 = vpack.c.bf16 %v5632, %v5632
      %v5641 = vpack.c.bf16 %v5633, %v5633
      %v5642 = vpack.c.bf16 %v5634, %v5634
      %v5643 = vpack.c.bf16 %v5635, %v5635
      %v5644 = vpack.c.bf16 %v5636, %v5636
      %v5645 = vpack.c.bf16 %v5637, %v5637
      %v5647 = vshrl.u32 %v5638, 16
      %v5649 = vrot.slane %v5647, 7
      %v5650 = vshll.u32 %v5638, 16
      %v5652 = vor.u32 %v5649, %v5650
      %v5654 = vshrl.u32 %v5639, 16
      %v5656 = vrot.slane %v5654, 7
      %v5657 = vshll.u32 %v5639, 16
      %v5659 = vor.u32 %v5656, %v5657
      %v5661 = vshrl.u32 %v5640, 16
      %v5663 = vrot.slane %v5661, 7
      %v5664 = vshll.u32 %v5640, 16
      %v5666 = vor.u32 %v5663, %v5664
      %v5668 = vshrl.u32 %v5641, 16
      %v5670 = vrot.slane %v5668, 7
      %v5671 = vshll.u32 %v5641, 16
      %v5673 = vor.u32 %v5670, %v5671
      %v5675 = vshrl.u32 %v5642, 16
      %v5677 = vrot.slane %v5675, 7
      %v5678 = vshll.u32 %v5642, 16
      %v5680 = vor.u32 %v5677, %v5678
      %v5682 = vshrl.u32 %v5643, 16
      %v5684 = vrot.slane %v5682, 7
      %v5685 = vshll.u32 %v5643, 16
      %v5687 = vor.u32 %v5684, %v5685
      %v5689 = vshrl.u32 %v5644, 16
      %v5691 = vrot.slane %v5689, 7
      %v5692 = vshll.u32 %v5644, 16
      %v5694 = vor.u32 %v5691, %v5692
      %v5696 = vshrl.u32 %v5645, 16
      %v5698 = vrot.slane %v5696, 7
      %v5699 = vshll.u32 %v5645, 16
      %v5701 = vor.u32 %v5698, %v5699
      %v5710 = vsel %vm1298, 0, %v5652
      %v5711 = vsel %vm1298, 0, %v5659
      %v5712 = vsel %vm1298, 0, %v5666
      %v5713 = vsel %vm1298, 0, %v5673
      %v5714 = vsel %vm1298, 0, %v5680
      %v5715 = vsel %vm1298, 0, %v5687
      %v5716 = vsel %vm1298, 0, %v5694
      %v5717 = vsel %vm1298, 0, %v5701
      %v5718 = vsel %vm2276, %v5710, 0
      %v5719 = vsel %vm2276, %v5711, 0
      %v5720 = vsel %vm2276, %v5712, 0
      %v5721 = vsel %vm2276, %v5713, 0
      %v5722 = vsel %vm2276, %v5714, 0
      %v5723 = vsel %vm2276, %v5715, 0
      %v5724 = vsel %vm2276, %v5716, 0
      %v5725 = vsel %vm2276, %v5717, 0
      %v5727 = vshrl.u32 %v5718, 16
      %v5729 = vshll.u32 %v5718, 16
      %v5731 = vrot.slane %v5729, 1
      %v5732 = vor.u32 %v5727, %v5731
      %v5734 = vshrl.u32 %v5719, 16
      %v5736 = vshll.u32 %v5719, 16
      %v5738 = vrot.slane %v5736, 1
      %v5739 = vor.u32 %v5734, %v5738
      %v5741 = vshrl.u32 %v5720, 16
      %v5743 = vshll.u32 %v5720, 16
      %v5745 = vrot.slane %v5743, 1
      %v5746 = vor.u32 %v5741, %v5745
      %v5748 = vshrl.u32 %v5721, 16
      %v5750 = vshll.u32 %v5721, 16
      %v5752 = vrot.slane %v5750, 1
      %v5753 = vor.u32 %v5748, %v5752
      %v5755 = vshrl.u32 %v5722, 16
      %v5757 = vshll.u32 %v5722, 16
      %v5759 = vrot.slane %v5757, 1
      %v5760 = vor.u32 %v5755, %v5759
      %v5762 = vshrl.u32 %v5723, 16
      %v5764 = vshll.u32 %v5723, 16
      %v5766 = vrot.slane %v5764, 1
      %v5767 = vor.u32 %v5762, %v5766
      %v5769 = vshrl.u32 %v5724, 16
      %v5771 = vshll.u32 %v5724, 16
      %v5773 = vrot.slane %v5771, 1
      %v5774 = vor.u32 %v5769, %v5773
      %5775 = vrot.lane.b32.xlu0 %v5732, 32
      %v5776 = vpop.permute.xlu0 %5775
      %5777 = vrot.lane.b32.xlu0 %v5739, 32
      %v5778 = vpop.permute.xlu0 %5777
      %5779 = vrot.lane.b32.xlu0 %v5746, 32
      %v5780 = vpop.permute.xlu0 %5779
      %5781 = vrot.lane.b32.xlu0 %v5753, 32
      %v5782 = vpop.permute.xlu0 %5781
      %5783 = vrot.lane.b32.xlu0 %v5760, 32
      %v5784 = vpop.permute.xlu0 %5783
      %5785 = vrot.lane.b32.xlu0 %v5767, 32
      %v5786 = vpop.permute.xlu0 %5785
      %5787 = vrot.lane.b32.xlu0 %v5774, 32
      %v5788 = vpop.permute.xlu0 %5787
      %v5796 = vrot.slane %v5718, 1
      %v5797 = vrot.slane %v5719, 1
      %v5798 = vrot.slane %v5720, 1
      %v5799 = vrot.slane %v5721, 1
      %v5800 = vrot.slane %v5722, 1
      %v5801 = vrot.slane %v5723, 1
      %v5802 = vrot.slane %v5724, 1
      %5803 = vrot.lane.b32.xlu0 %v5796, 64
      %v5804 = vpop.permute.xlu0 %5803
      %5805 = vrot.lane.b32.xlu0 %v5797, 64
      %v5806 = vpop.permute.xlu0 %5805
      %5807 = vrot.lane.b32.xlu0 %v5798, 64
      %v5808 = vpop.permute.xlu0 %5807
      %5809 = vrot.lane.b32.xlu0 %v5799, 64
      %v5810 = vpop.permute.xlu0 %5809
      %5811 = vrot.lane.b32.xlu0 %v5800, 64
      %v5812 = vpop.permute.xlu0 %5811
      %5813 = vrot.lane.b32.xlu0 %v5801, 64
      %v5814 = vpop.permute.xlu0 %5813
      %5815 = vrot.lane.b32.xlu0 %v5802, 64
      %v5816 = vpop.permute.xlu0 %5815
      %5818 = vrot.lane.b32.xlu0 %v5718, 96
      %v5819 = vpop.permute.xlu0 %5818
      %5820 = vrot.lane.b32.xlu0 %v5719, 96
      %v5821 = vpop.permute.xlu0 %5820
      %5822 = vrot.lane.b32.xlu0 %v5720, 96
      %v5823 = vpop.permute.xlu0 %5822
      %5824 = vrot.lane.b32.xlu0 %v5721, 96
      %v5825 = vpop.permute.xlu0 %5824
      %5826 = vrot.lane.b32.xlu0 %v5722, 96
      %v5827 = vpop.permute.xlu0 %5826
      %5828 = vrot.lane.b32.xlu0 %v5723, 96
      %v5829 = vpop.permute.xlu0 %5828
      %5830 = vrot.lane.b32.xlu0 %v5724, 96
      %v5831 = vpop.permute.xlu0 %5830
      %5832 = vrot.lane.b32.xlu0 %v5725, 96
      %v5833 = vpop.permute.xlu0 %5832
      %v5835 = vshrl.u32 %v5725, 16
      %v5837 = vshll.u32 %v5725, 16
      %v5839 = vrot.slane %v5837, 1
      %v5840 = vor.u32 %v5835, %v5839
      %v5841 = vrot.slane %v5725, 1
      %5842 = vrot.lane.b32.xlu0 %v5796, 32
      %v5843 = vpop.permute.xlu0 %5842
      %5844 = vrot.lane.b32.xlu0 %v5797, 32
      %v5845 = vpop.permute.xlu0 %5844
      %5846 = vrot.lane.b32.xlu0 %v5798, 32
      %v5847 = vpop.permute.xlu0 %5846
      %5848 = vrot.lane.b32.xlu0 %v5799, 32
      %v5849 = vpop.permute.xlu0 %5848
      %5850 = vrot.lane.b32.xlu0 %v5800, 32
      %v5851 = vpop.permute.xlu0 %5850
      %5852 = vrot.lane.b32.xlu0 %v5801, 32
      %v5853 = vpop.permute.xlu0 %5852
      %5854 = vrot.lane.b32.xlu0 %v5802, 32
      %v5855 = vpop.permute.xlu0 %5854
      %5856 = vrot.lane.b32.xlu0 %v5841, 32
      %v5857 = vpop.permute.xlu0 %5856
      %5858 = vrot.lane.b32.xlu0 %v5719, 64
      %v5859 = vpop.permute.xlu0 %5858
      %5860 = vrot.lane.b32.xlu0 %v5720, 64
      %v5861 = vpop.permute.xlu0 %5860
      %5862 = vrot.lane.b32.xlu0 %v5721, 64
      %v5863 = vpop.permute.xlu0 %5862
      %5864 = vrot.lane.b32.xlu0 %v5722, 64
      %v5865 = vpop.permute.xlu0 %5864
      %5866 = vrot.lane.b32.xlu0 %v5723, 64
      %v5867 = vpop.permute.xlu0 %5866
      %5868 = vrot.lane.b32.xlu0 %v5724, 64
      %v5869 = vpop.permute.xlu0 %5868
      %5870 = vrot.lane.b32.xlu0 %v5725, 64
      %v5871 = vpop.permute.xlu0 %5870
      %5872 = vrot.lane.b32.xlu0 %v5739, 96
      %v5873 = vpop.permute.xlu0 %5872
      %5874 = vrot.lane.b32.xlu0 %v5746, 96
      %v5875 = vpop.permute.xlu0 %5874
      %5876 = vrot.lane.b32.xlu0 %v5753, 96
      %v5877 = vpop.permute.xlu0 %5876
      %5878 = vrot.lane.b32.xlu0 %v5760, 96
      %v5879 = vpop.permute.xlu0 %5878
      %5880 = vrot.lane.b32.xlu0 %v5767, 96
      %v5881 = vpop.permute.xlu0 %5880
      %5882 = vrot.lane.b32.xlu0 %v5774, 96
      %v5883 = vpop.permute.xlu0 %5882
      %5884 = vrot.lane.b32.xlu0 %v5840, 96
      %v5885 = vpop.permute.xlu0 %5884
      %v5887 = vsel %vm2476, %v5718, %v5776
      %v5889 = vsel %vm2476, %v5719, %v5778
      %v5891 = vsel %vm2476, %v5720, %v5780
      %v5893 = vsel %vm2476, %v5721, %v5782
      %v5895 = vsel %vm2476, %v5722, %v5784
      %v5897 = vsel %vm2476, %v5723, %v5786
      %v5899 = vsel %vm2476, %v5724, %v5788
      %v5901 = vsel %vm2494, %v5887, %v5804
      %v5903 = vsel %vm2494, %v5889, %v5806
      %v5905 = vsel %vm2494, %v5891, %v5808
      %v5907 = vsel %vm2494, %v5893, %v5810
      %v5909 = vsel %vm2494, %v5895, %v5812
      %v5911 = vsel %vm2494, %v5897, %v5814
      %v5913 = vsel %vm2494, %v5899, %v5816
      %v5915 = vsel %vm2512, %v3321, %v5819
      %v5917 = vsel %vm2512, %v5901, %v5821
      %v5919 = vsel %vm2512, %v5903, %v5823
      %v5921 = vsel %vm2512, %v5905, %v5825
      %v5923 = vsel %vm2512, %v5907, %v5827
      %v5925 = vsel %vm2512, %v5909, %v5829
      %v5927 = vsel %vm2512, %v5911, %v5831
      %v5929 = vsel %vm2512, %v5913, %v5833
      %v5932 = vsel %vm2476, %v5732, %v5843
      %v5935 = vsel %vm2476, %v5739, %v5845
      %v5938 = vsel %vm2476, %v5746, %v5847
      %v5941 = vsel %vm2476, %v5753, %v5849
      %v5944 = vsel %vm2476, %v5760, %v5851
      %v5947 = vsel %vm2476, %v5767, %v5853
      %v5950 = vsel %vm2476, %v5774, %v5855
      %v5953 = vsel %vm2476, %v5840, %v5857
      %v5955 = vsel %vm2494, %v5932, %v5859
      %v5957 = vsel %vm2494, %v5935, %v5861
      %v5959 = vsel %vm2494, %v5938, %v5863
      %v5961 = vsel %vm2494, %v5941, %v5865
      %v5963 = vsel %vm2494, %v5944, %v5867
      %v5965 = vsel %vm2494, %v5947, %v5869
      %v5967 = vsel %vm2494, %v5950, %v5871
      %v5968 = vsel %vm2494, %v5953, %v3668
      %v5970 = vsel %vm2512, %v5955, %v5873
      %v5972 = vsel %vm2512, %v5957, %v5875
      %v5974 = vsel %vm2512, %v5959, %v5877
      %v5976 = vsel %vm2512, %v5961, %v5879
      %v5978 = vsel %vm2512, %v5963, %v5881
      %v5980 = vsel %vm2512, %v5965, %v5883
      %v5982 = vsel %vm2512, %v5967, %v5885
      %v5983 = vsel %vm2512, %v5968, %v3670
      %v6000 = vunpack.c.l.b16 %v5915
      %v6001 = vunpack.c.l.b16 %v5970
      %v6002 = vunpack.c.l.b16 %v5797
      %v6003 = vunpack.c.l.b16 %v5917
      %v6004 = vunpack.c.l.b16 %v5972
      %v6005 = vunpack.c.l.b16 %v5798
      %v6006 = vunpack.c.l.b16 %v5919
      %v6007 = vunpack.c.l.b16 %v5974
      %v6008 = vunpack.c.l.b16 %v5799
      %v6009 = vunpack.c.l.b16 %v5921
      %v6010 = vunpack.c.l.b16 %v5976
      %v6011 = vunpack.c.l.b16 %v5800
      %v6012 = vunpack.c.l.b16 %v5923
      %v6013 = vunpack.c.l.b16 %v5978
      %v6014 = vunpack.c.l.b16 %v5801
      %v6015 = vunpack.c.l.b16 %v5925
      %v6016 = vunpack.c.l.b16 %v5980
      %v6017 = vunpack.c.l.b16 %v5802
      %v6018 = vunpack.c.l.b16 %v5927
      %v6019 = vunpack.c.l.b16 %v5982
      %v6020 = vunpack.c.l.b16 %v5841
      %v6021 = vunpack.c.l.b16 %v5929
      %v6022 = vunpack.c.l.b16 %v5983
      %v6023 = vld [vmem:[%s35] sm:$0xf]
      %v6024 = vld [vmem:[%s35 + $0x4] sm:$0xf]
      %v6025 = vld [vmem:[%s35 + $0x8] sm:$0xf]
      %v6026 = vld [vmem:[%s35 + $0xc] sm:$0xf]
      %v6027 = vld [vmem:[%s35 + $0x10] sm:$0xf]
      %v6028 = vld [vmem:[%s35 + $0x14] sm:$0xf]
      %v6029 = vld [vmem:[%s35 + $0x18] sm:$0xf]
      %v6030 = vld [vmem:[%s35 + $0x1c] sm:$0xf]
      %v6031 = vld [vmem:[%s35 + $0x20] sm:$0xf]
      %v6032 = vld [vmem:[%s35 + $0x24] sm:$0xf]
      %v6033 = vld [vmem:[%s35 + $0x28] sm:$0xf]
      %v6034 = vld [vmem:[%s35 + $0x2c] sm:$0xf]
      %v6035 = vld [vmem:[%s35 + $0x30] sm:$0xf]
      %v6036 = vld [vmem:[%s35 + $0x34] sm:$0xf]
      %v6037 = vld [vmem:[%s35 + $0x38] sm:$0xf]
      %v6038 = vld [vmem:[%s35 + $0x3c] sm:$0xf]
      %v6039 = vld [vmem:[%s35 + $0x40] sm:$0xf]
      %v6040 = vld [vmem:[%s35 + $0x44] sm:$0xf]
      %v6041 = vld [vmem:[%s35 + $0x48] sm:$0xf]
      %v6042 = vld [vmem:[%s35 + $0x4c] sm:$0xf]
      %v6043 = vld [vmem:[%s35 + $0x50] sm:$0xf]
      %v6044 = vld [vmem:[%s35 + $0x54] sm:$0xf]
      %v6045 = vld [vmem:[%s35 + $0x58] sm:$0xf]
      %v6046 = vld [vmem:[%s35 + $0x5c] sm:$0xf]
      %v6047 = vld [vmem:[%s35 + $0x60] sm:$0xf]
      %v6048 = vld [vmem:[%s35 + $0x64] sm:$0xf]
      %v6049 = vld [vmem:[%s35 + $0x68] sm:$0xf]
      %v6050 = vld [vmem:[%s35 + $0x6c] sm:$0xf]
      %v6051 = vld [vmem:[%s35 + $0x70] sm:$0xf]
      %v6052 = vld [vmem:[%s35 + $0x74] sm:$0xf]
      %v6053 = vld [vmem:[%s35 + $0x78] sm:$0xf]
      %v6054 = vld [vmem:[%s35 + $0x7c] sm:$0xf]
      %v6055 = vld [vmem:[%s35 + $0x80] sm:$0xf]
      %v6056 = vld [vmem:[%s35 + $0x84] sm:$0xf]
      %v6057 = vld [vmem:[%s35 + $0x88] sm:$0xf]
      %v6058 = vld [vmem:[%s35 + $0x8c] sm:$0xf]
      %6059 = vrot.lane.b32.xlu0 %v3285, 16
      %v6060 = vpop.permute.xlu0 %6059
      %6061 = vrot.lane.b32.xlu0 %v2401, 16
      %v6062 = vpop.permute.xlu0 %6061
      %6063 = vrot.lane.b32.xlu0 %v2408, 16
      %v6064 = vpop.permute.xlu0 %6063
      %6065 = vrot.lane.b32.xlu0 %v2415, 16
      %v6066 = vpop.permute.xlu0 %6065
      %6067 = vrot.lane.b32.xlu0 %v2422, 16
      %v6068 = vpop.permute.xlu0 %6067
      %6069 = vrot.lane.b32.xlu0 %v3289, 32
      %v6070 = vpop.permute.xlu0 %6069
      %6071 = vrot.lane.b32.xlu0 %v2431, 32
      %v6072 = vpop.permute.xlu0 %6071
      %6073 = vrot.lane.b32.xlu0 %v2432, 32
      %v6074 = vpop.permute.xlu0 %6073
      %6075 = vrot.lane.b32.xlu0 %v2433, 32
      %v6076 = vpop.permute.xlu0 %6075
      %6077 = vrot.lane.b32.xlu0 %v2434, 32
      %v6078 = vpop.permute.xlu0 %6077
      %6079 = vrot.lane.b32.xlu0 %v2278, 48
      %v6080 = vpop.permute.xlu0 %6079
      %6081 = vrot.lane.b32.xlu0 %v2279, 48
      %v6082 = vpop.permute.xlu0 %6081
      %6083 = vrot.lane.b32.xlu0 %v2280, 48
      %v6084 = vpop.permute.xlu0 %6083
      %6085 = vrot.lane.b32.xlu0 %v2330, 48
      %v6086 = vpop.permute.xlu0 %6085
      %6087 = vrot.lane.b32.xlu0 %v2344, 64
      %v6088 = vpop.permute.xlu0 %6087
      %6089 = vrot.lane.b32.xlu0 %v2351, 64
      %v6090 = vpop.permute.xlu0 %6089
      %6091 = vrot.lane.b32.xlu0 %v2358, 64
      %v6092 = vpop.permute.xlu0 %6091
      %6093 = vrot.lane.b32.xlu0 %v2458, 64
      %v6094 = vpop.permute.xlu0 %6093
      %6095 = vrot.lane.b32.xlu0 %v2372, 80
      %v6096 = vpop.permute.xlu0 %6095
      %6097 = vrot.lane.b32.xlu0 %v2373, 80
      %v6098 = vpop.permute.xlu0 %6097
      %6099 = vrot.lane.b32.xlu0 %v2374, 80
      %v6100 = vpop.permute.xlu0 %6099
      %6101 = vrot.lane.b32.xlu0 %v2467, 80
      %v6102 = vpop.permute.xlu0 %6101
      %6103 = vrot.lane.b32.xlu0 %v2318, 96
      %v6104 = vpop.permute.xlu0 %6103
      %6105 = vrot.lane.b32.xlu0 %v2319, 96
      %v6106 = vpop.permute.xlu0 %6105
      %6107 = vrot.lane.b32.xlu0 %v2320, 96
      %v6108 = vpop.permute.xlu0 %6107
      %6109 = vrot.lane.b32.xlu0 0, 96
      %v6110 = vpop.permute.xlu0 %6109
      %6111 = vrot.lane.b32.xlu0 %v2408, 112
      %v6112 = vpop.permute.xlu0 %6111
      %6113 = vrot.lane.b32.xlu0 %v2415, 112
      %v6114 = vpop.permute.xlu0 %6113
      %6115 = vrot.lane.b32.xlu0 %v2422, 112
      %v6116 = vpop.permute.xlu0 %6115
      %6117 = vrot.lane.b32.xlu0 %v3285, 112
      %v6118 = vpop.permute.xlu0 %6117
      %v6120 = vsel %vm1952, 0, %v6060
      %v6122 = vsel %vm1952, %v2317, %v6062
      %v6124 = vsel %vm1952, %v2318, %v6064
      %v6126 = vsel %vm1952, %v2319, %v6066
      %v6128 = vsel %vm1952, %v2320, %v6068
      %v6130 = vsel %vm2476, %v6120, %v6070
      %v6132 = vsel %vm2476, %v6122, %v6072
      %v6134 = vsel %vm2476, %v6124, %v6074
      %v6136 = vsel %vm2476, %v6126, %v6076
      %v6138 = vsel %vm2476, %v6128, %v6078
      %v6139 = vsel %vm2485, %v6130, %v2388
      %v6141 = vsel %vm2485, %v6132, %v6080
      %v6143 = vsel %vm2485, %v6134, %v6082
      %v6145 = vsel %vm2485, %v6136, %v6084
      %v6147 = vsel %vm2485, %v6138, %v6086
      %v6148 = vsel %vm2494, %v6139, %v2424
      %v6150 = vsel %vm2494, %v6141, %v6088
      %v6152 = vsel %vm2494, %v6143, %v6090
      %v6154 = vsel %vm2494, %v6145, %v6092
      %v6156 = vsel %vm2494, %v6147, %v6094
      %v6157 = vsel %vm2503, %v6148, %v2436
      %v6159 = vsel %vm2503, %v6150, %v6096
      %v6161 = vsel %vm2503, %v6152, %v6098
      %v6163 = vsel %vm2503, %v6154, %v6100
      %v6165 = vsel %vm2503, %v6156, %v6102
      %v6166 = vsel %vm2512, %v6157, %v2445
      %v6168 = vsel %vm2512, %v6159, %v6104
      %v6170 = vsel %vm2512, %v6161, %v6106
      %v6172 = vsel %vm2512, %v6163, %v6108
      %v6174 = vsel %vm2512, %v6165, %v6110
      %v6175 = vsel %vm2521, %v6166, %v2460
      %v6177 = vsel %vm2521, %v6168, %v6112
      %v6179 = vsel %vm2521, %v6170, %v6114
      %v6181 = vsel %vm2521, %v6172, %v6116
      %v6183 = vsel %vm2521, %v6174, %v6118
      %v6189 = vunpack.c.l.b16 %v6175
      %v6190 = vunpack.c.l.b16 %v6177
      %v6191 = vunpack.c.l.b16 %v2432
      %v6192 = vunpack.c.l.b16 %v6179
      %v6193 = vunpack.c.l.b16 %v2433
      %v6194 = vunpack.c.l.b16 %v6181
      %v6195 = vunpack.c.l.b16 %v2434
      %v6196 = vunpack.c.l.b16 %v6183
      %v6197 = vld [vmem:[%s37] sm:$0xf]
      %v6198 = vld [vmem:[%s37 + $0x4] sm:$0xf]
      %v6199 = vld [vmem:[%s37 + $0x8] sm:$0xf]
      %v6200 = vld [vmem:[%s37 + $0xc] sm:$0xf]
      %v6201 = vld [vmem:[%s37 + $0x10] sm:$0xf]
      %v6202 = vld [vmem:[%s37 + $0x14] sm:$0xf]
      %v6203 = vld [vmem:[%s37 + $0x18] sm:$0xf]
      %v6204 = vld [vmem:[%s37 + $0x1c] sm:$0xf]
      %v6205 = vld [vmem:[%s37 + $0x20] sm:$0xf]
      %v6206 = vld [vmem:[%s37 + $0x24] sm:$0xf]
      %v6207 = vld [vmem:[%s37 + $0x28] sm:$0xf]
      %v6208 = vld [vmem:[%s37 + $0x2c] sm:$0xf]
      %v6209 = vld [vmem:[%s37 + $0x30] sm:$0xf]
      %v6210 = vld [vmem:[%s37 + $0x34] sm:$0xf]
      %v6211 = vld [vmem:[%s37 + $0x38] sm:$0xf]
      %v6212 = vld [vmem:[%s37 + $0x3c] sm:$0xf]
      %v6213 = vld [vmem:[%s37 + $0x40] sm:$0xf]
      %v6214 = vld [vmem:[%s37 + $0x44] sm:$0xf]
      %v6215 = vpack.c.b16 %v6190, %v6189
      %v6216 = vpack.c.b16 %v6191, %v2535
      %v6217 = vpack.c.b16 %v6192, %v2536
      %v6218 = vpack.c.b16 %v6193, %v2537
      %v6219 = vpack.c.b16 %v6194, %v2538
      %v6220 = vpack.c.b16 %v6195, %v2539
      %v6221 = vpack.c.b16 %v6196, %v2540
      %v6222 = vpack.c.b16 %v4090, %v2541
      %v6245 = vunpack.c.l.b16 %v6197
      %v6246 = vunpack.c.l.b16 %v6198
      %v6247 = vunpack.c.l.b16 %v6199
      %v6248 = vunpack.c.l.b16 %v6200
      %v6249 = vunpack.c.l.b16 %v6201
      %v6250 = vunpack.c.l.b16 %v6202
      %v6251 = vunpack.c.l.b16 %v6203
      %v6252 = vunpack.c.l.b16 %v6204
      %v6253 = vunpack.c.l.b16 %v6205
      %v6254 = vunpack.c.l.b16 %v6206
      %v6255 = vunpack.c.l.b16 %v6207
      %v6256 = vunpack.c.l.b16 %v6208
      %v6257 = vunpack.c.l.b16 %v6209
      %v6258 = vunpack.c.l.b16 %v6210
      %v6259 = vunpack.c.l.b16 %v6211
      %v6260 = vunpack.c.l.b16 %v6212
      %v6261 = vunpack.c.l.b16 %v6213
      %v6262 = vunpack.c.l.b16 %v6214
      %v6263 = vpack.c.b16 %v6246, %v6245
      %v6264 = vpack.c.b16 %v6248, %v6247
      %v6265 = vpack.c.b16 %v6250, %v6249
      %v6266 = vpack.c.b16 %v6252, %v6251
      %v6267 = vpack.c.b16 %v6254, %v6253
      %v6268 = vpack.c.b16 %v6256, %v6255
      %v6269 = vpack.c.b16 %v6258, %v6257
      %v6270 = vpack.c.b16 %v6260, %v6259
      %v6271 = vpack.c.b16 %v6262, %v6261
      %v6282 = vsel %vm1952, %v6216, 0
      %v6285 = vsel %vm1952, %v6218, 0
      %v6288 = vsel %vm1952, %v6220, 0
      %v6291 = vsel %vm1952, %v6222, 0
      %6293 = vmatprep.subr.bf16.mxu0 0
      %6294 = vmatpush1.bf16.msra.mxu0 %v6270
      %6295 = vmatprep.subr.bf16.mxu0 0
      %6296 = vmatpush1.bf16.msra.mxu0 %v6269
      %6297 = vmatprep.subr.bf16.mxu0 0
      %6298 = vmatpush1.bf16.msra.mxu0 %v6268
      %6299 = vmatprep.subr.bf16.mxu0 0
      %6300 = vmatpush1.bf16.msra.mxu0 %v6267
      %6301 = vmatprep.subr.bf16.mxu0 0
      %6302 = vmatpush1.bf16.msra.mxu0 %v6266
      %6303 = vmatprep.subr.bf16.mxu0 0
      %6304 = vmatpush1.bf16.msra.mxu0 %v6265
      %6305 = vmatprep.subr.bf16.mxu0 0
      %6306 = vmatpush1.bf16.msra.mxu0 %v6264
      %6307 = vmatprep.subr.bf16.mxu0 0
      %6308 = vmatpush1.bf16.msra.mxu0 %v6263
      %6309 = vmatprep.subr.bf16.mxu0 0
      %6310 = vmatpush2.bf16.msra.mxu0 0
      %6311 = vmatprep.subr.bf16.mxu0 0
      %6312 = vmatpush2.bf16.msra.mxu0 0
      %6313 = vmatprep.subr.bf16.mxu0 0
      %6314 = vmatpush2.bf16.msra.mxu0 0
      %6315 = vmatprep.subr.bf16.mxu0 0
      %6316 = vmatpush2.bf16.msra.mxu0 0
      %6317 = vmatprep.subr.bf16.mxu0 0
      %6318 = vmatpush2.bf16.msra.mxu0 0
      %6319 = vmatprep.subr.bf16.mxu0 0
      %6320 = vmatpush2.bf16.msra.mxu0 0
      %6321 = vmatprep.subr.bf16.mxu0 0
      %6322 = vmatpush2.bf16.msra.mxu0 0
      %6323 = vmatprep.subr.bf16.mxu0 0
      %6324 = vmatpush2.bf16.msra.mxu0 %v6271
      %6325 = vmatprep.mubr.bf16.mxu0 %v6282
      %6326 = vmatmul.mubr.bf16.gmra.mxu0 %v6215
      %v6327 = vpop.f32.mrf.mxu0
      %v6328 = vadd.f32 0.0, %v6327
      %v6329 = vpop.f32.mrf.mxu0
      %v6330 = vpop.f32.mrf.mxu0
      %v6331 = vadd.f32 0.0, %v6330
      %v6332 = vpop.f32.mrf.mxu0
      %6333 = vmatprep.mubr.bf16.mxu0 %v6285
      %6334 = vmatmul.mubr.bf16.gmra.mxu0 %v6217
      %v6335 = vpop.f32.mrf.mxu0
      %v6336 = vadd.f32 0.0, %v6335
      %v6337 = vpop.f32.mrf.mxu0
      %v6338 = vpop.f32.mrf.mxu0
      %v6339 = vadd.f32 0.0, %v6338
      %v6340 = vpop.f32.mrf.mxu0
      %6341 = vmatprep.mubr.bf16.mxu0 %v6288
      %6342 = vmatmul.mubr.bf16.gmra.mxu0 %v6219
      %v6343 = vpop.f32.mrf.mxu0
      %v6344 = vadd.f32 0.0, %v6343
      %v6345 = vpop.f32.mrf.mxu0
      %v6346 = vpop.f32.mrf.mxu0
      %v6347 = vadd.f32 0.0, %v6346
      %v6348 = vpop.f32.mrf.mxu0
      %6349 = vmatprep.mubr.bf16.mxu0 %v6291
      %6350 = vmatmul.mubr.bf16.gmra.mxu0 %v6221
      %v6351 = vpop.f32.mrf.mxu0
      %v6352 = vadd.f32 0.0, %v6351
      %v6353 = vpop.f32.mrf.mxu0
      %v6354 = vpop.f32.mrf.mxu0
      %v6355 = vadd.f32 0.0, %v6354
      %v6356 = vpop.f32.mrf.mxu0
      %6357 = vdwg.mxu0
      %v6358 = vpack.c.b16 %v6003, %v6000
      %v6359 = vpack.c.b16 %v6004, %v6001
      %v6360 = vpack.c.b16 %v6005, %v6002
      %v6361 = vpack.c.b16 %v6009, %v6006
      %v6362 = vpack.c.b16 %v6010, %v6007
      %v6363 = vpack.c.b16 %v6011, %v6008
      %v6364 = vpack.c.b16 %v6015, %v6012
      %v6365 = vpack.c.b16 %v6016, %v6013
      %v6366 = vpack.c.b16 %v6017, %v6014
      %v6367 = vpack.c.b16 %v6021, %v6018
      %v6368 = vpack.c.b16 %v6022, %v6019
      %v6369 = vpack.c.b16 %v4090, %v6020
      %v6414 = vunpack.c.l.b16 %v6023
      %v6415 = vunpack.c.l.b16 %v6024
      %v6416 = vunpack.c.l.b16 %v6025
      %v6417 = vunpack.c.l.b16 %v6026
      %v6418 = vunpack.c.l.b16 %v6027
      %v6419 = vunpack.c.l.b16 %v6028
      %v6420 = vunpack.c.l.b16 %v6029
      %v6421 = vunpack.c.l.b16 %v6030
      %v6422 = vunpack.c.l.b16 %v6031
      %v6423 = vunpack.c.l.b16 %v6032
      %v6424 = vunpack.c.l.b16 %v6033
      %v6425 = vunpack.c.l.b16 %v6034
      %v6426 = vunpack.c.l.b16 %v6035
      %v6427 = vunpack.c.l.b16 %v6036
      %v6428 = vunpack.c.l.b16 %v6037
      %v6429 = vunpack.c.l.b16 %v6038
      %v6430 = vunpack.c.l.b16 %v6039
      %v6431 = vunpack.c.l.b16 %v6040
      %v6432 = vunpack.c.l.b16 %v6041
      %v6433 = vunpack.c.l.b16 %v6042
      %v6434 = vunpack.c.l.b16 %v6043
      %v6435 = vunpack.c.l.b16 %v6044
      %v6436 = vunpack.c.l.b16 %v6045
      %v6437 = vunpack.c.l.b16 %v6046
      %v6438 = vunpack.c.l.b16 %v6047
      %v6439 = vunpack.c.l.b16 %v6048
      %v6440 = vunpack.c.l.b16 %v6049
      %v6441 = vunpack.c.l.b16 %v6050
      %v6442 = vunpack.c.l.b16 %v6051
      %v6443 = vunpack.c.l.b16 %v6052
      %v6444 = vunpack.c.l.b16 %v6053
      %v6445 = vunpack.c.l.b16 %v6054
      %v6446 = vunpack.c.l.b16 %v6055
      %v6447 = vunpack.c.l.b16 %v6056
      %v6448 = vunpack.c.l.b16 %v6057
      %v6449 = vunpack.c.l.b16 %v6058
      %v6450 = vpack.c.b16 %v6415, %v6414
      %v6451 = vpack.c.b16 %v6417, %v6416
      %v6452 = vpack.c.b16 %v6419, %v6418
      %v6453 = vpack.c.b16 %v6421, %v6420
      %v6454 = vpack.c.b16 %v6423, %v6422
      %v6455 = vpack.c.b16 %v6425, %v6424
      %v6456 = vpack.c.b16 %v6427, %v6426
      %v6457 = vpack.c.b16 %v6429, %v6428
      %v6458 = vpack.c.b16 %v6431, %v6430
      %v6459 = vpack.c.b16 %v6433, %v6432
      %v6460 = vpack.c.b16 %v6435, %v6434
      %v6461 = vpack.c.b16 %v6437, %v6436
      %v6462 = vpack.c.b16 %v6439, %v6438
      %v6463 = vpack.c.b16 %v6441, %v6440
      %v6464 = vpack.c.b16 %v6443, %v6442
      %v6465 = vpack.c.b16 %v6445, %v6444
      %v6466 = vpack.c.b16 %v6447, %v6446
      %v6467 = vpack.c.b16 %v6449, %v6448
      %v6487 = vsel %vm2476, %v6360, 0
      %v6490 = vsel %vm2476, %v6363, 0
      %v6493 = vsel %vm2476, %v6366, 0
      %v6496 = vsel %vm2476, %v6369, 0
      %6498 = vmatprep.subr.bf16.mxu0 0
      %6499 = vmatpush1.bf16.msra.mxu0 %v6457
      %6500 = vmatprep.subr.bf16.mxu0 0
      %6501 = vmatpush1.bf16.msra.mxu0 %v6456
      %6502 = vmatprep.subr.bf16.mxu0 0
      %6503 = vmatpush1.bf16.msra.mxu0 %v6455
      %6504 = vmatprep.subr.bf16.mxu0 0
      %6505 = vmatpush1.bf16.msra.mxu0 %v6454
      %6506 = vmatprep.subr.bf16.mxu0 0
      %6507 = vmatpush1.bf16.msra.mxu0 %v6453
      %6508 = vmatprep.subr.bf16.mxu0 0
      %6509 = vmatpush1.bf16.msra.mxu0 %v6452
      %6510 = vmatprep.subr.bf16.mxu0 0
      %6511 = vmatpush1.bf16.msra.mxu0 %v6451
      %6512 = vmatprep.subr.bf16.mxu0 0
      %6513 = vmatpush1.bf16.msra.mxu0 %v6450
      %6514 = vmatprep.subr.bf16.mxu0 0
      %6515 = vmatpush2.bf16.msra.mxu0 %v6465
      %6516 = vmatprep.subr.bf16.mxu0 0
      %6517 = vmatpush2.bf16.msra.mxu0 %v6464
      %6518 = vmatprep.subr.bf16.mxu0 0
      %6519 = vmatpush2.bf16.msra.mxu0 %v6463
      %6520 = vmatprep.subr.bf16.mxu0 0
      %6521 = vmatpush2.bf16.msra.mxu0 %v6462
      %6522 = vmatprep.subr.bf16.mxu0 0
      %6523 = vmatpush2.bf16.msra.mxu0 %v6461
      %6524 = vmatprep.subr.bf16.mxu0 0
      %6525 = vmatpush2.bf16.msra.mxu0 %v6460
      %6526 = vmatprep.subr.bf16.mxu0 0
      %6527 = vmatpush2.bf16.msra.mxu0 %v6459
      %6528 = vmatprep.subr.bf16.mxu0 0
      %6529 = vmatpush2.bf16.msra.mxu0 %v6458
      %6530 = vmatprep.mubr.bf16.mxu0 %v6359
      %6531 = vmatmul.mubr.bf16.gmra.mxu0 %v6358
      %v6532 = vpop.f32.mrf.mxu0
      %v6533 = vadd.f32 %v6328, %v6532
      %v6534 = vpop.f32.mrf.mxu0
      %v6535 = vpop.f32.mrf.mxu0
      %v6536 = vadd.f32 %v6331, %v6535
      %v6537 = vpop.f32.mrf.mxu0
      %6538 = vmatprep.mubr.bf16.mxu0 %v6362
      %6539 = vmatmul.mubr.bf16.gmra.mxu0 %v6361
      %v6540 = vpop.f32.mrf.mxu0
      %v6541 = vadd.f32 %v6336, %v6540
      %v6542 = vpop.f32.mrf.mxu0
      %v6543 = vpop.f32.mrf.mxu0
      %v6544 = vadd.f32 %v6339, %v6543
      %v6545 = vpop.f32.mrf.mxu0
      %6546 = vmatprep.mubr.bf16.mxu0 %v6365
      %6547 = vmatmul.mubr.bf16.gmra.mxu0 %v6364
      %v6548 = vpop.f32.mrf.mxu0
      %v6549 = vadd.f32 %v6344, %v6548
      %v6550 = vpop.f32.mrf.mxu0
      %v6551 = vpop.f32.mrf.mxu0
      %v6552 = vadd.f32 %v6347, %v6551
      %v6553 = vpop.f32.mrf.mxu0
      %6554 = vmatprep.mubr.bf16.mxu0 %v6368
      %6555 = vmatmul.mubr.bf16.gmra.mxu0 %v6367
      %v6556 = vpop.f32.mrf.mxu0
      %v6557 = vadd.f32 %v6352, %v6556
      %v6558 = vpop.f32.mrf.mxu0
      %v6559 = vpop.f32.mrf.mxu0
      %v6560 = vadd.f32 %v6355, %v6559
      %v6561 = vpop.f32.mrf.mxu0
      %6562 = vdwg.mxu0
      %6563 = vmatprep.subr.bf16.mxu0 0
      %6564 = vmatpush1.bf16.msra.mxu0 0
      %6565 = vmatprep.subr.bf16.mxu0 0
      %6566 = vmatpush1.bf16.msra.mxu0 0
      %6567 = vmatprep.subr.bf16.mxu0 0
      %6568 = vmatpush1.bf16.msra.mxu0 0
      %6569 = vmatprep.subr.bf16.mxu0 0
      %6570 = vmatpush1.bf16.msra.mxu0 0
      %6571 = vmatprep.subr.bf16.mxu0 0
      %6572 = vmatpush1.bf16.msra.mxu0 0
      %6573 = vmatprep.subr.bf16.mxu0 0
      %6574 = vmatpush1.bf16.msra.mxu0 0
      %6575 = vmatprep.subr.bf16.mxu0 0
      %6576 = vmatpush1.bf16.msra.mxu0 %v6467
      %6577 = vmatprep.subr.bf16.mxu0 0
      %6578 = vmatpush1.bf16.msra.mxu0 %v6466
      %6579 = vmatprep.subr.bf16.mxu0 0
      %6580 = vmatpush2.bf16.msra.mxu0 0
      %6581 = vmatprep.subr.bf16.mxu0 0
      %6582 = vmatpush2.bf16.msra.mxu0 0
      %6583 = vmatprep.subr.bf16.mxu0 0
      %6584 = vmatpush2.bf16.msra.mxu0 0
      %6585 = vmatprep.subr.bf16.mxu0 0
      %6586 = vmatpush2.bf16.msra.mxu0 0
      %6587 = vmatprep.subr.bf16.mxu0 0
      %6588 = vmatpush2.bf16.msra.mxu0 0
      %6589 = vmatprep.subr.bf16.mxu0 0
      %6590 = vmatpush2.bf16.msra.mxu0 0
      %6591 = vmatprep.subr.bf16.mxu0 0
      %6592 = vmatpush2.bf16.msra.mxu0 0
      %6593 = vmatprep.subr.bf16.mxu0 0
      %6594 = vmatpush2.bf16.msra.mxu0 0
      %6595 = vmatprep.mubr.bf16.mxu0 0
      %6596 = vmatmul.mubr.bf16.gmra.mxu0 %v6487
      %v6597 = vpop.f32.mrf.mxu0
      %v6598 = vadd.f32 %v6533, %v6597
      %v6599 = vpop.f32.mrf.mxu0
      %v6600 = vpop.f32.mrf.mxu0
      %v6601 = vadd.f32 %v6536, %v6600
      %v6602 = vpop.f32.mrf.mxu0
      %6603 = vmatprep.mubr.bf16.mxu0 0
      %6604 = vmatmul.mubr.bf16.gmra.mxu0 %v6490
      %v6605 = vpop.f32.mrf.mxu0
      %v6606 = vadd.f32 %v6541, %v6605
      %v6607 = vpop.f32.mrf.mxu0
      %v6608 = vpop.f32.mrf.mxu0
      %v6609 = vadd.f32 %v6544, %v6608
      %v6610 = vpop.f32.mrf.mxu0
      %6611 = vmatprep.mubr.bf16.mxu0 0
      %6612 = vmatmul.mubr.bf16.gmra.mxu0 %v6493
      %v6613 = vpop.f32.mrf.mxu0
      %v6614 = vadd.f32 %v6549, %v6613
      %v6615 = vpop.f32.mrf.mxu0
      %v6616 = vpop.f32.mrf.mxu0
      %v6617 = vadd.f32 %v6552, %v6616
      %v6618 = vpop.f32.mrf.mxu0
      %6619 = vmatprep.mubr.bf16.mxu0 0
      %6620 = vmatmul.mubr.bf16.gmra.mxu0 %v6496
      %v6621 = vpop.f32.mrf.mxu0
      %v6622 = vadd.f32 %v6557, %v6621
      %v6623 = vpop.f32.mrf.mxu0
      %v6624 = vpop.f32.mrf.mxu0
      %v6625 = vadd.f32 %v6560, %v6624
      %v6626 = vpop.f32.mrf.mxu0
      %6627 = vdwg.mxu0
      %v6628 = vld [vmem:[%s39] sm:$0x1]
      %v6630 = vlaneseq
      %v6631 = vshrl.u32 %v6630, 7
      %v6632 = vsub.s32 0, %v6631
      %v6633 = vrot.slane %v6628, %v6632
      %v6635 = vadd.f32 %v6598, %v6633
      %v6636 = vadd.f32 %v6601, %v6633
      %v6637 = vadd.f32 %v6606, %v6633
      %v6638 = vadd.f32 %v6609, %v6633
      %v6639 = vadd.f32 %v6614, %v6633
      %v6640 = vadd.f32 %v6617, %v6633
      %v6641 = vadd.f32 %v6622, %v6633
      %v6642 = vadd.f32 %v6625, %v6633
      %v6643 = vld [vmem:[%s69] sm:$0xff]
      %v6644 = vld [vmem:[%s69 + $0x8] sm:$0xff]
      %v6645 = vld [vmem:[%s69 + $0x10] sm:$0xff]
      %v6646 = vld [vmem:[%s69 + $0x18] sm:$0xff]
      %v6647 = vld [vmem:[%s69 + $0x20] sm:$0xff]
      %v6648 = vld [vmem:[%s69 + $0x28] sm:$0xff]
      %v6649 = vld [vmem:[%s69 + $0x30] sm:$0xff]
      %v6650 = vld [vmem:[%s69 + $0x38] sm:$0xff]
      %v6651 = vld [vmem:[%s69 + $0x40] sm:$0xff]
      %v6652 = vld [vmem:[%s69 + $0x48] sm:$0xff]
      %v6653 = vld [vmem:[%s69 + $0x50] sm:$0xff]
      %v6654 = vld [vmem:[%s69 + $0x58] sm:$0xff]
      %v6655 = vld [vmem:[%s69 + $0x60] sm:$0xff]
      %v6656 = vld [vmem:[%s69 + $0x68] sm:$0xff]
      %v6657 = vld [vmem:[%s69 + $0x70] sm:$0xff]
      %v6658 = vld [vmem:[%s69 + $0x78] sm:$0xff]
      %v6659 = vld [vmem:[%s69 + $0x80] sm:$0xff]
      %v6660 = vld [vmem:[%s69 + $0x88] sm:$0xff]
      %v6661 = vld [vmem:[%s69 + $0x90] sm:$0xff]
      %v6662 = vld [vmem:[%s69 + $0x98] sm:$0xff]
      %v6663 = vld [vmem:[%s69 + $0xa0] sm:$0xff]
      %v6664 = vld [vmem:[%s69 + $0xa8] sm:$0xff]
      %v6665 = vld [vmem:[%s69 + $0xb0] sm:$0xff]
      %v6666 = vld [vmem:[%s69 + $0xb8] sm:$0xff]
      %v6667 = vld [vmem:[%s69 + $0xc0] sm:$0xff]
      %v6668 = vld [vmem:[%s69 + $0xc8] sm:$0xff]
      %v6669 = vld [vmem:[%s69 + $0xd0] sm:$0xff]
      %v6670 = vld [vmem:[%s69 + $0xd8] sm:$0xff]
      %v6671 = vld [vmem:[%s69 + $0xe0] sm:$0xff]
      %v6672 = vld [vmem:[%s69 + $0xe8] sm:$0xff]
      %v6673 = vld [vmem:[%s69 + $0xf0] sm:$0xff]
      %v6674 = vld [vmem:[%s69 + $0xf8] sm:$0xff]
      %v6676 = vsel %vm2494, %v6643, 0
      %v6679 = vsel %vm2494, %v6644, 0
      %v6682 = vsel %vm2494, %v6645, 0
      %v6685 = vsel %vm2494, %v6646, 0
      %v6688 = vsel %vm2494, %v6647, 0
      %v6691 = vsel %vm2494, %v6648, 0
      %v6694 = vsel %vm2494, %v6649, 0
      %v6697 = vsel %vm2494, %v6650, 0
      %v6700 = vsel %vm2494, %v6651, 0
      %v6703 = vsel %vm2494, %v6652, 0
      %v6706 = vsel %vm2494, %v6653, 0
      %v6709 = vsel %vm2494, %v6654, 0
      %v6712 = vsel %vm2494, %v6655, 0
      %v6715 = vsel %vm2494, %v6656, 0
      %v6718 = vsel %vm2494, %v6657, 0
      %v6721 = vsel %vm2494, %v6658, 0
      %v6724 = vsel %vm2494, %v6659, 0
      %v6727 = vsel %vm2494, %v6660, 0
      %v6730 = vsel %vm2494, %v6661, 0
      %v6733 = vsel %vm2494, %v6662, 0
      %v6736 = vsel %vm2494, %v6663, 0
      %v6739 = vsel %vm2494, %v6664, 0
      %v6742 = vsel %vm2494, %v6665, 0
      %v6745 = vsel %vm2494, %v6666, 0
      %v6748 = vsel %vm2494, %v6667, 0
      %v6751 = vsel %vm2494, %v6668, 0
      %v6754 = vsel %vm2494, %v6669, 0
      %v6757 = vsel %vm2494, %v6670, 0
      %v6760 = vsel %vm2494, %v6671, 0
      %v6763 = vsel %vm2494, %v6672, 0
      %v6766 = vsel %vm2494, %v6673, 0
      %v6769 = vsel %vm2494, %v6674, 0
      %6771 = vmatprep.subr.mxu0 0.0
      %6772 = vmatpush1.msra.mxu0 0.0
      %6773 = vmatprep.subr.mxu0 0.0
      %6774 = vmatpush1.msra.mxu0 0.0
      %6775 = vmatprep.subr.mxu0 0.0
      %6776 = vmatpush1.msra.mxu0 0.0
      %6777 = vmatprep.subr.mxu0 0.0
      %6778 = vmatpush1.msra.mxu0 0.0
      %6779 = vmatprep.subr.mxu0 0.0
      %6780 = vmatpush1.msra.mxu0 0.0
      %6781 = vmatprep.subr.mxu0 0.0
      %6782 = vmatpush1.msra.mxu0 0.0
      %6783 = vmatprep.subr.mxu0 0.0
      %6784 = vmatpush1.msra.mxu0 0.0
      %6785 = vmatprep.subr.mxu0 0.0
      %6786 = vmatpush1.msra.mxu0 0.0
      %6787 = vmatprep.subr.mxu0 0.0
      %6788 = vmatpush1.msra.mxu0 %v6642
      %6789 = vmatprep.subr.mxu0 0.0
      %6790 = vmatpush1.msra.mxu0 %v6641
      %6791 = vmatprep.subr.mxu0 0.0
      %6792 = vmatpush1.msra.mxu0 %v6640
      %6793 = vmatprep.subr.mxu0 0.0
      %6794 = vmatpush1.msra.mxu0 %v6639
      %6795 = vmatprep.subr.mxu0 0.0
      %6796 = vmatpush1.msra.mxu0 %v6638
      %6797 = vmatprep.subr.mxu0 0.0
      %6798 = vmatpush1.msra.mxu0 %v6637
      %6799 = vmatprep.subr.mxu0 0.0
      %6800 = vmatpush1.msra.mxu0 %v6636
      %6801 = vmatprep.subr.mxu0 0.0
      %6802 = vmatpush1.msra.mxu0 %v6635
      %6803 = vmatprep.subr.mxu0 0.0
      %6804 = vmatpush2.msra.mxu0 0.0
      %6805 = vmatprep.subr.mxu0 0.0
      %6806 = vmatpush2.msra.mxu0 0.0
      %6807 = vmatprep.subr.mxu0 0.0
      %6808 = vmatpush2.msra.mxu0 0.0
      %6809 = vmatprep.subr.mxu0 0.0
      %6810 = vmatpush2.msra.mxu0 0.0
      %6811 = vmatprep.subr.mxu0 0.0
      %6812 = vmatpush2.msra.mxu0 0.0
      %6813 = vmatprep.subr.mxu0 0.0
      %6814 = vmatpush2.msra.mxu0 0.0
      %6815 = vmatprep.subr.mxu0 0.0
      %6816 = vmatpush2.msra.mxu0 0.0
      %6817 = vmatprep.subr.mxu0 0.0
      %6818 = vmatpush2.msra.mxu0 0.0
      %6819 = vmatprep.subr.mxu0 0.0
      %6820 = vmatpush2.msra.mxu0 0.0
      %6821 = vmatprep.subr.mxu0 0.0
      %6822 = vmatpush2.msra.mxu0 0.0
      %6823 = vmatprep.subr.mxu0 0.0
      %6824 = vmatpush2.msra.mxu0 0.0
      %6825 = vmatprep.subr.mxu0 0.0
      %6826 = vmatpush2.msra.mxu0 0.0
      %6827 = vmatprep.subr.mxu0 0.0
      %6828 = vmatpush2.msra.mxu0 0.0
      %6829 = vmatprep.subr.mxu0 0.0
      %6830 = vmatpush2.msra.mxu0 0.0
      %6831 = vmatprep.subr.mxu0 0.0
      %6832 = vmatpush2.msra.mxu0 0.0
      %6833 = vmatprep.subr.mxu0 0.0
      %6834 = vmatpush2.msra.mxu0 0.0
      %6835 = vmatprep.mubr.f32.mxu0 0.0
      %6836 = vmatmul.mubr.f32.gmra.mxu0 %v6676
      %v6837 = vpop.f32.mrf.mxu0
      %v6838 = vadd.f32 0.0, %v6837
      %v6839 = vpop.f32.mrf.mxu0
      %6840 = vmatprep.mubr.f32.mxu0 0.0
      %6841 = vmatmul.mubr.f32.gmra.mxu0 %v6679
      %v6842 = vpop.f32.mrf.mxu0
      %v6843 = vadd.f32 0.0, %v6842
      %v6844 = vpop.f32.mrf.mxu0
      %6845 = vmatprep.mubr.f32.mxu0 0.0
      %6846 = vmatmul.mubr.f32.gmra.mxu0 %v6682
      %v6847 = vpop.f32.mrf.mxu0
      %v6848 = vadd.f32 0.0, %v6847
      %v6849 = vpop.f32.mrf.mxu0
      %6850 = vmatprep.mubr.f32.mxu0 0.0
      %6851 = vmatmul.mubr.f32.gmra.mxu0 %v6685
      %v6852 = vpop.f32.mrf.mxu0
      %v6853 = vadd.f32 0.0, %v6852
      %v6854 = vpop.f32.mrf.mxu0
      %6855 = vmatprep.mubr.f32.mxu0 0.0
      %6856 = vmatmul.mubr.f32.gmra.mxu0 %v6688
      %v6857 = vpop.f32.mrf.mxu0
      %v6858 = vadd.f32 0.0, %v6857
      %v6859 = vpop.f32.mrf.mxu0
      %6860 = vmatprep.mubr.f32.mxu0 0.0
      %6861 = vmatmul.mubr.f32.gmra.mxu0 %v6691
      %v6862 = vpop.f32.mrf.mxu0
      %v6863 = vadd.f32 0.0, %v6862
      %v6864 = vpop.f32.mrf.mxu0
      %6865 = vmatprep.mubr.f32.mxu0 0.0
      %6866 = vmatmul.mubr.f32.gmra.mxu0 %v6694
      %v6867 = vpop.f32.mrf.mxu0
      %v6868 = vadd.f32 0.0, %v6867
      %v6869 = vpop.f32.mrf.mxu0
      %6870 = vmatprep.mubr.f32.mxu0 0.0
      %6871 = vmatmul.mubr.f32.gmra.mxu0 %v6697
      %v6872 = vpop.f32.mrf.mxu0
      %v6873 = vadd.f32 0.0, %v6872
      %v6874 = vpop.f32.mrf.mxu0
      %6875 = vmatprep.mubr.f32.mxu0 0.0
      %6876 = vmatmul.mubr.f32.gmra.mxu0 %v6700
      %v6877 = vpop.f32.mrf.mxu0
      %v6878 = vadd.f32 0.0, %v6877
      %v6879 = vpop.f32.mrf.mxu0
      %6880 = vmatprep.mubr.f32.mxu0 0.0
      %6881 = vmatmul.mubr.f32.gmra.mxu0 %v6703
      %v6882 = vpop.f32.mrf.mxu0
      %v6883 = vadd.f32 0.0, %v6882
      %v6884 = vpop.f32.mrf.mxu0
      %6885 = vmatprep.mubr.f32.mxu0 0.0
      %6886 = vmatmul.mubr.f32.gmra.mxu0 %v6706
      %v6887 = vpop.f32.mrf.mxu0
      %v6888 = vadd.f32 0.0, %v6887
      %v6889 = vpop.f32.mrf.mxu0
      %6890 = vmatprep.mubr.f32.mxu0 0.0
      %6891 = vmatmul.mubr.f32.gmra.mxu0 %v6709
      %v6892 = vpop.f32.mrf.mxu0
      %v6893 = vadd.f32 0.0, %v6892
      %v6894 = vpop.f32.mrf.mxu0
      %6895 = vmatprep.mubr.f32.mxu0 0.0
      %6896 = vmatmul.mubr.f32.gmra.mxu0 %v6712
      %v6897 = vpop.f32.mrf.mxu0
      %v6898 = vadd.f32 0.0, %v6897
      %v6899 = vpop.f32.mrf.mxu0
      %6900 = vmatprep.mubr.f32.mxu0 0.0
      %6901 = vmatmul.mubr.f32.gmra.mxu0 %v6715
      %v6902 = vpop.f32.mrf.mxu0
      %v6903 = vadd.f32 0.0, %v6902
      %v6904 = vpop.f32.mrf.mxu0
      %6905 = vmatprep.mubr.f32.mxu0 0.0
      %6906 = vmatmul.mubr.f32.gmra.mxu0 %v6718
      %v6907 = vpop.f32.mrf.mxu0
      %v6908 = vadd.f32 0.0, %v6907
      %v6909 = vpop.f32.mrf.mxu0
      %6910 = vmatprep.mubr.f32.mxu0 0.0
      %6911 = vmatmul.mubr.f32.gmra.mxu0 %v6721
      %v6912 = vpop.f32.mrf.mxu0
      %v6913 = vadd.f32 0.0, %v6912
      %v6914 = vpop.f32.mrf.mxu0
      %6915 = vmatprep.mubr.f32.mxu0 0.0
      %6916 = vmatmul.mubr.f32.gmra.mxu0 %v6724
      %v6917 = vpop.f32.mrf.mxu0
      %v6918 = vadd.f32 0.0, %v6917
      %v6919 = vpop.f32.mrf.mxu0
      %6920 = vmatprep.mubr.f32.mxu0 0.0
      %6921 = vmatmul.mubr.f32.gmra.mxu0 %v6727
      %v6922 = vpop.f32.mrf.mxu0
      %v6923 = vadd.f32 0.0, %v6922
      %v6924 = vpop.f32.mrf.mxu0
      %6925 = vmatprep.mubr.f32.mxu0 0.0
      %6926 = vmatmul.mubr.f32.gmra.mxu0 %v6730
      %v6927 = vpop.f32.mrf.mxu0
      %v6928 = vadd.f32 0.0, %v6927
      %v6929 = vpop.f32.mrf.mxu0
      %6930 = vmatprep.mubr.f32.mxu0 0.0
      %6931 = vmatmul.mubr.f32.gmra.mxu0 %v6733
      %v6932 = vpop.f32.mrf.mxu0
      %v6933 = vadd.f32 0.0, %v6932
      %v6934 = vpop.f32.mrf.mxu0
      %6935 = vmatprep.mubr.f32.mxu0 0.0
      %6936 = vmatmul.mubr.f32.gmra.mxu0 %v6736
      %v6937 = vpop.f32.mrf.mxu0
      %v6938 = vadd.f32 0.0, %v6937
      %v6939 = vpop.f32.mrf.mxu0
      %6940 = vmatprep.mubr.f32.mxu0 0.0
      %6941 = vmatmul.mubr.f32.gmra.mxu0 %v6739
      %v6942 = vpop.f32.mrf.mxu0
      %v6943 = vadd.f32 0.0, %v6942
      %v6944 = vpop.f32.mrf.mxu0
      %6945 = vmatprep.mubr.f32.mxu0 0.0
      %6946 = vmatmul.mubr.f32.gmra.mxu0 %v6742
      %v6947 = vpop.f32.mrf.mxu0
      %v6948 = vadd.f32 0.0, %v6947
      %v6949 = vpop.f32.mrf.mxu0
      %6950 = vmatprep.mubr.f32.mxu0 0.0
      %6951 = vmatmul.mubr.f32.gmra.mxu0 %v6745
      %v6952 = vpop.f32.mrf.mxu0
      %v6953 = vadd.f32 0.0, %v6952
      %v6954 = vpop.f32.mrf.mxu0
      %6955 = vmatprep.mubr.f32.mxu0 0.0
      %6956 = vmatmul.mubr.f32.gmra.mxu0 %v6748
      %v6957 = vpop.f32.mrf.mxu0
      %v6958 = vadd.f32 0.0, %v6957
      %v6959 = vpop.f32.mrf.mxu0
      %6960 = vmatprep.mubr.f32.mxu0 0.0
      %6961 = vmatmul.mubr.f32.gmra.mxu0 %v6751
      %v6962 = vpop.f32.mrf.mxu0
      %v6963 = vadd.f32 0.0, %v6962
      %v6964 = vpop.f32.mrf.mxu0
      %6965 = vmatprep.mubr.f32.mxu0 0.0
      %6966 = vmatmul.mubr.f32.gmra.mxu0 %v6754
      %v6967 = vpop.f32.mrf.mxu0
      %v6968 = vadd.f32 0.0, %v6967
      %v6969 = vpop.f32.mrf.mxu0
      %6970 = vmatprep.mubr.f32.mxu0 0.0
      %6971 = vmatmul.mubr.f32.gmra.mxu0 %v6757
      %v6972 = vpop.f32.mrf.mxu0
      %v6973 = vadd.f32 0.0, %v6972
      %v6974 = vpop.f32.mrf.mxu0
      %6975 = vmatprep.mubr.f32.mxu0 0.0
      %6976 = vmatmul.mubr.f32.gmra.mxu0 %v6760
      %v6977 = vpop.f32.mrf.mxu0
      %v6978 = vadd.f32 0.0, %v6977
      %v6979 = vpop.f32.mrf.mxu0
      %6980 = vmatprep.mubr.f32.mxu0 0.0
      %6981 = vmatmul.mubr.f32.gmra.mxu0 %v6763
      %v6982 = vpop.f32.mrf.mxu0
      %v6983 = vadd.f32 0.0, %v6982
      %v6984 = vpop.f32.mrf.mxu0
      %6985 = vmatprep.mubr.f32.mxu0 0.0
      %6986 = vmatmul.mubr.f32.gmra.mxu0 %v6766
      %v6987 = vpop.f32.mrf.mxu0
      %v6988 = vadd.f32 0.0, %v6987
      %v6989 = vpop.f32.mrf.mxu0
      %6990 = vmatprep.mubr.f32.mxu0 0.0
      %6991 = vmatmul.mubr.f32.gmra.mxu0 %v6769
      %v6992 = vpop.f32.mrf.mxu0
      %v6993 = vadd.f32 0.0, %v6992
      %v6994 = vpop.f32.mrf.mxu0
      %6995 = vdwg.mxu0
      %vm6996 = vcmp.ge.f32.partialorder %v6838, 0.0
      %vm6997 = vcmp.ge.f32.partialorder %v6843, 0.0
      %vm6998 = vcmp.ge.f32.partialorder %v6848, 0.0
      %vm6999 = vcmp.ge.f32.partialorder %v6853, 0.0
      %vm7000 = vcmp.ge.f32.partialorder %v6858, 0.0
      %vm7001 = vcmp.ge.f32.partialorder %v6863, 0.0
      %vm7002 = vcmp.ge.f32.partialorder %v6868, 0.0
      %vm7003 = vcmp.ge.f32.partialorder %v6873, 0.0
      %vm7004 = vcmp.ge.f32.partialorder %v6878, 0.0
      %vm7005 = vcmp.ge.f32.partialorder %v6883, 0.0
      %vm7006 = vcmp.ge.f32.partialorder %v6888, 0.0
      %vm7007 = vcmp.ge.f32.partialorder %v6893, 0.0
      %vm7008 = vcmp.ge.f32.partialorder %v6898, 0.0
      %vm7009 = vcmp.ge.f32.partialorder %v6903, 0.0
      %vm7010 = vcmp.ge.f32.partialorder %v6908, 0.0
      %vm7011 = vcmp.ge.f32.partialorder %v6913, 0.0
      %vm7012 = vcmp.ge.f32.partialorder %v6918, 0.0
      %vm7013 = vcmp.ge.f32.partialorder %v6923, 0.0
      %vm7014 = vcmp.ge.f32.partialorder %v6928, 0.0
      %vm7015 = vcmp.ge.f32.partialorder %v6933, 0.0
      %vm7016 = vcmp.ge.f32.partialorder %v6938, 0.0
      %vm7017 = vcmp.ge.f32.partialorder %v6943, 0.0
      %vm7018 = vcmp.ge.f32.partialorder %v6948, 0.0
      %vm7019 = vcmp.ge.f32.partialorder %v6953, 0.0
      %vm7020 = vcmp.ge.f32.partialorder %v6958, 0.0
      %vm7021 = vcmp.ge.f32.partialorder %v6963, 0.0
      %vm7022 = vcmp.ge.f32.partialorder %v6968, 0.0
      %vm7023 = vcmp.ge.f32.partialorder %v6973, 0.0
      %vm7024 = vcmp.ge.f32.partialorder %v6978, 0.0
      %vm7025 = vcmp.ge.f32.partialorder %v6983, 0.0
      %vm7026 = vcmp.ge.f32.partialorder %v6988, 0.0
      %vm7027 = vcmp.ge.f32.partialorder %v6993, 0.0
      %v7028 = vmul.f32 %v6838, 0.1
      %v7029 = vmul.f32 %v6843, 0.1
      %v7030 = vmul.f32 %v6848, 0.1
      %v7031 = vmul.f32 %v6853, 0.1
      %v7032 = vmul.f32 %v6858, 0.1
      %v7033 = vmul.f32 %v6863, 0.1
      %v7034 = vmul.f32 %v6868, 0.1
      %v7035 = vmul.f32 %v6873, 0.1
      %v7036 = vmul.f32 %v6878, 0.1
      %v7037 = vmul.f32 %v6883, 0.1
      %v7038 = vmul.f32 %v6888, 0.1
      %v7039 = vmul.f32 %v6893, 0.1
      %v7040 = vmul.f32 %v6898, 0.1
      %v7041 = vmul.f32 %v6903, 0.1
      %v7042 = vmul.f32 %v6908, 0.1
      %v7043 = vmul.f32 %v6913, 0.1
      %v7044 = vmul.f32 %v6918, 0.1
      %v7045 = vmul.f32 %v6923, 0.1
      %v7046 = vmul.f32 %v6928, 0.1
      %v7047 = vmul.f32 %v6933, 0.1
      %v7048 = vmul.f32 %v6938, 0.1
      %v7049 = vmul.f32 %v6943, 0.1
      %v7050 = vmul.f32 %v6948, 0.1
      %v7051 = vmul.f32 %v6953, 0.1
      %v7052 = vmul.f32 %v6958, 0.1
      %v7053 = vmul.f32 %v6963, 0.1
      %v7054 = vmul.f32 %v6968, 0.1
      %v7055 = vmul.f32 %v6973, 0.1
      %v7056 = vmul.f32 %v6978, 0.1
      %v7057 = vmul.f32 %v6983, 0.1
      %v7058 = vmul.f32 %v6988, 0.1
      %v7059 = vmul.f32 %v6993, 0.1
      %v7060 = vsel %vm6996, %v6838, %v7028
      %v7061 = vsel %vm6997, %v6843, %v7029
      %v7062 = vsel %vm6998, %v6848, %v7030
      %v7063 = vsel %vm6999, %v6853, %v7031
      %v7064 = vsel %vm7000, %v6858, %v7032
      %v7065 = vsel %vm7001, %v6863, %v7033
      %v7066 = vsel %vm7002, %v6868, %v7034
      %v7067 = vsel %vm7003, %v6873, %v7035
      %v7068 = vsel %vm7004, %v6878, %v7036
      %v7069 = vsel %vm7005, %v6883, %v7037
      %v7070 = vsel %vm7006, %v6888, %v7038
      %v7071 = vsel %vm7007, %v6893, %v7039
      %v7072 = vsel %vm7008, %v6898, %v7040
      %v7073 = vsel %vm7009, %v6903, %v7041
      %v7074 = vsel %vm7010, %v6908, %v7042
      %v7075 = vsel %vm7011, %v6913, %v7043
      %v7076 = vsel %vm7012, %v6918, %v7044
      %v7077 = vsel %vm7013, %v6923, %v7045
      %v7078 = vsel %vm7014, %v6928, %v7046
      %v7079 = vsel %vm7015, %v6933, %v7047
      %v7080 = vsel %vm7016, %v6938, %v7048
      %v7081 = vsel %vm7017, %v6943, %v7049
      %v7082 = vsel %vm7018, %v6948, %v7050
      %v7083 = vsel %vm7019, %v6953, %v7051
      %v7084 = vsel %vm7020, %v6958, %v7052
      %v7085 = vsel %vm7021, %v6963, %v7053
      %v7086 = vsel %vm7022, %v6968, %v7054
      %v7087 = vsel %vm7023, %v6973, %v7055
      %v7088 = vsel %vm7024, %v6978, %v7056
      %v7089 = vsel %vm7025, %v6983, %v7057
      %v7090 = vsel %vm7026, %v6988, %v7058
      %v7091 = vsel %vm7027, %v6993, %v7059
      %v7092 = vpack.c.bf16 %v7061, %v7060
      %v7093 = vpack.c.bf16 %v7063, %v7062
      %v7094 = vpack.c.bf16 %v7065, %v7064
      %v7095 = vpack.c.bf16 %v7067, %v7066
      %v7096 = vpack.c.bf16 %v7069, %v7068
      %v7097 = vpack.c.bf16 %v7071, %v7070
      %v7098 = vpack.c.bf16 %v7073, %v7072
      %v7099 = vpack.c.bf16 %v7075, %v7074
      %v7100 = vpack.c.bf16 %v7077, %v7076
      %v7101 = vpack.c.bf16 %v7079, %v7078
      %v7102 = vpack.c.bf16 %v7081, %v7080
      %v7103 = vpack.c.bf16 %v7083, %v7082
      %v7104 = vpack.c.bf16 %v7085, %v7084
      %v7105 = vpack.c.bf16 %v7087, %v7086
      %v7106 = vpack.c.bf16 %v7089, %v7088
      %v7107 = vpack.c.bf16 %v7091, %v7090
      %v7109 = vshrl.u32 %v7092, 16
      %v7111 = vrot.slane %v7109, 7
      %v7112 = vshll.u32 %v7092, 16
      %v7114 = vor.u32 %v7111, %v7112
      %v7116 = vshrl.u32 %v7093, 16
      %v7118 = vrot.slane %v7116, 7
      %v7119 = vshll.u32 %v7093, 16
      %v7121 = vor.u32 %v7118, %v7119
      %v7123 = vshrl.u32 %v7094, 16
      %v7125 = vrot.slane %v7123, 7
      %v7126 = vshll.u32 %v7094, 16
      %v7128 = vor.u32 %v7125, %v7126
      %v7130 = vshrl.u32 %v7095, 16
      %v7132 = vrot.slane %v7130, 7
      %v7133 = vshll.u32 %v7095, 16
      %v7135 = vor.u32 %v7132, %v7133
      %v7137 = vshrl.u32 %v7096, 16
      %v7139 = vrot.slane %v7137, 7
      %v7140 = vshll.u32 %v7096, 16
      %v7142 = vor.u32 %v7139, %v7140
      %v7144 = vshrl.u32 %v7097, 16
      %v7146 = vrot.slane %v7144, 7
      %v7147 = vshll.u32 %v7097, 16
      %v7149 = vor.u32 %v7146, %v7147
      %v7151 = vshrl.u32 %v7098, 16
      %v7153 = vrot.slane %v7151, 7
      %v7154 = vshll.u32 %v7098, 16
      %v7156 = vor.u32 %v7153, %v7154
      %v7158 = vshrl.u32 %v7099, 16
      %v7160 = vrot.slane %v7158, 7
      %v7161 = vshll.u32 %v7099, 16
      %v7163 = vor.u32 %v7160, %v7161
      %v7165 = vshrl.u32 %v7100, 16
      %v7167 = vrot.slane %v7165, 7
      %v7168 = vshll.u32 %v7100, 16
      %v7170 = vor.u32 %v7167, %v7168
      %v7172 = vshrl.u32 %v7101, 16
      %v7174 = vrot.slane %v7172, 7
      %v7175 = vshll.u32 %v7101, 16
      %v7177 = vor.u32 %v7174, %v7175
      %v7179 = vshrl.u32 %v7102, 16
      %v7181 = vrot.slane %v7179, 7
      %v7182 = vshll.u32 %v7102, 16
      %v7184 = vor.u32 %v7181, %v7182
      %v7186 = vshrl.u32 %v7103, 16
      %v7188 = vrot.slane %v7186, 7
      %v7189 = vshll.u32 %v7103, 16
      %v7191 = vor.u32 %v7188, %v7189
      %v7193 = vshrl.u32 %v7104, 16
      %v7195 = vrot.slane %v7193, 7
      %v7196 = vshll.u32 %v7104, 16
      %v7198 = vor.u32 %v7195, %v7196
      %v7200 = vshrl.u32 %v7105, 16
      %v7202 = vrot.slane %v7200, 7
      %v7203 = vshll.u32 %v7105, 16
      %v7205 = vor.u32 %v7202, %v7203
      %v7207 = vshrl.u32 %v7106, 16
      %v7209 = vrot.slane %v7207, 7
      %v7210 = vshll.u32 %v7106, 16
      %v7212 = vor.u32 %v7209, %v7210
      %v7214 = vshrl.u32 %v7107, 16
      %v7216 = vrot.slane %v7214, 7
      %v7217 = vshll.u32 %v7107, 16
      %v7219 = vor.u32 %v7216, %v7217
      %v7252 = vsel %vm1298, 0, %v7114
      %v7253 = vsel %vm1298, 0, %v7121
      %v7254 = vsel %vm1298, 0, %v7128
      %v7255 = vsel %vm1298, 0, %v7135
      %v7256 = vsel %vm1298, 0, %v7142
      %v7257 = vsel %vm1298, 0, %v7149
      %v7258 = vsel %vm1298, 0, %v7156
      %v7259 = vsel %vm1298, 0, %v7163
      %v7260 = vsel %vm1298, 0, %v7170
      %v7261 = vsel %vm1298, 0, %v7177
      %v7262 = vsel %vm1298, 0, %v7184
      %v7263 = vsel %vm1298, 0, %v7191
      %v7264 = vsel %vm1298, 0, %v7198
      %v7265 = vsel %vm1298, 0, %v7205
      %v7266 = vsel %vm1298, 0, %v7212
      %v7267 = vsel %vm1298, 0, %v7219
      %v7268 = vsel %vm1298, %v7111, 0
      %v7269 = vsel %vm1298, %v7118, 0
      %v7270 = vsel %vm1298, %v7125, 0
      %v7271 = vsel %vm1298, %v7132, 0
      %v7272 = vsel %vm1298, %v7139, 0
      %v7273 = vsel %vm1298, %v7146, 0
      %v7274 = vsel %vm1298, %v7153, 0
      %v7275 = vsel %vm1298, %v7160, 0
      %v7276 = vsel %vm1298, %v7167, 0
      %v7277 = vsel %vm1298, %v7174, 0
      %v7278 = vsel %vm1298, %v7181, 0
      %v7279 = vsel %vm1298, %v7188, 0
      %v7280 = vsel %vm1298, %v7195, 0
      %v7281 = vsel %vm1298, %v7202, 0
      %v7282 = vsel %vm1298, %v7209, 0
      %v7283 = vsel %vm1298, %v7216, 0
      %v7284 = vsel %vm1414, %v3285, %v3284
      %v7286 = vshrl.u32 %v7252, 16
      %v7288 = vshll.u32 %v7252, 16
      %v7290 = vrot.slane %v7288, 1
      %v7291 = vor.u32 %v7286, %v7290
      %v7293 = vshll.u32 %v7268, 16
      %v7295 = vrot.slane %v7293, 1
      %v7296 = vsel %vm1414, %v7291, %v7295
      %v7298 = vshrl.u32 %v7253, 16
      %v7300 = vshll.u32 %v7253, 16
      %v7302 = vrot.slane %v7300, 1
      %v7303 = vor.u32 %v7298, %v7302
      %v7305 = vshll.u32 %v7269, 16
      %v7307 = vrot.slane %v7305, 1
      %v7308 = vsel %vm1414, %v7303, %v7307
      %v7310 = vshrl.u32 %v7254, 16
      %v7312 = vshll.u32 %v7254, 16
      %v7314 = vrot.slane %v7312, 1
      %v7315 = vor.u32 %v7310, %v7314
      %v7317 = vshll.u32 %v7270, 16
      %v7319 = vrot.slane %v7317, 1
      %v7320 = vsel %vm1414, %v7315, %v7319
      %v7322 = vshrl.u32 %v7255, 16
      %v7324 = vshll.u32 %v7255, 16
      %v7326 = vrot.slane %v7324, 1
      %v7327 = vor.u32 %v7322, %v7326
      %v7329 = vshll.u32 %v7271, 16
      %v7331 = vrot.slane %v7329, 1
      %v7332 = vsel %vm1414, %v7327, %v7331
      %v7334 = vshrl.u32 %v7256, 16
      %v7336 = vshll.u32 %v7256, 16
      %v7338 = vrot.slane %v7336, 1
      %v7339 = vor.u32 %v7334, %v7338
      %v7341 = vshll.u32 %v7272, 16
      %v7343 = vrot.slane %v7341, 1
      %v7344 = vsel %vm1414, %v7339, %v7343
      %v7346 = vshrl.u32 %v7257, 16
      %v7348 = vshll.u32 %v7257, 16
      %v7350 = vrot.slane %v7348, 1
      %v7351 = vor.u32 %v7346, %v7350
      %v7353 = vshll.u32 %v7273, 16
      %v7355 = vrot.slane %v7353, 1
      %v7356 = vsel %vm1414, %v7351, %v7355
      %v7358 = vshrl.u32 %v7258, 16
      %v7360 = vshll.u32 %v7258, 16
      %v7362 = vrot.slane %v7360, 1
      %v7363 = vor.u32 %v7358, %v7362
      %v7365 = vshll.u32 %v7274, 16
      %v7367 = vrot.slane %v7365, 1
      %v7368 = vsel %vm1414, %v7363, %v7367
      %v7370 = vshrl.u32 %v7259, 16
      %v7372 = vshll.u32 %v7259, 16
      %v7374 = vrot.slane %v7372, 1
      %v7375 = vor.u32 %v7370, %v7374
      %v7377 = vshll.u32 %v7275, 16
      %v7379 = vrot.slane %v7377, 1
      %v7380 = vsel %vm1414, %v7375, %v7379
      %v7382 = vshrl.u32 %v7260, 16
      %v7384 = vshll.u32 %v7260, 16
      %v7386 = vrot.slane %v7384, 1
      %v7387 = vor.u32 %v7382, %v7386
      %v7389 = vshll.u32 %v7276, 16
      %v7391 = vrot.slane %v7389, 1
      %v7392 = vsel %vm1414, %v7387, %v7391
      %v7394 = vshrl.u32 %v7261, 16
      %v7396 = vshll.u32 %v7261, 16
      %v7398 = vrot.slane %v7396, 1
      %v7399 = vor.u32 %v7394, %v7398
      %v7401 = vshll.u32 %v7277, 16
      %v7403 = vrot.slane %v7401, 1
      %v7404 = vsel %vm1414, %v7399, %v7403
      %v7406 = vshrl.u32 %v7262, 16
      %v7408 = vshll.u32 %v7262, 16
      %v7410 = vrot.slane %v7408, 1
      %v7411 = vor.u32 %v7406, %v7410
      %v7413 = vshll.u32 %v7278, 16
      %v7415 = vrot.slane %v7413, 1
      %v7416 = vsel %vm1414, %v7411, %v7415
      %v7418 = vshrl.u32 %v7263, 16
      %v7420 = vshll.u32 %v7263, 16
      %v7422 = vrot.slane %v7420, 1
      %v7423 = vor.u32 %v7418, %v7422
      %v7425 = vshll.u32 %v7279, 16
      %v7427 = vrot.slane %v7425, 1
      %v7428 = vsel %vm1414, %v7423, %v7427
      %v7430 = vshrl.u32 %v7264, 16
      %v7432 = vshll.u32 %v7264, 16
      %v7434 = vrot.slane %v7432, 1
      %v7435 = vor.u32 %v7430, %v7434
      %v7437 = vshll.u32 %v7280, 16
      %v7439 = vrot.slane %v7437, 1
      %v7440 = vsel %vm1414, %v7435, %v7439
      %v7442 = vshrl.u32 %v7265, 16
      %v7444 = vshll.u32 %v7265, 16
      %v7446 = vrot.slane %v7444, 1
      %v7447 = vor.u32 %v7442, %v7446
      %v7449 = vshll.u32 %v7281, 16
      %v7451 = vrot.slane %v7449, 1
      %v7452 = vsel %vm1414, %v7447, %v7451
      %v7454 = vshrl.u32 %v7266, 16
      %v7456 = vshll.u32 %v7266, 16
      %v7458 = vrot.slane %v7456, 1
      %v7459 = vor.u32 %v7454, %v7458
      %v7461 = vshll.u32 %v7282, 16
      %v7463 = vrot.slane %v7461, 1
      %v7464 = vsel %vm1414, %v7459, %v7463
      %7465 = vrot.lane.b32.xlu0 %v7284, 32
      %v7466 = vpop.permute.xlu0 %7465
      %7467 = vrot.lane.b32.xlu0 %v7296, 32
      %v7468 = vpop.permute.xlu0 %7467
      %7469 = vrot.lane.b32.xlu0 %v7308, 32
      %v7470 = vpop.permute.xlu0 %7469
      %7471 = vrot.lane.b32.xlu0 %v7320, 32
      %v7472 = vpop.permute.xlu0 %7471
      %7473 = vrot.lane.b32.xlu0 %v7332, 32
      %v7474 = vpop.permute.xlu0 %7473
      %7475 = vrot.lane.b32.xlu0 %v7344, 32
      %v7476 = vpop.permute.xlu0 %7475
      %7477 = vrot.lane.b32.xlu0 %v7356, 32
      %v7478 = vpop.permute.xlu0 %7477
      %7479 = vrot.lane.b32.xlu0 %v7368, 32
      %v7480 = vpop.permute.xlu0 %7479
      %7481 = vrot.lane.b32.xlu0 %v7380, 32
      %v7482 = vpop.permute.xlu0 %7481
      %7483 = vrot.lane.b32.xlu0 %v7392, 32
      %v7484 = vpop.permute.xlu0 %7483
      %7485 = vrot.lane.b32.xlu0 %v7404, 32
      %v7486 = vpop.permute.xlu0 %7485
      %7487 = vrot.lane.b32.xlu0 %v7416, 32
      %v7488 = vpop.permute.xlu0 %7487
      %7489 = vrot.lane.b32.xlu0 %v7428, 32
      %v7490 = vpop.permute.xlu0 %7489
      %7491 = vrot.lane.b32.xlu0 %v7440, 32
      %v7492 = vpop.permute.xlu0 %7491
      %7493 = vrot.lane.b32.xlu0 %v7452, 32
      %v7494 = vpop.permute.xlu0 %7493
      %7495 = vrot.lane.b32.xlu0 %v7464, 32
      %v7496 = vpop.permute.xlu0 %7495
      %v7527 = vsel %vm1543, %v3289, %v3289
      %v7528 = vrot.slane %v7252, 1
      %v7529 = vrot.slane %v7268, 1
      %v7530 = vsel %vm1543, %v7528, %v7529
      %v7531 = vrot.slane %v7253, 1
      %v7532 = vrot.slane %v7269, 1
      %v7533 = vsel %vm1543, %v7531, %v7532
      %v7534 = vrot.slane %v7254, 1
      %v7535 = vrot.slane %v7270, 1
      %v7536 = vsel %vm1543, %v7534, %v7535
      %v7537 = vrot.slane %v7255, 1
      %v7538 = vrot.slane %v7271, 1
      %v7539 = vsel %vm1543, %v7537, %v7538
      %v7540 = vrot.slane %v7256, 1
      %v7541 = vrot.slane %v7272, 1
      %v7542 = vsel %vm1543, %v7540, %v7541
      %v7543 = vrot.slane %v7257, 1
      %v7544 = vrot.slane %v7273, 1
      %v7545 = vsel %vm1543, %v7543, %v7544
      %v7546 = vrot.slane %v7258, 1
      %v7547 = vrot.slane %v7274, 1
      %v7548 = vsel %vm1543, %v7546, %v7547
      %v7549 = vrot.slane %v7259, 1
      %v7550 = vrot.slane %v7275, 1
      %v7551 = vsel %vm1543, %v7549, %v7550
      %v7552 = vrot.slane %v7260, 1
      %v7553 = vrot.slane %v7276, 1
      %v7554 = vsel %vm1543, %v7552, %v7553
      %v7555 = vrot.slane %v7261, 1
      %v7556 = vrot.slane %v7277, 1
      %v7557 = vsel %vm1543, %v7555, %v7556
      %v7558 = vrot.slane %v7262, 1
      %v7559 = vrot.slane %v7278, 1
      %v7560 = vsel %vm1543, %v7558, %v7559
      %v7561 = vrot.slane %v7263, 1
      %v7562 = vrot.slane %v7279, 1
      %v7563 = vsel %vm1543, %v7561, %v7562
      %v7564 = vrot.slane %v7264, 1
      %v7565 = vrot.slane %v7280, 1
      %v7566 = vsel %vm1543, %v7564, %v7565
      %v7567 = vrot.slane %v7265, 1
      %v7568 = vrot.slane %v7281, 1
      %v7569 = vsel %vm1543, %v7567, %v7568
      %v7570 = vrot.slane %v7266, 1
      %v7571 = vrot.slane %v7282, 1
      %v7572 = vsel %vm1543, %v7570, %v7571
      %7573 = vrot.lane.b32.xlu0 %v7527, 64
      %v7574 = vpop.permute.xlu0 %7573
      %7575 = vrot.lane.b32.xlu0 %v7530, 64
      %v7576 = vpop.permute.xlu0 %7575
      %7577 = vrot.lane.b32.xlu0 %v7533, 64
      %v7578 = vpop.permute.xlu0 %7577
      %7579 = vrot.lane.b32.xlu0 %v7536, 64
      %v7580 = vpop.permute.xlu0 %7579
      %7581 = vrot.lane.b32.xlu0 %v7539, 64
      %v7582 = vpop.permute.xlu0 %7581
      %7583 = vrot.lane.b32.xlu0 %v7542, 64
      %v7584 = vpop.permute.xlu0 %7583
      %7585 = vrot.lane.b32.xlu0 %v7545, 64
      %v7586 = vpop.permute.xlu0 %7585
      %7587 = vrot.lane.b32.xlu0 %v7548, 64
      %v7588 = vpop.permute.xlu0 %7587
      %7589 = vrot.lane.b32.xlu0 %v7551, 64
      %v7590 = vpop.permute.xlu0 %7589
      %7591 = vrot.lane.b32.xlu0 %v7554, 64
      %v7592 = vpop.permute.xlu0 %7591
      %7593 = vrot.lane.b32.xlu0 %v7557, 64
      %v7594 = vpop.permute.xlu0 %7593
      %7595 = vrot.lane.b32.xlu0 %v7560, 64
      %v7596 = vpop.permute.xlu0 %7595
      %7597 = vrot.lane.b32.xlu0 %v7563, 64
      %v7598 = vpop.permute.xlu0 %7597
      %7599 = vrot.lane.b32.xlu0 %v7566, 64
      %v7600 = vpop.permute.xlu0 %7599
      %7601 = vrot.lane.b32.xlu0 %v7569, 64
      %v7602 = vpop.permute.xlu0 %7601
      %7603 = vrot.lane.b32.xlu0 %v7572, 64
      %v7604 = vpop.permute.xlu0 %7603
      %7606 = vrot.lane.b32.xlu0 %v7252, 96
      %v7607 = vpop.permute.xlu0 %7606
      %7608 = vrot.lane.b32.xlu0 %v7253, 96
      %v7609 = vpop.permute.xlu0 %7608
      %7610 = vrot.lane.b32.xlu0 %v7254, 96
      %v7611 = vpop.permute.xlu0 %7610
      %7612 = vrot.lane.b32.xlu0 %v7255, 96
      %v7613 = vpop.permute.xlu0 %7612
      %7614 = vrot.lane.b32.xlu0 %v7256, 96
      %v7615 = vpop.permute.xlu0 %7614
      %7616 = vrot.lane.b32.xlu0 %v7257, 96
      %v7617 = vpop.permute.xlu0 %7616
      %7618 = vrot.lane.b32.xlu0 %v7258, 96
      %v7619 = vpop.permute.xlu0 %7618
      %7620 = vrot.lane.b32.xlu0 %v7259, 96
      %v7621 = vpop.permute.xlu0 %7620
      %7622 = vrot.lane.b32.xlu0 %v7260, 96
      %v7623 = vpop.permute.xlu0 %7622
      %7624 = vrot.lane.b32.xlu0 %v7261, 96
      %v7625 = vpop.permute.xlu0 %7624
      %7626 = vrot.lane.b32.xlu0 %v7262, 96
      %v7627 = vpop.permute.xlu0 %7626
      %7628 = vrot.lane.b32.xlu0 %v7263, 96
      %v7629 = vpop.permute.xlu0 %7628
      %7630 = vrot.lane.b32.xlu0 %v7264, 96
      %v7631 = vpop.permute.xlu0 %7630
      %7632 = vrot.lane.b32.xlu0 %v7265, 96
      %v7633 = vpop.permute.xlu0 %7632
      %7634 = vrot.lane.b32.xlu0 %v7266, 96
      %v7635 = vpop.permute.xlu0 %7634
      %7636 = vrot.lane.b32.xlu0 %v7267, 96
      %v7637 = vpop.permute.xlu0 %7636
      %v7639 = vshrl.u32 %v7267, 16
      %v7641 = vshll.u32 %v7267, 16
      %v7643 = vrot.slane %v7641, 1
      %v7644 = vor.u32 %v7639, %v7643
      %v7646 = vshll.u32 %v7283, 16
      %v7648 = vrot.slane %v7646, 1
      %v7649 = vsel %vm1414, %v7644, %v7648
      %v7651 = vrot.slane %v7267, 1
      %v7652 = vrot.slane %v7283, 1
      %v7653 = vsel %vm1543, %v7651, %v7652
      %7654 = vrot.lane.b32.xlu0 %v7530, 32
      %v7655 = vpop.permute.xlu0 %7654
      %7656 = vrot.lane.b32.xlu0 %v7533, 32
      %v7657 = vpop.permute.xlu0 %7656
      %7658 = vrot.lane.b32.xlu0 %v7536, 32
      %v7659 = vpop.permute.xlu0 %7658
      %7660 = vrot.lane.b32.xlu0 %v7539, 32
      %v7661 = vpop.permute.xlu0 %7660
      %7662 = vrot.lane.b32.xlu0 %v7542, 32
      %v7663 = vpop.permute.xlu0 %7662
      %7664 = vrot.lane.b32.xlu0 %v7545, 32
      %v7665 = vpop.permute.xlu0 %7664
      %7666 = vrot.lane.b32.xlu0 %v7548, 32
      %v7667 = vpop.permute.xlu0 %7666
      %7668 = vrot.lane.b32.xlu0 %v7551, 32
      %v7669 = vpop.permute.xlu0 %7668
      %7670 = vrot.lane.b32.xlu0 %v7554, 32
      %v7671 = vpop.permute.xlu0 %7670
      %7672 = vrot.lane.b32.xlu0 %v7557, 32
      %v7673 = vpop.permute.xlu0 %7672
      %7674 = vrot.lane.b32.xlu0 %v7560, 32
      %v7675 = vpop.permute.xlu0 %7674
      %7676 = vrot.lane.b32.xlu0 %v7563, 32
      %v7677 = vpop.permute.xlu0 %7676
      %7678 = vrot.lane.b32.xlu0 %v7566, 32
      %v7679 = vpop.permute.xlu0 %7678
      %7680 = vrot.lane.b32.xlu0 %v7569, 32
      %v7681 = vpop.permute.xlu0 %7680
      %7682 = vrot.lane.b32.xlu0 %v7572, 32
      %v7683 = vpop.permute.xlu0 %7682
      %7684 = vrot.lane.b32.xlu0 %v7653, 32
      %v7685 = vpop.permute.xlu0 %7684
      %7686 = vrot.lane.b32.xlu0 %v7253, 64
      %v7687 = vpop.permute.xlu0 %7686
      %7688 = vrot.lane.b32.xlu0 %v7254, 64
      %v7689 = vpop.permute.xlu0 %7688
      %7690 = vrot.lane.b32.xlu0 %v7255, 64
      %v7691 = vpop.permute.xlu0 %7690
      %7692 = vrot.lane.b32.xlu0 %v7256, 64
      %v7693 = vpop.permute.xlu0 %7692
      %7694 = vrot.lane.b32.xlu0 %v7257, 64
      %v7695 = vpop.permute.xlu0 %7694
      %7696 = vrot.lane.b32.xlu0 %v7258, 64
      %v7697 = vpop.permute.xlu0 %7696
      %7698 = vrot.lane.b32.xlu0 %v7259, 64
      %v7699 = vpop.permute.xlu0 %7698
      %7700 = vrot.lane.b32.xlu0 %v7260, 64
      %v7701 = vpop.permute.xlu0 %7700
      %7702 = vrot.lane.b32.xlu0 %v7261, 64
      %v7703 = vpop.permute.xlu0 %7702
      %7704 = vrot.lane.b32.xlu0 %v7262, 64
      %v7705 = vpop.permute.xlu0 %7704
      %7706 = vrot.lane.b32.xlu0 %v7263, 64
      %v7707 = vpop.permute.xlu0 %7706
      %7708 = vrot.lane.b32.xlu0 %v7264, 64
      %v7709 = vpop.permute.xlu0 %7708
      %7710 = vrot.lane.b32.xlu0 %v7265, 64
      %v7711 = vpop.permute.xlu0 %7710
      %7712 = vrot.lane.b32.xlu0 %v7266, 64
      %v7713 = vpop.permute.xlu0 %7712
      %7714 = vrot.lane.b32.xlu0 %v7267, 64
      %v7715 = vpop.permute.xlu0 %7714
      %7716 = vrot.lane.b32.xlu0 %v7308, 96
      %v7717 = vpop.permute.xlu0 %7716
      %7718 = vrot.lane.b32.xlu0 %v7320, 96
      %v7719 = vpop.permute.xlu0 %7718
      %7720 = vrot.lane.b32.xlu0 %v7332, 96
      %v7721 = vpop.permute.xlu0 %7720
      %7722 = vrot.lane.b32.xlu0 %v7344, 96
      %v7723 = vpop.permute.xlu0 %7722
      %7724 = vrot.lane.b32.xlu0 %v7356, 96
      %v7725 = vpop.permute.xlu0 %7724
      %7726 = vrot.lane.b32.xlu0 %v7368, 96
      %v7727 = vpop.permute.xlu0 %7726
      %7728 = vrot.lane.b32.xlu0 %v7380, 96
      %v7729 = vpop.permute.xlu0 %7728
      %7730 = vrot.lane.b32.xlu0 %v7392, 96
      %v7731 = vpop.permute.xlu0 %7730
      %7732 = vrot.lane.b32.xlu0 %v7404, 96
      %v7733 = vpop.permute.xlu0 %7732
      %7734 = vrot.lane.b32.xlu0 %v7416, 96
      %v7735 = vpop.permute.xlu0 %7734
      %7736 = vrot.lane.b32.xlu0 %v7428, 96
      %v7737 = vpop.permute.xlu0 %7736
      %7738 = vrot.lane.b32.xlu0 %v7440, 96
      %v7739 = vpop.permute.xlu0 %7738
      %7740 = vrot.lane.b32.xlu0 %v7452, 96
      %v7741 = vpop.permute.xlu0 %7740
      %7742 = vrot.lane.b32.xlu0 %v7464, 96
      %v7743 = vpop.permute.xlu0 %7742
      %7744 = vrot.lane.b32.xlu0 %v7649, 96
      %v7745 = vpop.permute.xlu0 %7744
      %7746 = vrot.lane.b32.xlu0 %v7284, 96
      %v7747 = vpop.permute.xlu0 %7746
      %v7749 = vsel %vm2476, 0, %v7466
      %v7751 = vsel %vm2476, %v7252, %v7468
      %v7753 = vsel %vm2476, %v7253, %v7470
      %v7755 = vsel %vm2476, %v7254, %v7472
      %v7757 = vsel %vm2476, %v7255, %v7474
      %v7759 = vsel %vm2476, %v7256, %v7476
      %v7761 = vsel %vm2476, %v7257, %v7478
      %v7763 = vsel %vm2476, %v7258, %v7480
      %v7765 = vsel %vm2476, %v7259, %v7482
      %v7767 = vsel %vm2476, %v7260, %v7484
      %v7769 = vsel %vm2476, %v7261, %v7486
      %v7771 = vsel %vm2476, %v7262, %v7488
      %v7773 = vsel %vm2476, %v7263, %v7490
      %v7775 = vsel %vm2476, %v7264, %v7492
      %v7777 = vsel %vm2476, %v7265, %v7494
      %v7779 = vsel %vm2476, %v7266, %v7496
      %v7781 = vsel %vm2494, %v7749, %v7574
      %v7783 = vsel %vm2494, %v7751, %v7576
      %v7785 = vsel %vm2494, %v7753, %v7578
      %v7787 = vsel %vm2494, %v7755, %v7580
      %v7789 = vsel %vm2494, %v7757, %v7582
      %v7791 = vsel %vm2494, %v7759, %v7584
      %v7793 = vsel %vm2494, %v7761, %v7586
      %v7795 = vsel %vm2494, %v7763, %v7588
      %v7797 = vsel %vm2494, %v7765, %v7590
      %v7799 = vsel %vm2494, %v7767, %v7592
      %v7801 = vsel %vm2494, %v7769, %v7594
      %v7803 = vsel %vm2494, %v7771, %v7596
      %v7805 = vsel %vm2494, %v7773, %v7598
      %v7807 = vsel %vm2494, %v7775, %v7600
      %v7809 = vsel %vm2494, %v7777, %v7602
      %v7811 = vsel %vm2494, %v7779, %v7604
      %v7813 = vsel %vm2512, %v7781, %v7607
      %v7816 = vsel %vm2512, %v7783, %v7609
      %v7819 = vsel %vm2512, %v7785, %v7611
      %v7822 = vsel %vm2512, %v7787, %v7613
      %v7825 = vsel %vm2512, %v7789, %v7615
      %v7828 = vsel %vm2512, %v7791, %v7617
      %v7831 = vsel %vm2512, %v7793, %v7619
      %v7834 = vsel %vm2512, %v7795, %v7621
      %v7837 = vsel %vm2512, %v7797, %v7623
      %v7840 = vsel %vm2512, %v7799, %v7625
      %v7843 = vsel %vm2512, %v7801, %v7627
      %v7846 = vsel %vm2512, %v7803, %v7629
      %v7849 = vsel %vm2512, %v7805, %v7631
      %v7852 = vsel %vm2512, %v7807, %v7633
      %v7855 = vsel %vm2512, %v7809, %v7635
      %v7858 = vsel %vm2512, %v7811, %v7637
      %v7862 = vsel %vm2476, %v7296, %v7655
      %v7865 = vsel %vm2476, %v7308, %v7657
      %v7868 = vsel %vm2476, %v7320, %v7659
      %v7871 = vsel %vm2476, %v7332, %v7661
      %v7874 = vsel %vm2476, %v7344, %v7663
      %v7877 = vsel %vm2476, %v7356, %v7665
      %v7880 = vsel %vm2476, %v7368, %v7667
      %v7883 = vsel %vm2476, %v7380, %v7669
      %v7886 = vsel %vm2476, %v7392, %v7671
      %v7889 = vsel %vm2476, %v7404, %v7673
      %v7892 = vsel %vm2476, %v7416, %v7675
      %v7895 = vsel %vm2476, %v7428, %v7677
      %v7898 = vsel %vm2476, %v7440, %v7679
      %v7901 = vsel %vm2476, %v7452, %v7681
      %v7904 = vsel %vm2476, %v7464, %v7683
      %v7907 = vsel %vm2476, %v7649, %v7685
      %v7909 = vsel %vm2494, %v7862, %v7687
      %v7911 = vsel %vm2494, %v7865, %v7689
      %v7913 = vsel %vm2494, %v7868, %v7691
      %v7915 = vsel %vm2494, %v7871, %v7693
      %v7917 = vsel %vm2494, %v7874, %v7695
      %v7919 = vsel %vm2494, %v7877, %v7697
      %v7921 = vsel %vm2494, %v7880, %v7699
      %v7923 = vsel %vm2494, %v7883, %v7701
      %v7925 = vsel %vm2494, %v7886, %v7703
      %v7927 = vsel %vm2494, %v7889, %v7705
      %v7929 = vsel %vm2494, %v7892, %v7707
      %v7931 = vsel %vm2494, %v7895, %v7709
      %v7933 = vsel %vm2494, %v7898, %v7711
      %v7935 = vsel %vm2494, %v7901, %v7713
      %v7937 = vsel %vm2494, %v7904, %v7715
      %v7938 = vsel %vm2494, %v7907, %v3668
      %v7940 = vsel %vm2512, %v7909, %v7717
      %v7943 = vsel %vm2512, %v7911, %v7719
      %v7946 = vsel %vm2512, %v7913, %v7721
      %v7949 = vsel %vm2512, %v7915, %v7723
      %v7952 = vsel %vm2512, %v7917, %v7725
      %v7955 = vsel %vm2512, %v7919, %v7727
      %v7958 = vsel %vm2512, %v7921, %v7729
      %v7961 = vsel %vm2512, %v7923, %v7731
      %v7964 = vsel %vm2512, %v7925, %v7733
      %v7967 = vsel %vm2512, %v7927, %v7735
      %v7970 = vsel %vm2512, %v7929, %v7737
      %v7973 = vsel %vm2512, %v7931, %v7739
      %v7976 = vsel %vm2512, %v7933, %v7741
      %v7979 = vsel %vm2512, %v7935, %v7743
      %v7982 = vsel %vm2512, %v7937, %v7745
      %v7985 = vsel %vm2512, %v7938, %v7747
      %v7987 = vld [vmem:[%s41] sm:$0xf]
      %v7988 = vld [vmem:[%s41 + $0x4] sm:$0xf]
      %v7989 = vld [vmem:[%s41 + $0x8] sm:$0xf]
      %v7990 = vld [vmem:[%s41 + $0xc] sm:$0xf]
      %v7991 = vld [vmem:[%s41 + $0x10] sm:$0xf]
      %v7992 = vld [vmem:[%s41 + $0x14] sm:$0xf]
      %v7993 = vld [vmem:[%s41 + $0x18] sm:$0xf]
      %v7994 = vld [vmem:[%s41 + $0x1c] sm:$0xf]
      %v7995 = vld [vmem:[%s41 + $0x20] sm:$0xf]
      %v7996 = vld [vmem:[%s41 + $0x24] sm:$0xf]
      %v7997 = vld [vmem:[%s41 + $0x28] sm:$0xf]
      %v7998 = vld [vmem:[%s41 + $0x2c] sm:$0xf]
      %v7999 = vld [vmem:[%s41 + $0x30] sm:$0xf]
      %v8000 = vld [vmem:[%s41 + $0x34] sm:$0xf]
      %v8001 = vld [vmem:[%s41 + $0x38] sm:$0xf]
      %v8002 = vld [vmem:[%s41 + $0x3c] sm:$0xf]
      %v8003 = vld [vmem:[%s41 + $0x40] sm:$0xf]
      %v8004 = vld [vmem:[%s41 + $0x44] sm:$0xf]
      %v8005 = vld [vmem:[%s41 + $0x48] sm:$0xf]
      %v8006 = vld [vmem:[%s41 + $0x4c] sm:$0xf]
      %v8007 = vld [vmem:[%s41 + $0x50] sm:$0xf]
      %v8008 = vld [vmem:[%s41 + $0x54] sm:$0xf]
      %v8009 = vld [vmem:[%s41 + $0x58] sm:$0xf]
      %v8010 = vld [vmem:[%s41 + $0x5c] sm:$0xf]
      %v8011 = vld [vmem:[%s41 + $0x60] sm:$0xf]
      %v8012 = vld [vmem:[%s41 + $0x64] sm:$0xf]
      %v8013 = vld [vmem:[%s41 + $0x68] sm:$0xf]
      %v8014 = vld [vmem:[%s41 + $0x6c] sm:$0xf]
      %v8015 = vld [vmem:[%s41 + $0x70] sm:$0xf]
      %v8016 = vld [vmem:[%s41 + $0x74] sm:$0xf]
      %v8017 = vld [vmem:[%s41 + $0x78] sm:$0xf]
      %v8018 = vld [vmem:[%s41 + $0x7c] sm:$0xf]
      %v8019 = vld [vmem:[%s41 + $0x80] sm:$0xf]
      %v8020 = vld [vmem:[%s41 + $0x84] sm:$0xf]
      %v8021 = vld [vmem:[%s41 + $0x88] sm:$0xf]
      %v8022 = vld [vmem:[%s41 + $0x8c] sm:$0xf]
      %8023 = vrot.lane.b32.xlu0 %v7284, 2
      %v8024 = vpop.permute.xlu0 %8023
      %8025 = vrot.lane.b32.xlu0 %v1619, 2
      %v8026 = vpop.permute.xlu0 %8025
      %8027 = vrot.lane.b32.xlu0 %v1631, 2
      %v8028 = vpop.permute.xlu0 %8027
      %8029 = vrot.lane.b32.xlu0 %v1643, 2
      %v8030 = vpop.permute.xlu0 %8029
      %8031 = vrot.lane.b32.xlu0 %v1655, 2
      %v8032 = vpop.permute.xlu0 %8031
      %8033 = vrot.lane.b32.xlu0 %v1667, 2
      %v8034 = vpop.permute.xlu0 %8033
      %8035 = vrot.lane.b32.xlu0 %v1679, 2
      %v8036 = vpop.permute.xlu0 %8035
      %8037 = vrot.lane.b32.xlu0 %v1691, 2
      %v8038 = vpop.permute.xlu0 %8037
      %8039 = vrot.lane.b32.xlu0 %v1703, 2
      %v8040 = vpop.permute.xlu0 %8039
      %8041 = vrot.lane.b32.xlu0 %v7527, 4
      %v8042 = vpop.permute.xlu0 %8041
      %8043 = vrot.lane.b32.xlu0 %v1730, 4
      %v8044 = vpop.permute.xlu0 %8043
      %8045 = vrot.lane.b32.xlu0 %v1733, 4
      %v8046 = vpop.permute.xlu0 %8045
      %8047 = vrot.lane.b32.xlu0 %v1736, 4
      %v8048 = vpop.permute.xlu0 %8047
      %8049 = vrot.lane.b32.xlu0 %v1739, 4
      %v8050 = vpop.permute.xlu0 %8049
      %8051 = vrot.lane.b32.xlu0 %v1742, 4
      %v8052 = vpop.permute.xlu0 %8051
      %8053 = vrot.lane.b32.xlu0 %v1745, 4
      %v8054 = vpop.permute.xlu0 %8053
      %8055 = vrot.lane.b32.xlu0 %v1748, 4
      %v8056 = vpop.permute.xlu0 %8055
      %8057 = vrot.lane.b32.xlu0 %v1751, 4
      %v8058 = vpop.permute.xlu0 %8057
      %8059 = vrot.lane.b32.xlu0 %v1300, 6
      %v8060 = vpop.permute.xlu0 %8059
      %8061 = vrot.lane.b32.xlu0 %v1301, 6
      %v8062 = vpop.permute.xlu0 %8061
      %8063 = vrot.lane.b32.xlu0 %v1302, 6
      %v8064 = vpop.permute.xlu0 %8063
      %8065 = vrot.lane.b32.xlu0 %v1303, 6
      %v8066 = vpop.permute.xlu0 %8065
      %8067 = vrot.lane.b32.xlu0 %v1304, 6
      %v8068 = vpop.permute.xlu0 %8067
      %8069 = vrot.lane.b32.xlu0 %v1305, 6
      %v8070 = vpop.permute.xlu0 %8069
      %8071 = vrot.lane.b32.xlu0 %v1306, 6
      %v8072 = vpop.permute.xlu0 %8071
      %8073 = vrot.lane.b32.xlu0 %v1412, 6
      %v8074 = vpop.permute.xlu0 %8073
      %8075 = vrot.lane.b32.xlu0 %v1438, 8
      %v8076 = vpop.permute.xlu0 %8075
      %8077 = vrot.lane.b32.xlu0 %v1450, 8
      %v8078 = vpop.permute.xlu0 %8077
      %8079 = vrot.lane.b32.xlu0 %v1462, 8
      %v8080 = vpop.permute.xlu0 %8079
      %8081 = vrot.lane.b32.xlu0 %v1474, 8
      %v8082 = vpop.permute.xlu0 %8081
      %8083 = vrot.lane.b32.xlu0 %v1486, 8
      %v8084 = vpop.permute.xlu0 %8083
      %8085 = vrot.lane.b32.xlu0 %v1498, 8
      %v8086 = vpop.permute.xlu0 %8085
      %8087 = vrot.lane.b32.xlu0 %v1510, 8
      %v8088 = vpop.permute.xlu0 %8087
      %8089 = vrot.lane.b32.xlu0 %v1796, 8
      %v8090 = vpop.permute.xlu0 %8089
      %8091 = vrot.lane.b32.xlu0 %v1549, 10
      %v8092 = vpop.permute.xlu0 %8091
      %8093 = vrot.lane.b32.xlu0 %v1552, 10
      %v8094 = vpop.permute.xlu0 %8093
      %8095 = vrot.lane.b32.xlu0 %v1555, 10
      %v8096 = vpop.permute.xlu0 %8095
      %8097 = vrot.lane.b32.xlu0 %v1558, 10
      %v8098 = vpop.permute.xlu0 %8097
      %8099 = vrot.lane.b32.xlu0 %v1561, 10
      %v8100 = vpop.permute.xlu0 %8099
      %8101 = vrot.lane.b32.xlu0 %v1564, 10
      %v8102 = vpop.permute.xlu0 %8101
      %8103 = vrot.lane.b32.xlu0 %v1567, 10
      %v8104 = vpop.permute.xlu0 %8103
      %8105 = vrot.lane.b32.xlu0 %v1816, 10
      %v8106 = vpop.permute.xlu0 %8105
      %8107 = vrot.lane.b32.xlu0 %v1388, 12
      %v8108 = vpop.permute.xlu0 %8107
      %8109 = vrot.lane.b32.xlu0 %v1389, 12
      %v8110 = vpop.permute.xlu0 %8109
      %8111 = vrot.lane.b32.xlu0 %v1390, 12
      %v8112 = vpop.permute.xlu0 %8111
      %8113 = vrot.lane.b32.xlu0 %v1391, 12
      %v8114 = vpop.permute.xlu0 %8113
      %8115 = vrot.lane.b32.xlu0 %v1392, 12
      %v8116 = vpop.permute.xlu0 %8115
      %8117 = vrot.lane.b32.xlu0 %v1393, 12
      %v8118 = vpop.permute.xlu0 %8117
      %8119 = vrot.lane.b32.xlu0 %v1394, 12
      %v8120 = vpop.permute.xlu0 %8119
      %8121 = vrot.lane.b32.xlu0 0, 12
      %v8122 = vpop.permute.xlu0 %8121
      %8123 = vrot.lane.b32.xlu0 %v1631, 14
      %v8124 = vpop.permute.xlu0 %8123
      %8125 = vrot.lane.b32.xlu0 %v1643, 14
      %v8126 = vpop.permute.xlu0 %8125
      %8127 = vrot.lane.b32.xlu0 %v1655, 14
      %v8128 = vpop.permute.xlu0 %8127
      %8129 = vrot.lane.b32.xlu0 %v1667, 14
      %v8130 = vpop.permute.xlu0 %8129
      %8131 = vrot.lane.b32.xlu0 %v1679, 14
      %v8132 = vpop.permute.xlu0 %8131
      %8133 = vrot.lane.b32.xlu0 %v1691, 14
      %v8134 = vpop.permute.xlu0 %8133
      %8135 = vrot.lane.b32.xlu0 %v1703, 14
      %v8136 = vpop.permute.xlu0 %8135
      %8137 = vrot.lane.b32.xlu0 %v7284, 14
      %v8138 = vpop.permute.xlu0 %8137
      %8139 = vrot.lane.b32.xlu0 %v1733, 16
      %v8140 = vpop.permute.xlu0 %8139
      %8141 = vrot.lane.b32.xlu0 %v1736, 16
      %v8142 = vpop.permute.xlu0 %8141
      %8143 = vrot.lane.b32.xlu0 %v1739, 16
      %v8144 = vpop.permute.xlu0 %8143
      %8145 = vrot.lane.b32.xlu0 %v1742, 16
      %v8146 = vpop.permute.xlu0 %8145
      %8147 = vrot.lane.b32.xlu0 %v1745, 16
      %v8148 = vpop.permute.xlu0 %8147
      %8149 = vrot.lane.b32.xlu0 %v1748, 16
      %v8150 = vpop.permute.xlu0 %8149
      %8151 = vrot.lane.b32.xlu0 %v1751, 16
      %v8152 = vpop.permute.xlu0 %8151
      %8153 = vrot.lane.b32.xlu0 %v7527, 16
      %v8154 = vpop.permute.xlu0 %8153
      %v8156 = vsel %vm1833, 0, %v8024
      %v8158 = vsel %vm1833, %v1387, %v8026
      %v8160 = vsel %vm1833, %v1388, %v8028
      %v8162 = vsel %vm1833, %v1389, %v8030
      %v8164 = vsel %vm1833, %v1390, %v8032
      %v8166 = vsel %vm1833, %v1391, %v8034
      %v8168 = vsel %vm1833, %v1392, %v8036
      %v8170 = vsel %vm1833, %v1393, %v8038
      %v8172 = vsel %vm1833, %v1394, %v8040
      %v8174 = vsel %vm1850, %v8156, %v8042
      %v8176 = vsel %vm1850, %v8158, %v8044
      %v8178 = vsel %vm1850, %v8160, %v8046
      %v8180 = vsel %vm1850, %v8162, %v8048
      %v8182 = vsel %vm1850, %v8164, %v8050
      %v8184 = vsel %vm1850, %v8166, %v8052
      %v8186 = vsel %vm1850, %v8168, %v8054
      %v8188 = vsel %vm1850, %v8170, %v8056
      %v8190 = vsel %vm1850, %v8172, %v8058
      %v8191 = vsel %vm1867, %v8174, %v1593
      %v8193 = vsel %vm1867, %v8176, %v8060
      %v8195 = vsel %vm1867, %v8178, %v8062
      %v8197 = vsel %vm1867, %v8180, %v8064
      %v8199 = vsel %vm1867, %v8182, %v8066
      %v8201 = vsel %vm1867, %v8184, %v8068
      %v8203 = vsel %vm1867, %v8186, %v8070
      %v8205 = vsel %vm1867, %v8188, %v8072
      %v8207 = vsel %vm1867, %v8190, %v8074
      %v8208 = vsel %vm1884, %v8191, %v1705
      %v8210 = vsel %vm1884, %v8193, %v8076
      %v8212 = vsel %vm1884, %v8195, %v8078
      %v8214 = vsel %vm1884, %v8197, %v8080
      %v8216 = vsel %vm1884, %v8199, %v8082
      %v8218 = vsel %vm1884, %v8201, %v8084
      %v8220 = vsel %vm1884, %v8203, %v8086
      %v8222 = vsel %vm1884, %v8205, %v8088
      %v8224 = vsel %vm1884, %v8207, %v8090
      %v8225 = vsel %vm1901, %v8208, %v1753
      %v8227 = vsel %vm1901, %v8210, %v8092
      %v8229 = vsel %vm1901, %v8212, %v8094
      %v8231 = vsel %vm1901, %v8214, %v8096
      %v8233 = vsel %vm1901, %v8216, %v8098
      %v8235 = vsel %vm1901, %v8218, %v8100
      %v8237 = vsel %vm1901, %v8220, %v8102
      %v8239 = vsel %vm1901, %v8222, %v8104
      %v8241 = vsel %vm1901, %v8224, %v8106
      %v8242 = vsel %vm1918, %v8225, %v1770
      %v8244 = vsel %vm1918, %v8227, %v8108
      %v8246 = vsel %vm1918, %v8229, %v8110
      %v8248 = vsel %vm1918, %v8231, %v8112
      %v8250 = vsel %vm1918, %v8233, %v8114
      %v8252 = vsel %vm1918, %v8235, %v8116
      %v8254 = vsel %vm1918, %v8237, %v8118
      %v8256 = vsel %vm1918, %v8239, %v8120
      %v8258 = vsel %vm1918, %v8241, %v8122
      %v8259 = vsel %vm1935, %v8242, %v1798
      %v8261 = vsel %vm1935, %v8244, %v8124
      %v8263 = vsel %vm1935, %v8246, %v8126
      %v8265 = vsel %vm1935, %v8248, %v8128
      %v8267 = vsel %vm1935, %v8250, %v8130
      %v8269 = vsel %vm1935, %v8252, %v8132
      %v8271 = vsel %vm1935, %v8254, %v8134
      %v8273 = vsel %vm1935, %v8256, %v8136
      %v8275 = vsel %vm1935, %v8258, %v8138
      %v8276 = vsel %vm1952, %v8259, %v1818
      %v8278 = vsel %vm1952, %v8261, %v8140
      %v8280 = vsel %vm1952, %v8263, %v8142
      %v8282 = vsel %vm1952, %v8265, %v8144
      %v8284 = vsel %vm1952, %v8267, %v8146
      %v8286 = vsel %vm1952, %v8269, %v8148
      %v8288 = vsel %vm1952, %v8271, %v8150
      %v8290 = vsel %vm1952, %v8273, %v8152
      %v8292 = vsel %vm1952, %v8275, %v8154
      %v8293 = vld [vmem:[%s43] sm:$0xf]
      %v8294 = vld [vmem:[%s43 + $0x4] sm:$0xf]
      %v8295 = vld [vmem:[%s43 + $0x8] sm:$0x1]
      %v8299 = vunpack.c.l.b16 %v8293
      %v8300 = vunpack.c.l.b16 %v8294
      %v8301 = vunpack.c.l.b16 %v8295
      %v8302 = vpack.c.b16 %v8300, %v8299
      %v8303 = vpack.c.b16 %v8301, %v8301
      %v8305 = vsel %vm1988, %v8276, 0
      %v8307 = vsel %vm1988, %v8278, 0
      %v8309 = vsel %vm1988, %v8280, 0
      %v8311 = vsel %vm1988, %v8282, 0
      %v8313 = vsel %vm1988, %v8284, 0
      %v8315 = vsel %vm1988, %v8286, 0
      %v8317 = vsel %vm1988, %v8288, 0
      %v8319 = vsel %vm1988, %v8290, 0
      %v8321 = vsel %vm1988, %v8292, 0
      %v8324 = vsel %vm2005, %v8303, 0
      %8326 = vmatprep.subr.bf16.mxu0 0
      %8327 = vmatpush1.bf16.msra.mxu0 0
      %8328 = vmatprep.subr.bf16.mxu0 0
      %8329 = vmatpush1.bf16.msra.mxu0 0
      %8330 = vmatprep.subr.bf16.mxu0 0
      %8331 = vmatpush1.bf16.msra.mxu0 0
      %8332 = vmatprep.subr.bf16.mxu0 0
      %8333 = vmatpush1.bf16.msra.mxu0 0
      %8334 = vmatprep.subr.bf16.mxu0 0
      %8335 = vmatpush1.bf16.msra.mxu0 0
      %8336 = vmatprep.subr.bf16.mxu0 0
      %8337 = vmatpush1.bf16.msra.mxu0 0
      %8338 = vmatprep.subr.bf16.mxu0 0
      %8339 = vmatpush1.bf16.msra.mxu0 %v8324
      %8340 = vmatprep.subr.bf16.mxu0 0
      %8341 = vmatpush1.bf16.msra.mxu0 %v8302
      %8342 = vmatprep.subr.bf16.mxu0 0
      %8343 = vmatpush2.bf16.msra.mxu0 0
      %8344 = vmatprep.subr.bf16.mxu0 0
      %8345 = vmatpush2.bf16.msra.mxu0 0
      %8346 = vmatprep.subr.bf16.mxu0 0
      %8347 = vmatpush2.bf16.msra.mxu0 0
      %8348 = vmatprep.subr.bf16.mxu0 0
      %8349 = vmatpush2.bf16.msra.mxu0 0
      %8350 = vmatprep.subr.bf16.mxu0 0
      %8351 = vmatpush2.bf16.msra.mxu0 0
      %8352 = vmatprep.subr.bf16.mxu0 0
      %8353 = vmatpush2.bf16.msra.mxu0 0
      %8354 = vmatprep.subr.bf16.mxu0 0
      %8355 = vmatpush2.bf16.msra.mxu0 0
      %8356 = vmatprep.subr.bf16.mxu0 0
      %8357 = vmatpush2.bf16.msra.mxu0 0
      %8358 = vmatprep.mubr.bf16.mxu0 0
      %8359 = vmatmul.mubr.bf16.gmra.mxu0 %v8305
      %v8360 = vpop.f32.mrf.mxu0
      %v8361 = vadd.f32 0.0, %v8360
      %v8362 = vpop.f32.mrf.mxu0
      %v8363 = vpop.f32.mrf.mxu0
      %v8364 = vadd.f32 0.0, %v8363
      %v8365 = vpop.f32.mrf.mxu0
      %8366 = vmatprep.mubr.bf16.mxu0 0
      %8367 = vmatmul.mubr.bf16.gmra.mxu0 %v8307
      %v8368 = vpop.f32.mrf.mxu0
      %v8369 = vadd.f32 0.0, %v8368
      %v8370 = vpop.f32.mrf.mxu0
      %v8371 = vpop.f32.mrf.mxu0
      %v8372 = vadd.f32 0.0, %v8371
      %v8373 = vpop.f32.mrf.mxu0
      %8374 = vmatprep.mubr.bf16.mxu0 0
      %8375 = vmatmul.mubr.bf16.gmra.mxu0 %v1991
      %v8376 = vpop.f32.mrf.mxu0
      %v8377 = vadd.f32 0.0, %v8376
      %v8378 = vpop.f32.mrf.mxu0
      %v8379 = vpop.f32.mrf.mxu0
      %v8380 = vadd.f32 0.0, %v8379
      %v8381 = vpop.f32.mrf.mxu0
      %8382 = vmatprep.mubr.bf16.mxu0 0
      %8383 = vmatmul.mubr.bf16.gmra.mxu0 %v8309
      %v8384 = vpop.f32.mrf.mxu0
      %v8385 = vadd.f32 0.0, %v8384
      %v8386 = vpop.f32.mrf.mxu0
      %v8387 = vpop.f32.mrf.mxu0
      %v8388 = vadd.f32 0.0, %v8387
      %v8389 = vpop.f32.mrf.mxu0
      %8390 = vmatprep.mubr.bf16.mxu0 0
      %8391 = vmatmul.mubr.bf16.gmra.mxu0 %v1993
      %v8392 = vpop.f32.mrf.mxu0
      %v8393 = vadd.f32 0.0, %v8392
      %v8394 = vpop.f32.mrf.mxu0
      %v8395 = vpop.f32.mrf.mxu0
      %v8396 = vadd.f32 0.0, %v8395
      %v8397 = vpop.f32.mrf.mxu0
      %8398 = vmatprep.mubr.bf16.mxu0 0
      %8399 = vmatmul.mubr.bf16.gmra.mxu0 %v8311
      %v8400 = vpop.f32.mrf.mxu0
      %v8401 = vadd.f32 0.0, %v8400
      %v8402 = vpop.f32.mrf.mxu0
      %v8403 = vpop.f32.mrf.mxu0
      %v8404 = vadd.f32 0.0, %v8403
      %v8405 = vpop.f32.mrf.mxu0
      %8406 = vmatprep.mubr.bf16.mxu0 0
      %8407 = vmatmul.mubr.bf16.gmra.mxu0 %v1995
      %v8408 = vpop.f32.mrf.mxu0
      %v8409 = vadd.f32 0.0, %v8408
      %v8410 = vpop.f32.mrf.mxu0
      %v8411 = vpop.f32.mrf.mxu0
      %v8412 = vadd.f32 0.0, %v8411
      %v8413 = vpop.f32.mrf.mxu0
      %8414 = vmatprep.mubr.bf16.mxu0 0
      %8415 = vmatmul.mubr.bf16.gmra.mxu0 %v8313
      %v8416 = vpop.f32.mrf.mxu0
      %v8417 = vadd.f32 0.0, %v8416
      %v8418 = vpop.f32.mrf.mxu0
      %v8419 = vpop.f32.mrf.mxu0
      %v8420 = vadd.f32 0.0, %v8419
      %v8421 = vpop.f32.mrf.mxu0
      %8422 = vmatprep.mubr.bf16.mxu0 0
      %8423 = vmatmul.mubr.bf16.gmra.mxu0 %v1997
      %v8424 = vpop.f32.mrf.mxu0
      %v8425 = vadd.f32 0.0, %v8424
      %v8426 = vpop.f32.mrf.mxu0
      %v8427 = vpop.f32.mrf.mxu0
      %v8428 = vadd.f32 0.0, %v8427
      %v8429 = vpop.f32.mrf.mxu0
      %8430 = vmatprep.mubr.bf16.mxu0 0
      %8431 = vmatmul.mubr.bf16.gmra.mxu0 %v8315
      %v8432 = vpop.f32.mrf.mxu0
      %v8433 = vadd.f32 0.0, %v8432
      %v8434 = vpop.f32.mrf.mxu0
      %v8435 = vpop.f32.mrf.mxu0
      %v8436 = vadd.f32 0.0, %v8435
      %v8437 = vpop.f32.mrf.mxu0
      %8438 = vmatprep.mubr.bf16.mxu0 0
      %8439 = vmatmul.mubr.bf16.gmra.mxu0 %v1999
      %v8440 = vpop.f32.mrf.mxu0
      %v8441 = vadd.f32 0.0, %v8440
      %v8442 = vpop.f32.mrf.mxu0
      %v8443 = vpop.f32.mrf.mxu0
      %v8444 = vadd.f32 0.0, %v8443
      %v8445 = vpop.f32.mrf.mxu0
      %8446 = vmatprep.mubr.bf16.mxu0 0
      %8447 = vmatmul.mubr.bf16.gmra.mxu0 %v8317
      %v8448 = vpop.f32.mrf.mxu0
      %v8449 = vadd.f32 0.0, %v8448
      %v8450 = vpop.f32.mrf.mxu0
      %v8451 = vpop.f32.mrf.mxu0
      %v8452 = vadd.f32 0.0, %v8451
      %v8453 = vpop.f32.mrf.mxu0
      %8454 = vmatprep.mubr.bf16.mxu0 0
      %8455 = vmatmul.mubr.bf16.gmra.mxu0 %v2001
      %v8456 = vpop.f32.mrf.mxu0
      %v8457 = vadd.f32 0.0, %v8456
      %v8458 = vpop.f32.mrf.mxu0
      %v8459 = vpop.f32.mrf.mxu0
      %v8460 = vadd.f32 0.0, %v8459
      %v8461 = vpop.f32.mrf.mxu0
      %8462 = vmatprep.mubr.bf16.mxu0 0
      %8463 = vmatmul.mubr.bf16.gmra.mxu0 %v8319
      %v8464 = vpop.f32.mrf.mxu0
      %v8465 = vadd.f32 0.0, %v8464
      %v8466 = vpop.f32.mrf.mxu0
      %v8467 = vpop.f32.mrf.mxu0
      %v8468 = vadd.f32 0.0, %v8467
      %v8469 = vpop.f32.mrf.mxu0
      %8470 = vmatprep.mubr.bf16.mxu0 0
      %8471 = vmatmul.mubr.bf16.gmra.mxu0 %v2003
      %v8472 = vpop.f32.mrf.mxu0
      %v8473 = vadd.f32 0.0, %v8472
      %v8474 = vpop.f32.mrf.mxu0
      %v8475 = vpop.f32.mrf.mxu0
      %v8476 = vadd.f32 0.0, %v8475
      %v8477 = vpop.f32.mrf.mxu0
      %8478 = vmatprep.mubr.bf16.mxu0 0
      %8479 = vmatmul.mubr.bf16.gmra.mxu0 %v8321
      %v8480 = vpop.f32.mrf.mxu0
      %v8481 = vadd.f32 0.0, %v8480
      %v8482 = vpop.f32.mrf.mxu0
      %v8483 = vpop.f32.mrf.mxu0
      %v8484 = vadd.f32 0.0, %v8483
      %v8485 = vpop.f32.mrf.mxu0
      %8486 = vdwg.mxu0
      %v8523 = vunpack.c.l.b16 %v7987
      %v8524 = vunpack.c.l.b16 %v7988
      %v8525 = vunpack.c.l.b16 %v7989
      %v8526 = vunpack.c.l.b16 %v7990
      %v8527 = vunpack.c.l.b16 %v7991
      %v8528 = vunpack.c.l.b16 %v7992
      %v8529 = vunpack.c.l.b16 %v7993
      %v8530 = vunpack.c.l.b16 %v7994
      %v8531 = vunpack.c.l.b16 %v7995
      %v8532 = vunpack.c.l.b16 %v7996
      %v8533 = vunpack.c.l.b16 %v7997
      %v8534 = vunpack.c.l.b16 %v7998
      %v8535 = vunpack.c.l.b16 %v7999
      %v8536 = vunpack.c.l.b16 %v8000
      %v8537 = vunpack.c.l.b16 %v8001
      %v8538 = vunpack.c.l.b16 %v8002
      %v8539 = vunpack.c.l.b16 %v8003
      %v8540 = vunpack.c.l.b16 %v8004
      %v8541 = vunpack.c.l.b16 %v8005
      %v8542 = vunpack.c.l.b16 %v8006
      %v8543 = vunpack.c.l.b16 %v8007
      %v8544 = vunpack.c.l.b16 %v8008
      %v8545 = vunpack.c.l.b16 %v8009
      %v8546 = vunpack.c.l.b16 %v8010
      %v8547 = vunpack.c.l.b16 %v8011
      %v8548 = vunpack.c.l.b16 %v8012
      %v8549 = vunpack.c.l.b16 %v8013
      %v8550 = vunpack.c.l.b16 %v8014
      %v8551 = vunpack.c.l.b16 %v8015
      %v8552 = vunpack.c.l.b16 %v8016
      %v8553 = vunpack.c.l.b16 %v8017
      %v8554 = vunpack.c.l.b16 %v8018
      %v8555 = vunpack.c.l.b16 %v8019
      %v8556 = vunpack.c.l.b16 %v8020
      %v8557 = vunpack.c.l.b16 %v8021
      %v8558 = vunpack.c.l.b16 %v8022
      %v8559 = vpack.c.b16 %v8524, %v8523
      %v8560 = vpack.c.b16 %v8526, %v8525
      %v8561 = vpack.c.b16 %v8528, %v8527
      %v8562 = vpack.c.b16 %v8530, %v8529
      %v8563 = vpack.c.b16 %v8532, %v8531
      %v8564 = vpack.c.b16 %v8534, %v8533
      %v8565 = vpack.c.b16 %v8536, %v8535
      %v8566 = vpack.c.b16 %v8538, %v8537
      %v8567 = vpack.c.b16 %v8540, %v8539
      %v8568 = vpack.c.b16 %v8542, %v8541
      %v8569 = vpack.c.b16 %v8544, %v8543
      %v8570 = vpack.c.b16 %v8546, %v8545
      %v8571 = vpack.c.b16 %v8548, %v8547
      %v8572 = vpack.c.b16 %v8550, %v8549
      %v8573 = vpack.c.b16 %v8552, %v8551
      %v8574 = vpack.c.b16 %v8554, %v8553
      %v8575 = vpack.c.b16 %v8556, %v8555
      %v8576 = vpack.c.b16 %v8558, %v8557
      %v8596 = vsel %vm2476, %v7533, 0
      %v8599 = vsel %vm2476, %v7536, 0
      %v8602 = vsel %vm2476, %v7539, 0
      %v8605 = vsel %vm2476, %v7542, 0
      %v8608 = vsel %vm2476, %v7545, 0
      %v8611 = vsel %vm2476, %v7548, 0
      %v8614 = vsel %vm2476, %v7551, 0
      %v8617 = vsel %vm2476, %v7554, 0
      %v8620 = vsel %vm2476, %v7557, 0
      %v8623 = vsel %vm2476, %v7560, 0
      %v8626 = vsel %vm2476, %v7563, 0
      %v8629 = vsel %vm2476, %v7566, 0
      %v8632 = vsel %vm2476, %v7569, 0
      %v8635 = vsel %vm2476, %v7572, 0
      %v8638 = vsel %vm2476, %v7653, 0
      %v8641 = vsel %vm2476, %v7527, 0
      %8643 = vmatprep.subr.bf16.mxu0 0
      %8644 = vmatpush1.bf16.msra.mxu0 %v8566
      %8645 = vmatprep.subr.bf16.mxu0 0
      %8646 = vmatpush1.bf16.msra.mxu0 %v8565
      %8647 = vmatprep.subr.bf16.mxu0 0
      %8648 = vmatpush1.bf16.msra.mxu0 %v8564
      %8649 = vmatprep.subr.bf16.mxu0 0
      %8650 = vmatpush1.bf16.msra.mxu0 %v8563
      %8651 = vmatprep.subr.bf16.mxu0 0
      %8652 = vmatpush1.bf16.msra.mxu0 %v8562
      %8653 = vmatprep.subr.bf16.mxu0 0
      %8654 = vmatpush1.bf16.msra.mxu0 %v8561
      %8655 = vmatprep.subr.bf16.mxu0 0
      %8656 = vmatpush1.bf16.msra.mxu0 %v8560
      %8657 = vmatprep.subr.bf16.mxu0 0
      %8658 = vmatpush1.bf16.msra.mxu0 %v8559
      %8659 = vmatprep.subr.bf16.mxu0 0
      %8660 = vmatpush2.bf16.msra.mxu0 %v8574
      %8661 = vmatprep.subr.bf16.mxu0 0
      %8662 = vmatpush2.bf16.msra.mxu0 %v8573
      %8663 = vmatprep.subr.bf16.mxu0 0
      %8664 = vmatpush2.bf16.msra.mxu0 %v8572
      %8665 = vmatprep.subr.bf16.mxu0 0
      %8666 = vmatpush2.bf16.msra.mxu0 %v8571
      %8667 = vmatprep.subr.bf16.mxu0 0
      %8668 = vmatpush2.bf16.msra.mxu0 %v8570
      %8669 = vmatprep.subr.bf16.mxu0 0
      %8670 = vmatpush2.bf16.msra.mxu0 %v8569
      %8671 = vmatprep.subr.bf16.mxu0 0
      %8672 = vmatpush2.bf16.msra.mxu0 %v8568
      %8673 = vmatprep.subr.bf16.mxu0 0
      %8674 = vmatpush2.bf16.msra.mxu0 %v8567
      %8675 = vmatprep.mubr.bf16.mxu0 %v7940
      %8676 = vmatmul.mubr.bf16.gmra.mxu0 %v7813
      %v8677 = vpop.f32.mrf.mxu0
      %v8678 = vadd.f32 %v8361, %v8677
      %v8679 = vpop.f32.mrf.mxu0
      %v8680 = vpop.f32.mrf.mxu0
      %v8681 = vadd.f32 %v8364, %v8680
      %v8682 = vpop.f32.mrf.mxu0
      %8683 = vmatprep.mubr.bf16.mxu0 %v7943
      %8684 = vmatmul.mubr.bf16.gmra.mxu0 %v7816
      %v8685 = vpop.f32.mrf.mxu0
      %v8686 = vadd.f32 %v8369, %v8685
      %v8687 = vpop.f32.mrf.mxu0
      %v8688 = vpop.f32.mrf.mxu0
      %v8689 = vadd.f32 %v8372, %v8688
      %v8690 = vpop.f32.mrf.mxu0
      %8691 = vmatprep.mubr.bf16.mxu0 %v7946
      %8692 = vmatmul.mubr.bf16.gmra.mxu0 %v7819
      %v8693 = vpop.f32.mrf.mxu0
      %v8694 = vadd.f32 %v8377, %v8693
      %v8695 = vpop.f32.mrf.mxu0
      %v8696 = vpop.f32.mrf.mxu0
      %v8697 = vadd.f32 %v8380, %v8696
      %v8698 = vpop.f32.mrf.mxu0
      %8699 = vmatprep.mubr.bf16.mxu0 %v7949
      %8700 = vmatmul.mubr.bf16.gmra.mxu0 %v7822
      %v8701 = vpop.f32.mrf.mxu0
      %v8702 = vadd.f32 %v8385, %v8701
      %v8703 = vpop.f32.mrf.mxu0
      %v8704 = vpop.f32.mrf.mxu0
      %v8705 = vadd.f32 %v8388, %v8704
      %v8706 = vpop.f32.mrf.mxu0
      %8707 = vmatprep.mubr.bf16.mxu0 %v7952
      %8708 = vmatmul.mubr.bf16.gmra.mxu0 %v7825
      %v8709 = vpop.f32.mrf.mxu0
      %v8710 = vadd.f32 %v8393, %v8709
      %v8711 = vpop.f32.mrf.mxu0
      %v8712 = vpop.f32.mrf.mxu0
      %v8713 = vadd.f32 %v8396, %v8712
      %v8714 = vpop.f32.mrf.mxu0
      %8715 = vmatprep.mubr.bf16.mxu0 %v7955
      %8716 = vmatmul.mubr.bf16.gmra.mxu0 %v7828
      %v8717 = vpop.f32.mrf.mxu0
      %v8718 = vadd.f32 %v8401, %v8717
      %v8719 = vpop.f32.mrf.mxu0
      %v8720 = vpop.f32.mrf.mxu0
      %v8721 = vadd.f32 %v8404, %v8720
      %v8722 = vpop.f32.mrf.mxu0
      %8723 = vmatprep.mubr.bf16.mxu0 %v7958
      %8724 = vmatmul.mubr.bf16.gmra.mxu0 %v7831
      %v8725 = vpop.f32.mrf.mxu0
      %v8726 = vadd.f32 %v8409, %v8725
      %v8727 = vpop.f32.mrf.mxu0
      %v8728 = vpop.f32.mrf.mxu0
      %v8729 = vadd.f32 %v8412, %v8728
      %v8730 = vpop.f32.mrf.mxu0
      %8731 = vmatprep.mubr.bf16.mxu0 %v7961
      %8732 = vmatmul.mubr.bf16.gmra.mxu0 %v7834
      %v8733 = vpop.f32.mrf.mxu0
      %v8734 = vadd.f32 %v8417, %v8733
      %v8735 = vpop.f32.mrf.mxu0
      %v8736 = vpop.f32.mrf.mxu0
      %v8737 = vadd.f32 %v8420, %v8736
      %v8738 = vpop.f32.mrf.mxu0
      %8739 = vmatprep.mubr.bf16.mxu0 %v7964
      %8740 = vmatmul.mubr.bf16.gmra.mxu0 %v7837
      %v8741 = vpop.f32.mrf.mxu0
      %v8742 = vadd.f32 %v8425, %v8741
      %v8743 = vpop.f32.mrf.mxu0
      %v8744 = vpop.f32.mrf.mxu0
      %v8745 = vadd.f32 %v8428, %v8744
      %v8746 = vpop.f32.mrf.mxu0
      %8747 = vmatprep.mubr.bf16.mxu0 %v7967
      %8748 = vmatmul.mubr.bf16.gmra.mxu0 %v7840
      %v8749 = vpop.f32.mrf.mxu0
      %v8750 = vadd.f32 %v8433, %v8749
      %v8751 = vpop.f32.mrf.mxu0
      %v8752 = vpop.f32.mrf.mxu0
      %v8753 = vadd.f32 %v8436, %v8752
      %v8754 = vpop.f32.mrf.mxu0
      %8755 = vmatprep.mubr.bf16.mxu0 %v7970
      %8756 = vmatmul.mubr.bf16.gmra.mxu0 %v7843
      %v8757 = vpop.f32.mrf.mxu0
      %v8758 = vadd.f32 %v8441, %v8757
      %v8759 = vpop.f32.mrf.mxu0
      %v8760 = vpop.f32.mrf.mxu0
      %v8761 = vadd.f32 %v8444, %v8760
      %v8762 = vpop.f32.mrf.mxu0
      %8763 = vmatprep.mubr.bf16.mxu0 %v7973
      %8764 = vmatmul.mubr.bf16.gmra.mxu0 %v7846
      %v8765 = vpop.f32.mrf.mxu0
      %v8766 = vadd.f32 %v8449, %v8765
      %v8767 = vpop.f32.mrf.mxu0
      %v8768 = vpop.f32.mrf.mxu0
      %v8769 = vadd.f32 %v8452, %v8768
      %v8770 = vpop.f32.mrf.mxu0
      %8771 = vmatprep.mubr.bf16.mxu0 %v7976
      %8772 = vmatmul.mubr.bf16.gmra.mxu0 %v7849
      %v8773 = vpop.f32.mrf.mxu0
      %v8774 = vadd.f32 %v8457, %v8773
      %v8775 = vpop.f32.mrf.mxu0
      %v8776 = vpop.f32.mrf.mxu0
      %v8777 = vadd.f32 %v8460, %v8776
      %v8778 = vpop.f32.mrf.mxu0
      %8779 = vmatprep.mubr.bf16.mxu0 %v7979
      %8780 = vmatmul.mubr.bf16.gmra.mxu0 %v7852
      %v8781 = vpop.f32.mrf.mxu0
      %v8782 = vadd.f32 %v8465, %v8781
      %v8783 = vpop.f32.mrf.mxu0
      %v8784 = vpop.f32.mrf.mxu0
      %v8785 = vadd.f32 %v8468, %v8784
      %v8786 = vpop.f32.mrf.mxu0
      %8787 = vmatprep.mubr.bf16.mxu0 %v7982
      %8788 = vmatmul.mubr.bf16.gmra.mxu0 %v7855
      %v8789 = vpop.f32.mrf.mxu0
      %v8790 = vadd.f32 %v8473, %v8789
      %v8791 = vpop.f32.mrf.mxu0
      %v8792 = vpop.f32.mrf.mxu0
      %v8793 = vadd.f32 %v8476, %v8792
      %v8794 = vpop.f32.mrf.mxu0
      %8795 = vmatprep.mubr.bf16.mxu0 %v7985
      %8796 = vmatmul.mubr.bf16.gmra.mxu0 %v7858
      %v8797 = vpop.f32.mrf.mxu0
      %v8798 = vadd.f32 %v8481, %v8797
      %v8799 = vpop.f32.mrf.mxu0
      %v8800 = vpop.f32.mrf.mxu0
      %v8801 = vadd.f32 %v8484, %v8800
      %v8802 = vpop.f32.mrf.mxu0
      %8803 = vdwg.mxu0
      %8804 = vmatprep.subr.bf16.mxu0 0
      %8805 = vmatpush1.bf16.msra.mxu0 0
      %8806 = vmatprep.subr.bf16.mxu0 0
      %8807 = vmatpush1.bf16.msra.mxu0 0
      %8808 = vmatprep.subr.bf16.mxu0 0
      %8809 = vmatpush1.bf16.msra.mxu0 0
      %8810 = vmatprep.subr.bf16.mxu0 0
      %8811 = vmatpush1.bf16.msra.mxu0 0
      %8812 = vmatprep.subr.bf16.mxu0 0
      %8813 = vmatpush1.bf16.msra.mxu0 0
      %8814 = vmatprep.subr.bf16.mxu0 0
      %8815 = vmatpush1.bf16.msra.mxu0 0
      %8816 = vmatprep.subr.bf16.mxu0 0
      %8817 = vmatpush1.bf16.msra.mxu0 %v8576
      %8818 = vmatprep.subr.bf16.mxu0 0
      %8819 = vmatpush1.bf16.msra.mxu0 %v8575
      %8820 = vmatprep.subr.bf16.mxu0 0
      %8821 = vmatpush2.bf16.msra.mxu0 0
      %8822 = vmatprep.subr.bf16.mxu0 0
      %8823 = vmatpush2.bf16.msra.mxu0 0
      %8824 = vmatprep.subr.bf16.mxu0 0
      %8825 = vmatpush2.bf16.msra.mxu0 0
      %8826 = vmatprep.subr.bf16.mxu0 0
      %8827 = vmatpush2.bf16.msra.mxu0 0
      %8828 = vmatprep.subr.bf16.mxu0 0
      %8829 = vmatpush2.bf16.msra.mxu0 0
      %8830 = vmatprep.subr.bf16.mxu0 0
      %8831 = vmatpush2.bf16.msra.mxu0 0
      %8832 = vmatprep.subr.bf16.mxu0 0
      %8833 = vmatpush2.bf16.msra.mxu0 0
      %8834 = vmatprep.subr.bf16.mxu0 0
      %8835 = vmatpush2.bf16.msra.mxu0 0
      %8836 = vmatprep.mubr.bf16.mxu0 0
      %8837 = vmatmul.mubr.bf16.gmra.mxu0 %v8596
      %v8838 = vpop.f32.mrf.mxu0
      %v8839 = vadd.f32 %v8678, %v8838
      %v8840 = vpop.f32.mrf.mxu0
      %v8841 = vpop.f32.mrf.mxu0
      %v8842 = vadd.f32 %v8681, %v8841
      %v8843 = vpop.f32.mrf.mxu0
      %8844 = vmatprep.mubr.bf16.mxu0 0
      %8845 = vmatmul.mubr.bf16.gmra.mxu0 %v8599
      %v8846 = vpop.f32.mrf.mxu0
      %v8847 = vadd.f32 %v8686, %v8846
      %v8848 = vpop.f32.mrf.mxu0
      %v8849 = vpop.f32.mrf.mxu0
      %v8850 = vadd.f32 %v8689, %v8849
      %v8851 = vpop.f32.mrf.mxu0
      %8852 = vmatprep.mubr.bf16.mxu0 0
      %8853 = vmatmul.mubr.bf16.gmra.mxu0 %v8602
      %v8854 = vpop.f32.mrf.mxu0
      %v8855 = vadd.f32 %v8694, %v8854
      %v8856 = vpop.f32.mrf.mxu0
      %v8857 = vpop.f32.mrf.mxu0
      %v8858 = vadd.f32 %v8697, %v8857
      %v8859 = vpop.f32.mrf.mxu0
      %8860 = vmatprep.mubr.bf16.mxu0 0
      %8861 = vmatmul.mubr.bf16.gmra.mxu0 %v8605
      %v8862 = vpop.f32.mrf.mxu0
      %v8863 = vadd.f32 %v8702, %v8862
      %v8864 = vpop.f32.mrf.mxu0
      %v8865 = vpop.f32.mrf.mxu0
      %v8866 = vadd.f32 %v8705, %v8865
      %v8867 = vpop.f32.mrf.mxu0
      %8868 = vmatprep.mubr.bf16.mxu0 0
      %8869 = vmatmul.mubr.bf16.gmra.mxu0 %v8608
      %v8870 = vpop.f32.mrf.mxu0
      %v8871 = vadd.f32 %v8710, %v8870
      %v8872 = vpop.f32.mrf.mxu0
      %v8873 = vpop.f32.mrf.mxu0
      %v8874 = vadd.f32 %v8713, %v8873
      %v8875 = vpop.f32.mrf.mxu0
      %8876 = vmatprep.mubr.bf16.mxu0 0
      %8877 = vmatmul.mubr.bf16.gmra.mxu0 %v8611
      %v8878 = vpop.f32.mrf.mxu0
      %v8879 = vadd.f32 %v8718, %v8878
      %v8880 = vpop.f32.mrf.mxu0
      %v8881 = vpop.f32.mrf.mxu0
      %v8882 = vadd.f32 %v8721, %v8881
      %v8883 = vpop.f32.mrf.mxu0
      %8884 = vmatprep.mubr.bf16.mxu0 0
      %8885 = vmatmul.mubr.bf16.gmra.mxu0 %v8614
      %v8886 = vpop.f32.mrf.mxu0
      %v8887 = vadd.f32 %v8726, %v8886
      %v8888 = vpop.f32.mrf.mxu0
      %v8889 = vpop.f32.mrf.mxu0
      %v8890 = vadd.f32 %v8729, %v8889
      %v8891 = vpop.f32.mrf.mxu0
      %8892 = vmatprep.mubr.bf16.mxu0 0
      %8893 = vmatmul.mubr.bf16.gmra.mxu0 %v8617
      %v8894 = vpop.f32.mrf.mxu0
      %v8895 = vadd.f32 %v8734, %v8894
      %v8896 = vpop.f32.mrf.mxu0
      %v8897 = vpop.f32.mrf.mxu0
      %v8898 = vadd.f32 %v8737, %v8897
      %v8899 = vpop.f32.mrf.mxu0
      %8900 = vmatprep.mubr.bf16.mxu0 0
      %8901 = vmatmul.mubr.bf16.gmra.mxu0 %v8620
      %v8902 = vpop.f32.mrf.mxu0
      %v8903 = vadd.f32 %v8742, %v8902
      %v8904 = vpop.f32.mrf.mxu0
      %v8905 = vpop.f32.mrf.mxu0
      %v8906 = vadd.f32 %v8745, %v8905
      %v8907 = vpop.f32.mrf.mxu0
      %8908 = vmatprep.mubr.bf16.mxu0 0
      %8909 = vmatmul.mubr.bf16.gmra.mxu0 %v8623
      %v8910 = vpop.f32.mrf.mxu0
      %v8911 = vadd.f32 %v8750, %v8910
      %v8912 = vpop.f32.mrf.mxu0
      %v8913 = vpop.f32.mrf.mxu0
      %v8914 = vadd.f32 %v8753, %v8913
      %v8915 = vpop.f32.mrf.mxu0
      %8916 = vmatprep.mubr.bf16.mxu0 0
      %8917 = vmatmul.mubr.bf16.gmra.mxu0 %v8626
      %v8918 = vpop.f32.mrf.mxu0
      %v8919 = vadd.f32 %v8758, %v8918
      %v8920 = vpop.f32.mrf.mxu0
      %v8921 = vpop.f32.mrf.mxu0
      %v8922 = vadd.f32 %v8761, %v8921
      %v8923 = vpop.f32.mrf.mxu0
      %8924 = vmatprep.mubr.bf16.mxu0 0
      %8925 = vmatmul.mubr.bf16.gmra.mxu0 %v8629
      %v8926 = vpop.f32.mrf.mxu0
      %v8927 = vadd.f32 %v8766, %v8926
      %v8928 = vpop.f32.mrf.mxu0
      %v8929 = vpop.f32.mrf.mxu0
      %v8930 = vadd.f32 %v8769, %v8929
      %v8931 = vpop.f32.mrf.mxu0
      %8932 = vmatprep.mubr.bf16.mxu0 0
      %8933 = vmatmul.mubr.bf16.gmra.mxu0 %v8632
      %v8934 = vpop.f32.mrf.mxu0
      %v8935 = vadd.f32 %v8774, %v8934
      %v8936 = vpop.f32.mrf.mxu0
      %v8937 = vpop.f32.mrf.mxu0
      %v8938 = vadd.f32 %v8777, %v8937
      %v8939 = vpop.f32.mrf.mxu0
      %8940 = vmatprep.mubr.bf16.mxu0 0
      %8941 = vmatmul.mubr.bf16.gmra.mxu0 %v8635
      %v8942 = vpop.f32.mrf.mxu0
      %v8943 = vadd.f32 %v8782, %v8942
      %v8944 = vpop.f32.mrf.mxu0
      %v8945 = vpop.f32.mrf.mxu0
      %v8946 = vadd.f32 %v8785, %v8945
      %v8947 = vpop.f32.mrf.mxu0
      %8948 = vmatprep.mubr.bf16.mxu0 0
      %8949 = vmatmul.mubr.bf16.gmra.mxu0 %v8638
      %v8950 = vpop.f32.mrf.mxu0
      %v8951 = vadd.f32 %v8790, %v8950
      %v8952 = vpop.f32.mrf.mxu0
      %v8953 = vpop.f32.mrf.mxu0
      %v8954 = vadd.f32 %v8793, %v8953
      %v8955 = vpop.f32.mrf.mxu0
      %8956 = vmatprep.mubr.bf16.mxu0 0
      %8957 = vmatmul.mubr.bf16.gmra.mxu0 %v8641
      %v8958 = vpop.f32.mrf.mxu0
      %v8959 = vadd.f32 %v8798, %v8958
      %v8960 = vpop.f32.mrf.mxu0
      %v8961 = vpop.f32.mrf.mxu0
      %v8962 = vadd.f32 %v8801, %v8961
      %v8963 = vpop.f32.mrf.mxu0
      %8964 = vdwg.mxu0
      %v8965 = vld [vmem:[%s45] sm:$0x1]
      %v8967 = vlaneseq
      %v8968 = vshrl.u32 %v8967, 7
      %v8969 = vsub.s32 0, %v8968
      %v8970 = vrot.slane %v8965, %v8969
      %v8972 = vadd.f32 %v8839, %v8970
      %v8973 = vadd.f32 %v8842, %v8970
      %v8974 = vadd.f32 %v8847, %v8970
      %v8975 = vadd.f32 %v8850, %v8970
      %v8976 = vadd.f32 %v8855, %v8970
      %v8977 = vadd.f32 %v8858, %v8970
      %v8978 = vadd.f32 %v8863, %v8970
      %v8979 = vadd.f32 %v8866, %v8970
      %v8980 = vadd.f32 %v8871, %v8970
      %v8981 = vadd.f32 %v8874, %v8970
      %v8982 = vadd.f32 %v8879, %v8970
      %v8983 = vadd.f32 %v8882, %v8970
      %v8984 = vadd.f32 %v8887, %v8970
      %v8985 = vadd.f32 %v8890, %v8970
      %v8986 = vadd.f32 %v8895, %v8970
      %v8987 = vadd.f32 %v8898, %v8970
      %v8988 = vadd.f32 %v8903, %v8970
      %v8989 = vadd.f32 %v8906, %v8970
      %v8990 = vadd.f32 %v8911, %v8970
      %v8991 = vadd.f32 %v8914, %v8970
      %v8992 = vadd.f32 %v8919, %v8970
      %v8993 = vadd.f32 %v8922, %v8970
      %v8994 = vadd.f32 %v8927, %v8970
      %v8995 = vadd.f32 %v8930, %v8970
      %v8996 = vadd.f32 %v8935, %v8970
      %v8997 = vadd.f32 %v8938, %v8970
      %v8998 = vadd.f32 %v8943, %v8970
      %v8999 = vadd.f32 %v8946, %v8970
      %v9000 = vadd.f32 %v8951, %v8970
      %v9001 = vadd.f32 %v8954, %v8970
      %v9002 = vadd.f32 %v8959, %v8970
      %v9003 = vadd.f32 %v8962, %v8970
      %vm9004 = vcmp.ge.f32.partialorder %v8972, 0.0
      %vm9005 = vcmp.ge.f32.partialorder %v8973, 0.0
      %vm9006 = vcmp.ge.f32.partialorder %v8974, 0.0
      %vm9007 = vcmp.ge.f32.partialorder %v8975, 0.0
      %vm9008 = vcmp.ge.f32.partialorder %v8976, 0.0
      %vm9009 = vcmp.ge.f32.partialorder %v8977, 0.0
      %vm9010 = vcmp.ge.f32.partialorder %v8978, 0.0
      %vm9011 = vcmp.ge.f32.partialorder %v8979, 0.0
      %vm9012 = vcmp.ge.f32.partialorder %v8980, 0.0
      %vm9013 = vcmp.ge.f32.partialorder %v8981, 0.0
      %vm9014 = vcmp.ge.f32.partialorder %v8982, 0.0
      %vm9015 = vcmp.ge.f32.partialorder %v8983, 0.0
      %vm9016 = vcmp.ge.f32.partialorder %v8984, 0.0
      %vm9017 = vcmp.ge.f32.partialorder %v8985, 0.0
      %vm9018 = vcmp.ge.f32.partialorder %v8986, 0.0
      %vm9019 = vcmp.ge.f32.partialorder %v8987, 0.0
      %vm9020 = vcmp.ge.f32.partialorder %v8988, 0.0
      %vm9021 = vcmp.ge.f32.partialorder %v8989, 0.0
      %vm9022 = vcmp.ge.f32.partialorder %v8990, 0.0
      %vm9023 = vcmp.ge.f32.partialorder %v8991, 0.0
      %vm9024 = vcmp.ge.f32.partialorder %v8992, 0.0
      %vm9025 = vcmp.ge.f32.partialorder %v8993, 0.0
      %vm9026 = vcmp.ge.f32.partialorder %v8994, 0.0
      %vm9027 = vcmp.ge.f32.partialorder %v8995, 0.0
      %vm9028 = vcmp.ge.f32.partialorder %v8996, 0.0
      %vm9029 = vcmp.ge.f32.partialorder %v8997, 0.0
      %vm9030 = vcmp.ge.f32.partialorder %v8998, 0.0
      %vm9031 = vcmp.ge.f32.partialorder %v8999, 0.0
      %vm9032 = vcmp.ge.f32.partialorder %v9000, 0.0
      %vm9033 = vcmp.ge.f32.partialorder %v9001, 0.0
      %vm9034 = vcmp.ge.f32.partialorder %v9002, 0.0
      %vm9035 = vcmp.ge.f32.partialorder %v9003, 0.0
      %v9036 = vmul.f32 %v8972, 0.1
      %v9037 = vmul.f32 %v8973, 0.1
      %v9038 = vmul.f32 %v8974, 0.1
      %v9039 = vmul.f32 %v8975, 0.1
      %v9040 = vmul.f32 %v8976, 0.1
      %v9041 = vmul.f32 %v8977, 0.1
      %v9042 = vmul.f32 %v8978, 0.1
      %v9043 = vmul.f32 %v8979, 0.1
      %v9044 = vmul.f32 %v8980, 0.1
      %v9045 = vmul.f32 %v8981, 0.1
      %v9046 = vmul.f32 %v8982, 0.1
      %v9047 = vmul.f32 %v8983, 0.1
      %v9048 = vmul.f32 %v8984, 0.1
      %v9049 = vmul.f32 %v8985, 0.1
      %v9050 = vmul.f32 %v8986, 0.1
      %v9051 = vmul.f32 %v8987, 0.1
      %v9052 = vmul.f32 %v8988, 0.1
      %v9053 = vmul.f32 %v8989, 0.1
      %v9054 = vmul.f32 %v8990, 0.1
      %v9055 = vmul.f32 %v8991, 0.1
      %v9056 = vmul.f32 %v8992, 0.1
      %v9057 = vmul.f32 %v8993, 0.1
      %v9058 = vmul.f32 %v8994, 0.1
      %v9059 = vmul.f32 %v8995, 0.1
      %v9060 = vmul.f32 %v8996, 0.1
      %v9061 = vmul.f32 %v8997, 0.1
      %v9062 = vmul.f32 %v8998, 0.1
      %v9063 = vmul.f32 %v8999, 0.1
      %v9064 = vmul.f32 %v9000, 0.1
      %v9065 = vmul.f32 %v9001, 0.1
      %v9066 = vmul.f32 %v9002, 0.1
      %v9067 = vmul.f32 %v9003, 0.1
      %v9068 = vsel %vm9004, %v8972, %v9036
      %v9069 = vsel %vm9005, %v8973, %v9037
      %v9070 = vsel %vm9006, %v8974, %v9038
      %v9071 = vsel %vm9007, %v8975, %v9039
      %v9072 = vsel %vm9008, %v8976, %v9040
      %v9073 = vsel %vm9009, %v8977, %v9041
      %v9074 = vsel %vm9010, %v8978, %v9042
      %v9075 = vsel %vm9011, %v8979, %v9043
      %v9076 = vsel %vm9012, %v8980, %v9044
      %v9077 = vsel %vm9013, %v8981, %v9045
      %v9078 = vsel %vm9014, %v8982, %v9046
      %v9079 = vsel %vm9015, %v8983, %v9047
      %v9080 = vsel %vm9016, %v8984, %v9048
      %v9081 = vsel %vm9017, %v8985, %v9049
      %v9082 = vsel %vm9018, %v8986, %v9050
      %v9083 = vsel %vm9019, %v8987, %v9051
      %v9084 = vsel %vm9020, %v8988, %v9052
      %v9085 = vsel %vm9021, %v8989, %v9053
      %v9086 = vsel %vm9022, %v8990, %v9054
      %v9087 = vsel %vm9023, %v8991, %v9055
      %v9088 = vsel %vm9024, %v8992, %v9056
      %v9089 = vsel %vm9025, %v8993, %v9057
      %v9090 = vsel %vm9026, %v8994, %v9058
      %v9091 = vsel %vm9027, %v8995, %v9059
      %v9092 = vsel %vm9028, %v8996, %v9060
      %v9093 = vsel %vm9029, %v8997, %v9061
      %v9094 = vsel %vm9030, %v8998, %v9062
      %v9095 = vsel %vm9031, %v8999, %v9063
      %v9096 = vsel %vm9032, %v9000, %v9064
      %v9097 = vsel %vm9033, %v9001, %v9065
      %v9098 = vsel %vm9034, %v9002, %v9066
      %v9099 = vsel %vm9035, %v9003, %v9067
      %v9100 = vpack.c.bf16 %v9069, %v9068
      %v9101 = vpack.c.bf16 %v9071, %v9070
      %v9102 = vpack.c.bf16 %v9073, %v9072
      %v9103 = vpack.c.bf16 %v9075, %v9074
      %v9104 = vpack.c.bf16 %v9077, %v9076
      %v9105 = vpack.c.bf16 %v9079, %v9078
      %v9106 = vpack.c.bf16 %v9081, %v9080
      %v9107 = vpack.c.bf16 %v9083, %v9082
      %v9108 = vpack.c.bf16 %v9085, %v9084
      %v9109 = vpack.c.bf16 %v9087, %v9086
      %v9110 = vpack.c.bf16 %v9089, %v9088
      %v9111 = vpack.c.bf16 %v9091, %v9090
      %v9112 = vpack.c.bf16 %v9093, %v9092
      %v9113 = vpack.c.bf16 %v9095, %v9094
      %v9114 = vpack.c.bf16 %v9097, %v9096
      %v9115 = vpack.c.bf16 %v9099, %v9098
      %v9117 = vshrl.u32 %v9100, 16
      %v9119 = vrot.slane %v9117, 7
      %v9120 = vshll.u32 %v9100, 16
      %v9122 = vor.u32 %v9119, %v9120
      %v9124 = vshrl.u32 %v9101, 16
      %v9126 = vrot.slane %v9124, 7
      %v9127 = vshll.u32 %v9101, 16
      %v9129 = vor.u32 %v9126, %v9127
      %v9131 = vshrl.u32 %v9102, 16
      %v9133 = vrot.slane %v9131, 7
      %v9134 = vshll.u32 %v9102, 16
      %v9136 = vor.u32 %v9133, %v9134
      %v9138 = vshrl.u32 %v9103, 16
      %v9140 = vrot.slane %v9138, 7
      %v9141 = vshll.u32 %v9103, 16
      %v9143 = vor.u32 %v9140, %v9141
      %v9145 = vshrl.u32 %v9104, 16
      %v9147 = vrot.slane %v9145, 7
      %v9148 = vshll.u32 %v9104, 16
      %v9150 = vor.u32 %v9147, %v9148
      %v9152 = vshrl.u32 %v9105, 16
      %v9154 = vrot.slane %v9152, 7
      %v9155 = vshll.u32 %v9105, 16
      %v9157 = vor.u32 %v9154, %v9155
      %v9159 = vshrl.u32 %v9106, 16
      %v9161 = vrot.slane %v9159, 7
      %v9162 = vshll.u32 %v9106, 16
      %v9164 = vor.u32 %v9161, %v9162
      %v9166 = vshrl.u32 %v9107, 16
      %v9168 = vrot.slane %v9166, 7
      %v9169 = vshll.u32 %v9107, 16
      %v9171 = vor.u32 %v9168, %v9169
      %v9173 = vshrl.u32 %v9108, 16
      %v9175 = vrot.slane %v9173, 7
      %v9176 = vshll.u32 %v9108, 16
      %v9178 = vor.u32 %v9175, %v9176
      %v9180 = vshrl.u32 %v9109, 16
      %v9182 = vrot.slane %v9180, 7
      %v9183 = vshll.u32 %v9109, 16
      %v9185 = vor.u32 %v9182, %v9183
      %v9187 = vshrl.u32 %v9110, 16
      %v9189 = vrot.slane %v9187, 7
      %v9190 = vshll.u32 %v9110, 16
      %v9192 = vor.u32 %v9189, %v9190
      %v9194 = vshrl.u32 %v9111, 16
      %v9196 = vrot.slane %v9194, 7
      %v9197 = vshll.u32 %v9111, 16
      %v9199 = vor.u32 %v9196, %v9197
      %v9201 = vshrl.u32 %v9112, 16
      %v9203 = vrot.slane %v9201, 7
      %v9204 = vshll.u32 %v9112, 16
      %v9206 = vor.u32 %v9203, %v9204
      %v9208 = vshrl.u32 %v9113, 16
      %v9210 = vrot.slane %v9208, 7
      %v9211 = vshll.u32 %v9113, 16
      %v9213 = vor.u32 %v9210, %v9211
      %v9215 = vshrl.u32 %v9114, 16
      %v9217 = vrot.slane %v9215, 7
      %v9218 = vshll.u32 %v9114, 16
      %v9220 = vor.u32 %v9217, %v9218
      %v9222 = vshrl.u32 %v9115, 16
      %v9224 = vrot.slane %v9222, 7
      %v9225 = vshll.u32 %v9115, 16
      %v9227 = vor.u32 %v9224, %v9225
      %v9260 = vsel %vm1298, 0, %v9122
      %v9261 = vsel %vm1298, 0, %v9129
      %v9262 = vsel %vm1298, 0, %v9136
      %v9263 = vsel %vm1298, 0, %v9143
      %v9264 = vsel %vm1298, 0, %v9150
      %v9265 = vsel %vm1298, 0, %v9157
      %v9266 = vsel %vm1298, 0, %v9164
      %v9267 = vsel %vm1298, 0, %v9171
      %v9268 = vsel %vm1298, 0, %v9178
      %v9269 = vsel %vm1298, 0, %v9185
      %v9270 = vsel %vm1298, 0, %v9192
      %v9271 = vsel %vm1298, 0, %v9199
      %v9272 = vsel %vm1298, 0, %v9206
      %v9273 = vsel %vm1298, 0, %v9213
      %v9274 = vsel %vm1298, 0, %v9220
      %v9275 = vsel %vm1298, 0, %v9227
      %v9276 = vsel %vm1298, %v9119, 0
      %v9277 = vsel %vm1298, %v9126, 0
      %v9278 = vsel %vm1298, %v9133, 0
      %v9279 = vsel %vm1298, %v9140, 0
      %v9280 = vsel %vm1298, %v9147, 0
      %v9281 = vsel %vm1298, %v9154, 0
      %v9282 = vsel %vm1298, %v9161, 0
      %v9283 = vsel %vm1298, %v9168, 0
      %v9284 = vsel %vm1298, %v9175, 0
      %v9285 = vsel %vm1298, %v9182, 0
      %v9286 = vsel %vm1298, %v9189, 0
      %v9287 = vsel %vm1298, %v9196, 0
      %v9288 = vsel %vm1298, %v9203, 0
      %v9289 = vsel %vm1298, %v9210, 0
      %v9290 = vsel %vm1298, %v9217, 0
      %v9291 = vsel %vm1298, %v9224, 0
      %v9293 = vshrl.u32 %v9260, 16
      %v9295 = vshll.u32 %v9260, 16
      %v9297 = vrot.slane %v9295, 1
      %v9298 = vor.u32 %v9293, %v9297
      %v9300 = vshll.u32 %v9276, 16
      %v9302 = vrot.slane %v9300, 1
      %v9303 = vsel %vm1414, %v9298, %v9302
      %v9305 = vshrl.u32 %v9261, 16
      %v9307 = vshll.u32 %v9261, 16
      %v9309 = vrot.slane %v9307, 1
      %v9310 = vor.u32 %v9305, %v9309
      %v9312 = vshll.u32 %v9277, 16
      %v9314 = vrot.slane %v9312, 1
      %v9315 = vsel %vm1414, %v9310, %v9314
      %v9317 = vshrl.u32 %v9262, 16
      %v9319 = vshll.u32 %v9262, 16
      %v9321 = vrot.slane %v9319, 1
      %v9322 = vor.u32 %v9317, %v9321
      %v9324 = vshll.u32 %v9278, 16
      %v9326 = vrot.slane %v9324, 1
      %v9327 = vsel %vm1414, %v9322, %v9326
      %v9329 = vshrl.u32 %v9263, 16
      %v9331 = vshll.u32 %v9263, 16
      %v9333 = vrot.slane %v9331, 1
      %v9334 = vor.u32 %v9329, %v9333
      %v9336 = vshll.u32 %v9279, 16
      %v9338 = vrot.slane %v9336, 1
      %v9339 = vsel %vm1414, %v9334, %v9338
      %v9341 = vshrl.u32 %v9264, 16
      %v9343 = vshll.u32 %v9264, 16
      %v9345 = vrot.slane %v9343, 1
      %v9346 = vor.u32 %v9341, %v9345
      %v9348 = vshll.u32 %v9280, 16
      %v9350 = vrot.slane %v9348, 1
      %v9351 = vsel %vm1414, %v9346, %v9350
      %v9353 = vshrl.u32 %v9265, 16
      %v9355 = vshll.u32 %v9265, 16
      %v9357 = vrot.slane %v9355, 1
      %v9358 = vor.u32 %v9353, %v9357
      %v9360 = vshll.u32 %v9281, 16
      %v9362 = vrot.slane %v9360, 1
      %v9363 = vsel %vm1414, %v9358, %v9362
      %v9365 = vshrl.u32 %v9266, 16
      %v9367 = vshll.u32 %v9266, 16
      %v9369 = vrot.slane %v9367, 1
      %v9370 = vor.u32 %v9365, %v9369
      %v9372 = vshll.u32 %v9282, 16
      %v9374 = vrot.slane %v9372, 1
      %v9375 = vsel %vm1414, %v9370, %v9374
      %v9377 = vshrl.u32 %v9267, 16
      %v9379 = vshll.u32 %v9267, 16
      %v9381 = vrot.slane %v9379, 1
      %v9382 = vor.u32 %v9377, %v9381
      %v9384 = vshll.u32 %v9283, 16
      %v9386 = vrot.slane %v9384, 1
      %v9387 = vsel %vm1414, %v9382, %v9386
      %v9389 = vshrl.u32 %v9268, 16
      %v9391 = vshll.u32 %v9268, 16
      %v9393 = vrot.slane %v9391, 1
      %v9394 = vor.u32 %v9389, %v9393
      %v9396 = vshll.u32 %v9284, 16
      %v9398 = vrot.slane %v9396, 1
      %v9399 = vsel %vm1414, %v9394, %v9398
      %v9401 = vshrl.u32 %v9269, 16
      %v9403 = vshll.u32 %v9269, 16
      %v9405 = vrot.slane %v9403, 1
      %v9406 = vor.u32 %v9401, %v9405
      %v9408 = vshll.u32 %v9285, 16
      %v9410 = vrot.slane %v9408, 1
      %v9411 = vsel %vm1414, %v9406, %v9410
      %v9413 = vshrl.u32 %v9270, 16
      %v9415 = vshll.u32 %v9270, 16
      %v9417 = vrot.slane %v9415, 1
      %v9418 = vor.u32 %v9413, %v9417
      %v9420 = vshll.u32 %v9286, 16
      %v9422 = vrot.slane %v9420, 1
      %v9423 = vsel %vm1414, %v9418, %v9422
      %v9425 = vshrl.u32 %v9271, 16
      %v9427 = vshll.u32 %v9271, 16
      %v9429 = vrot.slane %v9427, 1
      %v9430 = vor.u32 %v9425, %v9429
      %v9432 = vshll.u32 %v9287, 16
      %v9434 = vrot.slane %v9432, 1
      %v9435 = vsel %vm1414, %v9430, %v9434
      %v9437 = vshrl.u32 %v9272, 16
      %v9439 = vshll.u32 %v9272, 16
      %v9441 = vrot.slane %v9439, 1
      %v9442 = vor.u32 %v9437, %v9441
      %v9444 = vshll.u32 %v9288, 16
      %v9446 = vrot.slane %v9444, 1
      %v9447 = vsel %vm1414, %v9442, %v9446
      %v9449 = vshrl.u32 %v9273, 16
      %v9451 = vshll.u32 %v9273, 16
      %v9453 = vrot.slane %v9451, 1
      %v9454 = vor.u32 %v9449, %v9453
      %v9456 = vshll.u32 %v9289, 16
      %v9458 = vrot.slane %v9456, 1
      %v9459 = vsel %vm1414, %v9454, %v9458
      %v9461 = vshrl.u32 %v9274, 16
      %v9463 = vshll.u32 %v9274, 16
      %v9465 = vrot.slane %v9463, 1
      %v9466 = vor.u32 %v9461, %v9465
      %v9468 = vshll.u32 %v9290, 16
      %v9470 = vrot.slane %v9468, 1
      %v9471 = vsel %vm1414, %v9466, %v9470
      %9472 = vrot.lane.b32.xlu0 %v7284, 16
      %v9473 = vpop.permute.xlu0 %9472
      %9474 = vrot.lane.b32.xlu0 %v9303, 16
      %v9475 = vpop.permute.xlu0 %9474
      %9476 = vrot.lane.b32.xlu0 %v9315, 16
      %v9477 = vpop.permute.xlu0 %9476
      %9478 = vrot.lane.b32.xlu0 %v9327, 16
      %v9479 = vpop.permute.xlu0 %9478
      %9480 = vrot.lane.b32.xlu0 %v9339, 16
      %v9481 = vpop.permute.xlu0 %9480
      %9482 = vrot.lane.b32.xlu0 %v9351, 16
      %v9483 = vpop.permute.xlu0 %9482
      %9484 = vrot.lane.b32.xlu0 %v9363, 16
      %v9485 = vpop.permute.xlu0 %9484
      %9486 = vrot.lane.b32.xlu0 %v9375, 16
      %v9487 = vpop.permute.xlu0 %9486
      %9488 = vrot.lane.b32.xlu0 %v9387, 16
      %v9489 = vpop.permute.xlu0 %9488
      %9490 = vrot.lane.b32.xlu0 %v9399, 16
      %v9491 = vpop.permute.xlu0 %9490
      %9492 = vrot.lane.b32.xlu0 %v9411, 16
      %v9493 = vpop.permute.xlu0 %9492
      %9494 = vrot.lane.b32.xlu0 %v9423, 16
      %v9495 = vpop.permute.xlu0 %9494
      %9496 = vrot.lane.b32.xlu0 %v9435, 16
      %v9497 = vpop.permute.xlu0 %9496
      %9498 = vrot.lane.b32.xlu0 %v9447, 16
      %v9499 = vpop.permute.xlu0 %9498
      %9500 = vrot.lane.b32.xlu0 %v9459, 16
      %v9501 = vpop.permute.xlu0 %9500
      %9502 = vrot.lane.b32.xlu0 %v9471, 16
      %v9503 = vpop.permute.xlu0 %9502
      %v9534 = vrot.slane %v9260, 1
      %v9535 = vrot.slane %v9276, 1
      %v9536 = vsel %vm1543, %v9534, %v9535
      %v9537 = vrot.slane %v9261, 1
      %v9538 = vrot.slane %v9277, 1
      %v9539 = vsel %vm1543, %v9537, %v9538
      %v9540 = vrot.slane %v9262, 1
      %v9541 = vrot.slane %v9278, 1
      %v9542 = vsel %vm1543, %v9540, %v9541
      %v9543 = vrot.slane %v9263, 1
      %v9544 = vrot.slane %v9279, 1
      %v9545 = vsel %vm1543, %v9543, %v9544
      %v9546 = vrot.slane %v9264, 1
      %v9547 = vrot.slane %v9280, 1
      %v9548 = vsel %vm1543, %v9546, %v9547
      %v9549 = vrot.slane %v9265, 1
      %v9550 = vrot.slane %v9281, 1
      %v9551 = vsel %vm1543, %v9549, %v9550
      %v9552 = vrot.slane %v9266, 1
      %v9553 = vrot.slane %v9282, 1
      %v9554 = vsel %vm1543, %v9552, %v9553
      %v9555 = vrot.slane %v9267, 1
      %v9556 = vrot.slane %v9283, 1
      %v9557 = vsel %vm1543, %v9555, %v9556
      %v9558 = vrot.slane %v9268, 1
      %v9559 = vrot.slane %v9284, 1
      %v9560 = vsel %vm1543, %v9558, %v9559
      %v9561 = vrot.slane %v9269, 1
      %v9562 = vrot.slane %v9285, 1
      %v9563 = vsel %vm1543, %v9561, %v9562
      %v9564 = vrot.slane %v9270, 1
      %v9565 = vrot.slane %v9286, 1
      %v9566 = vsel %vm1543, %v9564, %v9565
      %v9567 = vrot.slane %v9271, 1
      %v9568 = vrot.slane %v9287, 1
      %v9569 = vsel %vm1543, %v9567, %v9568
      %v9570 = vrot.slane %v9272, 1
      %v9571 = vrot.slane %v9288, 1
      %v9572 = vsel %vm1543, %v9570, %v9571
      %v9573 = vrot.slane %v9273, 1
      %v9574 = vrot.slane %v9289, 1
      %v9575 = vsel %vm1543, %v9573, %v9574
      %v9576 = vrot.slane %v9274, 1
      %v9577 = vrot.slane %v9290, 1
      %v9578 = vsel %vm1543, %v9576, %v9577
      %9579 = vrot.lane.b32.xlu0 %v7527, 32
      %v9580 = vpop.permute.xlu0 %9579
      %9581 = vrot.lane.b32.xlu0 %v9536, 32
      %v9582 = vpop.permute.xlu0 %9581
      %9583 = vrot.lane.b32.xlu0 %v9539, 32
      %v9584 = vpop.permute.xlu0 %9583
      %9585 = vrot.lane.b32.xlu0 %v9542, 32
      %v9586 = vpop.permute.xlu0 %9585
      %9587 = vrot.lane.b32.xlu0 %v9545, 32
      %v9588 = vpop.permute.xlu0 %9587
      %9589 = vrot.lane.b32.xlu0 %v9548, 32
      %v9590 = vpop.permute.xlu0 %9589
      %9591 = vrot.lane.b32.xlu0 %v9551, 32
      %v9592 = vpop.permute.xlu0 %9591
      %9593 = vrot.lane.b32.xlu0 %v9554, 32
      %v9594 = vpop.permute.xlu0 %9593
      %9595 = vrot.lane.b32.xlu0 %v9557, 32
      %v9596 = vpop.permute.xlu0 %9595
      %9597 = vrot.lane.b32.xlu0 %v9560, 32
      %v9598 = vpop.permute.xlu0 %9597
      %9599 = vrot.lane.b32.xlu0 %v9563, 32
      %v9600 = vpop.permute.xlu0 %9599
      %9601 = vrot.lane.b32.xlu0 %v9566, 32
      %v9602 = vpop.permute.xlu0 %9601
      %9603 = vrot.lane.b32.xlu0 %v9569, 32
      %v9604 = vpop.permute.xlu0 %9603
      %9605 = vrot.lane.b32.xlu0 %v9572, 32
      %v9606 = vpop.permute.xlu0 %9605
      %9607 = vrot.lane.b32.xlu0 %v9575, 32
      %v9608 = vpop.permute.xlu0 %9607
      %9609 = vrot.lane.b32.xlu0 %v9578, 32
      %v9610 = vpop.permute.xlu0 %9609
      %9612 = vrot.lane.b32.xlu0 %v9260, 48
      %v9613 = vpop.permute.xlu0 %9612
      %9614 = vrot.lane.b32.xlu0 %v9261, 48
      %v9615 = vpop.permute.xlu0 %9614
      %9616 = vrot.lane.b32.xlu0 %v9262, 48
      %v9617 = vpop.permute.xlu0 %9616
      %9618 = vrot.lane.b32.xlu0 %v9263, 48
      %v9619 = vpop.permute.xlu0 %9618
      %9620 = vrot.lane.b32.xlu0 %v9264, 48
      %v9621 = vpop.permute.xlu0 %9620
      %9622 = vrot.lane.b32.xlu0 %v9265, 48
      %v9623 = vpop.permute.xlu0 %9622
      %9624 = vrot.lane.b32.xlu0 %v9266, 48
      %v9625 = vpop.permute.xlu0 %9624
      %9626 = vrot.lane.b32.xlu0 %v9267, 48
      %v9627 = vpop.permute.xlu0 %9626
      %9628 = vrot.lane.b32.xlu0 %v9268, 48
      %v9629 = vpop.permute.xlu0 %9628
      %9630 = vrot.lane.b32.xlu0 %v9269, 48
      %v9631 = vpop.permute.xlu0 %9630
      %9632 = vrot.lane.b32.xlu0 %v9270, 48
      %v9633 = vpop.permute.xlu0 %9632
      %9634 = vrot.lane.b32.xlu0 %v9271, 48
      %v9635 = vpop.permute.xlu0 %9634
      %9636 = vrot.lane.b32.xlu0 %v9272, 48
      %v9637 = vpop.permute.xlu0 %9636
      %9638 = vrot.lane.b32.xlu0 %v9273, 48
      %v9639 = vpop.permute.xlu0 %9638
      %9640 = vrot.lane.b32.xlu0 %v9274, 48
      %v9641 = vpop.permute.xlu0 %9640
      %9642 = vrot.lane.b32.xlu0 %v9275, 48
      %v9643 = vpop.permute.xlu0 %9642
      %v9645 = vshrl.u32 %v9275, 16
      %v9647 = vshll.u32 %v9275, 16
      %v9649 = vrot.slane %v9647, 1
      %v9650 = vor.u32 %v9645, %v9649
      %v9652 = vshll.u32 %v9291, 16
      %v9654 = vrot.slane %v9652, 1
      %v9655 = vsel %vm1414, %v9650, %v9654
      %9656 = vrot.lane.b32.xlu0 %v9303, 64
      %v9657 = vpop.permute.xlu0 %9656
      %9658 = vrot.lane.b32.xlu0 %v9315, 64
      %v9659 = vpop.permute.xlu0 %9658
      %9660 = vrot.lane.b32.xlu0 %v9327, 64
      %v9661 = vpop.permute.xlu0 %9660
      %9662 = vrot.lane.b32.xlu0 %v9339, 64
      %v9663 = vpop.permute.xlu0 %9662
      %9664 = vrot.lane.b32.xlu0 %v9351, 64
      %v9665 = vpop.permute.xlu0 %9664
      %9666 = vrot.lane.b32.xlu0 %v9363, 64
      %v9667 = vpop.permute.xlu0 %9666
      %9668 = vrot.lane.b32.xlu0 %v9375, 64
      %v9669 = vpop.permute.xlu0 %9668
      %9670 = vrot.lane.b32.xlu0 %v9387, 64
      %v9671 = vpop.permute.xlu0 %9670
      %9672 = vrot.lane.b32.xlu0 %v9399, 64
      %v9673 = vpop.permute.xlu0 %9672
      %9674 = vrot.lane.b32.xlu0 %v9411, 64
      %v9675 = vpop.permute.xlu0 %9674
      %9676 = vrot.lane.b32.xlu0 %v9423, 64
      %v9677 = vpop.permute.xlu0 %9676
      %9678 = vrot.lane.b32.xlu0 %v9435, 64
      %v9679 = vpop.permute.xlu0 %9678
      %9680 = vrot.lane.b32.xlu0 %v9447, 64
      %v9681 = vpop.permute.xlu0 %9680
      %9682 = vrot.lane.b32.xlu0 %v9459, 64
      %v9683 = vpop.permute.xlu0 %9682
      %9684 = vrot.lane.b32.xlu0 %v9471, 64
      %v9685 = vpop.permute.xlu0 %9684
      %9686 = vrot.lane.b32.xlu0 %v9655, 64
      %v9687 = vpop.permute.xlu0 %9686
      %v9689 = vrot.slane %v9275, 1
      %v9690 = vrot.slane %v9291, 1
      %v9691 = vsel %vm1543, %v9689, %v9690
      %9692 = vrot.lane.b32.xlu0 %v9536, 80
      %v9693 = vpop.permute.xlu0 %9692
      %9694 = vrot.lane.b32.xlu0 %v9539, 80
      %v9695 = vpop.permute.xlu0 %9694
      %9696 = vrot.lane.b32.xlu0 %v9542, 80
      %v9697 = vpop.permute.xlu0 %9696
      %9698 = vrot.lane.b32.xlu0 %v9545, 80
      %v9699 = vpop.permute.xlu0 %9698
      %9700 = vrot.lane.b32.xlu0 %v9548, 80
      %v9701 = vpop.permute.xlu0 %9700
      %9702 = vrot.lane.b32.xlu0 %v9551, 80
      %v9703 = vpop.permute.xlu0 %9702
      %9704 = vrot.lane.b32.xlu0 %v9554, 80
      %v9705 = vpop.permute.xlu0 %9704
      %9706 = vrot.lane.b32.xlu0 %v9557, 80
      %v9707 = vpop.permute.xlu0 %9706
      %9708 = vrot.lane.b32.xlu0 %v9560, 80
      %v9709 = vpop.permute.xlu0 %9708
      %9710 = vrot.lane.b32.xlu0 %v9563, 80
      %v9711 = vpop.permute.xlu0 %9710
      %9712 = vrot.lane.b32.xlu0 %v9566, 80
      %v9713 = vpop.permute.xlu0 %9712
      %9714 = vrot.lane.b32.xlu0 %v9569, 80
      %v9715 = vpop.permute.xlu0 %9714
      %9716 = vrot.lane.b32.xlu0 %v9572, 80
      %v9717 = vpop.permute.xlu0 %9716
      %9718 = vrot.lane.b32.xlu0 %v9575, 80
      %v9719 = vpop.permute.xlu0 %9718
      %9720 = vrot.lane.b32.xlu0 %v9578, 80
      %v9721 = vpop.permute.xlu0 %9720
      %9722 = vrot.lane.b32.xlu0 %v9691, 80
      %v9723 = vpop.permute.xlu0 %9722
      %9724 = vrot.lane.b32.xlu0 %v9261, 96
      %v9725 = vpop.permute.xlu0 %9724
      %9726 = vrot.lane.b32.xlu0 %v9262, 96
      %v9727 = vpop.permute.xlu0 %9726
      %9728 = vrot.lane.b32.xlu0 %v9263, 96
      %v9729 = vpop.permute.xlu0 %9728
      %9730 = vrot.lane.b32.xlu0 %v9264, 96
      %v9731 = vpop.permute.xlu0 %9730
      %9732 = vrot.lane.b32.xlu0 %v9265, 96
      %v9733 = vpop.permute.xlu0 %9732
      %9734 = vrot.lane.b32.xlu0 %v9266, 96
      %v9735 = vpop.permute.xlu0 %9734
      %9736 = vrot.lane.b32.xlu0 %v9267, 96
      %v9737 = vpop.permute.xlu0 %9736
      %9738 = vrot.lane.b32.xlu0 %v9268, 96
      %v9739 = vpop.permute.xlu0 %9738
      %9740 = vrot.lane.b32.xlu0 %v9269, 96
      %v9741 = vpop.permute.xlu0 %9740
      %9742 = vrot.lane.b32.xlu0 %v9270, 96
      %v9743 = vpop.permute.xlu0 %9742
      %9744 = vrot.lane.b32.xlu0 %v9271, 96
      %v9745 = vpop.permute.xlu0 %9744
      %9746 = vrot.lane.b32.xlu0 %v9272, 96
      %v9747 = vpop.permute.xlu0 %9746
      %9748 = vrot.lane.b32.xlu0 %v9273, 96
      %v9749 = vpop.permute.xlu0 %9748
      %9750 = vrot.lane.b32.xlu0 %v9274, 96
      %v9751 = vpop.permute.xlu0 %9750
      %9752 = vrot.lane.b32.xlu0 %v9275, 96
      %v9753 = vpop.permute.xlu0 %9752
      %9754 = vrot.lane.b32.xlu0 %v9315, 112
      %v9755 = vpop.permute.xlu0 %9754
      %9756 = vrot.lane.b32.xlu0 %v9327, 112
      %v9757 = vpop.permute.xlu0 %9756
      %9758 = vrot.lane.b32.xlu0 %v9339, 112
      %v9759 = vpop.permute.xlu0 %9758
      %9760 = vrot.lane.b32.xlu0 %v9351, 112
      %v9761 = vpop.permute.xlu0 %9760
      %9762 = vrot.lane.b32.xlu0 %v9363, 112
      %v9763 = vpop.permute.xlu0 %9762
      %9764 = vrot.lane.b32.xlu0 %v9375, 112
      %v9765 = vpop.permute.xlu0 %9764
      %9766 = vrot.lane.b32.xlu0 %v9387, 112
      %v9767 = vpop.permute.xlu0 %9766
      %9768 = vrot.lane.b32.xlu0 %v9399, 112
      %v9769 = vpop.permute.xlu0 %9768
      %9770 = vrot.lane.b32.xlu0 %v9411, 112
      %v9771 = vpop.permute.xlu0 %9770
      %9772 = vrot.lane.b32.xlu0 %v9423, 112
      %v9773 = vpop.permute.xlu0 %9772
      %9774 = vrot.lane.b32.xlu0 %v9435, 112
      %v9775 = vpop.permute.xlu0 %9774
      %9776 = vrot.lane.b32.xlu0 %v9447, 112
      %v9777 = vpop.permute.xlu0 %9776
      %9778 = vrot.lane.b32.xlu0 %v9459, 112
      %v9779 = vpop.permute.xlu0 %9778
      %9780 = vrot.lane.b32.xlu0 %v9471, 112
      %v9781 = vpop.permute.xlu0 %9780
      %9782 = vrot.lane.b32.xlu0 %v9655, 112
      %v9783 = vpop.permute.xlu0 %9782
      %9784 = vrot.lane.b32.xlu0 %v7284, 112
      %v9785 = vpop.permute.xlu0 %9784
      %v9787 = vsel %vm1952, 0, %v9473
      %v9789 = vsel %vm1952, %v9260, %v9475
      %v9791 = vsel %vm1952, %v9261, %v9477
      %v9793 = vsel %vm1952, %v9262, %v9479
      %v9795 = vsel %vm1952, %v9263, %v9481
      %v9797 = vsel %vm1952, %v9264, %v9483
      %v9799 = vsel %vm1952, %v9265, %v9485
      %v9801 = vsel %vm1952, %v9266, %v9487
      %v9803 = vsel %vm1952, %v9267, %v9489
      %v9805 = vsel %vm1952, %v9268, %v9491
      %v9807 = vsel %vm1952, %v9269, %v9493
      %v9809 = vsel %vm1952, %v9270, %v9495
      %v9811 = vsel %vm1952, %v9271, %v9497
      %v9813 = vsel %vm1952, %v9272, %v9499
      %v9815 = vsel %vm1952, %v9273, %v9501
      %v9817 = vsel %vm1952, %v9274, %v9503
      %v9819 = vsel %vm2476, %v9787, %v9580
      %v9821 = vsel %vm2476, %v9789, %v9582
      %v9823 = vsel %vm2476, %v9791, %v9584
      %v9825 = vsel %vm2476, %v9793, %v9586
      %v9827 = vsel %vm2476, %v9795, %v9588
      %v9829 = vsel %vm2476, %v9797, %v9590
      %v9831 = vsel %vm2476, %v9799, %v9592
      %v9833 = vsel %vm2476, %v9801, %v9594
      %v9835 = vsel %vm2476, %v9803, %v9596
      %v9837 = vsel %vm2476, %v9805, %v9598
      %v9839 = vsel %vm2476, %v9807, %v9600
      %v9841 = vsel %vm2476, %v9809, %v9602
      %v9843 = vsel %vm2476, %v9811, %v9604
      %v9845 = vsel %vm2476, %v9813, %v9606
      %v9847 = vsel %vm2476, %v9815, %v9608
      %v9849 = vsel %vm2476, %v9817, %v9610
      %v9851 = vsel %vm2485, %v9819, %v9613
      %v9853 = vsel %vm2485, %v9821, %v9615
      %v9855 = vsel %vm2485, %v9823, %v9617
      %v9857 = vsel %vm2485, %v9825, %v9619
      %v9859 = vsel %vm2485, %v9827, %v9621
      %v9861 = vsel %vm2485, %v9829, %v9623
      %v9863 = vsel %vm2485, %v9831, %v9625
      %v9865 = vsel %vm2485, %v9833, %v9627
      %v9867 = vsel %vm2485, %v9835, %v9629
      %v9869 = vsel %vm2485, %v9837, %v9631
      %v9871 = vsel %vm2485, %v9839, %v9633
      %v9873 = vsel %vm2485, %v9841, %v9635
      %v9875 = vsel %vm2485, %v9843, %v9637
      %v9877 = vsel %vm2485, %v9845, %v9639
      %v9879 = vsel %vm2485, %v9847, %v9641
      %v9881 = vsel %vm2485, %v9849, %v9643
      %v9883 = vsel %vm2494, %v9851, %v9657
      %v9885 = vsel %vm2494, %v9853, %v9659
      %v9887 = vsel %vm2494, %v9855, %v9661
      %v9889 = vsel %vm2494, %v9857, %v9663
      %v9891 = vsel %vm2494, %v9859, %v9665
      %v9893 = vsel %vm2494, %v9861, %v9667
      %v9895 = vsel %vm2494, %v9863, %v9669
      %v9897 = vsel %vm2494, %v9865, %v9671
      %v9899 = vsel %vm2494, %v9867, %v9673
      %v9901 = vsel %vm2494, %v9869, %v9675
      %v9903 = vsel %vm2494, %v9871, %v9677
      %v9905 = vsel %vm2494, %v9873, %v9679
      %v9907 = vsel %vm2494, %v9875, %v9681
      %v9909 = vsel %vm2494, %v9877, %v9683
      %v9911 = vsel %vm2494, %v9879, %v9685
      %v9913 = vsel %vm2494, %v9881, %v9687
      %v9915 = vsel %vm2503, %v9883, %v9693
      %v9917 = vsel %vm2503, %v9885, %v9695
      %v9919 = vsel %vm2503, %v9887, %v9697
      %v9921 = vsel %vm2503, %v9889, %v9699
      %v9923 = vsel %vm2503, %v9891, %v9701
      %v9925 = vsel %vm2503, %v9893, %v9703
      %v9927 = vsel %vm2503, %v9895, %v9705
      %v9929 = vsel %vm2503, %v9897, %v9707
      %v9931 = vsel %vm2503, %v9899, %v9709
      %v9933 = vsel %vm2503, %v9901, %v9711
      %v9935 = vsel %vm2503, %v9903, %v9713
      %v9937 = vsel %vm2503, %v9905, %v9715
      %v9939 = vsel %vm2503, %v9907, %v9717
      %v9941 = vsel %vm2503, %v9909, %v9719
      %v9943 = vsel %vm2503, %v9911, %v9721
      %v9945 = vsel %vm2503, %v9913, %v9723
      %v9947 = vsel %vm2512, %v9915, %v9725
      %v9949 = vsel %vm2512, %v9917, %v9727
      %v9951 = vsel %vm2512, %v9919, %v9729
      %v9953 = vsel %vm2512, %v9921, %v9731
      %v9955 = vsel %vm2512, %v9923, %v9733
      %v9957 = vsel %vm2512, %v9925, %v9735
      %v9959 = vsel %vm2512, %v9927, %v9737
      %v9961 = vsel %vm2512, %v9929, %v9739
      %v9963 = vsel %vm2512, %v9931, %v9741
      %v9965 = vsel %vm2512, %v9933, %v9743
      %v9967 = vsel %vm2512, %v9935, %v9745
      %v9969 = vsel %vm2512, %v9937, %v9747
      %v9971 = vsel %vm2512, %v9939, %v9749
      %v9973 = vsel %vm2512, %v9941, %v9751
      %v9975 = vsel %vm2512, %v9943, %v9753
      %v9976 = vsel %vm2512, %v9945, %v6110
      %v9978 = vsel %vm2521, %v9947, %v9755
      %v9981 = vsel %vm2521, %v9949, %v9757
      %v9984 = vsel %vm2521, %v9951, %v9759
      %v9987 = vsel %vm2521, %v9953, %v9761
      %v9990 = vsel %vm2521, %v9955, %v9763
      %v9993 = vsel %vm2521, %v9957, %v9765
      %v9996 = vsel %vm2521, %v9959, %v9767
      %v9999 = vsel %vm2521, %v9961, %v9769
      %v10002 = vsel %vm2521, %v9963, %v9771
      %v10005 = vsel %vm2521, %v9965, %v9773
      %v10008 = vsel %vm2521, %v9967, %v9775
      %v10011 = vsel %vm2521, %v9969, %v9777
      %v10014 = vsel %vm2521, %v9971, %v9779
      %v10017 = vsel %vm2521, %v9973, %v9781
      %v10020 = vsel %vm2521, %v9975, %v9783
      %v10023 = vsel %vm2521, %v9976, %v9785
      %v10025 = vld [vmem:[%s47] sm:$0xf]
      %v10026 = vld [vmem:[%s47 + $0x4] sm:$0xf]
      %v10027 = vld [vmem:[%s47 + $0x8] sm:$0xf]
      %v10028 = vld [vmem:[%s47 + $0xc] sm:$0xf]
      %v10029 = vld [vmem:[%s47 + $0x10] sm:$0xf]
      %v10030 = vld [vmem:[%s47 + $0x14] sm:$0xf]
      %v10031 = vld [vmem:[%s47 + $0x18] sm:$0xf]
      %v10032 = vld [vmem:[%s47 + $0x1c] sm:$0xf]
      %v10033 = vld [vmem:[%s47 + $0x20] sm:$0xf]
      %v10034 = vld [vmem:[%s47 + $0x24] sm:$0xf]
      %v10035 = vld [vmem:[%s47 + $0x28] sm:$0xf]
      %v10036 = vld [vmem:[%s47 + $0x2c] sm:$0xf]
      %v10037 = vld [vmem:[%s47 + $0x30] sm:$0xf]
      %v10038 = vld [vmem:[%s47 + $0x34] sm:$0xf]
      %v10039 = vld [vmem:[%s47 + $0x38] sm:$0xf]
      %v10040 = vld [vmem:[%s47 + $0x3c] sm:$0xf]
      %v10041 = vld [vmem:[%s47 + $0x40] sm:$0xf]
      %v10042 = vld [vmem:[%s47 + $0x44] sm:$0xf]
      %v10043 = vld [vmem:[%s49] sm:$0x1]
      %v10045 = vlaneseq
      %v10046 = vshrl.u32 %v10045, 7
      %v10047 = vsub.s32 0, %v10046
      %v10048 = vrot.slane %v10043, %v10047
      %v10068 = vunpack.c.l.b16 %v10025
      %v10069 = vunpack.c.l.b16 %v10026
      %v10070 = vunpack.c.l.b16 %v10027
      %v10071 = vunpack.c.l.b16 %v10028
      %v10072 = vunpack.c.l.b16 %v10029
      %v10073 = vunpack.c.l.b16 %v10030
      %v10074 = vunpack.c.l.b16 %v10031
      %v10075 = vunpack.c.l.b16 %v10032
      %v10076 = vunpack.c.l.b16 %v10033
      %v10077 = vunpack.c.l.b16 %v10034
      %v10078 = vunpack.c.l.b16 %v10035
      %v10079 = vunpack.c.l.b16 %v10036
      %v10080 = vunpack.c.l.b16 %v10037
      %v10081 = vunpack.c.l.b16 %v10038
      %v10082 = vunpack.c.l.b16 %v10039
      %v10083 = vunpack.c.l.b16 %v10040
      %v10084 = vunpack.c.l.b16 %v10041
      %v10085 = vunpack.c.l.b16 %v10042
      %v10086 = vpack.c.b16 %v10069, %v10068
      %v10087 = vpack.c.b16 %v10071, %v10070
      %v10088 = vpack.c.b16 %v10073, %v10072
      %v10089 = vpack.c.b16 %v10075, %v10074
      %v10090 = vpack.c.b16 %v10077, %v10076
      %v10091 = vpack.c.b16 %v10079, %v10078
      %v10092 = vpack.c.b16 %v10081, %v10080
      %v10093 = vpack.c.b16 %v10083, %v10082
      %v10094 = vpack.c.b16 %v10085, %v10084
      %v10105 = vsel %vm1952, %v9539, 0
      %v10108 = vsel %vm1952, %v9542, 0
      %v10111 = vsel %vm1952, %v9545, 0
      %v10114 = vsel %vm1952, %v9548, 0
      %v10117 = vsel %vm1952, %v9551, 0
      %v10120 = vsel %vm1952, %v9554, 0
      %v10123 = vsel %vm1952, %v9557, 0
      %v10126 = vsel %vm1952, %v9560, 0
      %v10129 = vsel %vm1952, %v9563, 0
      %v10132 = vsel %vm1952, %v9566, 0
      %v10135 = vsel %vm1952, %v9569, 0
      %v10138 = vsel %vm1952, %v9572, 0
      %v10141 = vsel %vm1952, %v9575, 0
      %v10144 = vsel %vm1952, %v9578, 0
      %v10147 = vsel %vm1952, %v9691, 0
      %v10149 = vsel %vm1952, %v7527, 0
      %10151 = vmatprep.subr.bf16.mxu0 0
      %10152 = vmatpush1.bf16.msra.mxu0 %v10093
      %10153 = vmatprep.subr.bf16.mxu0 0
      %10154 = vmatpush1.bf16.msra.mxu0 %v10092
      %10155 = vmatprep.subr.bf16.mxu0 0
      %10156 = vmatpush1.bf16.msra.mxu0 %v10091
      %10157 = vmatprep.subr.bf16.mxu0 0
      %10158 = vmatpush1.bf16.msra.mxu0 %v10090
      %10159 = vmatprep.subr.bf16.mxu0 0
      %10160 = vmatpush1.bf16.msra.mxu0 %v10089
      %10161 = vmatprep.subr.bf16.mxu0 0
      %10162 = vmatpush1.bf16.msra.mxu0 %v10088
      %10163 = vmatprep.subr.bf16.mxu0 0
      %10164 = vmatpush1.bf16.msra.mxu0 %v10087
      %10165 = vmatprep.subr.bf16.mxu0 0
      %10166 = vmatpush1.bf16.msra.mxu0 %v10086
      %10167 = vmatprep.subr.bf16.mxu0 0
      %10168 = vmatpush2.bf16.msra.mxu0 0
      %10169 = vmatprep.subr.bf16.mxu0 0
      %10170 = vmatpush2.bf16.msra.mxu0 0
      %10171 = vmatprep.subr.bf16.mxu0 0
      %10172 = vmatpush2.bf16.msra.mxu0 0
      %10173 = vmatprep.subr.bf16.mxu0 0
      %10174 = vmatpush2.bf16.msra.mxu0 0
      %10175 = vmatprep.subr.bf16.mxu0 0
      %10176 = vmatpush2.bf16.msra.mxu0 0
      %10177 = vmatprep.subr.bf16.mxu0 0
      %10178 = vmatpush2.bf16.msra.mxu0 0
      %10179 = vmatprep.subr.bf16.mxu0 0
      %10180 = vmatpush2.bf16.msra.mxu0 0
      %10181 = vmatprep.subr.bf16.mxu0 0
      %10182 = vmatpush2.bf16.msra.mxu0 %v10094
      %10183 = vmatprep.mubr.bf16.mxu0 %v10105
      %10184 = vmatmul.mubr.bf16.gmra.mxu0 %v9978
      %v10185 = vpop.f32.mrf.mxu0
      %v10186 = vadd.f32 %v10048, %v10185
      %v10187 = vpop.f32.mrf.mxu0
      %v10188 = vpop.f32.mrf.mxu0
      %v10189 = vadd.f32 %v10048, %v10188
      %v10190 = vpop.f32.mrf.mxu0
      %10191 = vmatprep.mubr.bf16.mxu0 %v10108
      %10192 = vmatmul.mubr.bf16.gmra.mxu0 %v9981
      %v10193 = vpop.f32.mrf.mxu0
      %v10194 = vadd.f32 %v10048, %v10193
      %v10195 = vpop.f32.mrf.mxu0
      %v10196 = vpop.f32.mrf.mxu0
      %v10197 = vadd.f32 %v10048, %v10196
      %v10198 = vpop.f32.mrf.mxu0
      %10199 = vmatprep.mubr.bf16.mxu0 %v10111
      %10200 = vmatmul.mubr.bf16.gmra.mxu0 %v9984
      %v10201 = vpop.f32.mrf.mxu0
      %v10202 = vadd.f32 %v10048, %v10201
      %v10203 = vpop.f32.mrf.mxu0
      %v10204 = vpop.f32.mrf.mxu0
      %v10205 = vadd.f32 %v10048, %v10204
      %v10206 = vpop.f32.mrf.mxu0
      %10207 = vmatprep.mubr.bf16.mxu0 %v10114
      %10208 = vmatmul.mubr.bf16.gmra.mxu0 %v9987
      %v10209 = vpop.f32.mrf.mxu0
      %v10210 = vadd.f32 %v10048, %v10209
      %v10211 = vpop.f32.mrf.mxu0
      %v10212 = vpop.f32.mrf.mxu0
      %v10213 = vadd.f32 %v10048, %v10212
      %v10214 = vpop.f32.mrf.mxu0
      %10215 = vmatprep.mubr.bf16.mxu0 %v10117
      %10216 = vmatmul.mubr.bf16.gmra.mxu0 %v9990
      %v10217 = vpop.f32.mrf.mxu0
      %v10218 = vadd.f32 %v10048, %v10217
      %v10219 = vpop.f32.mrf.mxu0
      %v10220 = vpop.f32.mrf.mxu0
      %v10221 = vadd.f32 %v10048, %v10220
      %v10222 = vpop.f32.mrf.mxu0
      %10223 = vmatprep.mubr.bf16.mxu0 %v10120
      %10224 = vmatmul.mubr.bf16.gmra.mxu0 %v9993
      %v10225 = vpop.f32.mrf.mxu0
      %v10226 = vadd.f32 %v10048, %v10225
      %v10227 = vpop.f32.mrf.mxu0
      %v10228 = vpop.f32.mrf.mxu0
      %v10229 = vadd.f32 %v10048, %v10228
      %v10230 = vpop.f32.mrf.mxu0
      %10231 = vmatprep.mubr.bf16.mxu0 %v10123
      %10232 = vmatmul.mubr.bf16.gmra.mxu0 %v9996
      %v10233 = vpop.f32.mrf.mxu0
      %v10234 = vadd.f32 %v10048, %v10233
      %v10235 = vpop.f32.mrf.mxu0
      %v10236 = vpop.f32.mrf.mxu0
      %v10237 = vadd.f32 %v10048, %v10236
      %v10238 = vpop.f32.mrf.mxu0
      %10239 = vmatprep.mubr.bf16.mxu0 %v10126
      %10240 = vmatmul.mubr.bf16.gmra.mxu0 %v9999
      %v10241 = vpop.f32.mrf.mxu0
      %v10242 = vadd.f32 %v10048, %v10241
      %v10243 = vpop.f32.mrf.mxu0
      %v10244 = vpop.f32.mrf.mxu0
      %v10245 = vadd.f32 %v10048, %v10244
      %v10246 = vpop.f32.mrf.mxu0
      %10247 = vmatprep.mubr.bf16.mxu0 %v10129
      %10248 = vmatmul.mubr.bf16.gmra.mxu0 %v10002
      %v10249 = vpop.f32.mrf.mxu0
      %v10250 = vadd.f32 %v10048, %v10249
      %v10251 = vpop.f32.mrf.mxu0
      %v10252 = vpop.f32.mrf.mxu0
      %v10253 = vadd.f32 %v10048, %v10252
      %v10254 = vpop.f32.mrf.mxu0
      %10255 = vmatprep.mubr.bf16.mxu0 %v10132
      %10256 = vmatmul.mubr.bf16.gmra.mxu0 %v10005
      %v10257 = vpop.f32.mrf.mxu0
      %v10258 = vadd.f32 %v10048, %v10257
      %v10259 = vpop.f32.mrf.mxu0
      %v10260 = vpop.f32.mrf.mxu0
      %v10261 = vadd.f32 %v10048, %v10260
      %v10262 = vpop.f32.mrf.mxu0
      %10263 = vmatprep.mubr.bf16.mxu0 %v10135
      %10264 = vmatmul.mubr.bf16.gmra.mxu0 %v10008
      %v10265 = vpop.f32.mrf.mxu0
      %v10266 = vadd.f32 %v10048, %v10265
      %v10267 = vpop.f32.mrf.mxu0
      %v10268 = vpop.f32.mrf.mxu0
      %v10269 = vadd.f32 %v10048, %v10268
      %v10270 = vpop.f32.mrf.mxu0
      %10271 = vmatprep.mubr.bf16.mxu0 %v10138
      %10272 = vmatmul.mubr.bf16.gmra.mxu0 %v10011
      %v10273 = vpop.f32.mrf.mxu0
      %v10274 = vadd.f32 %v10048, %v10273
      %v10275 = vpop.f32.mrf.mxu0
      %v10276 = vpop.f32.mrf.mxu0
      %v10277 = vadd.f32 %v10048, %v10276
      %v10278 = vpop.f32.mrf.mxu0
      %10279 = vmatprep.mubr.bf16.mxu0 %v10141
      %10280 = vmatmul.mubr.bf16.gmra.mxu0 %v10014
      %v10281 = vpop.f32.mrf.mxu0
      %v10282 = vadd.f32 %v10048, %v10281
      %v10283 = vpop.f32.mrf.mxu0
      %v10284 = vpop.f32.mrf.mxu0
      %v10285 = vadd.f32 %v10048, %v10284
      %v10286 = vpop.f32.mrf.mxu0
      %10287 = vmatprep.mubr.bf16.mxu0 %v10144
      %10288 = vmatmul.mubr.bf16.gmra.mxu0 %v10017
      %v10289 = vpop.f32.mrf.mxu0
      %v10290 = vadd.f32 %v10048, %v10289
      %v10291 = vpop.f32.mrf.mxu0
      %v10292 = vpop.f32.mrf.mxu0
      %v10293 = vadd.f32 %v10048, %v10292
      %v10294 = vpop.f32.mrf.mxu0
      %10295 = vmatprep.mubr.bf16.mxu0 %v10147
      %10296 = vmatmul.mubr.bf16.gmra.mxu0 %v10020
      %v10297 = vpop.f32.mrf.mxu0
      %v10298 = vadd.f32 %v10048, %v10297
      %v10299 = vpop.f32.mrf.mxu0
      %v10300 = vpop.f32.mrf.mxu0
      %v10301 = vadd.f32 %v10048, %v10300
      %v10302 = vpop.f32.mrf.mxu0
      %10303 = vmatprep.mubr.bf16.mxu0 %v10149
      %10304 = vmatmul.mubr.bf16.gmra.mxu0 %v10023
      %v10305 = vpop.f32.mrf.mxu0
      %v10306 = vadd.f32 %v10048, %v10305
      %v10307 = vpop.f32.mrf.mxu0
      %v10308 = vpop.f32.mrf.mxu0
      %v10309 = vadd.f32 %v10048, %v10308
      %v10310 = vpop.f32.mrf.mxu0
      %10311 = vdwg.mxu0
      %v10312 = vpack.c.bf16 %v10189, %v10186
      %v10313 = vpack.c.bf16 %v10197, %v10194
      %v10314 = vpack.c.bf16 %v10205, %v10202
      %v10315 = vpack.c.bf16 %v10213, %v10210
      %v10316 = vpack.c.bf16 %v10221, %v10218
      %v10317 = vpack.c.bf16 %v10229, %v10226
      %v10318 = vpack.c.bf16 %v10237, %v10234
      %v10319 = vpack.c.bf16 %v10245, %v10242
      %v10320 = vpack.c.bf16 %v10253, %v10250
      %v10321 = vpack.c.bf16 %v10261, %v10258
      %v10322 = vpack.c.bf16 %v10269, %v10266
      %v10323 = vpack.c.bf16 %v10277, %v10274
      %v10324 = vpack.c.bf16 %v10285, %v10282
      %v10325 = vpack.c.bf16 %v10293, %v10290
      %v10326 = vpack.c.bf16 %v10301, %v10298
      %v10327 = vpack.c.bf16 %v10309, %v10306
      %v10329 = vshrl.u32 %v10312, 16
      %v10331 = vrot.slane %v10329, 7
      %v10332 = vshll.u32 %v10312, 16
      %v10334 = vor.u32 %v10331, %v10332
      %v10336 = vshrl.u32 %v10313, 16
      %v10338 = vrot.slane %v10336, 7
      %v10339 = vshll.u32 %v10313, 16
      %v10341 = vor.u32 %v10338, %v10339
      %v10343 = vshrl.u32 %v10314, 16
      %v10345 = vrot.slane %v10343, 7
      %v10346 = vshll.u32 %v10314, 16
      %v10348 = vor.u32 %v10345, %v10346
      %v10350 = vshrl.u32 %v10315, 16
      %v10352 = vrot.slane %v10350, 7
      %v10353 = vshll.u32 %v10315, 16
      %v10355 = vor.u32 %v10352, %v10353
      %v10357 = vshrl.u32 %v10316, 16
      %v10359 = vrot.slane %v10357, 7
      %v10360 = vshll.u32 %v10316, 16
      %v10362 = vor.u32 %v10359, %v10360
      %v10364 = vshrl.u32 %v10317, 16
      %v10366 = vrot.slane %v10364, 7
      %v10367 = vshll.u32 %v10317, 16
      %v10369 = vor.u32 %v10366, %v10367
      %v10371 = vshrl.u32 %v10318, 16
      %v10373 = vrot.slane %v10371, 7
      %v10374 = vshll.u32 %v10318, 16
      %v10376 = vor.u32 %v10373, %v10374
      %v10378 = vshrl.u32 %v10319, 16
      %v10380 = vrot.slane %v10378, 7
      %v10381 = vshll.u32 %v10319, 16
      %v10383 = vor.u32 %v10380, %v10381
      %v10385 = vshrl.u32 %v10320, 16
      %v10387 = vrot.slane %v10385, 7
      %v10388 = vshll.u32 %v10320, 16
      %v10390 = vor.u32 %v10387, %v10388
      %v10392 = vshrl.u32 %v10321, 16
      %v10394 = vrot.slane %v10392, 7
      %v10395 = vshll.u32 %v10321, 16
      %v10397 = vor.u32 %v10394, %v10395
      %v10399 = vshrl.u32 %v10322, 16
      %v10401 = vrot.slane %v10399, 7
      %v10402 = vshll.u32 %v10322, 16
      %v10404 = vor.u32 %v10401, %v10402
      %v10406 = vshrl.u32 %v10323, 16
      %v10408 = vrot.slane %v10406, 7
      %v10409 = vshll.u32 %v10323, 16
      %v10411 = vor.u32 %v10408, %v10409
      %v10413 = vshrl.u32 %v10324, 16
      %v10415 = vrot.slane %v10413, 7
      %v10416 = vshll.u32 %v10324, 16
      %v10418 = vor.u32 %v10415, %v10416
      %v10420 = vshrl.u32 %v10325, 16
      %v10422 = vrot.slane %v10420, 7
      %v10423 = vshll.u32 %v10325, 16
      %v10425 = vor.u32 %v10422, %v10423
      %v10427 = vshrl.u32 %v10326, 16
      %v10429 = vrot.slane %v10427, 7
      %v10430 = vshll.u32 %v10326, 16
      %v10432 = vor.u32 %v10429, %v10430
      %v10434 = vshrl.u32 %v10327, 16
      %v10436 = vrot.slane %v10434, 7
      %v10437 = vshll.u32 %v10327, 16
      %v10439 = vor.u32 %v10436, %v10437
      %v10472 = vsel %vm1298, 0, %v10334
      %v10473 = vsel %vm1298, 0, %v10341
      %v10474 = vsel %vm1298, 0, %v10348
      %v10475 = vsel %vm1298, 0, %v10355
      %v10476 = vsel %vm1298, 0, %v10362
      %v10477 = vsel %vm1298, 0, %v10369
      %v10478 = vsel %vm1298, 0, %v10376
      %v10479 = vsel %vm1298, 0, %v10383
      %v10480 = vsel %vm1298, 0, %v10390
      %v10481 = vsel %vm1298, 0, %v10397
      %v10482 = vsel %vm1298, 0, %v10404
      %v10483 = vsel %vm1298, 0, %v10411
      %v10484 = vsel %vm1298, 0, %v10418
      %v10485 = vsel %vm1298, 0, %v10425
      %v10486 = vsel %vm1298, 0, %v10432
      %v10487 = vsel %vm1298, 0, %v10439
      %v10488 = vsel %vm1298, %v10331, 0
      %v10489 = vsel %vm1298, %v10338, 0
      %v10490 = vsel %vm1298, %v10345, 0
      %v10491 = vsel %vm1298, %v10352, 0
      %v10492 = vsel %vm1298, %v10359, 0
      %v10493 = vsel %vm1298, %v10366, 0
      %v10494 = vsel %vm1298, %v10373, 0
      %v10495 = vsel %vm1298, %v10380, 0
      %v10496 = vsel %vm1298, %v10387, 0
      %v10497 = vsel %vm1298, %v10394, 0
      %v10498 = vsel %vm1298, %v10401, 0
      %v10499 = vsel %vm1298, %v10408, 0
      %v10500 = vsel %vm1298, %v10415, 0
      %v10501 = vsel %vm1298, %v10422, 0
      %v10502 = vsel %vm1298, %v10429, 0
      %v10503 = vsel %vm1298, %v10436, 0
      %v10505 = vshrl.u32 %v10472, 16
      %v10507 = vshll.u32 %v10472, 16
      %v10509 = vrot.slane %v10507, 1
      %v10510 = vor.u32 %v10505, %v10509
      %v10512 = vshll.u32 %v10488, 16
      %v10514 = vrot.slane %v10512, 1
      %v10515 = vsel %vm1414, %v10510, %v10514
      %v10517 = vshrl.u32 %v10473, 16
      %v10519 = vshll.u32 %v10473, 16
      %v10521 = vrot.slane %v10519, 1
      %v10522 = vor.u32 %v10517, %v10521
      %v10524 = vshll.u32 %v10489, 16
      %v10526 = vrot.slane %v10524, 1
      %v10527 = vsel %vm1414, %v10522, %v10526
      %v10529 = vshrl.u32 %v10474, 16
      %v10531 = vshll.u32 %v10474, 16
      %v10533 = vrot.slane %v10531, 1
      %v10534 = vor.u32 %v10529, %v10533
      %v10536 = vshll.u32 %v10490, 16
      %v10538 = vrot.slane %v10536, 1
      %v10539 = vsel %vm1414, %v10534, %v10538
      %v10541 = vshrl.u32 %v10475, 16
      %v10543 = vshll.u32 %v10475, 16
      %v10545 = vrot.slane %v10543, 1
      %v10546 = vor.u32 %v10541, %v10545
      %v10548 = vshll.u32 %v10491, 16
      %v10550 = vrot.slane %v10548, 1
      %v10551 = vsel %vm1414, %v10546, %v10550
      %v10553 = vshrl.u32 %v10476, 16
      %v10555 = vshll.u32 %v10476, 16
      %v10557 = vrot.slane %v10555, 1
      %v10558 = vor.u32 %v10553, %v10557
      %v10560 = vshll.u32 %v10492, 16
      %v10562 = vrot.slane %v10560, 1
      %v10563 = vsel %vm1414, %v10558, %v10562
      %v10565 = vshrl.u32 %v10477, 16
      %v10567 = vshll.u32 %v10477, 16
      %v10569 = vrot.slane %v10567, 1
      %v10570 = vor.u32 %v10565, %v10569
      %v10572 = vshll.u32 %v10493, 16
      %v10574 = vrot.slane %v10572, 1
      %v10575 = vsel %vm1414, %v10570, %v10574
      %v10577 = vshrl.u32 %v10478, 16
      %v10579 = vshll.u32 %v10478, 16
      %v10581 = vrot.slane %v10579, 1
      %v10582 = vor.u32 %v10577, %v10581
      %v10584 = vshll.u32 %v10494, 16
      %v10586 = vrot.slane %v10584, 1
      %v10587 = vsel %vm1414, %v10582, %v10586
      %v10589 = vshrl.u32 %v10479, 16
      %v10591 = vshll.u32 %v10479, 16
      %v10593 = vrot.slane %v10591, 1
      %v10594 = vor.u32 %v10589, %v10593
      %v10596 = vshll.u32 %v10495, 16
      %v10598 = vrot.slane %v10596, 1
      %v10599 = vsel %vm1414, %v10594, %v10598
      %v10601 = vshrl.u32 %v10480, 16
      %v10603 = vshll.u32 %v10480, 16
      %v10605 = vrot.slane %v10603, 1
      %v10606 = vor.u32 %v10601, %v10605
      %v10608 = vshll.u32 %v10496, 16
      %v10610 = vrot.slane %v10608, 1
      %v10611 = vsel %vm1414, %v10606, %v10610
      %v10613 = vshrl.u32 %v10481, 16
      %v10615 = vshll.u32 %v10481, 16
      %v10617 = vrot.slane %v10615, 1
      %v10618 = vor.u32 %v10613, %v10617
      %v10620 = vshll.u32 %v10497, 16
      %v10622 = vrot.slane %v10620, 1
      %v10623 = vsel %vm1414, %v10618, %v10622
      %v10625 = vshrl.u32 %v10482, 16
      %v10627 = vshll.u32 %v10482, 16
      %v10629 = vrot.slane %v10627, 1
      %v10630 = vor.u32 %v10625, %v10629
      %v10632 = vshll.u32 %v10498, 16
      %v10634 = vrot.slane %v10632, 1
      %v10635 = vsel %vm1414, %v10630, %v10634
      %v10637 = vshrl.u32 %v10483, 16
      %v10639 = vshll.u32 %v10483, 16
      %v10641 = vrot.slane %v10639, 1
      %v10642 = vor.u32 %v10637, %v10641
      %v10644 = vshll.u32 %v10499, 16
      %v10646 = vrot.slane %v10644, 1
      %v10647 = vsel %vm1414, %v10642, %v10646
      %v10649 = vshrl.u32 %v10484, 16
      %v10651 = vshll.u32 %v10484, 16
      %v10653 = vrot.slane %v10651, 1
      %v10654 = vor.u32 %v10649, %v10653
      %v10656 = vshll.u32 %v10500, 16
      %v10658 = vrot.slane %v10656, 1
      %v10659 = vsel %vm1414, %v10654, %v10658
      %v10661 = vshrl.u32 %v10485, 16
      %v10663 = vshll.u32 %v10485, 16
      %v10665 = vrot.slane %v10663, 1
      %v10666 = vor.u32 %v10661, %v10665
      %v10668 = vshll.u32 %v10501, 16
      %v10670 = vrot.slane %v10668, 1
      %v10671 = vsel %vm1414, %v10666, %v10670
      %v10673 = vshrl.u32 %v10486, 16
      %v10675 = vshll.u32 %v10486, 16
      %v10677 = vrot.slane %v10675, 1
      %v10678 = vor.u32 %v10673, %v10677
      %v10680 = vshll.u32 %v10502, 16
      %v10682 = vrot.slane %v10680, 1
      %v10683 = vsel %vm1414, %v10678, %v10682
      %10684 = vrot.lane.b32.xlu0 %v10515, 16
      %v10685 = vpop.permute.xlu0 %10684
      %10686 = vrot.lane.b32.xlu0 %v10527, 16
      %v10687 = vpop.permute.xlu0 %10686
      %10688 = vrot.lane.b32.xlu0 %v10539, 16
      %v10689 = vpop.permute.xlu0 %10688
      %10690 = vrot.lane.b32.xlu0 %v10551, 16
      %v10691 = vpop.permute.xlu0 %10690
      %10692 = vrot.lane.b32.xlu0 %v10563, 16
      %v10693 = vpop.permute.xlu0 %10692
      %10694 = vrot.lane.b32.xlu0 %v10575, 16
      %v10695 = vpop.permute.xlu0 %10694
      %10696 = vrot.lane.b32.xlu0 %v10587, 16
      %v10697 = vpop.permute.xlu0 %10696
      %10698 = vrot.lane.b32.xlu0 %v10599, 16
      %v10699 = vpop.permute.xlu0 %10698
      %10700 = vrot.lane.b32.xlu0 %v10611, 16
      %v10701 = vpop.permute.xlu0 %10700
      %10702 = vrot.lane.b32.xlu0 %v10623, 16
      %v10703 = vpop.permute.xlu0 %10702
      %10704 = vrot.lane.b32.xlu0 %v10635, 16
      %v10705 = vpop.permute.xlu0 %10704
      %10706 = vrot.lane.b32.xlu0 %v10647, 16
      %v10707 = vpop.permute.xlu0 %10706
      %10708 = vrot.lane.b32.xlu0 %v10659, 16
      %v10709 = vpop.permute.xlu0 %10708
      %10710 = vrot.lane.b32.xlu0 %v10671, 16
      %v10711 = vpop.permute.xlu0 %10710
      %10712 = vrot.lane.b32.xlu0 %v10683, 16
      %v10713 = vpop.permute.xlu0 %10712
      %v10744 = vrot.slane %v10472, 1
      %v10745 = vrot.slane %v10488, 1
      %v10746 = vsel %vm1543, %v10744, %v10745
      %v10747 = vrot.slane %v10473, 1
      %v10748 = vrot.slane %v10489, 1
      %v10749 = vsel %vm1543, %v10747, %v10748
      %v10750 = vrot.slane %v10474, 1
      %v10751 = vrot.slane %v10490, 1
      %v10752 = vsel %vm1543, %v10750, %v10751
      %v10753 = vrot.slane %v10475, 1
      %v10754 = vrot.slane %v10491, 1
      %v10755 = vsel %vm1543, %v10753, %v10754
      %v10756 = vrot.slane %v10476, 1
      %v10757 = vrot.slane %v10492, 1
      %v10758 = vsel %vm1543, %v10756, %v10757
      %v10759 = vrot.slane %v10477, 1
      %v10760 = vrot.slane %v10493, 1
      %v10761 = vsel %vm1543, %v10759, %v10760
      %v10762 = vrot.slane %v10478, 1
      %v10763 = vrot.slane %v10494, 1
      %v10764 = vsel %vm1543, %v10762, %v10763
      %v10765 = vrot.slane %v10479, 1
      %v10766 = vrot.slane %v10495, 1
      %v10767 = vsel %vm1543, %v10765, %v10766
      %v10768 = vrot.slane %v10480, 1
      %v10769 = vrot.slane %v10496, 1
      %v10770 = vsel %vm1543, %v10768, %v10769
      %v10771 = vrot.slane %v10481, 1
      %v10772 = vrot.slane %v10497, 1
      %v10773 = vsel %vm1543, %v10771, %v10772
      %v10774 = vrot.slane %v10482, 1
      %v10775 = vrot.slane %v10498, 1
      %v10776 = vsel %vm1543, %v10774, %v10775
      %v10777 = vrot.slane %v10483, 1
      %v10778 = vrot.slane %v10499, 1
      %v10779 = vsel %vm1543, %v10777, %v10778
      %v10780 = vrot.slane %v10484, 1
      %v10781 = vrot.slane %v10500, 1
      %v10782 = vsel %vm1543, %v10780, %v10781
      %v10783 = vrot.slane %v10485, 1
      %v10784 = vrot.slane %v10501, 1
      %v10785 = vsel %vm1543, %v10783, %v10784
      %v10786 = vrot.slane %v10486, 1
      %v10787 = vrot.slane %v10502, 1
      %v10788 = vsel %vm1543, %v10786, %v10787
      %10789 = vrot.lane.b32.xlu0 %v10746, 32
      %v10790 = vpop.permute.xlu0 %10789
      %10791 = vrot.lane.b32.xlu0 %v10749, 32
      %v10792 = vpop.permute.xlu0 %10791
      %10793 = vrot.lane.b32.xlu0 %v10752, 32
      %v10794 = vpop.permute.xlu0 %10793
      %10795 = vrot.lane.b32.xlu0 %v10755, 32
      %v10796 = vpop.permute.xlu0 %10795
      %10797 = vrot.lane.b32.xlu0 %v10758, 32
      %v10798 = vpop.permute.xlu0 %10797
      %10799 = vrot.lane.b32.xlu0 %v10761, 32
      %v10800 = vpop.permute.xlu0 %10799
      %10801 = vrot.lane.b32.xlu0 %v10764, 32
      %v10802 = vpop.permute.xlu0 %10801
      %10803 = vrot.lane.b32.xlu0 %v10767, 32
      %v10804 = vpop.permute.xlu0 %10803
      %10805 = vrot.lane.b32.xlu0 %v10770, 32
      %v10806 = vpop.permute.xlu0 %10805
      %10807 = vrot.lane.b32.xlu0 %v10773, 32
      %v10808 = vpop.permute.xlu0 %10807
      %10809 = vrot.lane.b32.xlu0 %v10776, 32
      %v10810 = vpop.permute.xlu0 %10809
      %10811 = vrot.lane.b32.xlu0 %v10779, 32
      %v10812 = vpop.permute.xlu0 %10811
      %10813 = vrot.lane.b32.xlu0 %v10782, 32
      %v10814 = vpop.permute.xlu0 %10813
      %10815 = vrot.lane.b32.xlu0 %v10785, 32
      %v10816 = vpop.permute.xlu0 %10815
      %10817 = vrot.lane.b32.xlu0 %v10788, 32
      %v10818 = vpop.permute.xlu0 %10817
      %10820 = vrot.lane.b32.xlu0 %v10472, 48
      %v10821 = vpop.permute.xlu0 %10820
      %10822 = vrot.lane.b32.xlu0 %v10473, 48
      %v10823 = vpop.permute.xlu0 %10822
      %10824 = vrot.lane.b32.xlu0 %v10474, 48
      %v10825 = vpop.permute.xlu0 %10824
      %10826 = vrot.lane.b32.xlu0 %v10475, 48
      %v10827 = vpop.permute.xlu0 %10826
      %10828 = vrot.lane.b32.xlu0 %v10476, 48
      %v10829 = vpop.permute.xlu0 %10828
      %10830 = vrot.lane.b32.xlu0 %v10477, 48
      %v10831 = vpop.permute.xlu0 %10830
      %10832 = vrot.lane.b32.xlu0 %v10478, 48
      %v10833 = vpop.permute.xlu0 %10832
      %10834 = vrot.lane.b32.xlu0 %v10479, 48
      %v10835 = vpop.permute.xlu0 %10834
      %10836 = vrot.lane.b32.xlu0 %v10480, 48
      %v10837 = vpop.permute.xlu0 %10836
      %10838 = vrot.lane.b32.xlu0 %v10481, 48
      %v10839 = vpop.permute.xlu0 %10838
      %10840 = vrot.lane.b32.xlu0 %v10482, 48
      %v10841 = vpop.permute.xlu0 %10840
      %10842 = vrot.lane.b32.xlu0 %v10483, 48
      %v10843 = vpop.permute.xlu0 %10842
      %10844 = vrot.lane.b32.xlu0 %v10484, 48
      %v10845 = vpop.permute.xlu0 %10844
      %10846 = vrot.lane.b32.xlu0 %v10485, 48
      %v10847 = vpop.permute.xlu0 %10846
      %10848 = vrot.lane.b32.xlu0 %v10486, 48
      %v10849 = vpop.permute.xlu0 %10848
      %10850 = vrot.lane.b32.xlu0 %v10487, 48
      %v10851 = vpop.permute.xlu0 %10850
      %v10853 = vshrl.u32 %v10487, 16
      %v10855 = vshll.u32 %v10487, 16
      %v10857 = vrot.slane %v10855, 1
      %v10858 = vor.u32 %v10853, %v10857
      %v10860 = vshll.u32 %v10503, 16
      %v10862 = vrot.slane %v10860, 1
      %v10863 = vsel %vm1414, %v10858, %v10862
      %10864 = vrot.lane.b32.xlu0 %v10515, 64
      %v10865 = vpop.permute.xlu0 %10864
      %10866 = vrot.lane.b32.xlu0 %v10527, 64
      %v10867 = vpop.permute.xlu0 %10866
      %10868 = vrot.lane.b32.xlu0 %v10539, 64
      %v10869 = vpop.permute.xlu0 %10868
      %10870 = vrot.lane.b32.xlu0 %v10551, 64
      %v10871 = vpop.permute.xlu0 %10870
      %10872 = vrot.lane.b32.xlu0 %v10563, 64
      %v10873 = vpop.permute.xlu0 %10872
      %10874 = vrot.lane.b32.xlu0 %v10575, 64
      %v10875 = vpop.permute.xlu0 %10874
      %10876 = vrot.lane.b32.xlu0 %v10587, 64
      %v10877 = vpop.permute.xlu0 %10876
      %10878 = vrot.lane.b32.xlu0 %v10599, 64
      %v10879 = vpop.permute.xlu0 %10878
      %10880 = vrot.lane.b32.xlu0 %v10611, 64
      %v10881 = vpop.permute.xlu0 %10880
      %10882 = vrot.lane.b32.xlu0 %v10623, 64
      %v10883 = vpop.permute.xlu0 %10882
      %10884 = vrot.lane.b32.xlu0 %v10635, 64
      %v10885 = vpop.permute.xlu0 %10884
      %10886 = vrot.lane.b32.xlu0 %v10647, 64
      %v10887 = vpop.permute.xlu0 %10886
      %10888 = vrot.lane.b32.xlu0 %v10659, 64
      %v10889 = vpop.permute.xlu0 %10888
      %10890 = vrot.lane.b32.xlu0 %v10671, 64
      %v10891 = vpop.permute.xlu0 %10890
      %10892 = vrot.lane.b32.xlu0 %v10683, 64
      %v10893 = vpop.permute.xlu0 %10892
      %10894 = vrot.lane.b32.xlu0 %v10863, 64
      %v10895 = vpop.permute.xlu0 %10894
      %v10897 = vrot.slane %v10487, 1
      %v10898 = vrot.slane %v10503, 1
      %v10899 = vsel %vm1543, %v10897, %v10898
      %10900 = vrot.lane.b32.xlu0 %v10746, 80
      %v10901 = vpop.permute.xlu0 %10900
      %10902 = vrot.lane.b32.xlu0 %v10749, 80
      %v10903 = vpop.permute.xlu0 %10902
      %10904 = vrot.lane.b32.xlu0 %v10752, 80
      %v10905 = vpop.permute.xlu0 %10904
      %10906 = vrot.lane.b32.xlu0 %v10755, 80
      %v10907 = vpop.permute.xlu0 %10906
      %10908 = vrot.lane.b32.xlu0 %v10758, 80
      %v10909 = vpop.permute.xlu0 %10908
      %10910 = vrot.lane.b32.xlu0 %v10761, 80
      %v10911 = vpop.permute.xlu0 %10910
      %10912 = vrot.lane.b32.xlu0 %v10764, 80
      %v10913 = vpop.permute.xlu0 %10912
      %10914 = vrot.lane.b32.xlu0 %v10767, 80
      %v10915 = vpop.permute.xlu0 %10914
      %10916 = vrot.lane.b32.xlu0 %v10770, 80
      %v10917 = vpop.permute.xlu0 %10916
      %10918 = vrot.lane.b32.xlu0 %v10773, 80
      %v10919 = vpop.permute.xlu0 %10918
      %10920 = vrot.lane.b32.xlu0 %v10776, 80
      %v10921 = vpop.permute.xlu0 %10920
      %10922 = vrot.lane.b32.xlu0 %v10779, 80
      %v10923 = vpop.permute.xlu0 %10922
      %10924 = vrot.lane.b32.xlu0 %v10782, 80
      %v10925 = vpop.permute.xlu0 %10924
      %10926 = vrot.lane.b32.xlu0 %v10785, 80
      %v10927 = vpop.permute.xlu0 %10926
      %10928 = vrot.lane.b32.xlu0 %v10788, 80
      %v10929 = vpop.permute.xlu0 %10928
      %10930 = vrot.lane.b32.xlu0 %v10899, 80
      %v10931 = vpop.permute.xlu0 %10930
      %10932 = vrot.lane.b32.xlu0 %v10473, 96
      %v10933 = vpop.permute.xlu0 %10932
      %10934 = vrot.lane.b32.xlu0 %v10474, 96
      %v10935 = vpop.permute.xlu0 %10934
      %10936 = vrot.lane.b32.xlu0 %v10475, 96
      %v10937 = vpop.permute.xlu0 %10936
      %10938 = vrot.lane.b32.xlu0 %v10476, 96
      %v10939 = vpop.permute.xlu0 %10938
      %10940 = vrot.lane.b32.xlu0 %v10477, 96
      %v10941 = vpop.permute.xlu0 %10940
      %10942 = vrot.lane.b32.xlu0 %v10478, 96
      %v10943 = vpop.permute.xlu0 %10942
      %10944 = vrot.lane.b32.xlu0 %v10479, 96
      %v10945 = vpop.permute.xlu0 %10944
      %10946 = vrot.lane.b32.xlu0 %v10480, 96
      %v10947 = vpop.permute.xlu0 %10946
      %10948 = vrot.lane.b32.xlu0 %v10481, 96
      %v10949 = vpop.permute.xlu0 %10948
      %10950 = vrot.lane.b32.xlu0 %v10482, 96
      %v10951 = vpop.permute.xlu0 %10950
      %10952 = vrot.lane.b32.xlu0 %v10483, 96
      %v10953 = vpop.permute.xlu0 %10952
      %10954 = vrot.lane.b32.xlu0 %v10484, 96
      %v10955 = vpop.permute.xlu0 %10954
      %10956 = vrot.lane.b32.xlu0 %v10485, 96
      %v10957 = vpop.permute.xlu0 %10956
      %10958 = vrot.lane.b32.xlu0 %v10486, 96
      %v10959 = vpop.permute.xlu0 %10958
      %10960 = vrot.lane.b32.xlu0 %v10487, 96
      %v10961 = vpop.permute.xlu0 %10960
      %10962 = vrot.lane.b32.xlu0 %v10527, 112
      %v10963 = vpop.permute.xlu0 %10962
      %10964 = vrot.lane.b32.xlu0 %v10539, 112
      %v10965 = vpop.permute.xlu0 %10964
      %10966 = vrot.lane.b32.xlu0 %v10551, 112
      %v10967 = vpop.permute.xlu0 %10966
      %10968 = vrot.lane.b32.xlu0 %v10563, 112
      %v10969 = vpop.permute.xlu0 %10968
      %10970 = vrot.lane.b32.xlu0 %v10575, 112
      %v10971 = vpop.permute.xlu0 %10970
      %10972 = vrot.lane.b32.xlu0 %v10587, 112
      %v10973 = vpop.permute.xlu0 %10972
      %10974 = vrot.lane.b32.xlu0 %v10599, 112
      %v10975 = vpop.permute.xlu0 %10974
      %10976 = vrot.lane.b32.xlu0 %v10611, 112
      %v10977 = vpop.permute.xlu0 %10976
      %10978 = vrot.lane.b32.xlu0 %v10623, 112
      %v10979 = vpop.permute.xlu0 %10978
      %10980 = vrot.lane.b32.xlu0 %v10635, 112
      %v10981 = vpop.permute.xlu0 %10980
      %10982 = vrot.lane.b32.xlu0 %v10647, 112
      %v10983 = vpop.permute.xlu0 %10982
      %10984 = vrot.lane.b32.xlu0 %v10659, 112
      %v10985 = vpop.permute.xlu0 %10984
      %10986 = vrot.lane.b32.xlu0 %v10671, 112
      %v10987 = vpop.permute.xlu0 %10986
      %10988 = vrot.lane.b32.xlu0 %v10683, 112
      %v10989 = vpop.permute.xlu0 %10988
      %10990 = vrot.lane.b32.xlu0 %v10863, 112
      %v10991 = vpop.permute.xlu0 %10990
      %v10993 = vsel %vm1952, %v10472, %v10685
      %v10995 = vsel %vm1952, %v10473, %v10687
      %v10997 = vsel %vm1952, %v10474, %v10689
      %v10999 = vsel %vm1952, %v10475, %v10691
      %v11001 = vsel %vm1952, %v10476, %v10693
      %v11003 = vsel %vm1952, %v10477, %v10695
      %v11005 = vsel %vm1952, %v10478, %v10697
      %v11007 = vsel %vm1952, %v10479, %v10699
      %v11009 = vsel %vm1952, %v10480, %v10701
      %v11011 = vsel %vm1952, %v10481, %v10703
      %v11013 = vsel %vm1952, %v10482, %v10705
      %v11015 = vsel %vm1952, %v10483, %v10707
      %v11017 = vsel %vm1952, %v10484, %v10709
      %v11019 = vsel %vm1952, %v10485, %v10711
      %v11021 = vsel %vm1952, %v10486, %v10713
      %v11023 = vsel %vm2476, %v10993, %v10790
      %v11025 = vsel %vm2476, %v10995, %v10792
      %v11027 = vsel %vm2476, %v10997, %v10794
      %v11029 = vsel %vm2476, %v10999, %v10796
      %v11031 = vsel %vm2476, %v11001, %v10798
      %v11033 = vsel %vm2476, %v11003, %v10800
      %v11035 = vsel %vm2476, %v11005, %v10802
      %v11037 = vsel %vm2476, %v11007, %v10804
      %v11039 = vsel %vm2476, %v11009, %v10806
      %v11041 = vsel %vm2476, %v11011, %v10808
      %v11043 = vsel %vm2476, %v11013, %v10810
      %v11045 = vsel %vm2476, %v11015, %v10812
      %v11047 = vsel %vm2476, %v11017, %v10814
      %v11049 = vsel %vm2476, %v11019, %v10816
      %v11051 = vsel %vm2476, %v11021, %v10818
      %v11053 = vsel %vm2485, %v9819, %v10821
      %v11055 = vsel %vm2485, %v11023, %v10823
      %v11057 = vsel %vm2485, %v11025, %v10825
      %v11059 = vsel %vm2485, %v11027, %v10827
      %v11061 = vsel %vm2485, %v11029, %v10829
      %v11063 = vsel %vm2485, %v11031, %v10831
      %v11065 = vsel %vm2485, %v11033, %v10833
      %v11067 = vsel %vm2485, %v11035, %v10835
      %v11069 = vsel %vm2485, %v11037, %v10837
      %v11071 = vsel %vm2485, %v11039, %v10839
      %v11073 = vsel %vm2485, %v11041, %v10841
      %v11075 = vsel %vm2485, %v11043, %v10843
      %v11077 = vsel %vm2485, %v11045, %v10845
      %v11079 = vsel %vm2485, %v11047, %v10847
      %v11081 = vsel %vm2485, %v11049, %v10849
      %v11083 = vsel %vm2485, %v11051, %v10851
      %v11085 = vsel %vm2494, %v11053, %v10865
      %v11087 = vsel %vm2494, %v11055, %v10867
      %v11089 = vsel %vm2494, %v11057, %v10869
      %v11091 = vsel %vm2494, %v11059, %v10871
      %v11093 = vsel %vm2494, %v11061, %v10873
      %v11095 = vsel %vm2494, %v11063, %v10875
      %v11097 = vsel %vm2494, %v11065, %v10877
      %v11099 = vsel %vm2494, %v11067, %v10879
      %v11101 = vsel %vm2494, %v11069, %v10881
      %v11103 = vsel %vm2494, %v11071, %v10883
      %v11105 = vsel %vm2494, %v11073, %v10885
      %v11107 = vsel %vm2494, %v11075, %v10887
      %v11109 = vsel %vm2494, %v11077, %v10889
      %v11111 = vsel %vm2494, %v11079, %v10891
      %v11113 = vsel %vm2494, %v11081, %v10893
      %v11115 = vsel %vm2494, %v11083, %v10895
      %v11117 = vsel %vm2503, %v11085, %v10901
      %v11119 = vsel %vm2503, %v11087, %v10903
      %v11121 = vsel %vm2503, %v11089, %v10905
      %v11123 = vsel %vm2503, %v11091, %v10907
      %v11125 = vsel %vm2503, %v11093, %v10909
      %v11127 = vsel %vm2503, %v11095, %v10911
      %v11129 = vsel %vm2503, %v11097, %v10913
      %v11131 = vsel %vm2503, %v11099, %v10915
      %v11133 = vsel %vm2503, %v11101, %v10917
      %v11135 = vsel %vm2503, %v11103, %v10919
      %v11137 = vsel %vm2503, %v11105, %v10921
      %v11139 = vsel %vm2503, %v11107, %v10923
      %v11141 = vsel %vm2503, %v11109, %v10925
      %v11143 = vsel %vm2503, %v11111, %v10927
      %v11145 = vsel %vm2503, %v11113, %v10929
      %v11147 = vsel %vm2503, %v11115, %v10931
      %v11149 = vsel %vm2512, %v11117, %v10933
      %v11151 = vsel %vm2512, %v11119, %v10935
      %v11153 = vsel %vm2512, %v11121, %v10937
      %v11155 = vsel %vm2512, %v11123, %v10939
      %v11157 = vsel %vm2512, %v11125, %v10941
      %v11159 = vsel %vm2512, %v11127, %v10943
      %v11161 = vsel %vm2512, %v11129, %v10945
      %v11163 = vsel %vm2512, %v11131, %v10947
      %v11165 = vsel %vm2512, %v11133, %v10949
      %v11167 = vsel %vm2512, %v11135, %v10951
      %v11169 = vsel %vm2512, %v11137, %v10953
      %v11171 = vsel %vm2512, %v11139, %v10955
      %v11173 = vsel %vm2512, %v11141, %v10957
      %v11175 = vsel %vm2512, %v11143, %v10959
      %v11177 = vsel %vm2512, %v11145, %v10961
      %v11178 = vsel %vm2512, %v11147, %v6110
      %v11180 = vsel %vm2521, %v11149, %v10963
      %v11183 = vsel %vm2521, %v11151, %v10965
      %v11186 = vsel %vm2521, %v11153, %v10967
      %v11189 = vsel %vm2521, %v11155, %v10969
      %v11192 = vsel %vm2521, %v11157, %v10971
      %v11195 = vsel %vm2521, %v11159, %v10973
      %v11198 = vsel %vm2521, %v11161, %v10975
      %v11201 = vsel %vm2521, %v11163, %v10977
      %v11204 = vsel %vm2521, %v11165, %v10979
      %v11207 = vsel %vm2521, %v11167, %v10981
      %v11210 = vsel %vm2521, %v11169, %v10983
      %v11213 = vsel %vm2521, %v11171, %v10985
      %v11216 = vsel %vm2521, %v11173, %v10987
      %v11219 = vsel %vm2521, %v11175, %v10989
      %v11222 = vsel %vm2521, %v11177, %v10991
      %v11224 = vsel %vm2521, %v11178, %v9785
      %v11226 = vld [vmem:[%s51] sm:$0xf]
      %v11227 = vld [vmem:[%s51 + $0x4] sm:$0xf]
      %v11228 = vld [vmem:[%s51 + $0x8] sm:$0xf]
      %v11229 = vld [vmem:[%s51 + $0xc] sm:$0xf]
      %v11230 = vld [vmem:[%s51 + $0x10] sm:$0xf]
      %v11231 = vld [vmem:[%s51 + $0x14] sm:$0xf]
      %v11232 = vld [vmem:[%s51 + $0x18] sm:$0xf]
      %v11233 = vld [vmem:[%s51 + $0x1c] sm:$0xf]
      %v11234 = vld [vmem:[%s51 + $0x20] sm:$0xf]
      %v11235 = vld [vmem:[%s51 + $0x24] sm:$0xf]
      %v11236 = vld [vmem:[%s51 + $0x28] sm:$0xf]
      %v11237 = vld [vmem:[%s51 + $0x2c] sm:$0xf]
      %v11238 = vld [vmem:[%s51 + $0x30] sm:$0xf]
      %v11239 = vld [vmem:[%s51 + $0x34] sm:$0xf]
      %v11240 = vld [vmem:[%s51 + $0x38] sm:$0xf]
      %v11241 = vld [vmem:[%s51 + $0x3c] sm:$0xf]
      %v11242 = vld [vmem:[%s51 + $0x40] sm:$0xf]
      %v11243 = vld [vmem:[%s51 + $0x44] sm:$0xf]
      %v11244 = vld [vmem:[%s53] sm:$0x1]
      %v11246 = vlaneseq
      %v11247 = vshrl.u32 %v11246, 7
      %v11248 = vsub.s32 0, %v11247
      %v11249 = vrot.slane %v11244, %v11248
      %v11269 = vunpack.c.l.b16 %v11226
      %v11270 = vunpack.c.l.b16 %v11227
      %v11271 = vunpack.c.l.b16 %v11228
      %v11272 = vunpack.c.l.b16 %v11229
      %v11273 = vunpack.c.l.b16 %v11230
      %v11274 = vunpack.c.l.b16 %v11231
      %v11275 = vunpack.c.l.b16 %v11232
      %v11276 = vunpack.c.l.b16 %v11233
      %v11277 = vunpack.c.l.b16 %v11234
      %v11278 = vunpack.c.l.b16 %v11235
      %v11279 = vunpack.c.l.b16 %v11236
      %v11280 = vunpack.c.l.b16 %v11237
      %v11281 = vunpack.c.l.b16 %v11238
      %v11282 = vunpack.c.l.b16 %v11239
      %v11283 = vunpack.c.l.b16 %v11240
      %v11284 = vunpack.c.l.b16 %v11241
      %v11285 = vunpack.c.l.b16 %v11242
      %v11286 = vunpack.c.l.b16 %v11243
      %v11287 = vpack.c.b16 %v11270, %v11269
      %v11288 = vpack.c.b16 %v11272, %v11271
      %v11289 = vpack.c.b16 %v11274, %v11273
      %v11290 = vpack.c.b16 %v11276, %v11275
      %v11291 = vpack.c.b16 %v11278, %v11277
      %v11292 = vpack.c.b16 %v11280, %v11279
      %v11293 = vpack.c.b16 %v11282, %v11281
      %v11294 = vpack.c.b16 %v11284, %v11283
      %v11295 = vpack.c.b16 %v11286, %v11285
      %v11306 = vsel %vm1952, %v10749, 0
      %v11309 = vsel %vm1952, %v10752, 0
      %v11312 = vsel %vm1952, %v10755, 0
      %v11315 = vsel %vm1952, %v10758, 0
      %v11318 = vsel %vm1952, %v10761, 0
      %v11321 = vsel %vm1952, %v10764, 0
      %v11324 = vsel %vm1952, %v10767, 0
      %v11327 = vsel %vm1952, %v10770, 0
      %v11330 = vsel %vm1952, %v10773, 0
      %v11333 = vsel %vm1952, %v10776, 0
      %v11336 = vsel %vm1952, %v10779, 0
      %v11339 = vsel %vm1952, %v10782, 0
      %v11342 = vsel %vm1952, %v10785, 0
      %v11345 = vsel %vm1952, %v10788, 0
      %v11348 = vsel %vm1952, %v10899, 0
      %11350 = vmatprep.subr.bf16.mxu0 0
      %11351 = vmatpush1.bf16.msra.mxu0 %v11294
      %11352 = vmatprep.subr.bf16.mxu0 0
      %11353 = vmatpush1.bf16.msra.mxu0 %v11293
      %11354 = vmatprep.subr.bf16.mxu0 0
      %11355 = vmatpush1.bf16.msra.mxu0 %v11292
      %11356 = vmatprep.subr.bf16.mxu0 0
      %11357 = vmatpush1.bf16.msra.mxu0 %v11291
      %11358 = vmatprep.subr.bf16.mxu0 0
      %11359 = vmatpush1.bf16.msra.mxu0 %v11290
      %11360 = vmatprep.subr.bf16.mxu0 0
      %11361 = vmatpush1.bf16.msra.mxu0 %v11289
      %11362 = vmatprep.subr.bf16.mxu0 0
      %11363 = vmatpush1.bf16.msra.mxu0 %v11288
      %11364 = vmatprep.subr.bf16.mxu0 0
      %11365 = vmatpush1.bf16.msra.mxu0 %v11287
      %11366 = vmatprep.subr.bf16.mxu0 0
      %11367 = vmatpush2.bf16.msra.mxu0 0
      %11368 = vmatprep.subr.bf16.mxu0 0
      %11369 = vmatpush2.bf16.msra.mxu0 0
      %11370 = vmatprep.subr.bf16.mxu0 0
      %11371 = vmatpush2.bf16.msra.mxu0 0
      %11372 = vmatprep.subr.bf16.mxu0 0
      %11373 = vmatpush2.bf16.msra.mxu0 0
      %11374 = vmatprep.subr.bf16.mxu0 0
      %11375 = vmatpush2.bf16.msra.mxu0 0
      %11376 = vmatprep.subr.bf16.mxu0 0
      %11377 = vmatpush2.bf16.msra.mxu0 0
      %11378 = vmatprep.subr.bf16.mxu0 0
      %11379 = vmatpush2.bf16.msra.mxu0 0
      %11380 = vmatprep.subr.bf16.mxu0 0
      %11381 = vmatpush2.bf16.msra.mxu0 %v11295
      %11382 = vmatprep.mubr.bf16.mxu0 %v11306
      %11383 = vmatmul.mubr.bf16.gmra.mxu0 %v11180
      %v11384 = vpop.f32.mrf.mxu0
      %v11385 = vadd.f32 %v11249, %v11384
      %v11386 = vpop.f32.mrf.mxu0
      %v11387 = vpop.f32.mrf.mxu0
      %v11388 = vadd.f32 %v11249, %v11387
      %v11389 = vpop.f32.mrf.mxu0
      %11390 = vmatprep.mubr.bf16.mxu0 %v11309
      %11391 = vmatmul.mubr.bf16.gmra.mxu0 %v11183
      %v11392 = vpop.f32.mrf.mxu0
      %v11393 = vadd.f32 %v11249, %v11392
      %v11394 = vpop.f32.mrf.mxu0
      %v11395 = vpop.f32.mrf.mxu0
      %v11396 = vadd.f32 %v11249, %v11395
      %v11397 = vpop.f32.mrf.mxu0
      %11398 = vmatprep.mubr.bf16.mxu0 %v11312
      %11399 = vmatmul.mubr.bf16.gmra.mxu0 %v11186
      %v11400 = vpop.f32.mrf.mxu0
      %v11401 = vadd.f32 %v11249, %v11400
      %v11402 = vpop.f32.mrf.mxu0
      %v11403 = vpop.f32.mrf.mxu0
      %v11404 = vadd.f32 %v11249, %v11403
      %v11405 = vpop.f32.mrf.mxu0
      %11406 = vmatprep.mubr.bf16.mxu0 %v11315
      %11407 = vmatmul.mubr.bf16.gmra.mxu0 %v11189
      %v11408 = vpop.f32.mrf.mxu0
      %v11409 = vadd.f32 %v11249, %v11408
      %v11410 = vpop.f32.mrf.mxu0
      %v11411 = vpop.f32.mrf.mxu0
      %v11412 = vadd.f32 %v11249, %v11411
      %v11413 = vpop.f32.mrf.mxu0
      %11414 = vmatprep.mubr.bf16.mxu0 %v11318
      %11415 = vmatmul.mubr.bf16.gmra.mxu0 %v11192
      %v11416 = vpop.f32.mrf.mxu0
      %v11417 = vadd.f32 %v11249, %v11416
      %v11418 = vpop.f32.mrf.mxu0
      %v11419 = vpop.f32.mrf.mxu0
      %v11420 = vadd.f32 %v11249, %v11419
      %v11421 = vpop.f32.mrf.mxu0
      %11422 = vmatprep.mubr.bf16.mxu0 %v11321
      %11423 = vmatmul.mubr.bf16.gmra.mxu0 %v11195
      %v11424 = vpop.f32.mrf.mxu0
      %v11425 = vadd.f32 %v11249, %v11424
      %v11426 = vpop.f32.mrf.mxu0
      %v11427 = vpop.f32.mrf.mxu0
      %v11428 = vadd.f32 %v11249, %v11427
      %v11429 = vpop.f32.mrf.mxu0
      %11430 = vmatprep.mubr.bf16.mxu0 %v11324
      %11431 = vmatmul.mubr.bf16.gmra.mxu0 %v11198
      %v11432 = vpop.f32.mrf.mxu0
      %v11433 = vadd.f32 %v11249, %v11432
      %v11434 = vpop.f32.mrf.mxu0
      %v11435 = vpop.f32.mrf.mxu0
      %v11436 = vadd.f32 %v11249, %v11435
      %v11437 = vpop.f32.mrf.mxu0
      %11438 = vmatprep.mubr.bf16.mxu0 %v11327
      %11439 = vmatmul.mubr.bf16.gmra.mxu0 %v11201
      %v11440 = vpop.f32.mrf.mxu0
      %v11441 = vadd.f32 %v11249, %v11440
      %v11442 = vpop.f32.mrf.mxu0
      %v11443 = vpop.f32.mrf.mxu0
      %v11444 = vadd.f32 %v11249, %v11443
      %v11445 = vpop.f32.mrf.mxu0
      %11446 = vmatprep.mubr.bf16.mxu0 %v11330
      %11447 = vmatmul.mubr.bf16.gmra.mxu0 %v11204
      %v11448 = vpop.f32.mrf.mxu0
      %v11449 = vadd.f32 %v11249, %v11448
      %v11450 = vpop.f32.mrf.mxu0
      %v11451 = vpop.f32.mrf.mxu0
      %v11452 = vadd.f32 %v11249, %v11451
      %v11453 = vpop.f32.mrf.mxu0
      %11454 = vmatprep.mubr.bf16.mxu0 %v11333
      %11455 = vmatmul.mubr.bf16.gmra.mxu0 %v11207
      %v11456 = vpop.f32.mrf.mxu0
      %v11457 = vadd.f32 %v11249, %v11456
      %v11458 = vpop.f32.mrf.mxu0
      %v11459 = vpop.f32.mrf.mxu0
      %v11460 = vadd.f32 %v11249, %v11459
      %v11461 = vpop.f32.mrf.mxu0
      %11462 = vmatprep.mubr.bf16.mxu0 %v11336
      %11463 = vmatmul.mubr.bf16.gmra.mxu0 %v11210
      %v11464 = vpop.f32.mrf.mxu0
      %v11465 = vadd.f32 %v11249, %v11464
      %v11466 = vpop.f32.mrf.mxu0
      %v11467 = vpop.f32.mrf.mxu0
      %v11468 = vadd.f32 %v11249, %v11467
      %v11469 = vpop.f32.mrf.mxu0
      %11470 = vmatprep.mubr.bf16.mxu0 %v11339
      %11471 = vmatmul.mubr.bf16.gmra.mxu0 %v11213
      %v11472 = vpop.f32.mrf.mxu0
      %v11473 = vadd.f32 %v11249, %v11472
      %v11474 = vpop.f32.mrf.mxu0
      %v11475 = vpop.f32.mrf.mxu0
      %v11476 = vadd.f32 %v11249, %v11475
      %v11477 = vpop.f32.mrf.mxu0
      %11478 = vmatprep.mubr.bf16.mxu0 %v11342
      %11479 = vmatmul.mubr.bf16.gmra.mxu0 %v11216
      %v11480 = vpop.f32.mrf.mxu0
      %v11481 = vadd.f32 %v11249, %v11480
      %v11482 = vpop.f32.mrf.mxu0
      %v11483 = vpop.f32.mrf.mxu0
      %v11484 = vadd.f32 %v11249, %v11483
      %v11485 = vpop.f32.mrf.mxu0
      %11486 = vmatprep.mubr.bf16.mxu0 %v11345
      %11487 = vmatmul.mubr.bf16.gmra.mxu0 %v11219
      %v11488 = vpop.f32.mrf.mxu0
      %v11489 = vadd.f32 %v11249, %v11488
      %v11490 = vpop.f32.mrf.mxu0
      %v11491 = vpop.f32.mrf.mxu0
      %v11492 = vadd.f32 %v11249, %v11491
      %v11493 = vpop.f32.mrf.mxu0
      %11494 = vmatprep.mubr.bf16.mxu0 %v11348
      %11495 = vmatmul.mubr.bf16.gmra.mxu0 %v11222
      %v11496 = vpop.f32.mrf.mxu0
      %v11497 = vadd.f32 %v11249, %v11496
      %v11498 = vpop.f32.mrf.mxu0
      %v11499 = vpop.f32.mrf.mxu0
      %v11500 = vadd.f32 %v11249, %v11499
      %v11501 = vpop.f32.mrf.mxu0
      %11502 = vmatprep.mubr.bf16.mxu0 %v10149
      %11503 = vmatmul.mubr.bf16.gmra.mxu0 %v11224
      %v11504 = vpop.f32.mrf.mxu0
      %v11505 = vadd.f32 %v11249, %v11504
      %v11506 = vpop.f32.mrf.mxu0
      %v11507 = vpop.f32.mrf.mxu0
      %v11508 = vadd.f32 %v11249, %v11507
      %v11509 = vpop.f32.mrf.mxu0
      %11510 = vdwg.mxu0
      %11511 = vst.msk [vmem:[%s1070] sm:$0xff] %vm1833, %v11385
      %11512 = vst.msk [vmem:[%s1070 + $0x8] sm:$0xff] %vm1833, %v11388
      %11513 = vst.msk [vmem:[%s1070 + $0x10] sm:$0xff] %vm1833, %v11393
      %11514 = vst.msk [vmem:[%s1070 + $0x18] sm:$0xff] %vm1833, %v11396
      %11515 = vst.msk [vmem:[%s1070 + $0x20] sm:$0xff] %vm1833, %v11401
      %11516 = vst.msk [vmem:[%s1070 + $0x28] sm:$0xff] %vm1833, %v11404
      %11517 = vst.msk [vmem:[%s1070 + $0x30] sm:$0xff] %vm1833, %v11409
      %11518 = vst.msk [vmem:[%s1070 + $0x38] sm:$0xff] %vm1833, %v11412
      %11519 = vst.msk [vmem:[%s1070 + $0x40] sm:$0xff] %vm1833, %v11417
      %11520 = vst.msk [vmem:[%s1070 + $0x48] sm:$0xff] %vm1833, %v11420
      %11521 = vst.msk [vmem:[%s1070 + $0x50] sm:$0xff] %vm1833, %v11425
      %11522 = vst.msk [vmem:[%s1070 + $0x58] sm:$0xff] %vm1833, %v11428
      %11523 = vst.msk [vmem:[%s1070 + $0x60] sm:$0xff] %vm1833, %v11433
      %11524 = vst.msk [vmem:[%s1070 + $0x68] sm:$0xff] %vm1833, %v11436
      %11525 = vst.msk [vmem:[%s1070 + $0x70] sm:$0xff] %vm1833, %v11441
      %11526 = vst.msk [vmem:[%s1070 + $0x78] sm:$0xff] %vm1833, %v11444
      %11527 = vst.msk [vmem:[%s1070 + $0x80] sm:$0xff] %vm1833, %v11449
      %11528 = vst.msk [vmem:[%s1070 + $0x88] sm:$0xff] %vm1833, %v11452
      %11529 = vst.msk [vmem:[%s1070 + $0x90] sm:$0xff] %vm1833, %v11457
      %11530 = vst.msk [vmem:[%s1070 + $0x98] sm:$0xff] %vm1833, %v11460
      %11531 = vst.msk [vmem:[%s1070 + $0xa0] sm:$0xff] %vm1833, %v11465
      %11532 = vst.msk [vmem:[%s1070 + $0xa8] sm:$0xff] %vm1833, %v11468
      %11533 = vst.msk [vmem:[%s1070 + $0xb0] sm:$0xff] %vm1833, %v11473
      %11534 = vst.msk [vmem:[%s1070 + $0xb8] sm:$0xff] %vm1833, %v11476
      %11535 = vst.msk [vmem:[%s1070 + $0xc0] sm:$0xff] %vm1833, %v11481
      %11536 = vst.msk [vmem:[%s1070 + $0xc8] sm:$0xff] %vm1833, %v11484
      %11537 = vst.msk [vmem:[%s1070 + $0xd0] sm:$0xff] %vm1833, %v11489
      %11538 = vst.msk [vmem:[%s1070 + $0xd8] sm:$0xff] %vm1833, %v11492
      %11539 = vst.msk [vmem:[%s1070 + $0xe0] sm:$0xff] %vm1833, %v11497
      %11540 = vst.msk [vmem:[%s1070 + $0xe8] sm:$0xff] %vm1833, %v11500
      %11541 = vst.msk [vmem:[%s1070 + $0xf0] sm:$0xff] %vm1833, %v11505
      %11542 = vst.msk [vmem:[%s1070 + $0xf8] sm:$0xff] %vm1833, %v11508
      %p11543 = scmp.lt.s32.totalorder %s82, 1
      %s11544 = scalar_select %p11543, %s82, 1
      %s11545 = smul.addr %s11544, 32
      %s11546 = smul.addr %s11545, 8
      %s11547 = scalar_lea.vmem %s71, %s11546
      // Predicated region
      $region161: #{vxm_forward.1} parent=159 // pred_check
        %p11548 = pneg %p840
      $region162: #{vxm_forward.1} parent=159 // pred_check_branch
        %11550 = sbr.rel (%p11548) target = $region164
      $region163: #{vxm_forward.1} parent=159 // pred_region
        _
      $region164: #{vxm_forward.1} parent=159 // pred_fallthru
        _
    $region160: #{vxm_forward.1} parent=5 // pred_fallthru
      _
    %p11551 = scmp.le.s32.totalorder 2, %s77
    // Predicated region
    $region165: #{vxm_forward.1} parent=5 // pred_check
      %p11552 = pneg %p11551
    $region166: #{vxm_forward.1} parent=5 // pred_check_branch
      %11554 = sbr.rel (%p11552) target = $region168
    $region167: #{vxm_forward.1} parent=5 // pred_region
      %s11555 = ssub.s32 %s77, 2
      // Predicated region
      $region169: #{vxm_forward.1} parent=167 // pred_check
        %p11556 = pneg %p846
      $region170: #{vxm_forward.1} parent=167 // pred_check_branch
        %11558 = sbr.rel (%p11556) target = $region172
      $region171: #{vxm_forward.1} parent=167 // pred_region
        %p11559 = scmp.lt.s32.totalorder %s83, 1
        %s11560 = scalar_select %p11559, %s83, 1
        %s11561 = smul.addr %s11560, 32
        %s11562 = smul.addr %s11561, 8
        %s11563 = scalar_lea.vmem %s71, %s11562
      $region172: #{vxm_forward.1} parent=167 // pred_fallthru
        _
    $region168: #{vxm_forward.1} parent=5 // pred_fallthru
      _
  $region6: #{vxm_forward.1} parent=0 // loop_footer
    %s81 = sadd.s32 1, %s77
  $region7: #{vxm_forward.1} parent=0 // loop_footer_branch
    %76 = sbr.rel target = $region3
  $region8: #{vxm_forward.1} parent=0 // loop_exit
    _

</llo_original>
